<compile_context>
chip_gen: v7x
topology: tpu7x:2x2x1
jax: 0.10.0
libtpu: 0.0.40
codegen_flags: <defaults>
</compile_context>

<pallas_src>
import functools

import numpy as np
import jax
import jax.numpy as jnp
from jax import lax
from jax.experimental import pallas as pl
from jax.experimental.pallas import tpu as pltpu

EPS = 1e-5


def _round_up(v, m):
    return ((v + m - 1) // m) * m


# ------------------------- in-kernel building blocks -------------------------

def _frn(x, gamma, beta, tau, eps):
    # x: (HW, C) f32; gamma/beta/tau: (1, C)
    ms = jnp.mean(x * x, axis=0, keepdims=True)
    xn = x * lax.rsqrt(ms + eps)
    return jnp.maximum(gamma * xn + beta, tau)


def _conv3x3_flat(y, w_ref, pad_ref, width, margin):
    """3x3 / stride-1 / zero-pad-1 conv on a flattened (H*W, Cin) image.

    y       : (H*W, Cin) f32 value (already in registers/VMEM)
    w_ref   : (9, Cin, Cout) weight ref, tap order (dh, dw) row-major
    pad_ref : (H*W + 2*margin, Cin) f32 VMEM scratch, margin >= width + 1
    width   : W of the image y was flattened from
    margin  : sublane zero-padding on each side (multiple of 8)
    """
    hw, cin = y.shape
    cout = w_ref.shape[-1]

    zeros = jnp.zeros((margin, cin), jnp.float32)
    pad_ref[pl.ds(0, margin), :] = zeros                 # top zero strip
    pad_ref[pl.ds(margin + hw, margin), :] = zeros       # bottom zero strip
    pad_ref[pl.ds(margin, hw), :] = y                    # interior

    col = lax.broadcasted_iota(jnp.int32, (hw, 1), 0) % width
    not_first_col = col != 0                             # needed for dw = -1
    not_last_col = col != (width - 1)                    # needed for dw = +1

    acc = jnp.zeros((hw, cout), jnp.float32)
    tap_idx = 0
    for dh in (-1, 0, 1):
        for dw in (-1, 0, 1):
            tap = pad_ref[pl.ds(margin + dh * width + dw, hw), :]
            if dw == -1:
                tap = jnp.where(not_first_col, tap, 0.0)
            elif dw == 1:
                tap = jnp.where(not_last_col, tap, 0.0)
            acc = acc + jnp.dot(tap, w_ref[tap_idx],
                                preferred_element_type=jnp.float32)
            tap_idx += 1
    return acc


# ----------------------------- fused kernels ---------------------------------

def _gres_same_kernel(x_ref, g1_ref, b1_ref, t1_ref, w1_ref, c1b_ref,
                      g2_ref, b2_ref, t2_ref, w2_ref, c2b_ref,
                      o_ref, pad_ref, *, width, margin, eps):
    # dim_in == dim_out: FRN1 -> conv3x3 -> FRN2 -> conv3x3 -> + x
    x = x_ref[...].astype(jnp.float32)                               # (HW, C)
    y1 = _frn(x, g1_ref[...], b1_ref[...], t1_ref[...], eps)
    h1 = _conv3x3_flat(y1, w1_ref, pad_ref, width, margin) + c1b_ref[...]
    y2 = _frn(h1, g2_ref[...], b2_ref[...], t2_ref[...], eps)
    dx = _conv3x3_flat(y2, w2_ref, pad_ref, width, margin) + c2b_ref[...]
    o_ref[...] = (dx + x).astype(o_ref.dtype)


def _gres_down_kernel(x_ref, g1_ref, b1_ref, t1_ref, w1_ref, c1b_ref,
                      g2_ref, b2_ref, t2_ref, w2_ref, c2b_ref,
                      w1x1_ref, b1x1_ref, pool_ref,
                      o_ref, pad1_ref, pad2_ref,
                      *, width, width_o, margin1, margin2, eps):
    # dim_in != dim_out:
    #   main    : FRN1 -> conv3x3 -> FRN2 -> avgpool(3,2,1) -> conv3x3
    #   shortcut: conv1x1 -> avgpool(3,2,1)
    x = x_ref[...].astype(jnp.float32)                               # (HW, Cin)

    y1 = _frn(x, g1_ref[...], b1_ref[...], t1_ref[...], eps)
    h1 = _conv3x3_flat(y1, w1_ref, pad1_ref, width, margin1) + c1b_ref[...]
    y2 = _frn(h1, g2_ref[...], b2_ref[...], t2_ref[...], eps)
    pooled = jnp.dot(pool_ref[...], y2,
                     preferred_element_type=jnp.float32)             # (HoWo, Cin)
    dx = _conv3x3_flat(pooled, w2_ref, pad2_ref, width_o, margin2) + c2b_ref[...]

    sc = jnp.dot(x, w1x1_ref[...],
                 preferred_element_type=jnp.float32) + b1x1_ref[...] # (HW, Cout)
    sc = jnp.dot(pool_ref[...], sc,
                 preferred_element_type=jnp.float32)                 # (HoWo, Cout)

    o_ref[...] = (dx + sc).astype(o_ref.dtype)


# ----------------------------- wrapper ---------------------------------------

def _pool_matrix(h, w):
    """AvgPool2d(3, stride=2, padding=1, count_include_pad=True) as a matrix."""
    ho, wo = (h - 1) // 2 + 1, (w - 1) // 2 + 1
    p = np.zeros((ho * wo, h * w), np.float32)
    for io in range(ho):
        for jo in range(wo):
            for dh in (-1, 0, 1):
                for dw in (-1, 0, 1):
                    i, j = 2 * io + dh, 2 * jo + dw
                    if 0 <= i < h and 0 <= j < w:
                        p[io * wo + jo, i * w + j] = 1.0 / 9.0
    return jnp.asarray(p)


def gresidual_block_forward(x_nchw, params, *, dim_in, dim_out, eps=EPS):
    """Matches GResidualBlock.forward (PyTorch NCHW in / NCHW out)."""
    n, _, h, w = x_nchw.shape
    hw = h * w
    x = jnp.transpose(x_nchw, (0, 2, 3, 1)).reshape(n, hw, dim_in)

    g1 = params["frn1_gamma"].reshape(1, dim_in)
    b1 = params["frn1_beta"].reshape(1, dim_in)
    t1 = params["frn1_tau"].reshape(1, dim_in)
    g2 = params["frn2_gamma"].reshape(1, dim_in)
    b2 = params["frn2_beta"].reshape(1, dim_in)
    t2 = params["frn2_tau"].reshape(1, dim_in)
    w1 = params["conv1_w"].reshape(9, dim_in, dim_in)
    c1b = params["conv1_b"].reshape(1, dim_in)
    w2 = params["conv2_w"].reshape(9, dim_in, dim_out)
    c2b = params["conv2_b"].reshape(1, dim_out)

    margin1 = _round_up(w + 1, 8)
    cparams = pltpu.CompilerParams(dimension_semantics=("parallel",))

    def rep(a):                       # replicated (grid-invariant) operand
        nd = a.ndim
        return pl.BlockSpec(a.shape, lambda i, _nd=nd: (0,) * _nd)

    if dim_in == dim_out:
        kern = functools.partial(_gres_same_kernel,
                                 width=w, margin=margin1, eps=eps)
        out = pl.pallas_call(
            kern,
            out_shape=jax.ShapeDtypeStruct((n, hw, dim_out), x.dtype),
            grid=(n,),
            in_specs=[pl.BlockSpec((None, hw, dim_in), lambda i: (i, 0, 0)),
                      rep(g1), rep(b1), rep(t1), rep(w1), rep(c1b),
                      rep(g2), rep(b2), rep(t2), rep(w2), rep(c2b)],
            out_specs=pl.BlockSpec((None, hw, dim_out), lambda i: (i, 0, 0)),
            scratch_shapes=[pltpu.VMEM((hw + 2 * margin1, dim_in), jnp.float32)],
            compiler_params=cparams,
        )(x, g1, b1, t1, w1, c1b, g2, b2, t2, w2, c2b)
        out = out.reshape(n, h, w, dim_out)
    else:
        ho, wo = (h - 1) // 2 + 1, (w - 1) // 2 + 1
        howo = ho * wo
        margin2 = _round_up(wo + 1, 8)
        pool = _pool_matrix(h, w)
        w1x1 = params["conv1x1_w"].reshape(dim_in, dim_out)
        b1x1 = params["conv1x1_b"].reshape(1, dim_out)

        kern = functools.partial(_gres_down_kernel,
                                 width=w, width_o=wo,
                                 margin1=margin1, margin2=margin2, eps=eps)
        out = pl.pallas_call(
            kern,
            out_shape=jax.ShapeDtypeStruct((n, howo, dim_out), x.dtype),
            grid=(n,),
            in_specs=[pl.BlockSpec((None, hw, dim_in), lambda i: (i, 0, 0)),
                      rep(g1), rep(b1), rep(t1), rep(w1), rep(c1b),
                      rep(g2), rep(b2), rep(t2), rep(w2), rep(c2b),
                      rep(w1x1), rep(b1x1), rep(pool)],
            out_specs=pl.BlockSpec((None, howo, dim_out), lambda i: (i, 0, 0)),
            scratch_shapes=[
                pltpu.VMEM((hw + 2 * margin1, dim_in), jnp.float32),
                pltpu.VMEM((howo + 2 * margin2, dim_in), jnp.float32)],
            compiler_params=cparams,
        )(x, g1, b1, t1, w1, c1b, g2, b2, t2, w2, c2b, w1x1, b1x1, pool)
        out = out.reshape(n, ho, wo, dim_out)

    return jnp.transpose(out, (0, 3, 1, 2))               # NHWC -> NCHW


# ----------------------------- pure-JAX reference ----------------------------

def _frn_ref(x, gamma, beta, tau, eps=EPS):
    ms = jnp.mean(x * x, axis=(2, 3), keepdims=True)
    xn = x * lax.rsqrt(ms + eps)
    g = gamma.reshape(1, -1, 1, 1)
    b = beta.reshape(1, -1, 1, 1)
    t = tau.reshape(1, -1, 1, 1)
    return jnp.maximum(g * xn + b, t)


def _conv_ref(x, w_hwio, b, padding):
    w_oihw = jnp.transpose(w_hwio, (3, 2, 0, 1))
    y = lax.conv_general_dilated(
        x, w_oihw, window_strides=(1, 1),
        padding=[(padding, padding), (padding, padding)],
        dimension_numbers=("NCHW", "OIHW", "NCHW"),
        precision=lax.Precision.HIGHEST)
    return y + b.reshape(1, -1, 1, 1)


def _avgpool_ref(x):
    s = lax.reduce_window(x, jnp.float32(0.0), lax.add,
                          (1, 1, 3, 3), (1, 1, 2, 2),
                          [(0, 0), (0, 0), (1, 1), (1, 1)])
    return s / 9.0


def ref_forward(x, p, *, dim_in, dim_out):
    h = _frn_ref(x, p["frn1_gamma"], p["frn1_beta"], p["frn1_tau"])
    h = _conv_ref(h, p["conv1_w"], p["conv1_b"], 1)
    h = _frn_ref(h, p["frn2_gamma"], p["frn2_beta"], p["frn2_tau"])
    if dim_in != dim_out:
        h = _avgpool_ref(h)
    dx = _conv_ref(h, p["conv2_w"], p["conv2_b"], 1)
    if dim_in != dim_out:
        sc = _avgpool_ref(_conv_ref(x, p["conv1x1_w"], p["conv1x1_b"], 0))
    else:
        sc = x
    return dx + sc


# ----------------------------- demo -------------------------------------------

def _make_params(key, din, dout):
    ks = jax.random.split(key, 12)
    return {
        "frn1_gamma": 1.0 + 0.1 * jax.random.normal(ks[0], (din,), jnp.float32),
        "frn1_beta": 0.1 * jax.random.normal(ks[1], (din,), jnp.float32),
        "frn1_tau": 0.1 * jax.random.normal(ks[2], (din,), jnp.float32),
        "conv1_w": 0.2 * jax.random.normal(ks[3], (3, 3, din, din), jnp.float32),
        "conv1_b": 0.1 * jax.random.normal(ks[4], (din,), jnp.float32),
        "frn2_gamma": 1.0 + 0.1 * jax.random.normal(ks[5], (din,), jnp.float32),
        "frn2_beta": 0.1 * jax.random.normal(ks[6], (din,), jnp.float32),
        "frn2_tau": 0.1 * jax.random.normal(ks[7], (din,), jnp.float32),
        "conv2_w": 0.2 * jax.random.normal(ks[8], (3, 3, din, dout), jnp.float32),
        "conv2_b": 0.1 * jax.random.normal(ks[9], (dout,), jnp.float32),
        "conv1x1_w": 0.2 * jax.random.normal(ks[10], (1, 1, din, dout), jnp.float32),
        "conv1x1_b": 0.1 * jax.random.normal(ks[11], (dout,), jnp.float32),
    }


if __name__ == "__main__":
    key = jax.random.PRNGKey(0)
    N, H, W = 2, 16, 16

    # --- variant 1: downsampling block (dim_in != dim_out) --------------------
    din, dout = 4, 8
    kp, kx, key = jax.random.split(key, 3)
    params = _make_params(kp, din, dout)
    x = jax.random.normal(kx, (N, din, H, W), jnp.float32)   # NCHW, like PyTorch

    fwd = jax.jit(functools.partial(gresidual_block_forward,
                                    dim_in=din, dim_out=dout))
    out = jax.block_until_ready(fwd(x, params))
    ref = ref_forward(x, params, dim_in=din, dim_out=dout)
    assert out.shape == (N, dout, H // 2, W // 2), out.shape
    err = float(jnp.max(jnp.abs(out - ref)))
    assert err < 1e-2, f"downsample max abs err {err}"

    # --- variant 2: same-dim block (identity shortcut) ------------------------
    din2 = dout2 = 4
    kp2, kx2, key = jax.random.split(key, 3)
    params2 = _make_params(kp2, din2, dout2)
    x2 = jax.random.normal(kx2, (N, din2, H, W), jnp.float32)

    fwd2 = jax.jit(functools.partial(gresidual_block_forward,
                                     dim_in=din2, dim_out=dout2))
    out2 = jax.block_until_ready(fwd2(x2, params2))
    ref2 = ref_forward(x2, params2, dim_in=din2, dim_out=dout2)
    assert out2.shape == (N, dout2, H, W), out2.shape
    err2 = float(jnp.max(jnp.abs(out2 - ref2)))
    assert err2 < 1e-2, f"same-dim max abs err {err2}"

    print("KERNEL_OK")
</pallas_src>

<mosaic_0001>
module attributes {stable_mosaic.version = 11 : i64} {
  func.func @_gres_down_kernel(%arg0: i32, %arg1: memref<1x256x4xf32, #tpu.memory_space<vmem>>, %arg2: memref<1x4xf32, #tpu.memory_space<vmem>>, %arg3: memref<1x4xf32, #tpu.memory_space<vmem>>, %arg4: memref<1x4xf32, #tpu.memory_space<vmem>>, %arg5: memref<9x4x4xf32, #tpu.memory_space<vmem>>, %arg6: memref<1x4xf32, #tpu.memory_space<vmem>>, %arg7: memref<1x4xf32, #tpu.memory_space<vmem>>, %arg8: memref<1x4xf32, #tpu.memory_space<vmem>>, %arg9: memref<1x4xf32, #tpu.memory_space<vmem>>, %arg10: memref<9x4x8xf32, #tpu.memory_space<vmem>>, %arg11: memref<1x8xf32, #tpu.memory_space<vmem>>, %arg12: memref<4x8xf32, #tpu.memory_space<vmem>>, %arg13: memref<1x8xf32, #tpu.memory_space<vmem>>, %arg14: memref<64x256xf32, #tpu.memory_space<vmem>>, %arg15: memref<1x64x8xf32, #tpu.memory_space<vmem>>, %arg16: memref<304x4xf32, #tpu.memory_space<vmem>>, %arg17: memref<96x4xf32, #tpu.memory_space<vmem>>) attributes {dimension_semantics = [#tpu.dimension_semantics<parallel>], iteration_bounds = array<i64: 2>, scalar_prefetch = 0 : i64, scratch_operands = 2 : i64, tpu.core_type = #tpu.core_type<tc>, window_params = [{transform_indices = @transform_0, window_bounds = array<i64: 1, 256, 4>}, {pipeline_mode = #tpu.pipeline_mode<synchronous>, transform_indices = @transform_1, window_bounds = array<i64: 1, 4>}, {pipeline_mode = #tpu.pipeline_mode<synchronous>, transform_indices = @transform_2, window_bounds = array<i64: 1, 4>}, {pipeline_mode = #tpu.pipeline_mode<synchronous>, transform_indices = @transform_3, window_bounds = array<i64: 1, 4>}, {pipeline_mode = #tpu.pipeline_mode<synchronous>, transform_indices = @transform_4, window_bounds = array<i64: 9, 4, 4>}, {pipeline_mode = #tpu.pipeline_mode<synchronous>, transform_indices = @transform_5, window_bounds = array<i64: 1, 4>}, {pipeline_mode = #tpu.pipeline_mode<synchronous>, transform_indices = @transform_6, window_bounds = array<i64: 1, 4>}, {pipeline_mode = #tpu.pipeline_mode<synchronous>, transform_indices = @transform_7, window_bounds = array<i64: 1, 4>}, {pipeline_mode = #tpu.pipeline_mode<synchronous>, transform_indices = @transform_8, window_bounds = array<i64: 1, 4>}, {pipeline_mode = #tpu.pipeline_mode<synchronous>, transform_indices = @transform_9, window_bounds = array<i64: 9, 4, 8>}, {pipeline_mode = #tpu.pipeline_mode<synchronous>, transform_indices = @transform_10, window_bounds = array<i64: 1, 8>}, {pipeline_mode = #tpu.pipeline_mode<synchronous>, transform_indices = @transform_11, window_bounds = array<i64: 4, 8>}, {pipeline_mode = #tpu.pipeline_mode<synchronous>, transform_indices = @transform_12, window_bounds = array<i64: 1, 8>}, {pipeline_mode = #tpu.pipeline_mode<synchronous>, transform_indices = @transform_13, window_bounds = array<i64: 64, 256>}, {transform_indices = @transform_14, window_bounds = array<i64: 1, 64, 8>}]} {
    %c0 = arith.constant 0 : index
    %c0_0 = arith.constant 0 : index
    %c0_1 = arith.constant 0 : index
    %0 = vector.load %arg1[%c0, %c0_0, %c0_1] : memref<1x256x4xf32, #tpu.memory_space<vmem>>, vector<1x256x4xf32>
    %1 = vector.shape_cast %0 : vector<1x256x4xf32> to vector<256x4xf32>
    %c0_2 = arith.constant 0 : index
    %c0_3 = arith.constant 0 : index
    %2 = vector.load %arg2[%c0_2, %c0_3] : memref<1x4xf32, #tpu.memory_space<vmem>>, vector<1x4xf32>
    %c0_4 = arith.constant 0 : index
    %c0_5 = arith.constant 0 : index
    %3 = vector.load %arg3[%c0_4, %c0_5] : memref<1x4xf32, #tpu.memory_space<vmem>>, vector<1x4xf32>
    %c0_6 = arith.constant 0 : index
    %c0_7 = arith.constant 0 : index
    %4 = vector.load %arg4[%c0_6, %c0_7] : memref<1x4xf32, #tpu.memory_space<vmem>>, vector<1x4xf32>
    %5 = arith.mulf %1, %1 : vector<256x4xf32>
    %cst = arith.constant dense<0.000000e+00> : vector<4xf32>
    %6 = vector.multi_reduction <add>, %5, %cst [0] : vector<256x4xf32> to vector<4xf32>
    %7 = vector.shape_cast %6 : vector<4xf32> to vector<1x4xf32>
    %cst_8 = arith.constant 2.560000e+02 : f32
    %8 = vector.broadcast %cst_8 : f32 to vector<1x4xf32>
    %9 = arith.divf %7, %8 : vector<1x4xf32>
    %cst_9 = arith.constant 9.99999974E-6 : f32
    %10 = vector.broadcast %cst_9 : f32 to vector<1x4xf32>
    %11 = arith.addf %9, %10 : vector<1x4xf32>
    %12 = math.rsqrt %11 : vector<1x4xf32>
    %13 = vector.broadcast %12 : vector<1x4xf32> to vector<256x4xf32>
    %14 = arith.mulf %1, %13 : vector<256x4xf32>
    %15 = vector.broadcast %2 : vector<1x4xf32> to vector<256x4xf32>
    %16 = arith.mulf %15, %14 : vector<256x4xf32>
    %17 = vector.broadcast %3 : vector<1x4xf32> to vector<256x4xf32>
    %18 = arith.addf %16, %17 : vector<256x4xf32>
    %19 = vector.broadcast %4 : vector<1x4xf32> to vector<256x4xf32>
    %20 = arith.maximumf %18, %19 : vector<256x4xf32>
    %cst_10 = arith.constant 0.000000e+00 : f32
    %21 = vector.broadcast %cst_10 : f32 to vector<24x4xf32>
    %c0_11 = arith.constant 0 : index
    %c0_12 = arith.constant 0 : index
    %22 = vector.load %arg16[%c0_11, %c0_12] : memref<304x4xf32, #tpu.memory_space<vmem>>, vector<24x4xf32>
    tpu.vector_store %arg16[%c0_11, %c0_12], %21 {strides = array<i32>} : memref<304x4xf32, #tpu.memory_space<vmem>>, vector<24x4xf32>,
    %c280 = arith.constant 280 : index
    %c0_13 = arith.constant 0 : index
    %23 = vector.load %arg16[%c280, %c0_13] : memref<304x4xf32, #tpu.memory_space<vmem>>, vector<24x4xf32>
    tpu.vector_store %arg16[%c280, %c0_13], %21 {strides = array<i32>} : memref<304x4xf32, #tpu.memory_space<vmem>>, vector<24x4xf32>,
    %c24 = arith.constant 24 : index
    %c0_14 = arith.constant 0 : index
    %24 = vector.load %arg16[%c24, %c0_14] : memref<304x4xf32, #tpu.memory_space<vmem>>, vector<256x4xf32>
    tpu.vector_store %arg16[%c24, %c0_14], %20 {strides = array<i32>} : memref<304x4xf32, #tpu.memory_space<vmem>>, vector<256x4xf32>,
    %25 = tpu.iota {dimensions = array<i32: 0>} : vector<256x1xi32>
    %c16_i32 = arith.constant 16 : i32
    %c0_i32 = arith.constant 0 : i32
    %26 = arith.cmpi eq, %c16_i32, %c0_i32 : i32
    %c1_i32 = arith.constant 1 : i32
    %27 = arith.select %26, %c1_i32, %c16_i32 : i32
    %28 = vector.broadcast %27 : i32 to vector<256x1xi32>
    %29 = arith.remsi %25, %28 : vector<256x1xi32>
    %c0_i32_15 = arith.constant 0 : i32
    %30 = vector.broadcast %c0_i32_15 : i32 to vector<256x1xi32>
    %31 = arith.cmpi ne, %29, %30 : vector<256x1xi32>
    %c0_i32_16 = arith.constant 0 : i32
    %32 = vector.broadcast %c0_i32_16 : i32 to vector<256x1xi32>
    %33 = arith.cmpi slt, %29, %32 : vector<256x1xi32>
    %c0_i32_17 = arith.constant 0 : i32
    %34 = arith.cmpi slt, %27, %c0_i32_17 : i32
    %35 = vector.broadcast %34 : i1 to vector<256x1xi1>
    %36 = vector.broadcast %35 : vector<256x1xi1> to vector<256x1xi1>
    %37 = arith.xori %33, %36 : vector<256x1xi1>
    %38 = arith.andi %37, %31 : vector<256x1xi1>
    %39 = vector.broadcast %27 : i32 to vector<256x1xi32>
    %40 = arith.addi %29, %39 : vector<256x1xi32>
    %41 = arith.select %38, %40, %29 : vector<256x1xi1>, vector<256x1xi32>
    %c0_i32_18 = arith.constant 0 : i32
    %42 = vector.broadcast %c0_i32_18 : i32 to vector<256x1xi32>
    %43 = arith.cmpi ne, %41, %42 : vector<256x1xi32>
    %c15_i32 = arith.constant 15 : i32
    %44 = vector.broadcast %c15_i32 : i32 to vector<256x1xi32>
    %45 = arith.cmpi ne, %41, %44 : vector<256x1xi32>
    %cst_19 = arith.constant 0.000000e+00 : f32
    %46 = vector.broadcast %cst_19 : f32 to vector<256x4xf32>
    %c7 = arith.constant 7 : index
    %c0_20 = arith.constant 0 : index
    %47 = vector.load %arg16[%c7, %c0_20] : memref<304x4xf32, #tpu.memory_space<vmem>>, vector<256x4xf32>
    %cst_21 = arith.constant 0.000000e+00 : f32
    %48 = vector.shape_cast %43 : vector<256x1xi1> to vector<256x1xi1>
    %49 = vector.broadcast %48 : vector<256x1xi1> to vector<256x4xi1>
    %50 = vector.broadcast %cst_21 : f32 to vector<256x4xf32>
    %51 = arith.select %49, %47, %50 : vector<256x4xi1>, vector<256x4xf32>
    %c0_22 = arith.constant 0 : index
    %c0_23 = arith.constant 0 : index
    %c0_24 = arith.constant 0 : index
    %52 = vector.load %arg5[%c0_22, %c0_23, %c0_24] : memref<9x4x4xf32, #tpu.memory_space<vmem>>, vector<1x4x4xf32>
    %53 = vector.shape_cast %52 : vector<1x4x4xf32> to vector<4x4xf32>
    %cst_25 = arith.constant dense<0.000000e+00> : vector<256x4xf32>
    %54 = tpu.matmul %51, %53, %cst_25 {dimension_numbers = #tpu.dot_dimension_numbers<[1], [0], [0], [1], [0, 0, 1, 1], [], []>} : vector<256x4xf32>, vector<4x4xf32>, vector<256x4xf32> -> vector<256x4xf32>
    %55 = arith.addf %46, %54 : vector<256x4xf32>
    %c8 = arith.constant 8 : index
    %c0_26 = arith.constant 0 : index
    %56 = vector.load %arg16[%c8, %c0_26] : memref<304x4xf32, #tpu.memory_space<vmem>>, vector<256x4xf32>
    %c1 = arith.constant 1 : index
    %c0_27 = arith.constant 0 : index
    %c0_28 = arith.constant 0 : index
    %57 = vector.load %arg5[%c1, %c0_27, %c0_28] : memref<9x4x4xf32, #tpu.memory_space<vmem>>, vector<1x4x4xf32>
    %58 = vector.shape_cast %57 : vector<1x4x4xf32> to vector<4x4xf32>
    %cst_29 = arith.constant dense<0.000000e+00> : vector<256x4xf32>
    %59 = tpu.matmul %56, %58, %cst_29 {dimension_numbers = #tpu.dot_dimension_numbers<[1], [0], [0], [1], [0, 0, 1, 1], [], []>} : vector<256x4xf32>, vector<4x4xf32>, vector<256x4xf32> -> vector<256x4xf32>
    %60 = arith.addf %55, %59 : vector<256x4xf32>
    %c9 = arith.constant 9 : index
    %c0_30 = arith.constant 0 : index
    %61 = vector.load %arg16[%c9, %c0_30] : memref<304x4xf32, #tpu.memory_space<vmem>>, vector<256x4xf32>
    %cst_31 = arith.constant 0.000000e+00 : f32
    %62 = vector.shape_cast %45 : vector<256x1xi1> to vector<256x1xi1>
    %63 = vector.broadcast %62 : vector<256x1xi1> to vector<256x4xi1>
    %64 = vector.broadcast %cst_31 : f32 to vector<256x4xf32>
    %65 = arith.select %63, %61, %64 : vector<256x4xi1>, vector<256x4xf32>
    %c2 = arith.constant 2 : index
    %c0_32 = arith.constant 0 : index
    %c0_33 = arith.constant 0 : index
    %66 = vector.load %arg5[%c2, %c0_32, %c0_33] : memref<9x4x4xf32, #tpu.memory_space<vmem>>, vector<1x4x4xf32>
    %67 = vector.shape_cast %66 : vector<1x4x4xf32> to vector<4x4xf32>
    %cst_34 = arith.constant dense<0.000000e+00> : vector<256x4xf32>
    %68 = tpu.matmul %65, %67, %cst_34 {dimension_numbers = #tpu.dot_dimension_numbers<[1], [0], [0], [1], [0, 0, 1, 1], [], []>} : vector<256x4xf32>, vector<4x4xf32>, vector<256x4xf32> -> vector<256x4xf32>
    %69 = arith.addf %60, %68 : vector<256x4xf32>
    %c23 = arith.constant 23 : index
    %c0_35 = arith.constant 0 : index
    %70 = vector.load %arg16[%c23, %c0_35] : memref<304x4xf32, #tpu.memory_space<vmem>>, vector<256x4xf32>
    %cst_36 = arith.constant 0.000000e+00 : f32
    %71 = vector.shape_cast %43 : vector<256x1xi1> to vector<256x1xi1>
    %72 = vector.broadcast %71 : vector<256x1xi1> to vector<256x4xi1>
    %73 = vector.broadcast %cst_36 : f32 to vector<256x4xf32>
    %74 = arith.select %72, %70, %73 : vector<256x4xi1>, vector<256x4xf32>
    %c3 = arith.constant 3 : index
    %c0_37 = arith.constant 0 : index
    %c0_38 = arith.constant 0 : index
    %75 = vector.load %arg5[%c3, %c0_37, %c0_38] : memref<9x4x4xf32, #tpu.memory_space<vmem>>, vector<1x4x4xf32>
    %76 = vector.shape_cast %75 : vector<1x4x4xf32> to vector<4x4xf32>
    %cst_39 = arith.constant dense<0.000000e+00> : vector<256x4xf32>
    %77 = tpu.matmul %74, %76, %cst_39 {dimension_numbers = #tpu.dot_dimension_numbers<[1], [0], [0], [1], [0, 0, 1, 1], [], []>} : vector<256x4xf32>, vector<4x4xf32>, vector<256x4xf32> -> vector<256x4xf32>
    %78 = arith.addf %69, %77 : vector<256x4xf32>
    %c24_40 = arith.constant 24 : index
    %c0_41 = arith.constant 0 : index
    %79 = vector.load %arg16[%c24_40, %c0_41] : memref<304x4xf32, #tpu.memory_space<vmem>>, vector<256x4xf32>
    %c4 = arith.constant 4 : index
    %c0_42 = arith.constant 0 : index
    %c0_43 = arith.constant 0 : index
    %80 = vector.load %arg5[%c4, %c0_42, %c0_43] : memref<9x4x4xf32, #tpu.memory_space<vmem>>, vector<1x4x4xf32>
    %81 = vector.shape_cast %80 : vector<1x4x4xf32> to vector<4x4xf32>
    %cst_44 = arith.constant dense<0.000000e+00> : vector<256x4xf32>
    %82 = tpu.matmul %79, %81, %cst_44 {dimension_numbers = #tpu.dot_dimension_numbers<[1], [0], [0], [1], [0, 0, 1, 1], [], []>} : vector<256x4xf32>, vector<4x4xf32>, vector<256x4xf32> -> vector<256x4xf32>
    %83 = arith.addf %78, %82 : vector<256x4xf32>
    %c25 = arith.constant 25 : index
    %c0_45 = arith.constant 0 : index
    %84 = vector.load %arg16[%c25, %c0_45] : memref<304x4xf32, #tpu.memory_space<vmem>>, vector<256x4xf32>
    %cst_46 = arith.constant 0.000000e+00 : f32
    %85 = vector.shape_cast %45 : vector<256x1xi1> to vector<256x1xi1>
    %86 = vector.broadcast %85 : vector<256x1xi1> to vector<256x4xi1>
    %87 = vector.broadcast %cst_46 : f32 to vector<256x4xf32>
    %88 = arith.select %86, %84, %87 : vector<256x4xi1>, vector<256x4xf32>
    %c5 = arith.constant 5 : index
    %c0_47 = arith.constant 0 : index
    %c0_48 = arith.constant 0 : index
    %89 = vector.load %arg5[%c5, %c0_47, %c0_48] : memref<9x4x4xf32, #tpu.memory_space<vmem>>, vector<1x4x4xf32>
    %90 = vector.shape_cast %89 : vector<1x4x4xf32> to vector<4x4xf32>
    %cst_49 = arith.constant dense<0.000000e+00> : vector<256x4xf32>
    %91 = tpu.matmul %88, %90, %cst_49 {dimension_numbers = #tpu.dot_dimension_numbers<[1], [0], [0], [1], [0, 0, 1, 1], [], []>} : vector<256x4xf32>, vector<4x4xf32>, vector<256x4xf32> -> vector<256x4xf32>
    %92 = arith.addf %83, %91 : vector<256x4xf32>
    %c39 = arith.constant 39 : index
    %c0_50 = arith.constant 0 : index
    %93 = vector.load %arg16[%c39, %c0_50] : memref<304x4xf32, #tpu.memory_space<vmem>>, vector<256x4xf32>
    %cst_51 = arith.constant 0.000000e+00 : f32
    %94 = vector.shape_cast %43 : vector<256x1xi1> to vector<256x1xi1>
    %95 = vector.broadcast %94 : vector<256x1xi1> to vector<256x4xi1>
    %96 = vector.broadcast %cst_51 : f32 to vector<256x4xf32>
    %97 = arith.select %95, %93, %96 : vector<256x4xi1>, vector<256x4xf32>
    %c6 = arith.constant 6 : index
    %c0_52 = arith.constant 0 : index
    %c0_53 = arith.constant 0 : index
    %98 = vector.load %arg5[%c6, %c0_52, %c0_53] : memref<9x4x4xf32, #tpu.memory_space<vmem>>, vector<1x4x4xf32>
    %99 = vector.shape_cast %98 : vector<1x4x4xf32> to vector<4x4xf32>
    %cst_54 = arith.constant dense<0.000000e+00> : vector<256x4xf32>
    %100 = tpu.matmul %97, %99, %cst_54 {dimension_numbers = #tpu.dot_dimension_numbers<[1], [0], [0], [1], [0, 0, 1, 1], [], []>} : vector<256x4xf32>, vector<4x4xf32>, vector<256x4xf32> -> vector<256x4xf32>
    %101 = arith.addf %92, %100 : vector<256x4xf32>
    %c40 = arith.constant 40 : index
    %c0_55 = arith.constant 0 : index
    %102 = vector.load %arg16[%c40, %c0_55] : memref<304x4xf32, #tpu.memory_space<vmem>>, vector<256x4xf32>
    %c7_56 = arith.constant 7 : index
    %c0_57 = arith.constant 0 : index
    %c0_58 = arith.constant 0 : index
    %103 = vector.load %arg5[%c7_56, %c0_57, %c0_58] : memref<9x4x4xf32, #tpu.memory_space<vmem>>, vector<1x4x4xf32>
    %104 = vector.shape_cast %103 : vector<1x4x4xf32> to vector<4x4xf32>
    %cst_59 = arith.constant dense<0.000000e+00> : vector<256x4xf32>
    %105 = tpu.matmul %102, %104, %cst_59 {dimension_numbers = #tpu.dot_dimension_numbers<[1], [0], [0], [1], [0, 0, 1, 1], [], []>} : vector<256x4xf32>, vector<4x4xf32>, vector<256x4xf32> -> vector<256x4xf32>
    %106 = arith.addf %101, %105 : vector<256x4xf32>
    %c41 = arith.constant 41 : index
    %c0_60 = arith.constant 0 : index
    %107 = vector.load %arg16[%c41, %c0_60] : memref<304x4xf32, #tpu.memory_space<vmem>>, vector<256x4xf32>
    %cst_61 = arith.constant 0.000000e+00 : f32
    %108 = vector.shape_cast %45 : vector<256x1xi1> to vector<256x1xi1>
    %109 = vector.broadcast %108 : vector<256x1xi1> to vector<256x4xi1>
    %110 = vector.broadcast %cst_61 : f32 to vector<256x4xf32>
    %111 = arith.select %109, %107, %110 : vector<256x4xi1>, vector<256x4xf32>
    %c8_62 = arith.constant 8 : index
    %c0_63 = arith.constant 0 : index
    %c0_64 = arith.constant 0 : index
    %112 = vector.load %arg5[%c8_62, %c0_63, %c0_64] : memref<9x4x4xf32, #tpu.memory_space<vmem>>, vector<1x4x4xf32>
    %113 = vector.shape_cast %112 : vector<1x4x4xf32> to vector<4x4xf32>
    %cst_65 = arith.constant dense<0.000000e+00> : vector<256x4xf32>
    %114 = tpu.matmul %111, %113, %cst_65 {dimension_numbers = #tpu.dot_dimension_numbers<[1], [0], [0], [1], [0, 0, 1, 1], [], []>} : vector<256x4xf32>, vector<4x4xf32>, vector<256x4xf32> -> vector<256x4xf32>
    %115 = arith.addf %106, %114 : vector<256x4xf32>
    %c0_66 = arith.constant 0 : index
    %c0_67 = arith.constant 0 : index
    %116 = vector.load %arg6[%c0_66, %c0_67] : memref<1x4xf32, #tpu.memory_space<vmem>>, vector<1x4xf32>
    %117 = vector.broadcast %116 : vector<1x4xf32> to vector<256x4xf32>
    %118 = arith.addf %115, %117 : vector<256x4xf32>
    %c0_68 = arith.constant 0 : index
    %c0_69 = arith.constant 0 : index
    %119 = vector.load %arg7[%c0_68, %c0_69] : memref<1x4xf32, #tpu.memory_space<vmem>>, vector<1x4xf32>
    %c0_70 = arith.constant 0 : index
    %c0_71 = arith.constant 0 : index
    %120 = vector.load %arg8[%c0_70, %c0_71] : memref<1x4xf32, #tpu.memory_space<vmem>>, vector<1x4xf32>
    %c0_72 = arith.constant 0 : index
    %c0_73 = arith.constant 0 : index
    %121 = vector.load %arg9[%c0_72, %c0_73] : memref<1x4xf32, #tpu.memory_space<vmem>>, vector<1x4xf32>
    %122 = arith.mulf %118, %118 : vector<256x4xf32>
    %cst_74 = arith.constant dense<0.000000e+00> : vector<4xf32>
    %123 = vector.multi_reduction <add>, %122, %cst_74 [0] : vector<256x4xf32> to vector<4xf32>
    %124 = vector.shape_cast %123 : vector<4xf32> to vector<1x4xf32>
    %cst_75 = arith.constant 2.560000e+02 : f32
    %125 = vector.broadcast %cst_75 : f32 to vector<1x4xf32>
    %126 = arith.divf %124, %125 : vector<1x4xf32>
    %cst_76 = arith.constant 9.99999974E-6 : f32
    %127 = vector.broadcast %cst_76 : f32 to vector<1x4xf32>
    %128 = arith.addf %126, %127 : vector<1x4xf32>
    %129 = math.rsqrt %128 : vector<1x4xf32>
    %130 = vector.broadcast %129 : vector<1x4xf32> to vector<256x4xf32>
    %131 = arith.mulf %118, %130 : vector<256x4xf32>
    %132 = vector.broadcast %119 : vector<1x4xf32> to vector<256x4xf32>
    %133 = arith.mulf %132, %131 : vector<256x4xf32>
    %134 = vector.broadcast %120 : vector<1x4xf32> to vector<256x4xf32>
    %135 = arith.addf %133, %134 : vector<256x4xf32>
    %136 = vector.broadcast %121 : vector<1x4xf32> to vector<256x4xf32>
    %137 = arith.maximumf %135, %136 : vector<256x4xf32>
    %c0_77 = arith.constant 0 : index
    %c0_78 = arith.constant 0 : index
    %138 = vector.load %arg14[%c0_77, %c0_78] : memref<64x256xf32, #tpu.memory_space<vmem>>, vector<64x256xf32>
    %cst_79 = arith.constant dense<0.000000e+00> : vector<64x4xf32>
    %139 = tpu.matmul %138, %137, %cst_79 {dimension_numbers = #tpu.dot_dimension_numbers<[1], [0], [0], [1], [0, 0, 1, 1], [], []>} : vector<64x256xf32>, vector<256x4xf32>, vector<64x4xf32> -> vector<64x4xf32>
    %cst_80 = arith.constant 0.000000e+00 : f32
    %140 = vector.broadcast %cst_80 : f32 to vector<16x4xf32>
    %c0_81 = arith.constant 0 : index
    %c0_82 = arith.constant 0 : index
    %141 = vector.load %arg17[%c0_81, %c0_82] : memref<96x4xf32, #tpu.memory_space<vmem>>, vector<16x4xf32>
    tpu.vector_store %arg17[%c0_81, %c0_82], %140 {strides = array<i32>} : memref<96x4xf32, #tpu.memory_space<vmem>>, vector<16x4xf32>,
    %c80 = arith.constant 80 : index
    %c0_83 = arith.constant 0 : index
    %142 = vector.load %arg17[%c80, %c0_83] : memref<96x4xf32, #tpu.memory_space<vmem>>, vector<16x4xf32>
    tpu.vector_store %arg17[%c80, %c0_83], %140 {strides = array<i32>} : memref<96x4xf32, #tpu.memory_space<vmem>>, vector<16x4xf32>,
    %c16 = arith.constant 16 : index
    %c0_84 = arith.constant 0 : index
    %143 = vector.load %arg17[%c16, %c0_84] : memref<96x4xf32, #tpu.memory_space<vmem>>, vector<64x4xf32>
    tpu.vector_store %arg17[%c16, %c0_84], %139 {strides = array<i32>} : memref<96x4xf32, #tpu.memory_space<vmem>>, vector<64x4xf32>,
    %144 = tpu.iota {dimensions = array<i32: 0>} : vector<64x1xi32>
    %c8_i32 = arith.constant 8 : i32
    %c0_i32_85 = arith.constant 0 : i32
    %145 = arith.cmpi eq, %c8_i32, %c0_i32_85 : i32
    %c1_i32_86 = arith.constant 1 : i32
    %146 = arith.select %145, %c1_i32_86, %c8_i32 : i32
    %147 = vector.broadcast %146 : i32 to vector<64x1xi32>
    %148 = arith.remsi %144, %147 : vector<64x1xi32>
    %c0_i32_87 = arith.constant 0 : i32
    %149 = vector.broadcast %c0_i32_87 : i32 to vector<64x1xi32>
    %150 = arith.cmpi ne, %148, %149 : vector<64x1xi32>
    %c0_i32_88 = arith.constant 0 : i32
    %151 = vector.broadcast %c0_i32_88 : i32 to vector<64x1xi32>
    %152 = arith.cmpi slt, %148, %151 : vector<64x1xi32>
    %c0_i32_89 = arith.constant 0 : i32
    %153 = arith.cmpi slt, %146, %c0_i32_89 : i32
    %154 = vector.broadcast %153 : i1 to vector<64x1xi1>
    %155 = vector.broadcast %154 : vector<64x1xi1> to vector<64x1xi1>
    %156 = arith.xori %152, %155 : vector<64x1xi1>
    %157 = arith.andi %156, %150 : vector<64x1xi1>
    %158 = vector.broadcast %146 : i32 to vector<64x1xi32>
    %159 = arith.addi %148, %158 : vector<64x1xi32>
    %160 = arith.select %157, %159, %148 : vector<64x1xi1>, vector<64x1xi32>
    %c0_i32_90 = arith.constant 0 : i32
    %161 = vector.broadcast %c0_i32_90 : i32 to vector<64x1xi32>
    %162 = arith.cmpi ne, %160, %161 : vector<64x1xi32>
    %c7_i32 = arith.constant 7 : i32
    %163 = vector.broadcast %c7_i32 : i32 to vector<64x1xi32>
    %164 = arith.cmpi ne, %160, %163 : vector<64x1xi32>
    %cst_91 = arith.constant 0.000000e+00 : f32
    %165 = vector.broadcast %cst_91 : f32 to vector<64x8xf32>
    %c7_92 = arith.constant 7 : index
    %c0_93 = arith.constant 0 : index
    %166 = vector.load %arg17[%c7_92, %c0_93] : memref<96x4xf32, #tpu.memory_space<vmem>>, vector<64x4xf32>
    %cst_94 = arith.constant 0.000000e+00 : f32
    %167 = vector.shape_cast %162 : vector<64x1xi1> to vector<64x1xi1>
    %168 = vector.broadcast %167 : vector<64x1xi1> to vector<64x4xi1>
    %169 = vector.broadcast %cst_94 : f32 to vector<64x4xf32>
    %170 = arith.select %168, %166, %169 : vector<64x4xi1>, vector<64x4xf32>
    %c0_95 = arith.constant 0 : index
    %c0_96 = arith.constant 0 : index
    %c0_97 = arith.constant 0 : index
    %171 = vector.load %arg10[%c0_95, %c0_96, %c0_97] : memref<9x4x8xf32, #tpu.memory_space<vmem>>, vector<1x4x8xf32>
    %172 = vector.shape_cast %171 : vector<1x4x8xf32> to vector<4x8xf32>
    %cst_98 = arith.constant dense<0.000000e+00> : vector<64x8xf32>
    %173 = tpu.matmul %170, %172, %cst_98 {dimension_numbers = #tpu.dot_dimension_numbers<[1], [0], [0], [1], [0, 0, 1, 1], [], []>} : vector<64x4xf32>, vector<4x8xf32>, vector<64x8xf32> -> vector<64x8xf32>
    %174 = arith.addf %165, %173 : vector<64x8xf32>
    %c8_99 = arith.constant 8 : index
    %c0_100 = arith.constant 0 : index
    %175 = vector.load %arg17[%c8_99, %c0_100] : memref<96x4xf32, #tpu.memory_space<vmem>>, vector<64x4xf32>
    %c1_101 = arith.constant 1 : index
    %c0_102 = arith.constant 0 : index
    %c0_103 = arith.constant 0 : index
    %176 = vector.load %arg10[%c1_101, %c0_102, %c0_103] : memref<9x4x8xf32, #tpu.memory_space<vmem>>, vector<1x4x8xf32>
    %177 = vector.shape_cast %176 : vector<1x4x8xf32> to vector<4x8xf32>
    %cst_104 = arith.constant dense<0.000000e+00> : vector<64x8xf32>
    %178 = tpu.matmul %175, %177, %cst_104 {dimension_numbers = #tpu.dot_dimension_numbers<[1], [0], [0], [1], [0, 0, 1, 1], [], []>} : vector<64x4xf32>, vector<4x8xf32>, vector<64x8xf32> -> vector<64x8xf32>
    %179 = arith.addf %174, %178 : vector<64x8xf32>
    %c9_105 = arith.constant 9 : index
    %c0_106 = arith.constant 0 : index
    %180 = vector.load %arg17[%c9_105, %c0_106] : memref<96x4xf32, #tpu.memory_space<vmem>>, vector<64x4xf32>
    %cst_107 = arith.constant 0.000000e+00 : f32
    %181 = vector.shape_cast %164 : vector<64x1xi1> to vector<64x1xi1>
    %182 = vector.broadcast %181 : vector<64x1xi1> to vector<64x4xi1>
    %183 = vector.broadcast %cst_107 : f32 to vector<64x4xf32>
    %184 = arith.select %182, %180, %183 : vector<64x4xi1>, vector<64x4xf32>
    %c2_108 = arith.constant 2 : index
    %c0_109 = arith.constant 0 : index
    %c0_110 = arith.constant 0 : index
    %185 = vector.load %arg10[%c2_108, %c0_109, %c0_110] : memref<9x4x8xf32, #tpu.memory_space<vmem>>, vector<1x4x8xf32>
    %186 = vector.shape_cast %185 : vector<1x4x8xf32> to vector<4x8xf32>
    %cst_111 = arith.constant dense<0.000000e+00> : vector<64x8xf32>
    %187 = tpu.matmul %184, %186, %cst_111 {dimension_numbers = #tpu.dot_dimension_numbers<[1], [0], [0], [1], [0, 0, 1, 1], [], []>} : vector<64x4xf32>, vector<4x8xf32>, vector<64x8xf32> -> vector<64x8xf32>
    %188 = arith.addf %179, %187 : vector<64x8xf32>
    %c15 = arith.constant 15 : index
    %c0_112 = arith.constant 0 : index
    %189 = vector.load %arg17[%c15, %c0_112] : memref<96x4xf32, #tpu.memory_space<vmem>>, vector<64x4xf32>
    %cst_113 = arith.constant 0.000000e+00 : f32
    %190 = vector.shape_cast %162 : vector<64x1xi1> to vector<64x1xi1>
    %191 = vector.broadcast %190 : vector<64x1xi1> to vector<64x4xi1>
    %192 = vector.broadcast %cst_113 : f32 to vector<64x4xf32>
    %193 = arith.select %191, %189, %192 : vector<64x4xi1>, vector<64x4xf32>
    %c3_114 = arith.constant 3 : index
    %c0_115 = arith.constant 0 : index
    %c0_116 = arith.constant 0 : index
    %194 = vector.load %arg10[%c3_114, %c0_115, %c0_116] : memref<9x4x8xf32, #tpu.memory_space<vmem>>, vector<1x4x8xf32>
    %195 = vector.shape_cast %194 : vector<1x4x8xf32> to vector<4x8xf32>
    %cst_117 = arith.constant dense<0.000000e+00> : vector<64x8xf32>
    %196 = tpu.matmul %193, %195, %cst_117 {dimension_numbers = #tpu.dot_dimension_numbers<[1], [0], [0], [1], [0, 0, 1, 1], [], []>} : vector<64x4xf32>, vector<4x8xf32>, vector<64x8xf32> -> vector<64x8xf32>
    %197 = arith.addf %188, %196 : vector<64x8xf32>
    %c16_118 = arith.constant 16 : index
    %c0_119 = arith.constant 0 : index
    %198 = vector.load %arg17[%c16_118, %c0_119] : memref<96x4xf32, #tpu.memory_space<vmem>>, vector<64x4xf32>
    %c4_120 = arith.constant 4 : index
    %c0_121 = arith.constant 0 : index
    %c0_122 = arith.constant 0 : index
    %199 = vector.load %arg10[%c4_120, %c0_121, %c0_122] : memref<9x4x8xf32, #tpu.memory_space<vmem>>, vector<1x4x8xf32>
    %200 = vector.shape_cast %199 : vector<1x4x8xf32> to vector<4x8xf32>
    %cst_123 = arith.constant dense<0.000000e+00> : vector<64x8xf32>
    %201 = tpu.matmul %198, %200, %cst_123 {dimension_numbers = #tpu.dot_dimension_numbers<[1], [0], [0], [1], [0, 0, 1, 1], [], []>} : vector<64x4xf32>, vector<4x8xf32>, vector<64x8xf32> -> vector<64x8xf32>
    %202 = arith.addf %197, %201 : vector<64x8xf32>
    %c17 = arith.constant 17 : index
    %c0_124 = arith.constant 0 : index
    %203 = vector.load %arg17[%c17, %c0_124] : memref<96x4xf32, #tpu.memory_space<vmem>>, vector<64x4xf32>
    %cst_125 = arith.constant 0.000000e+00 : f32
    %204 = vector.shape_cast %164 : vector<64x1xi1> to vector<64x1xi1>
    %205 = vector.broadcast %204 : vector<64x1xi1> to vector<64x4xi1>
    %206 = vector.broadcast %cst_125 : f32 to vector<64x4xf32>
    %207 = arith.select %205, %203, %206 : vector<64x4xi1>, vector<64x4xf32>
    %c5_126 = arith.constant 5 : index
    %c0_127 = arith.constant 0 : index
    %c0_128 = arith.constant 0 : index
    %208 = vector.load %arg10[%c5_126, %c0_127, %c0_128] : memref<9x4x8xf32, #tpu.memory_space<vmem>>, vector<1x4x8xf32>
    %209 = vector.shape_cast %208 : vector<1x4x8xf32> to vector<4x8xf32>
    %cst_129 = arith.constant dense<0.000000e+00> : vector<64x8xf32>
    %210 = tpu.matmul %207, %209, %cst_129 {dimension_numbers = #tpu.dot_dimension_numbers<[1], [0], [0], [1], [0, 0, 1, 1], [], []>} : vector<64x4xf32>, vector<4x8xf32>, vector<64x8xf32> -> vector<64x8xf32>
    %211 = arith.addf %202, %210 : vector<64x8xf32>
    %c23_130 = arith.constant 23 : index
    %c0_131 = arith.constant 0 : index
    %212 = vector.load %arg17[%c23_130, %c0_131] : memref<96x4xf32, #tpu.memory_space<vmem>>, vector<64x4xf32>
    %cst_132 = arith.constant 0.000000e+00 : f32
    %213 = vector.shape_cast %162 : vector<64x1xi1> to vector<64x1xi1>
    %214 = vector.broadcast %213 : vector<64x1xi1> to vector<64x4xi1>
    %215 = vector.broadcast %cst_132 : f32 to vector<64x4xf32>
    %216 = arith.select %214, %212, %215 : vector<64x4xi1>, vector<64x4xf32>
    %c6_133 = arith.constant 6 : index
    %c0_134 = arith.constant 0 : index
    %c0_135 = arith.constant 0 : index
    %217 = vector.load %arg10[%c6_133, %c0_134, %c0_135] : memref<9x4x8xf32, #tpu.memory_space<vmem>>, vector<1x4x8xf32>
    %218 = vector.shape_cast %217 : vector<1x4x8xf32> to vector<4x8xf32>
    %cst_136 = arith.constant dense<0.000000e+00> : vector<64x8xf32>
    %219 = tpu.matmul %216, %218, %cst_136 {dimension_numbers = #tpu.dot_dimension_numbers<[1], [0], [0], [1], [0, 0, 1, 1], [], []>} : vector<64x4xf32>, vector<4x8xf32>, vector<64x8xf32> -> vector<64x8xf32>
    %220 = arith.addf %211, %219 : vector<64x8xf32>
    %c24_137 = arith.constant 24 : index
    %c0_138 = arith.constant 0 : index
    %221 = vector.load %arg17[%c24_137, %c0_138] : memref<96x4xf32, #tpu.memory_space<vmem>>, vector<64x4xf32>
    %c7_139 = arith.constant 7 : index
    %c0_140 = arith.constant 0 : index
    %c0_141 = arith.constant 0 : index
    %222 = vector.load %arg10[%c7_139, %c0_140, %c0_141] : memref<9x4x8xf32, #tpu.memory_space<vmem>>, vector<1x4x8xf32>
    %223 = vector.shape_cast %222 : vector<1x4x8xf32> to vector<4x8xf32>
    %cst_142 = arith.constant dense<0.000000e+00> : vector<64x8xf32>
    %224 = tpu.matmul %221, %223, %cst_142 {dimension_numbers = #tpu.dot_dimension_numbers<[1], [0], [0], [1], [0, 0, 1, 1], [], []>} : vector<64x4xf32>, vector<4x8xf32>, vector<64x8xf32> -> vector<64x8xf32>
    %225 = arith.addf %220, %224 : vector<64x8xf32>
    %c25_143 = arith.constant 25 : index
    %c0_144 = arith.constant 0 : index
    %226 = vector.load %arg17[%c25_143, %c0_144] : memref<96x4xf32, #tpu.memory_space<vmem>>, vector<64x4xf32>
    %cst_145 = arith.constant 0.000000e+00 : f32
    %227 = vector.shape_cast %164 : vector<64x1xi1> to vector<64x1xi1>
    %228 = vector.broadcast %227 : vector<64x1xi1> to vector<64x4xi1>
    %229 = vector.broadcast %cst_145 : f32 to vector<64x4xf32>
    %230 = arith.select %228, %226, %229 : vector<64x4xi1>, vector<64x4xf32>
    %c8_146 = arith.constant 8 : index
    %c0_147 = arith.constant 0 : index
    %c0_148 = arith.constant 0 : index
    %231 = vector.load %arg10[%c8_146, %c0_147, %c0_148] : memref<9x4x8xf32, #tpu.memory_space<vmem>>, vector<1x4x8xf32>
    %232 = vector.shape_cast %231 : vector<1x4x8xf32> to vector<4x8xf32>
    %cst_149 = arith.constant dense<0.000000e+00> : vector<64x8xf32>
    %233 = tpu.matmul %230, %232, %cst_149 {dimension_numbers = #tpu.dot_dimension_numbers<[1], [0], [0], [1], [0, 0, 1, 1], [], []>} : vector<64x4xf32>, vector<4x8xf32>, vector<64x8xf32> -> vector<64x8xf32>
    %234 = arith.addf %225, %233 : vector<64x8xf32>
    %c0_150 = arith.constant 0 : index
    %c0_151 = arith.constant 0 : index
    %235 = vector.load %arg11[%c0_150, %c0_151] : memref<1x8xf32, #tpu.memory_space<vmem>>, vector<1x8xf32>
    %236 = vector.broadcast %235 : vector<1x8xf32> to vector<64x8xf32>
    %237 = arith.addf %234, %236 : vector<64x8xf32>
    %c0_152 = arith.constant 0 : index
    %c0_153 = arith.constant 0 : index
    %238 = vector.load %arg12[%c0_152, %c0_153] : memref<4x8xf32, #tpu.memory_space<vmem>>, vector<4x8xf32>
    %cst_154 = arith.constant dense<0.000000e+00> : vector<256x8xf32>
    %239 = tpu.matmul %1, %238, %cst_154 {dimension_numbers = #tpu.dot_dimension_numbers<[1], [0], [0], [1], [0, 0, 1, 1], [], []>} : vector<256x4xf32>, vector<4x8xf32>, vector<256x8xf32> -> vector<256x8xf32>
    %c0_155 = arith.constant 0 : index
    %c0_156 = arith.constant 0 : index
    %240 = vector.load %arg13[%c0_155, %c0_156] : memref<1x8xf32, #tpu.memory_space<vmem>>, vector<1x8xf32>
    %241 = vector.broadcast %240 : vector<1x8xf32> to vector<256x8xf32>
    %242 = arith.addf %239, %241 : vector<256x8xf32>
    %c0_157 = arith.constant 0 : index
    %c0_158 = arith.constant 0 : index
    %243 = vector.load %arg14[%c0_157, %c0_158] : memref<64x256xf32, #tpu.memory_space<vmem>>, vector<64x256xf32>
    %cst_159 = arith.constant dense<0.000000e+00> : vector<64x8xf32>
    %244 = tpu.matmul %243, %242, %cst_159 {dimension_numbers = #tpu.dot_dimension_numbers<[1], [0], [0], [1], [0, 0, 1, 1], [], []>} : vector<64x256xf32>, vector<256x8xf32>, vector<64x8xf32> -> vector<64x8xf32>
    %245 = arith.addf %237, %244 : vector<64x8xf32>
    %c0_160 = arith.constant 0 : index
    %c0_161 = arith.constant 0 : index
    %c0_162 = arith.constant 0 : index
    %246 = vector.load %arg15[%c0_160, %c0_161, %c0_162] : memref<1x64x8xf32, #tpu.memory_space<vmem>>, vector<1x64x8xf32>
    %247 = vector.shape_cast %246 : vector<1x64x8xf32> to vector<64x8xf32>
    %248 = vector.shape_cast %245 : vector<64x8xf32> to vector<1x64x8xf32>
    tpu.vector_store %arg15[%c0_160, %c0_161, %c0_162], %248 {strides = array<i32>} : memref<1x64x8xf32, #tpu.memory_space<vmem>>, vector<1x64x8xf32>,
    return
  }
  func.func @transform_0(%arg0: i32) -> (i32, i32, i32) {
    %c0_i32 = arith.constant 0 : i32
    %c0_i32_0 = arith.constant 0 : i32
    %c0_i32_1 = arith.constant 0 : i32
    return %arg0, %c0_i32, %c0_i32_0 : i32, i32, i32
  }
  func.func @transform_1(%arg0: i32) -> (i32, i32) {
    %c0_i32 = arith.constant 0 : i32
    %c0_i32_0 = arith.constant 0 : i32
    %c0_i32_1 = arith.constant 0 : i32
    return %c0_i32, %c0_i32_0 : i32, i32
  }
  func.func @transform_2(%arg0: i32) -> (i32, i32) {
    %c0_i32 = arith.constant 0 : i32
    %c0_i32_0 = arith.constant 0 : i32
    %c0_i32_1 = arith.constant 0 : i32
    return %c0_i32, %c0_i32_0 : i32, i32
  }
  func.func @transform_3(%arg0: i32) -> (i32, i32) {
    %c0_i32 = arith.constant 0 : i32
    %c0_i32_0 = arith.constant 0 : i32
    %c0_i32_1 = arith.constant 0 : i32
    return %c0_i32, %c0_i32_0 : i32, i32
  }
  func.func @transform_4(%arg0: i32) -> (i32, i32, i32) {
    %c0_i32 = arith.constant 0 : i32
    %c0_i32_0 = arith.constant 0 : i32
    %c0_i32_1 = arith.constant 0 : i32
    %c0_i32_2 = arith.constant 0 : i32
    return %c0_i32, %c0_i32_0, %c0_i32_1 : i32, i32, i32
  }
  func.func @transform_5(%arg0: i32) -> (i32, i32) {
    %c0_i32 = arith.constant 0 : i32
    %c0_i32_0 = arith.constant 0 : i32
    %c0_i32_1 = arith.constant 0 : i32
    return %c0_i32, %c0_i32_0 : i32, i32
  }
  func.func @transform_6(%arg0: i32) -> (i32, i32) {
    %c0_i32 = arith.constant 0 : i32
    %c0_i32_0 = arith.constant 0 : i32
    %c0_i32_1 = arith.constant 0 : i32
    return %c0_i32, %c0_i32_0 : i32, i32
  }
  func.func @transform_7(%arg0: i32) -> (i32, i32) {
    %c0_i32 = arith.constant 0 : i32
    %c0_i32_0 = arith.constant 0 : i32
    %c0_i32_1 = arith.constant 0 : i32
    return %c0_i32, %c0_i32_0 : i32, i32
  }
  func.func @transform_8(%arg0: i32) -> (i32, i32) {
    %c0_i32 = arith.constant 0 : i32
    %c0_i32_0 = arith.constant 0 : i32
    %c0_i32_1 = arith.constant 0 : i32
    return %c0_i32, %c0_i32_0 : i32, i32
  }
  func.func @transform_9(%arg0: i32) -> (i32, i32, i32) {
    %c0_i32 = arith.constant 0 : i32
    %c0_i32_0 = arith.constant 0 : i32
    %c0_i32_1 = arith.constant 0 : i32
    %c0_i32_2 = arith.constant 0 : i32
    return %c0_i32, %c0_i32_0, %c0_i32_1 : i32, i32, i32
  }
  func.func @transform_10(%arg0: i32) -> (i32, i32) {
    %c0_i32 = arith.constant 0 : i32
    %c0_i32_0 = arith.constant 0 : i32
    %c0_i32_1 = arith.constant 0 : i32
    return %c0_i32, %c0_i32_0 : i32, i32
  }
  func.func @transform_11(%arg0: i32) -> (i32, i32) {
    %c0_i32 = arith.constant 0 : i32
    %c0_i32_0 = arith.constant 0 : i32
    %c0_i32_1 = arith.constant 0 : i32
    return %c0_i32, %c0_i32_0 : i32, i32
  }
  func.func @transform_12(%arg0: i32) -> (i32, i32) {
    %c0_i32 = arith.constant 0 : i32
    %c0_i32_0 = arith.constant 0 : i32
    %c0_i32_1 = arith.constant 0 : i32
    return %c0_i32, %c0_i32_0 : i32, i32
  }
  func.func @transform_13(%arg0: i32) -> (i32, i32) {
    %c0_i32 = arith.constant 0 : i32
    %c0_i32_0 = arith.constant 0 : i32
    %c0_i32_1 = arith.constant 0 : i32
    return %c0_i32, %c0_i32_0 : i32, i32
  }
  func.func @transform_14(%arg0: i32) -> (i32, i32, i32) {
    %c0_i32 = arith.constant 0 : i32
    %c0_i32_0 = arith.constant 0 : i32
    %c0_i32_1 = arith.constant 0 : i32
    return %arg0, %c0_i32, %c0_i32_0 : i32, i32, i32
  }
}

</mosaic_0001>

<llo_original>
// kernel: gresidual_block_forward.1
$region0: #{gresidual_block_forward.1}
  #allocation0 [shape = 'u32[]', space=smem, size = 0x4, offset = 0x4, fixed_abs, tag = 'smem constant byte address 0x4 - core index']
  #allocation1 [shape = 'u32[144,128]{1,0:T(1,128)}', space=vmem, size = 0x12000, scoped, tag = 'internal scratch']
  #allocation2 [shape = 'f32[304,4]{1,0:T(8,128)}', space=vmem, size = 0x26000, scoped, tag = 'scratch operand']
  #allocation3 [shape = 'f32[96,4]{1,0:T(8,128)}', space=vmem, size = 0xc000, scoped, tag = 'scratch operand']
  %s0 = inlined_call_operand.vmem [shape: f32[2,256,4], index: 0, kind: input, shape index: {}]
  %s1 = inlined_call_operand.vmem [shape: f32[1,4], index: 1, kind: input, shape index: {}]
  %s2 = inlined_call_operand.vmem [shape: f32[1,4], index: 2, kind: input, shape index: {}]
  %s3 = inlined_call_operand.vmem [shape: f32[1,4], index: 3, kind: input, shape index: {}]
  %s4 = inlined_call_operand.vmem [shape: f32[9,4,4], index: 4, kind: input, shape index: {}]
  %s5 = inlined_call_operand.vmem [shape: f32[1,4], index: 5, kind: input, shape index: {}]
  %s6 = inlined_call_operand.vmem [shape: f32[1,4], index: 6, kind: input, shape index: {}]
  %s7 = inlined_call_operand.vmem [shape: f32[1,4], index: 7, kind: input, shape index: {}]
  %s8 = inlined_call_operand.vmem [shape: f32[1,4], index: 8, kind: input, shape index: {}]
  %s9 = inlined_call_operand.vmem [shape: f32[9,4,8], index: 9, kind: input, shape index: {}]
  %s10 = inlined_call_operand.vmem [shape: f32[1,8], index: 10, kind: input, shape index: {}]
  %s11 = inlined_call_operand.vmem [shape: f32[4,8], index: 11, kind: input, shape index: {}]
  %s12 = inlined_call_operand.vmem [shape: f32[1,8], index: 12, kind: input, shape index: {}]
  %s13 = inlined_call_operand.vmem [shape: f32[64,256], index: 13, kind: input, shape index: {}]
  %s14 = inlined_call_operand.vmem [shape: f32[2,64,8], index: 14, kind: output, shape index: {}]
  %s15 = sld [smem:[#allocation0]]
  $region89: #{gresidual_block_forward.1} parent=0
    _
  %s17 = ssub.s32 1, %s15
  %s18 = scalar_select 0, %s17, %s15
  loop: start=0, step=1, limit=4
  $region2: #{gresidual_block_forward.1} parent=0 // loop_pre_header
    _
  $region3: #{gresidual_block_forward.1} parent=0 // loop_header
    %s20 = sphi 0, %s24
    %p21 = scmp.ge.s32.totalorder %s20, 4
    %s30 = sphi 0, %s32
    %s33 = sphi 0, %s30
    %s34 = sphi 0, %s33
    %s50 = sphi 0, %s34
    %s54 = sphi 0, %s54
    %s56 = sphi 0, %s54
    %s57 = sphi 0, %s56
    %s71 = sphi 0, %s57
    %s75 = sphi 0, %s75
    %s77 = sphi 0, %s75
    %s78 = sphi 0, %s77
    %s92 = sphi 0, %s78
    %s96 = sphi 0, %s96
    %s98 = sphi 0, %s96
    %s99 = sphi 0, %s98
    %s113 = sphi 0, %s99
    %s117 = sphi 0, %s117
    %s119 = sphi 0, %s117
    %s120 = sphi 0, %s119
    %s134 = sphi 0, %s120
    %s138 = sphi 0, %s138
    %s140 = sphi 0, %s138
    %s141 = sphi 0, %s140
    %s155 = sphi 0, %s141
    %s159 = sphi 0, %s159
    %s161 = sphi 0, %s159
    %s162 = sphi 0, %s161
    %s176 = sphi 0, %s162
    %s180 = sphi 0, %s180
    %s182 = sphi 0, %s180
    %s183 = sphi 0, %s182
    %s197 = sphi 0, %s183
    %s201 = sphi 0, %s201
    %s203 = sphi 0, %s201
    %s204 = sphi 0, %s203
    %s218 = sphi 0, %s204
    %s222 = sphi 0, %s222
    %s224 = sphi 0, %s222
    %s225 = sphi 0, %s224
    %s239 = sphi 0, %s225
    %s243 = sphi 0, %s243
    %s245 = sphi 0, %s243
    %s246 = sphi 0, %s245
    %s260 = sphi 0, %s246
    %s264 = sphi 0, %s264
    %s266 = sphi 0, %s264
    %s267 = sphi 0, %s266
    %s281 = sphi 0, %s267
    %s285 = sphi 0, %s285
    %s287 = sphi 0, %s285
    %s288 = sphi 0, %s287
    %s302 = sphi 0, %s288
    %s306 = sphi 0, %s306
    %s308 = sphi 0, %s306
    %s309 = sphi 0, %s308
    %s323 = sphi 0, %s309
    %s329 = sphi 0, %s331
    %s332 = sphi 0, %s329
    %s333 = sphi 0, %s332
    %s349 = sphi 0, %s333
  $region4: #{gresidual_block_forward.1} parent=0 // loop_header_branch
    %23 = sbr.rel (%p21) target = $region8
  $region5: #{gresidual_block_forward.1} parent=0 // loop_body
    %s25 = ssub.s32 %s20, 1
    %s26 = ssub.s32 %s20, 2
    %s27 = sadd.s32 %s20, 1
    %s28 = ssub.s32 %s20, %s27
    %p29 = scmp.eq.s32.totalorder %s28, 0
    %s31 = sadd.s32 %s30, 1
    %s32 = scalar_select %p29, %s30, %s31
    %p35 = pneg %p29
    %p36 = scmp.eq.s32.totalorder %s20, 1
    %p37 = por %p35, %p36
    %p38 = scmp.ne.s32.totalorder %s30, %s33
    %p39 = scmp.eq.s32.totalorder %s20, 0
    %p40 = por %p38, %p39
    %p41 = scmp.ne.s32.totalorder %s30, %s33
    %p42 = scmp.eq.s32.totalorder %s25, 1
    %p43 = por %p41, %p42
    %p44 = scmp.ne.s32.totalorder %s33, %s34
    %p45 = scmp.eq.s32.totalorder %s25, 0
    %p46 = por %p44, %p45
    %p47 = scmp.ne.s32.totalorder %s33, %s34
    %p48 = scmp.eq.s32.totalorder %s26, 1
    %p49 = por %p47, %p48
    %p51 = scmp.ne.s32.totalorder %s34, %s50
    %p52 = scmp.eq.s32.totalorder %s26, 0
    %p53 = por %p51, %p52
    %s55 = sadd.s32 %s54, 1
    %p58 = scmp.eq.s32.totalorder %s20, 1
    %p59 = scmp.ne.s32.totalorder %s54, %s56
    %p60 = scmp.eq.s32.totalorder %s20, 0
    %p61 = por %p59, %p60
    %p62 = scmp.ne.s32.totalorder %s54, %s56
    %p63 = scmp.eq.s32.totalorder %s25, 1
    %p64 = por %p62, %p63
    %p65 = scmp.ne.s32.totalorder %s56, %s57
    %p66 = scmp.eq.s32.totalorder %s25, 0
    %p67 = por %p65, %p66
    %p68 = scmp.ne.s32.totalorder %s56, %s57
    %p69 = scmp.eq.s32.totalorder %s26, 1
    %p70 = por %p68, %p69
    %p72 = scmp.ne.s32.totalorder %s57, %s71
    %p73 = scmp.eq.s32.totalorder %s26, 0
    %p74 = por %p72, %p73
    %s76 = sadd.s32 %s75, 1
    %p79 = scmp.eq.s32.totalorder %s20, 1
    %p80 = scmp.ne.s32.totalorder %s75, %s77
    %p81 = scmp.eq.s32.totalorder %s20, 0
    %p82 = por %p80, %p81
    %p83 = scmp.ne.s32.totalorder %s75, %s77
    %p84 = scmp.eq.s32.totalorder %s25, 1
    %p85 = por %p83, %p84
    %p86 = scmp.ne.s32.totalorder %s77, %s78
    %p87 = scmp.eq.s32.totalorder %s25, 0
    %p88 = por %p86, %p87
    %p89 = scmp.ne.s32.totalorder %s77, %s78
    %p90 = scmp.eq.s32.totalorder %s26, 1
    %p91 = por %p89, %p90
    %p93 = scmp.ne.s32.totalorder %s78, %s92
    %p94 = scmp.eq.s32.totalorder %s26, 0
    %p95 = por %p93, %p94
    %s97 = sadd.s32 %s96, 1
    %p100 = scmp.eq.s32.totalorder %s20, 1
    %p101 = scmp.ne.s32.totalorder %s96, %s98
    %p102 = scmp.eq.s32.totalorder %s20, 0
    %p103 = por %p101, %p102
    %p104 = scmp.ne.s32.totalorder %s96, %s98
    %p105 = scmp.eq.s32.totalorder %s25, 1
    %p106 = por %p104, %p105
    %p107 = scmp.ne.s32.totalorder %s98, %s99
    %p108 = scmp.eq.s32.totalorder %s25, 0
    %p109 = por %p107, %p108
    %p110 = scmp.ne.s32.totalorder %s98, %s99
    %p111 = scmp.eq.s32.totalorder %s26, 1
    %p112 = por %p110, %p111
    %p114 = scmp.ne.s32.totalorder %s99, %s113
    %p115 = scmp.eq.s32.totalorder %s26, 0
    %p116 = por %p114, %p115
    %s118 = sadd.s32 %s117, 1
    %p121 = scmp.eq.s32.totalorder %s20, 1
    %p122 = scmp.ne.s32.totalorder %s117, %s119
    %p123 = scmp.eq.s32.totalorder %s20, 0
    %p124 = por %p122, %p123
    %p125 = scmp.ne.s32.totalorder %s117, %s119
    %p126 = scmp.eq.s32.totalorder %s25, 1
    %p127 = por %p125, %p126
    %p128 = scmp.ne.s32.totalorder %s119, %s120
    %p129 = scmp.eq.s32.totalorder %s25, 0
    %p130 = por %p128, %p129
    %p131 = scmp.ne.s32.totalorder %s119, %s120
    %p132 = scmp.eq.s32.totalorder %s26, 1
    %p133 = por %p131, %p132
    %p135 = scmp.ne.s32.totalorder %s120, %s134
    %p136 = scmp.eq.s32.totalorder %s26, 0
    %p137 = por %p135, %p136
    %s139 = sadd.s32 %s138, 1
    %p142 = scmp.eq.s32.totalorder %s20, 1
    %p143 = scmp.ne.s32.totalorder %s138, %s140
    %p144 = scmp.eq.s32.totalorder %s20, 0
    %p145 = por %p143, %p144
    %p146 = scmp.ne.s32.totalorder %s138, %s140
    %p147 = scmp.eq.s32.totalorder %s25, 1
    %p148 = por %p146, %p147
    %p149 = scmp.ne.s32.totalorder %s140, %s141
    %p150 = scmp.eq.s32.totalorder %s25, 0
    %p151 = por %p149, %p150
    %p152 = scmp.ne.s32.totalorder %s140, %s141
    %p153 = scmp.eq.s32.totalorder %s26, 1
    %p154 = por %p152, %p153
    %p156 = scmp.ne.s32.totalorder %s141, %s155
    %p157 = scmp.eq.s32.totalorder %s26, 0
    %p158 = por %p156, %p157
    %s160 = sadd.s32 %s159, 1
    %p163 = scmp.eq.s32.totalorder %s20, 1
    %p164 = scmp.ne.s32.totalorder %s159, %s161
    %p165 = scmp.eq.s32.totalorder %s20, 0
    %p166 = por %p164, %p165
    %p167 = scmp.ne.s32.totalorder %s159, %s161
    %p168 = scmp.eq.s32.totalorder %s25, 1
    %p169 = por %p167, %p168
    %p170 = scmp.ne.s32.totalorder %s161, %s162
    %p171 = scmp.eq.s32.totalorder %s25, 0
    %p172 = por %p170, %p171
    %p173 = scmp.ne.s32.totalorder %s161, %s162
    %p174 = scmp.eq.s32.totalorder %s26, 1
    %p175 = por %p173, %p174
    %p177 = scmp.ne.s32.totalorder %s162, %s176
    %p178 = scmp.eq.s32.totalorder %s26, 0
    %p179 = por %p177, %p178
    %s181 = sadd.s32 %s180, 1
    %p184 = scmp.eq.s32.totalorder %s20, 1
    %p185 = scmp.ne.s32.totalorder %s180, %s182
    %p186 = scmp.eq.s32.totalorder %s20, 0
    %p187 = por %p185, %p186
    %p188 = scmp.ne.s32.totalorder %s180, %s182
    %p189 = scmp.eq.s32.totalorder %s25, 1
    %p190 = por %p188, %p189
    %p191 = scmp.ne.s32.totalorder %s182, %s183
    %p192 = scmp.eq.s32.totalorder %s25, 0
    %p193 = por %p191, %p192
    %p194 = scmp.ne.s32.totalorder %s182, %s183
    %p195 = scmp.eq.s32.totalorder %s26, 1
    %p196 = por %p194, %p195
    %p198 = scmp.ne.s32.totalorder %s183, %s197
    %p199 = scmp.eq.s32.totalorder %s26, 0
    %p200 = por %p198, %p199
    %s202 = sadd.s32 %s201, 1
    %p205 = scmp.eq.s32.totalorder %s20, 1
    %p206 = scmp.ne.s32.totalorder %s201, %s203
    %p207 = scmp.eq.s32.totalorder %s20, 0
    %p208 = por %p206, %p207
    %p209 = scmp.ne.s32.totalorder %s201, %s203
    %p210 = scmp.eq.s32.totalorder %s25, 1
    %p211 = por %p209, %p210
    %p212 = scmp.ne.s32.totalorder %s203, %s204
    %p213 = scmp.eq.s32.totalorder %s25, 0
    %p214 = por %p212, %p213
    %p215 = scmp.ne.s32.totalorder %s203, %s204
    %p216 = scmp.eq.s32.totalorder %s26, 1
    %p217 = por %p215, %p216
    %p219 = scmp.ne.s32.totalorder %s204, %s218
    %p220 = scmp.eq.s32.totalorder %s26, 0
    %p221 = por %p219, %p220
    %s223 = sadd.s32 %s222, 1
    %p226 = scmp.eq.s32.totalorder %s20, 1
    %p227 = scmp.ne.s32.totalorder %s222, %s224
    %p228 = scmp.eq.s32.totalorder %s20, 0
    %p229 = por %p227, %p228
    %p230 = scmp.ne.s32.totalorder %s222, %s224
    %p231 = scmp.eq.s32.totalorder %s25, 1
    %p232 = por %p230, %p231
    %p233 = scmp.ne.s32.totalorder %s224, %s225
    %p234 = scmp.eq.s32.totalorder %s25, 0
    %p235 = por %p233, %p234
    %p236 = scmp.ne.s32.totalorder %s224, %s225
    %p237 = scmp.eq.s32.totalorder %s26, 1
    %p238 = por %p236, %p237
    %p240 = scmp.ne.s32.totalorder %s225, %s239
    %p241 = scmp.eq.s32.totalorder %s26, 0
    %p242 = por %p240, %p241
    %s244 = sadd.s32 %s243, 1
    %p247 = scmp.eq.s32.totalorder %s20, 1
    %p248 = scmp.ne.s32.totalorder %s243, %s245
    %p249 = scmp.eq.s32.totalorder %s20, 0
    %p250 = por %p248, %p249
    %p251 = scmp.ne.s32.totalorder %s243, %s245
    %p252 = scmp.eq.s32.totalorder %s25, 1
    %p253 = por %p251, %p252
    %p254 = scmp.ne.s32.totalorder %s245, %s246
    %p255 = scmp.eq.s32.totalorder %s25, 0
    %p256 = por %p254, %p255
    %p257 = scmp.ne.s32.totalorder %s245, %s246
    %p258 = scmp.eq.s32.totalorder %s26, 1
    %p259 = por %p257, %p258
    %p261 = scmp.ne.s32.totalorder %s246, %s260
    %p262 = scmp.eq.s32.totalorder %s26, 0
    %p263 = por %p261, %p262
    %s265 = sadd.s32 %s264, 1
    %p268 = scmp.eq.s32.totalorder %s20, 1
    %p269 = scmp.ne.s32.totalorder %s264, %s266
    %p270 = scmp.eq.s32.totalorder %s20, 0
    %p271 = por %p269, %p270
    %p272 = scmp.ne.s32.totalorder %s264, %s266
    %p273 = scmp.eq.s32.totalorder %s25, 1
    %p274 = por %p272, %p273
    %p275 = scmp.ne.s32.totalorder %s266, %s267
    %p276 = scmp.eq.s32.totalorder %s25, 0
    %p277 = por %p275, %p276
    %p278 = scmp.ne.s32.totalorder %s266, %s267
    %p279 = scmp.eq.s32.totalorder %s26, 1
    %p280 = por %p278, %p279
    %p282 = scmp.ne.s32.totalorder %s267, %s281
    %p283 = scmp.eq.s32.totalorder %s26, 0
    %p284 = por %p282, %p283
    %s286 = sadd.s32 %s285, 1
    %p289 = scmp.eq.s32.totalorder %s20, 1
    %p290 = scmp.ne.s32.totalorder %s285, %s287
    %p291 = scmp.eq.s32.totalorder %s20, 0
    %p292 = por %p290, %p291
    %p293 = scmp.ne.s32.totalorder %s285, %s287
    %p294 = scmp.eq.s32.totalorder %s25, 1
    %p295 = por %p293, %p294
    %p296 = scmp.ne.s32.totalorder %s287, %s288
    %p297 = scmp.eq.s32.totalorder %s25, 0
    %p298 = por %p296, %p297
    %p299 = scmp.ne.s32.totalorder %s287, %s288
    %p300 = scmp.eq.s32.totalorder %s26, 1
    %p301 = por %p299, %p300
    %p303 = scmp.ne.s32.totalorder %s288, %s302
    %p304 = scmp.eq.s32.totalorder %s26, 0
    %p305 = por %p303, %p304
    %s307 = sadd.s32 %s306, 1
    %p310 = scmp.eq.s32.totalorder %s20, 1
    %p311 = scmp.ne.s32.totalorder %s306, %s308
    %p312 = scmp.eq.s32.totalorder %s20, 0
    %p313 = por %p311, %p312
    %p314 = scmp.ne.s32.totalorder %s306, %s308
    %p315 = scmp.eq.s32.totalorder %s25, 1
    %p316 = por %p314, %p315
    %p317 = scmp.ne.s32.totalorder %s308, %s309
    %p318 = scmp.eq.s32.totalorder %s25, 0
    %p319 = por %p317, %p318
    %p320 = scmp.ne.s32.totalorder %s308, %s309
    %p321 = scmp.eq.s32.totalorder %s26, 1
    %p322 = por %p320, %p321
    %p324 = scmp.ne.s32.totalorder %s309, %s323
    %p325 = scmp.eq.s32.totalorder %s26, 0
    %p326 = por %p324, %p325
    %s327 = ssub.s32 %s20, %s27
    %p328 = scmp.eq.s32.totalorder %s327, 0
    %s330 = sadd.s32 %s329, 1
    %s331 = scalar_select %p328, %s329, %s330
    %p334 = pneg %p328
    %p335 = scmp.eq.s32.totalorder %s20, 1
    %p336 = por %p334, %p335
    %p337 = scmp.ne.s32.totalorder %s329, %s332
    %p338 = scmp.eq.s32.totalorder %s20, 0
    %p339 = por %p337, %p338
    %p340 = scmp.ne.s32.totalorder %s329, %s332
    %p341 = scmp.eq.s32.totalorder %s25, 1
    %p342 = por %p340, %p341
    %p343 = scmp.ne.s32.totalorder %s332, %s333
    %p344 = scmp.eq.s32.totalorder %s25, 0
    %p345 = por %p343, %p344
    %p346 = scmp.ne.s32.totalorder %s332, %s333
    %p347 = scmp.eq.s32.totalorder %s26, 1
    %p348 = por %p346, %p347
    %p350 = scmp.ne.s32.totalorder %s333, %s349
    %p351 = scmp.eq.s32.totalorder %s26, 0
    %p352 = por %p350, %p351
    %p353 = scmp.le.s32.totalorder 1, %s20
    %p354 = scmp.lt.s32.totalorder %s20, 3
    %p355 = pnand %p353, %p354
    %p356 = pneg %p355
    // Predicated region
    $region9: #{gresidual_block_forward.1} parent=5 // pred_check
      _
    $region10: #{gresidual_block_forward.1} parent=5 // pred_check_branch
      %358 = sbr.rel (%p355) target = $region12
    $region11: #{gresidual_block_forward.1} parent=5 // pred_region
      %s359 = ssub.s32 %s20, 1
      // Predicated region
      $region13: #{gresidual_block_forward.1} parent=11 // pred_check
        %p360 = pneg %p67
      $region14: #{gresidual_block_forward.1} parent=11 // pred_check_branch
        %362 = sbr.rel (%p360) target = $region16
      $region15: #{gresidual_block_forward.1} parent=11 // pred_region
        _
      $region16: #{gresidual_block_forward.1} parent=11 // pred_fallthru
        _
      // Predicated region
      $region17: #{gresidual_block_forward.1} parent=11 // pred_check
        %p363 = pneg %p88
      $region18: #{gresidual_block_forward.1} parent=11 // pred_check_branch
        %365 = sbr.rel (%p363) target = $region20
      $region19: #{gresidual_block_forward.1} parent=11 // pred_region
        _
      $region20: #{gresidual_block_forward.1} parent=11 // pred_fallthru
        _
      // Predicated region
      $region21: #{gresidual_block_forward.1} parent=11 // pred_check
        %p366 = pneg %p109
      $region22: #{gresidual_block_forward.1} parent=11 // pred_check_branch
        %368 = sbr.rel (%p366) target = $region24
      $region23: #{gresidual_block_forward.1} parent=11 // pred_region
        _
      $region24: #{gresidual_block_forward.1} parent=11 // pred_fallthru
        _
      // Predicated region
      $region25: #{gresidual_block_forward.1} parent=11 // pred_check
        %p369 = pneg %p130
      $region26: #{gresidual_block_forward.1} parent=11 // pred_check_branch
        %371 = sbr.rel (%p369) target = $region28
      $region27: #{gresidual_block_forward.1} parent=11 // pred_region
        _
      $region28: #{gresidual_block_forward.1} parent=11 // pred_fallthru
        _
      // Predicated region
      $region29: #{gresidual_block_forward.1} parent=11 // pred_check
        %p372 = pneg %p151
      $region30: #{gresidual_block_forward.1} parent=11 // pred_check_branch
        %374 = sbr.rel (%p372) target = $region32
      $region31: #{gresidual_block_forward.1} parent=11 // pred_region
        _
      $region32: #{gresidual_block_forward.1} parent=11 // pred_fallthru
        _
      // Predicated region
      $region33: #{gresidual_block_forward.1} parent=11 // pred_check
        %p375 = pneg %p172
      $region34: #{gresidual_block_forward.1} parent=11 // pred_check_branch
        %377 = sbr.rel (%p375) target = $region36
      $region35: #{gresidual_block_forward.1} parent=11 // pred_region
        _
      $region36: #{gresidual_block_forward.1} parent=11 // pred_fallthru
        _
      // Predicated region
      $region37: #{gresidual_block_forward.1} parent=11 // pred_check
        %p378 = pneg %p193
      $region38: #{gresidual_block_forward.1} parent=11 // pred_check_branch
        %380 = sbr.rel (%p378) target = $region40
      $region39: #{gresidual_block_forward.1} parent=11 // pred_region
        _
      $region40: #{gresidual_block_forward.1} parent=11 // pred_fallthru
        _
      // Predicated region
      $region41: #{gresidual_block_forward.1} parent=11 // pred_check
        %p381 = pneg %p214
      $region42: #{gresidual_block_forward.1} parent=11 // pred_check_branch
        %383 = sbr.rel (%p381) target = $region44
      $region43: #{gresidual_block_forward.1} parent=11 // pred_region
        _
      $region44: #{gresidual_block_forward.1} parent=11 // pred_fallthru
        _
      // Predicated region
      $region45: #{gresidual_block_forward.1} parent=11 // pred_check
        %p384 = pneg %p235
      $region46: #{gresidual_block_forward.1} parent=11 // pred_check_branch
        %386 = sbr.rel (%p384) target = $region48
      $region47: #{gresidual_block_forward.1} parent=11 // pred_region
        _
      $region48: #{gresidual_block_forward.1} parent=11 // pred_fallthru
        _
      // Predicated region
      $region49: #{gresidual_block_forward.1} parent=11 // pred_check
        %p387 = pneg %p256
      $region50: #{gresidual_block_forward.1} parent=11 // pred_check_branch
        %389 = sbr.rel (%p387) target = $region52
      $region51: #{gresidual_block_forward.1} parent=11 // pred_region
        _
      $region52: #{gresidual_block_forward.1} parent=11 // pred_fallthru
        _
      // Predicated region
      $region53: #{gresidual_block_forward.1} parent=11 // pred_check
        %p390 = pneg %p277
      $region54: #{gresidual_block_forward.1} parent=11 // pred_check_branch
        %392 = sbr.rel (%p390) target = $region56
      $region55: #{gresidual_block_forward.1} parent=11 // pred_region
        _
      $region56: #{gresidual_block_forward.1} parent=11 // pred_fallthru
        _
      // Predicated region
      $region57: #{gresidual_block_forward.1} parent=11 // pred_check
        %p393 = pneg %p298
      $region58: #{gresidual_block_forward.1} parent=11 // pred_check_branch
        %395 = sbr.rel (%p393) target = $region60
      $region59: #{gresidual_block_forward.1} parent=11 // pred_region
        _
      $region60: #{gresidual_block_forward.1} parent=11 // pred_fallthru
        _
      // Predicated region
      $region61: #{gresidual_block_forward.1} parent=11 // pred_check
        %p396 = pneg %p319
      $region62: #{gresidual_block_forward.1} parent=11 // pred_check_branch
        %398 = sbr.rel (%p396) target = $region64
      $region63: #{gresidual_block_forward.1} parent=11 // pred_region
        _
      $region64: #{gresidual_block_forward.1} parent=11 // pred_fallthru
        _
    $region12: #{gresidual_block_forward.1} parent=5 // pred_fallthru
      _
    %p399 = scmp.lt.s32.totalorder %s20, 2
    // Predicated region
    $region65: #{gresidual_block_forward.1} parent=5 // pred_check
      %p400 = pneg %p399
    $region66: #{gresidual_block_forward.1} parent=5 // pred_check_branch
      %402 = sbr.rel (%p400) target = $region68
    $region67: #{gresidual_block_forward.1} parent=5 // pred_region
      // Predicated region
      $region69: #{gresidual_block_forward.1} parent=67 // pred_check
        %p403 = pneg %p40
      $region70: #{gresidual_block_forward.1} parent=67 // pred_check_branch
        %405 = sbr.rel (%p403) target = $region72
      $region71: #{gresidual_block_forward.1} parent=67 // pred_region
        %p406 = scmp.lt.s32.totalorder %s20, 1
        %s407 = scalar_select %p406, %s20, 1
        %s408 = smul.addr %s407, 32
        %s409 = smul.addr %s408, 8
        %s410 = scalar_lea.vmem %s0, %s409
      $region72: #{gresidual_block_forward.1} parent=67 // pred_fallthru
        _
    $region68: #{gresidual_block_forward.1} parent=5 // pred_fallthru
      _
    %p411 = scmp.le.s32.totalorder 1, %s20
    %p412 = scmp.lt.s32.totalorder %s20, 3
    %p413 = pnand %p411, %p412
    %p414 = pneg %p413
    // Predicated region
    $region73: #{gresidual_block_forward.1} parent=5 // pred_check
      _
    $region74: #{gresidual_block_forward.1} parent=5 // pred_check_branch
      %416 = sbr.rel (%p413) target = $region76
    $region75: #{gresidual_block_forward.1} parent=5 // pred_region
      %s417 = ssub.s32 %s20, 1
      %p418 = scmp.lt.s32.totalorder %s25, 1
      %s419 = scalar_select %p418, %s25, 1
      %s420 = smul.addr %s419, 32
      %s421 = smul.addr %s420, 8
      %s422 = scalar_lea.vmem %s0, %s421
      %p423 = pneg %p46
      %p424 = pneg %p43
      %p425 = pneg %p67
      %p426 = pneg %p64
      %p427 = pneg %p88
      %p428 = pneg %p85
      %p429 = pneg %p109
      %p430 = pneg %p106
      %p431 = pneg %p130
      %p432 = pneg %p127
      %p433 = pneg %p151
      %p434 = pneg %p148
      %p435 = pneg %p172
      %p436 = pneg %p169
      %p437 = pneg %p193
      %p438 = pneg %p190
      %p439 = pneg %p214
      %p440 = pneg %p211
      %p441 = pneg %p235
      %p442 = pneg %p232
      %p443 = pneg %p256
      %p444 = pneg %p253
      %p445 = pneg %p277
      %p446 = pneg %p274
      %p447 = pneg %p298
      %p448 = pneg %p295
      %p449 = pneg %p319
      %p450 = pneg %p316
      %p451 = pneg %p345
      %p452 = pneg %p342
      %p453 = scmp.lt.s32.totalorder %s25, 1
      %s454 = scalar_select %p453, %s25, 1
      %s455 = smul.addr %s454, 8
      %s456 = smul.addr %s455, 8
      %s457 = scalar_lea.vmem %s14, %s456
      %p458 = scmp.lt.s32.totalorder %s25, 1
      %s459 = scalar_select %p458, %s25, 1
      %s460 = smul.addr %s459, 32
      %s461 = smul.addr %s460, 8
      %s462 = scalar_lea.vmem %s0, %s461
      %p463 = scmp.lt.s32.totalorder %s25, 1
      %s464 = scalar_select %p463, %s25, 1
      %s465 = smul.addr %s464, 8
      %s466 = smul.addr %s465, 8
      %s467 = scalar_lea.vmem %s14, %s466
      %v468 = vld [vmem:[%s462] sm:$0xff]
      %v469 = vld [vmem:[%s462 + $0x8] sm:$0xff]
      %v470 = vld [vmem:[%s462 + $0x10] sm:$0xff]
      %v471 = vld [vmem:[%s462 + $0x18] sm:$0xff]
      %v472 = vld [vmem:[%s462 + $0x20] sm:$0xff]
      %v473 = vld [vmem:[%s462 + $0x28] sm:$0xff]
      %v474 = vld [vmem:[%s462 + $0x30] sm:$0xff]
      %v475 = vld [vmem:[%s462 + $0x38] sm:$0xff]
      %v476 = vld [vmem:[%s462 + $0x40] sm:$0xff]
      %v477 = vld [vmem:[%s462 + $0x48] sm:$0xff]
      %v478 = vld [vmem:[%s462 + $0x50] sm:$0xff]
      %v479 = vld [vmem:[%s462 + $0x58] sm:$0xff]
      %v480 = vld [vmem:[%s462 + $0x60] sm:$0xff]
      %v481 = vld [vmem:[%s462 + $0x68] sm:$0xff]
      %v482 = vld [vmem:[%s462 + $0x70] sm:$0xff]
      %v483 = vld [vmem:[%s462 + $0x78] sm:$0xff]
      %v484 = vld [vmem:[%s462 + $0x80] sm:$0xff]
      %v485 = vld [vmem:[%s462 + $0x88] sm:$0xff]
      %v486 = vld [vmem:[%s462 + $0x90] sm:$0xff]
      %v487 = vld [vmem:[%s462 + $0x98] sm:$0xff]
      %v488 = vld [vmem:[%s462 + $0xa0] sm:$0xff]
      %v489 = vld [vmem:[%s462 + $0xa8] sm:$0xff]
      %v490 = vld [vmem:[%s462 + $0xb0] sm:$0xff]
      %v491 = vld [vmem:[%s462 + $0xb8] sm:$0xff]
      %v492 = vld [vmem:[%s462 + $0xc0] sm:$0xff]
      %v493 = vld [vmem:[%s462 + $0xc8] sm:$0xff]
      %v494 = vld [vmem:[%s462 + $0xd0] sm:$0xff]
      %v495 = vld [vmem:[%s462 + $0xd8] sm:$0xff]
      %v496 = vld [vmem:[%s462 + $0xe0] sm:$0xff]
      %v497 = vld [vmem:[%s462 + $0xe8] sm:$0xff]
      %v498 = vld [vmem:[%s462 + $0xf0] sm:$0xff]
      %v499 = vld [vmem:[%s462 + $0xf8] sm:$0xff]
      %v500 = vld [vmem:[%s1] sm:$0x1]
      %v501 = vld [vmem:[%s2] sm:$0x1]
      %v502 = vld [vmem:[%s3] sm:$0x1]
      %v503 = vmul.f32 %v468, %v468
      %v504 = vmul.f32 %v469, %v469
      %v505 = vmul.f32 %v470, %v470
      %v506 = vmul.f32 %v471, %v471
      %v507 = vmul.f32 %v472, %v472
      %v508 = vmul.f32 %v473, %v473
      %v509 = vmul.f32 %v474, %v474
      %v510 = vmul.f32 %v475, %v475
      %v511 = vmul.f32 %v476, %v476
      %v512 = vmul.f32 %v477, %v477
      %v513 = vmul.f32 %v478, %v478
      %v514 = vmul.f32 %v479, %v479
      %v515 = vmul.f32 %v480, %v480
      %v516 = vmul.f32 %v481, %v481
      %v517 = vmul.f32 %v482, %v482
      %v518 = vmul.f32 %v483, %v483
      %v519 = vmul.f32 %v484, %v484
      %v520 = vmul.f32 %v485, %v485
      %v521 = vmul.f32 %v486, %v486
      %v522 = vmul.f32 %v487, %v487
      %v523 = vmul.f32 %v488, %v488
      %v524 = vmul.f32 %v489, %v489
      %v525 = vmul.f32 %v490, %v490
      %v526 = vmul.f32 %v491, %v491
      %v527 = vmul.f32 %v492, %v492
      %v528 = vmul.f32 %v493, %v493
      %v529 = vmul.f32 %v494, %v494
      %v530 = vmul.f32 %v495, %v495
      %v531 = vmul.f32 %v496, %v496
      %v532 = vmul.f32 %v497, %v497
      %v533 = vmul.f32 %v498, %v498
      %v534 = vmul.f32 %v499, %v499
      %vm535 = vcmask 31744
      %v536 = vsel %vm535, %v503, 0.0
      %v537 = vsel %vm535, %v504, 0.0
      %v538 = vadd.f32 %v536, %v537
      %v539 = vsel %vm535, %v505, 0.0
      %v540 = vadd.f32 %v538, %v539
      %v541 = vsel %vm535, %v506, 0.0
      %v542 = vadd.f32 %v540, %v541
      %v543 = vsel %vm535, %v507, 0.0
      %v544 = vadd.f32 %v542, %v543
      %v545 = vsel %vm535, %v508, 0.0
      %v546 = vadd.f32 %v544, %v545
      %v547 = vsel %vm535, %v509, 0.0
      %v548 = vadd.f32 %v546, %v547
      %v549 = vsel %vm535, %v510, 0.0
      %v550 = vadd.f32 %v548, %v549
      %v551 = vsel %vm535, %v511, 0.0
      %v552 = vadd.f32 %v550, %v551
      %v553 = vsel %vm535, %v512, 0.0
      %v554 = vadd.f32 %v552, %v553
      %v555 = vsel %vm535, %v513, 0.0
      %v556 = vadd.f32 %v554, %v555
      %v557 = vsel %vm535, %v514, 0.0
      %v558 = vadd.f32 %v556, %v557
      %v559 = vsel %vm535, %v515, 0.0
      %v560 = vadd.f32 %v558, %v559
      %v561 = vsel %vm535, %v516, 0.0
      %v562 = vadd.f32 %v560, %v561
      %v563 = vsel %vm535, %v517, 0.0
      %v564 = vadd.f32 %v562, %v563
      %v565 = vsel %vm535, %v518, 0.0
      %v566 = vadd.f32 %v564, %v565
      %v567 = vsel %vm535, %v519, 0.0
      %v568 = vadd.f32 %v566, %v567
      %v569 = vsel %vm535, %v520, 0.0
      %v570 = vadd.f32 %v568, %v569
      %v571 = vsel %vm535, %v521, 0.0
      %v572 = vadd.f32 %v570, %v571
      %v573 = vsel %vm535, %v522, 0.0
      %v574 = vadd.f32 %v572, %v573
      %v575 = vsel %vm535, %v523, 0.0
      %v576 = vadd.f32 %v574, %v575
      %v577 = vsel %vm535, %v524, 0.0
      %v578 = vadd.f32 %v576, %v577
      %v579 = vsel %vm535, %v525, 0.0
      %v580 = vadd.f32 %v578, %v579
      %v581 = vsel %vm535, %v526, 0.0
      %v582 = vadd.f32 %v580, %v581
      %v583 = vsel %vm535, %v527, 0.0
      %v584 = vadd.f32 %v582, %v583
      %v585 = vsel %vm535, %v528, 0.0
      %v586 = vadd.f32 %v584, %v585
      %v587 = vsel %vm535, %v529, 0.0
      %v588 = vadd.f32 %v586, %v587
      %v589 = vsel %vm535, %v530, 0.0
      %v590 = vadd.f32 %v588, %v589
      %v591 = vsel %vm535, %v531, 0.0
      %v592 = vadd.f32 %v590, %v591
      %v593 = vsel %vm535, %v532, 0.0
      %v594 = vadd.f32 %v592, %v593
      %v595 = vsel %vm535, %v533, 0.0
      %v596 = vadd.f32 %v594, %v595
      %v597 = vsel %vm535, %v534, 0.0
      %v598 = vadd.f32 %v596, %v597
      %v599 = vrot.slane %v598, 4
      %v600 = vadd.f32 %v598, %v599
      %v601 = vrot.slane %v600, 2
      %v602 = vadd.f32 %v600, %v601
      %v603 = vrot.slane %v602, 1
      %v604 = vadd.f32 %v602, %v603
      %v605 = vrcp.pop 256.0
      %v606 = vmul.f32 %v604, %v605
      %v607 = vadd.f32 %v606, 1e-05
      %v608 = vrsqrt.pop %v607
      %v609 = vmul.f32 %v468, %v608
      %v610 = vmul.f32 %v469, %v608
      %v611 = vmul.f32 %v470, %v608
      %v612 = vmul.f32 %v471, %v608
      %v613 = vmul.f32 %v472, %v608
      %v614 = vmul.f32 %v473, %v608
      %v615 = vmul.f32 %v474, %v608
      %v616 = vmul.f32 %v475, %v608
      %v617 = vmul.f32 %v476, %v608
      %v618 = vmul.f32 %v477, %v608
      %v619 = vmul.f32 %v478, %v608
      %v620 = vmul.f32 %v479, %v608
      %v621 = vmul.f32 %v480, %v608
      %v622 = vmul.f32 %v481, %v608
      %v623 = vmul.f32 %v482, %v608
      %v624 = vmul.f32 %v483, %v608
      %v625 = vmul.f32 %v484, %v608
      %v626 = vmul.f32 %v485, %v608
      %v627 = vmul.f32 %v486, %v608
      %v628 = vmul.f32 %v487, %v608
      %v629 = vmul.f32 %v488, %v608
      %v630 = vmul.f32 %v489, %v608
      %v631 = vmul.f32 %v490, %v608
      %v632 = vmul.f32 %v491, %v608
      %v633 = vmul.f32 %v492, %v608
      %v634 = vmul.f32 %v493, %v608
      %v635 = vmul.f32 %v494, %v608
      %v636 = vmul.f32 %v495, %v608
      %v637 = vmul.f32 %v496, %v608
      %v638 = vmul.f32 %v497, %v608
      %v639 = vmul.f32 %v498, %v608
      %v640 = vmul.f32 %v499, %v608
      %v642 = vlaneseq
      %v643 = vshrl.u32 %v642, 7
      %v644 = vsub.s32 0, %v643
      %v645 = vrot.slane %v500, %v644
      %v647 = vmul.f32 %v645, %v609
      %v648 = vmul.f32 %v645, %v610
      %v649 = vmul.f32 %v645, %v611
      %v650 = vmul.f32 %v645, %v612
      %v651 = vmul.f32 %v645, %v613
      %v652 = vmul.f32 %v645, %v614
      %v653 = vmul.f32 %v645, %v615
      %v654 = vmul.f32 %v645, %v616
      %v655 = vmul.f32 %v645, %v617
      %v656 = vmul.f32 %v645, %v618
      %v657 = vmul.f32 %v645, %v619
      %v658 = vmul.f32 %v645, %v620
      %v659 = vmul.f32 %v645, %v621
      %v660 = vmul.f32 %v645, %v622
      %v661 = vmul.f32 %v645, %v623
      %v662 = vmul.f32 %v645, %v624
      %v663 = vmul.f32 %v645, %v625
      %v664 = vmul.f32 %v645, %v626
      %v665 = vmul.f32 %v645, %v627
      %v666 = vmul.f32 %v645, %v628
      %v667 = vmul.f32 %v645, %v629
      %v668 = vmul.f32 %v645, %v630
      %v669 = vmul.f32 %v645, %v631
      %v670 = vmul.f32 %v645, %v632
      %v671 = vmul.f32 %v645, %v633
      %v672 = vmul.f32 %v645, %v634
      %v673 = vmul.f32 %v645, %v635
      %v674 = vmul.f32 %v645, %v636
      %v675 = vmul.f32 %v645, %v637
      %v676 = vmul.f32 %v645, %v638
      %v677 = vmul.f32 %v645, %v639
      %v678 = vmul.f32 %v645, %v640
      %v680 = vlaneseq
      %v681 = vshrl.u32 %v680, 7
      %v682 = vsub.s32 0, %v681
      %v683 = vrot.slane %v501, %v682
      %v685 = vadd.f32 %v647, %v683
      %v686 = vadd.f32 %v648, %v683
      %v687 = vadd.f32 %v649, %v683
      %v688 = vadd.f32 %v650, %v683
      %v689 = vadd.f32 %v651, %v683
      %v690 = vadd.f32 %v652, %v683
      %v691 = vadd.f32 %v653, %v683
      %v692 = vadd.f32 %v654, %v683
      %v693 = vadd.f32 %v655, %v683
      %v694 = vadd.f32 %v656, %v683
      %v695 = vadd.f32 %v657, %v683
      %v696 = vadd.f32 %v658, %v683
      %v697 = vadd.f32 %v659, %v683
      %v698 = vadd.f32 %v660, %v683
      %v699 = vadd.f32 %v661, %v683
      %v700 = vadd.f32 %v662, %v683
      %v701 = vadd.f32 %v663, %v683
      %v702 = vadd.f32 %v664, %v683
      %v703 = vadd.f32 %v665, %v683
      %v704 = vadd.f32 %v666, %v683
      %v705 = vadd.f32 %v667, %v683
      %v706 = vadd.f32 %v668, %v683
      %v707 = vadd.f32 %v669, %v683
      %v708 = vadd.f32 %v670, %v683
      %v709 = vadd.f32 %v671, %v683
      %v710 = vadd.f32 %v672, %v683
      %v711 = vadd.f32 %v673, %v683
      %v712 = vadd.f32 %v674, %v683
      %v713 = vadd.f32 %v675, %v683
      %v714 = vadd.f32 %v676, %v683
      %v715 = vadd.f32 %v677, %v683
      %v716 = vadd.f32 %v678, %v683
      %v718 = vlaneseq
      %v719 = vshrl.u32 %v718, 7
      %v720 = vsub.s32 0, %v719
      %v721 = vrot.slane %v502, %v720
      %v723 = vmax.f32 %v685, %v721
      %v724 = vmax.f32 %v686, %v721
      %v725 = vmax.f32 %v687, %v721
      %v726 = vmax.f32 %v688, %v721
      %v727 = vmax.f32 %v689, %v721
      %v728 = vmax.f32 %v690, %v721
      %v729 = vmax.f32 %v691, %v721
      %v730 = vmax.f32 %v692, %v721
      %v731 = vmax.f32 %v693, %v721
      %v732 = vmax.f32 %v694, %v721
      %v733 = vmax.f32 %v695, %v721
      %v734 = vmax.f32 %v696, %v721
      %v735 = vmax.f32 %v697, %v721
      %v736 = vmax.f32 %v698, %v721
      %v737 = vmax.f32 %v699, %v721
      %v738 = vmax.f32 %v700, %v721
      %v739 = vmax.f32 %v701, %v721
      %v740 = vmax.f32 %v702, %v721
      %v741 = vmax.f32 %v703, %v721
      %v742 = vmax.f32 %v704, %v721
      %v743 = vmax.f32 %v705, %v721
      %v744 = vmax.f32 %v706, %v721
      %v745 = vmax.f32 %v707, %v721
      %v746 = vmax.f32 %v708, %v721
      %v747 = vmax.f32 %v709, %v721
      %v748 = vmax.f32 %v710, %v721
      %v749 = vmax.f32 %v711, %v721
      %v750 = vmax.f32 %v712, %v721
      %v751 = vmax.f32 %v713, %v721
      %v752 = vmax.f32 %v714, %v721
      %v753 = vmax.f32 %v715, %v721
      %v754 = vmax.f32 %v716, %v721
      %755 = vst.msk [vmem:[#allocation2] sm:$0xff] %vm535, 0.0
      %756 = vst.msk [vmem:[#allocation2 + $0x8] sm:$0xff] %vm535, 0.0
      %757 = vst.msk [vmem:[#allocation2 + $0x10] sm:$0xff] %vm535, 0.0
      %758 = vst.msk [vmem:[#allocation2 + $0x118] sm:$0xff] %vm535, 0.0
      %759 = vst.msk [vmem:[#allocation2 + $0x120] sm:$0xff] %vm535, 0.0
      %760 = vst.msk [vmem:[#allocation2 + $0x128] sm:$0xff] %vm535, 0.0
      %761 = vst.msk [vmem:[#allocation2 + $0x18] sm:$0xff] %vm535, %v723
      %762 = vst.msk [vmem:[#allocation2 + $0x20] sm:$0xff] %vm535, %v724
      %763 = vst.msk [vmem:[#allocation2 + $0x28] sm:$0xff] %vm535, %v725
      %764 = vst.msk [vmem:[#allocation2 + $0x30] sm:$0xff] %vm535, %v726
      %765 = vst.msk [vmem:[#allocation2 + $0x38] sm:$0xff] %vm535, %v727
      %766 = vst.msk [vmem:[#allocation2 + $0x40] sm:$0xff] %vm535, %v728
      %767 = vst.msk [vmem:[#allocation2 + $0x48] sm:$0xff] %vm535, %v729
      %768 = vst.msk [vmem:[#allocation2 + $0x50] sm:$0xff] %vm535, %v730
      %769 = vst.msk [vmem:[#allocation2 + $0x58] sm:$0xff] %vm535, %v731
      %770 = vst.msk [vmem:[#allocation2 + $0x60] sm:$0xff] %vm535, %v732
      %771 = vst.msk [vmem:[#allocation2 + $0x68] sm:$0xff] %vm535, %v733
      %772 = vst.msk [vmem:[#allocation2 + $0x70] sm:$0xff] %vm535, %v734
      %773 = vst.msk [vmem:[#allocation2 + $0x78] sm:$0xff] %vm535, %v735
      %774 = vst.msk [vmem:[#allocation2 + $0x80] sm:$0xff] %vm535, %v736
      %775 = vst.msk [vmem:[#allocation2 + $0x88] sm:$0xff] %vm535, %v737
      %776 = vst.msk [vmem:[#allocation2 + $0x90] sm:$0xff] %vm535, %v738
      %777 = vst.msk [vmem:[#allocation2 + $0x98] sm:$0xff] %vm535, %v739
      %778 = vst.msk [vmem:[#allocation2 + $0xa0] sm:$0xff] %vm535, %v740
      %779 = vst.msk [vmem:[#allocation2 + $0xa8] sm:$0xff] %vm535, %v741
      %780 = vst.msk [vmem:[#allocation2 + $0xb0] sm:$0xff] %vm535, %v742
      %781 = vst.msk [vmem:[#allocation2 + $0xb8] sm:$0xff] %vm535, %v743
      %782 = vst.msk [vmem:[#allocation2 + $0xc0] sm:$0xff] %vm535, %v744
      %783 = vst.msk [vmem:[#allocation2 + $0xc8] sm:$0xff] %vm535, %v745
      %784 = vst.msk [vmem:[#allocation2 + $0xd0] sm:$0xff] %vm535, %v746
      %785 = vst.msk [vmem:[#allocation2 + $0xd8] sm:$0xff] %vm535, %v747
      %786 = vst.msk [vmem:[#allocation2 + $0xe0] sm:$0xff] %vm535, %v748
      %787 = vst.msk [vmem:[#allocation2 + $0xe8] sm:$0xff] %vm535, %v749
      %788 = vst.msk [vmem:[#allocation2 + $0xf0] sm:$0xff] %vm535, %v750
      %789 = vst.msk [vmem:[#allocation2 + $0xf8] sm:$0xff] %vm535, %v751
      %790 = vst.msk [vmem:[#allocation2 + $0x100] sm:$0xff] %vm535, %v752
      %791 = vst.msk [vmem:[#allocation2 + $0x108] sm:$0xff] %vm535, %v753
      %792 = vst.msk [vmem:[#allocation2 + $0x110] sm:$0xff] %vm535, %v754
      %v793 = vlaneseq
      %v794 = vshrl.u32 %v793, 7
      %v795 = vadd.s32 %v794, 8
      %v796 = vadd.s32 %v794, 16
      %v797 = vadd.s32 %v794, 24
      %v798 = vadd.s32 %v794, 32
      %v799 = vadd.s32 %v794, 40
      %v800 = vadd.s32 %v794, 48
      %v801 = vadd.s32 %v794, 56
      %v802 = vadd.s32 %v794, 64
      %v803 = vadd.s32 %v794, 72
      %v804 = vadd.s32 %v794, 80
      %v805 = vadd.s32 %v794, 88
      %v806 = vadd.s32 %v794, 96
      %v807 = vadd.s32 %v794, 104
      %v808 = vadd.s32 %v794, 112
      %v809 = vadd.s32 %v794, 120
      %v810 = vadd.s32 %v794, 128
      %v811 = vadd.s32 %v794, 136
      %v812 = vadd.s32 %v794, 144
      %v813 = vadd.s32 %v794, 152
      %v814 = vadd.s32 %v794, 160
      %v815 = vadd.s32 %v794, 168
      %v816 = vadd.s32 %v794, 176
      %v817 = vadd.s32 %v794, 184
      %v818 = vadd.s32 %v794, 192
      %v819 = vadd.s32 %v794, 200
      %v820 = vadd.s32 %v794, 208
      %v821 = vadd.s32 %v794, 216
      %v822 = vadd.s32 %v794, 224
      %v823 = vadd.s32 %v794, 232
      %v824 = vadd.s32 %v794, 240
      %v825 = vadd.s32 %v794, 248
      %vm826 = vcmp.lt.s32.totalorder %v794, 0
      %v827 = vsub.s32 0, %v794
      %v828 = vsel %vm826, %v827, %v794
      %v829 = vshrl.u32 %v828, 4
      %v830 = vand.u32 %v828, 15
      %v831 = vsub.s32 0, %v830
      %v832 = vsel %vm826, %v831, %v830
      %vm833 = vcmp.lt.s32.totalorder %v795, 0
      %v834 = vsub.s32 0, %v795
      %v835 = vsel %vm833, %v834, %v795
      %v836 = vshrl.u32 %v835, 4
      %v837 = vand.u32 %v835, 15
      %v838 = vsub.s32 0, %v837
      %v839 = vsel %vm833, %v838, %v837
      %vm840 = vcmp.lt.s32.totalorder %v796, 0
      %v841 = vsub.s32 0, %v796
      %v842 = vsel %vm840, %v841, %v796
      %v843 = vshrl.u32 %v842, 4
      %v844 = vand.u32 %v842, 15
      %v845 = vsub.s32 0, %v844
      %v846 = vsel %vm840, %v845, %v844
      %vm847 = vcmp.lt.s32.totalorder %v797, 0
      %v848 = vsub.s32 0, %v797
      %v849 = vsel %vm847, %v848, %v797
      %v850 = vshrl.u32 %v849, 4
      %v851 = vand.u32 %v849, 15
      %v852 = vsub.s32 0, %v851
      %v853 = vsel %vm847, %v852, %v851
      %vm854 = vcmp.lt.s32.totalorder %v798, 0
      %v855 = vsub.s32 0, %v798
      %v856 = vsel %vm854, %v855, %v798
      %v857 = vshrl.u32 %v856, 4
      %v858 = vand.u32 %v856, 15
      %v859 = vsub.s32 0, %v858
      %v860 = vsel %vm854, %v859, %v858
      %vm861 = vcmp.lt.s32.totalorder %v799, 0
      %v862 = vsub.s32 0, %v799
      %v863 = vsel %vm861, %v862, %v799
      %v864 = vshrl.u32 %v863, 4
      %v865 = vand.u32 %v863, 15
      %v866 = vsub.s32 0, %v865
      %v867 = vsel %vm861, %v866, %v865
      %vm868 = vcmp.lt.s32.totalorder %v800, 0
      %v869 = vsub.s32 0, %v800
      %v870 = vsel %vm868, %v869, %v800
      %v871 = vshrl.u32 %v870, 4
      %v872 = vand.u32 %v870, 15
      %v873 = vsub.s32 0, %v872
      %v874 = vsel %vm868, %v873, %v872
      %vm875 = vcmp.lt.s32.totalorder %v801, 0
      %v876 = vsub.s32 0, %v801
      %v877 = vsel %vm875, %v876, %v801
      %v878 = vshrl.u32 %v877, 4
      %v879 = vand.u32 %v877, 15
      %v880 = vsub.s32 0, %v879
      %v881 = vsel %vm875, %v880, %v879
      %vm882 = vcmp.lt.s32.totalorder %v802, 0
      %v883 = vsub.s32 0, %v802
      %v884 = vsel %vm882, %v883, %v802
      %v885 = vshrl.u32 %v884, 4
      %v886 = vand.u32 %v884, 15
      %v887 = vsub.s32 0, %v886
      %v888 = vsel %vm882, %v887, %v886
      %vm889 = vcmp.lt.s32.totalorder %v803, 0
      %v890 = vsub.s32 0, %v803
      %v891 = vsel %vm889, %v890, %v803
      %v892 = vshrl.u32 %v891, 4
      %v893 = vand.u32 %v891, 15
      %v894 = vsub.s32 0, %v893
      %v895 = vsel %vm889, %v894, %v893
      %vm896 = vcmp.lt.s32.totalorder %v804, 0
      %v897 = vsub.s32 0, %v804
      %v898 = vsel %vm896, %v897, %v804
      %v899 = vshrl.u32 %v898, 4
      %v900 = vand.u32 %v898, 15
      %v901 = vsub.s32 0, %v900
      %v902 = vsel %vm896, %v901, %v900
      %vm903 = vcmp.lt.s32.totalorder %v805, 0
      %v904 = vsub.s32 0, %v805
      %v905 = vsel %vm903, %v904, %v805
      %v906 = vshrl.u32 %v905, 4
      %v907 = vand.u32 %v905, 15
      %v908 = vsub.s32 0, %v907
      %v909 = vsel %vm903, %v908, %v907
      %vm910 = vcmp.lt.s32.totalorder %v806, 0
      %v911 = vsub.s32 0, %v806
      %v912 = vsel %vm910, %v911, %v806
      %v913 = vshrl.u32 %v912, 4
      %v914 = vand.u32 %v912, 15
      %v915 = vsub.s32 0, %v914
      %v916 = vsel %vm910, %v915, %v914
      %vm917 = vcmp.lt.s32.totalorder %v807, 0
      %v918 = vsub.s32 0, %v807
      %v919 = vsel %vm917, %v918, %v807
      %v920 = vshrl.u32 %v919, 4
      %v921 = vand.u32 %v919, 15
      %v922 = vsub.s32 0, %v921
      %v923 = vsel %vm917, %v922, %v921
      %vm924 = vcmp.lt.s32.totalorder %v808, 0
      %v925 = vsub.s32 0, %v808
      %v926 = vsel %vm924, %v925, %v808
      %v927 = vshrl.u32 %v926, 4
      %v928 = vand.u32 %v926, 15
      %v929 = vsub.s32 0, %v928
      %v930 = vsel %vm924, %v929, %v928
      %vm931 = vcmp.lt.s32.totalorder %v809, 0
      %v932 = vsub.s32 0, %v809
      %v933 = vsel %vm931, %v932, %v809
      %v934 = vshrl.u32 %v933, 4
      %v935 = vand.u32 %v933, 15
      %v936 = vsub.s32 0, %v935
      %v937 = vsel %vm931, %v936, %v935
      %vm938 = vcmp.lt.s32.totalorder %v810, 0
      %v939 = vsub.s32 0, %v810
      %v940 = vsel %vm938, %v939, %v810
      %v941 = vshrl.u32 %v940, 4
      %v942 = vand.u32 %v940, 15
      %v943 = vsub.s32 0, %v942
      %v944 = vsel %vm938, %v943, %v942
      %vm945 = vcmp.lt.s32.totalorder %v811, 0
      %v946 = vsub.s32 0, %v811
      %v947 = vsel %vm945, %v946, %v811
      %v948 = vshrl.u32 %v947, 4
      %v949 = vand.u32 %v947, 15
      %v950 = vsub.s32 0, %v949
      %v951 = vsel %vm945, %v950, %v949
      %vm952 = vcmp.lt.s32.totalorder %v812, 0
      %v953 = vsub.s32 0, %v812
      %v954 = vsel %vm952, %v953, %v812
      %v955 = vshrl.u32 %v954, 4
      %v956 = vand.u32 %v954, 15
      %v957 = vsub.s32 0, %v956
      %v958 = vsel %vm952, %v957, %v956
      %vm959 = vcmp.lt.s32.totalorder %v813, 0
      %v960 = vsub.s32 0, %v813
      %v961 = vsel %vm959, %v960, %v813
      %v962 = vshrl.u32 %v961, 4
      %v963 = vand.u32 %v961, 15
      %v964 = vsub.s32 0, %v963
      %v965 = vsel %vm959, %v964, %v963
      %vm966 = vcmp.lt.s32.totalorder %v814, 0
      %v967 = vsub.s32 0, %v814
      %v968 = vsel %vm966, %v967, %v814
      %v969 = vshrl.u32 %v968, 4
      %v970 = vand.u32 %v968, 15
      %v971 = vsub.s32 0, %v970
      %v972 = vsel %vm966, %v971, %v970
      %vm973 = vcmp.lt.s32.totalorder %v815, 0
      %v974 = vsub.s32 0, %v815
      %v975 = vsel %vm973, %v974, %v815
      %v976 = vshrl.u32 %v975, 4
      %v977 = vand.u32 %v975, 15
      %v978 = vsub.s32 0, %v977
      %v979 = vsel %vm973, %v978, %v977
      %vm980 = vcmp.lt.s32.totalorder %v816, 0
      %v981 = vsub.s32 0, %v816
      %v982 = vsel %vm980, %v981, %v816
      %v983 = vshrl.u32 %v982, 4
      %v984 = vand.u32 %v982, 15
      %v985 = vsub.s32 0, %v984
      %v986 = vsel %vm980, %v985, %v984
      %vm987 = vcmp.lt.s32.totalorder %v817, 0
      %v988 = vsub.s32 0, %v817
      %v989 = vsel %vm987, %v988, %v817
      %v990 = vshrl.u32 %v989, 4
      %v991 = vand.u32 %v989, 15
      %v992 = vsub.s32 0, %v991
      %v993 = vsel %vm987, %v992, %v991
      %vm994 = vcmp.lt.s32.totalorder %v818, 0
      %v995 = vsub.s32 0, %v818
      %v996 = vsel %vm994, %v995, %v818
      %v997 = vshrl.u32 %v996, 4
      %v998 = vand.u32 %v996, 15
      %v999 = vsub.s32 0, %v998
      %v1000 = vsel %vm994, %v999, %v998
      %vm1001 = vcmp.lt.s32.totalorder %v819, 0
      %v1002 = vsub.s32 0, %v819
      %v1003 = vsel %vm1001, %v1002, %v819
      %v1004 = vshrl.u32 %v1003, 4
      %v1005 = vand.u32 %v1003, 15
      %v1006 = vsub.s32 0, %v1005
      %v1007 = vsel %vm1001, %v1006, %v1005
      %vm1008 = vcmp.lt.s32.totalorder %v820, 0
      %v1009 = vsub.s32 0, %v820
      %v1010 = vsel %vm1008, %v1009, %v820
      %v1011 = vshrl.u32 %v1010, 4
      %v1012 = vand.u32 %v1010, 15
      %v1013 = vsub.s32 0, %v1012
      %v1014 = vsel %vm1008, %v1013, %v1012
      %vm1015 = vcmp.lt.s32.totalorder %v821, 0
      %v1016 = vsub.s32 0, %v821
      %v1017 = vsel %vm1015, %v1016, %v821
      %v1018 = vshrl.u32 %v1017, 4
      %v1019 = vand.u32 %v1017, 15
      %v1020 = vsub.s32 0, %v1019
      %v1021 = vsel %vm1015, %v1020, %v1019
      %vm1022 = vcmp.lt.s32.totalorder %v822, 0
      %v1023 = vsub.s32 0, %v822
      %v1024 = vsel %vm1022, %v1023, %v822
      %v1025 = vshrl.u32 %v1024, 4
      %v1026 = vand.u32 %v1024, 15
      %v1027 = vsub.s32 0, %v1026
      %v1028 = vsel %vm1022, %v1027, %v1026
      %vm1029 = vcmp.lt.s32.totalorder %v823, 0
      %v1030 = vsub.s32 0, %v823
      %v1031 = vsel %vm1029, %v1030, %v823
      %v1032 = vshrl.u32 %v1031, 4
      %v1033 = vand.u32 %v1031, 15
      %v1034 = vsub.s32 0, %v1033
      %v1035 = vsel %vm1029, %v1034, %v1033
      %vm1036 = vcmp.lt.s32.totalorder %v824, 0
      %v1037 = vsub.s32 0, %v824
      %v1038 = vsel %vm1036, %v1037, %v824
      %v1039 = vshrl.u32 %v1038, 4
      %v1040 = vand.u32 %v1038, 15
      %v1041 = vsub.s32 0, %v1040
      %v1042 = vsel %vm1036, %v1041, %v1040
      %vm1043 = vcmp.lt.s32.totalorder %v825, 0
      %v1044 = vsub.s32 0, %v825
      %v1045 = vsel %vm1043, %v1044, %v825
      %v1046 = vshrl.u32 %v1045, 4
      %v1047 = vand.u32 %v1045, 15
      %v1048 = vsub.s32 0, %v1047
      %v1049 = vsel %vm1043, %v1048, %v1047
      %vm1050 = vcmp.ne.s32.totalorder %v832, 0
      %vm1051 = vcmp.ne.s32.totalorder %v839, 0
      %vm1052 = vcmp.ne.s32.totalorder %v846, 0
      %vm1053 = vcmp.ne.s32.totalorder %v853, 0
      %vm1054 = vcmp.ne.s32.totalorder %v860, 0
      %vm1055 = vcmp.ne.s32.totalorder %v867, 0
      %vm1056 = vcmp.ne.s32.totalorder %v874, 0
      %vm1057 = vcmp.ne.s32.totalorder %v881, 0
      %vm1058 = vcmp.ne.s32.totalorder %v888, 0
      %vm1059 = vcmp.ne.s32.totalorder %v895, 0
      %vm1060 = vcmp.ne.s32.totalorder %v902, 0
      %vm1061 = vcmp.ne.s32.totalorder %v909, 0
      %vm1062 = vcmp.ne.s32.totalorder %v916, 0
      %vm1063 = vcmp.ne.s32.totalorder %v923, 0
      %vm1064 = vcmp.ne.s32.totalorder %v930, 0
      %vm1065 = vcmp.ne.s32.totalorder %v937, 0
      %vm1066 = vcmp.ne.s32.totalorder %v944, 0
      %vm1067 = vcmp.ne.s32.totalorder %v951, 0
      %vm1068 = vcmp.ne.s32.totalorder %v958, 0
      %vm1069 = vcmp.ne.s32.totalorder %v965, 0
      %vm1070 = vcmp.ne.s32.totalorder %v972, 0
      %vm1071 = vcmp.ne.s32.totalorder %v979, 0
      %vm1072 = vcmp.ne.s32.totalorder %v986, 0
      %vm1073 = vcmp.ne.s32.totalorder %v993, 0
      %vm1074 = vcmp.ne.s32.totalorder %v1000, 0
      %vm1075 = vcmp.ne.s32.totalorder %v1007, 0
      %vm1076 = vcmp.ne.s32.totalorder %v1014, 0
      %vm1077 = vcmp.ne.s32.totalorder %v1021, 0
      %vm1078 = vcmp.ne.s32.totalorder %v1028, 0
      %vm1079 = vcmp.ne.s32.totalorder %v1035, 0
      %vm1080 = vcmp.ne.s32.totalorder %v1042, 0
      %vm1081 = vcmp.ne.s32.totalorder %v1049, 0
      %vm1082 = vcmp.lt.s32.totalorder %v832, 0
      %vm1083 = vcmp.lt.s32.totalorder %v839, 0
      %vm1084 = vcmp.lt.s32.totalorder %v846, 0
      %vm1085 = vcmp.lt.s32.totalorder %v853, 0
      %vm1086 = vcmp.lt.s32.totalorder %v860, 0
      %vm1087 = vcmp.lt.s32.totalorder %v867, 0
      %vm1088 = vcmp.lt.s32.totalorder %v874, 0
      %vm1089 = vcmp.lt.s32.totalorder %v881, 0
      %vm1090 = vcmp.lt.s32.totalorder %v888, 0
      %vm1091 = vcmp.lt.s32.totalorder %v895, 0
      %vm1092 = vcmp.lt.s32.totalorder %v902, 0
      %vm1093 = vcmp.lt.s32.totalorder %v909, 0
      %vm1094 = vcmp.lt.s32.totalorder %v916, 0
      %vm1095 = vcmp.lt.s32.totalorder %v923, 0
      %vm1096 = vcmp.lt.s32.totalorder %v930, 0
      %vm1097 = vcmp.lt.s32.totalorder %v937, 0
      %vm1098 = vcmp.lt.s32.totalorder %v944, 0
      %vm1099 = vcmp.lt.s32.totalorder %v951, 0
      %vm1100 = vcmp.lt.s32.totalorder %v958, 0
      %vm1101 = vcmp.lt.s32.totalorder %v965, 0
      %vm1102 = vcmp.lt.s32.totalorder %v972, 0
      %vm1103 = vcmp.lt.s32.totalorder %v979, 0
      %vm1104 = vcmp.lt.s32.totalorder %v986, 0
      %vm1105 = vcmp.lt.s32.totalorder %v993, 0
      %vm1106 = vcmp.lt.s32.totalorder %v1000, 0
      %vm1107 = vcmp.lt.s32.totalorder %v1007, 0
      %vm1108 = vcmp.lt.s32.totalorder %v1014, 0
      %vm1109 = vcmp.lt.s32.totalorder %v1021, 0
      %vm1110 = vcmp.lt.s32.totalorder %v1028, 0
      %vm1111 = vcmp.lt.s32.totalorder %v1035, 0
      %vm1112 = vcmp.lt.s32.totalorder %v1042, 0
      %vm1113 = vcmp.lt.s32.totalorder %v1049, 0
      %vm1114 = vmand %vm1082, %vm1050
      %vm1115 = vmand %vm1083, %vm1051
      %vm1116 = vmand %vm1084, %vm1052
      %vm1117 = vmand %vm1085, %vm1053
      %vm1118 = vmand %vm1086, %vm1054
      %vm1119 = vmand %vm1087, %vm1055
      %vm1120 = vmand %vm1088, %vm1056
      %vm1121 = vmand %vm1089, %vm1057
      %vm1122 = vmand %vm1090, %vm1058
      %vm1123 = vmand %vm1091, %vm1059
      %vm1124 = vmand %vm1092, %vm1060
      %vm1125 = vmand %vm1093, %vm1061
      %vm1126 = vmand %vm1094, %vm1062
      %vm1127 = vmand %vm1095, %vm1063
      %vm1128 = vmand %vm1096, %vm1064
      %vm1129 = vmand %vm1097, %vm1065
      %vm1130 = vmand %vm1098, %vm1066
      %vm1131 = vmand %vm1099, %vm1067
      %vm1132 = vmand %vm1100, %vm1068
      %vm1133 = vmand %vm1101, %vm1069
      %vm1134 = vmand %vm1102, %vm1070
      %vm1135 = vmand %vm1103, %vm1071
      %vm1136 = vmand %vm1104, %vm1072
      %vm1137 = vmand %vm1105, %vm1073
      %vm1138 = vmand %vm1106, %vm1074
      %vm1139 = vmand %vm1107, %vm1075
      %vm1140 = vmand %vm1108, %vm1076
      %vm1141 = vmand %vm1109, %vm1077
      %vm1142 = vmand %vm1110, %vm1078
      %vm1143 = vmand %vm1111, %vm1079
      %vm1144 = vmand %vm1112, %vm1080
      %vm1145 = vmand %vm1113, %vm1081
      %v1146 = vadd.s32 %v832, 16
      %v1147 = vadd.s32 %v839, 16
      %v1148 = vadd.s32 %v846, 16
      %v1149 = vadd.s32 %v853, 16
      %v1150 = vadd.s32 %v860, 16
      %v1151 = vadd.s32 %v867, 16
      %v1152 = vadd.s32 %v874, 16
      %v1153 = vadd.s32 %v881, 16
      %v1154 = vadd.s32 %v888, 16
      %v1155 = vadd.s32 %v895, 16
      %v1156 = vadd.s32 %v902, 16
      %v1157 = vadd.s32 %v909, 16
      %v1158 = vadd.s32 %v916, 16
      %v1159 = vadd.s32 %v923, 16
      %v1160 = vadd.s32 %v930, 16
      %v1161 = vadd.s32 %v937, 16
      %v1162 = vadd.s32 %v944, 16
      %v1163 = vadd.s32 %v951, 16
      %v1164 = vadd.s32 %v958, 16
      %v1165 = vadd.s32 %v965, 16
      %v1166 = vadd.s32 %v972, 16
      %v1167 = vadd.s32 %v979, 16
      %v1168 = vadd.s32 %v986, 16
      %v1169 = vadd.s32 %v993, 16
      %v1170 = vadd.s32 %v1000, 16
      %v1171 = vadd.s32 %v1007, 16
      %v1172 = vadd.s32 %v1014, 16
      %v1173 = vadd.s32 %v1021, 16
      %v1174 = vadd.s32 %v1028, 16
      %v1175 = vadd.s32 %v1035, 16
      %v1176 = vadd.s32 %v1042, 16
      %v1177 = vadd.s32 %v1049, 16
      %v1178 = vsel %vm1114, %v1146, %v832
      %v1179 = vsel %vm1115, %v1147, %v839
      %v1180 = vsel %vm1116, %v1148, %v846
      %v1181 = vsel %vm1117, %v1149, %v853
      %v1182 = vsel %vm1118, %v1150, %v860
      %v1183 = vsel %vm1119, %v1151, %v867
      %v1184 = vsel %vm1120, %v1152, %v874
      %v1185 = vsel %vm1121, %v1153, %v881
      %v1186 = vsel %vm1122, %v1154, %v888
      %v1187 = vsel %vm1123, %v1155, %v895
      %v1188 = vsel %vm1124, %v1156, %v902
      %v1189 = vsel %vm1125, %v1157, %v909
      %v1190 = vsel %vm1126, %v1158, %v916
      %v1191 = vsel %vm1127, %v1159, %v923
      %v1192 = vsel %vm1128, %v1160, %v930
      %v1193 = vsel %vm1129, %v1161, %v937
      %v1194 = vsel %vm1130, %v1162, %v944
      %v1195 = vsel %vm1131, %v1163, %v951
      %v1196 = vsel %vm1132, %v1164, %v958
      %v1197 = vsel %vm1133, %v1165, %v965
      %v1198 = vsel %vm1134, %v1166, %v972
      %v1199 = vsel %vm1135, %v1167, %v979
      %v1200 = vsel %vm1136, %v1168, %v986
      %v1201 = vsel %vm1137, %v1169, %v993
      %v1202 = vsel %vm1138, %v1170, %v1000
      %v1203 = vsel %vm1139, %v1171, %v1007
      %v1204 = vsel %vm1140, %v1172, %v1014
      %v1205 = vsel %vm1141, %v1173, %v1021
      %v1206 = vsel %vm1142, %v1174, %v1028
      %v1207 = vsel %vm1143, %v1175, %v1035
      %v1208 = vsel %vm1144, %v1176, %v1042
      %v1209 = vsel %vm1145, %v1177, %v1049
      %vm1210 = vcmp.ne.s32.totalorder %v1178, 0
      %vm1211 = vcmp.ne.s32.totalorder %v1179, 0
      %vm1212 = vcmp.ne.s32.totalorder %v1180, 0
      %vm1213 = vcmp.ne.s32.totalorder %v1181, 0
      %vm1214 = vcmp.ne.s32.totalorder %v1182, 0
      %vm1215 = vcmp.ne.s32.totalorder %v1183, 0
      %vm1216 = vcmp.ne.s32.totalorder %v1184, 0
      %vm1217 = vcmp.ne.s32.totalorder %v1185, 0
      %vm1218 = vcmp.ne.s32.totalorder %v1186, 0
      %vm1219 = vcmp.ne.s32.totalorder %v1187, 0
      %vm1220 = vcmp.ne.s32.totalorder %v1188, 0
      %vm1221 = vcmp.ne.s32.totalorder %v1189, 0
      %vm1222 = vcmp.ne.s32.totalorder %v1190, 0
      %vm1223 = vcmp.ne.s32.totalorder %v1191, 0
      %vm1224 = vcmp.ne.s32.totalorder %v1192, 0
      %vm1225 = vcmp.ne.s32.totalorder %v1193, 0
      %vm1226 = vcmp.ne.s32.totalorder %v1194, 0
      %vm1227 = vcmp.ne.s32.totalorder %v1195, 0
      %vm1228 = vcmp.ne.s32.totalorder %v1196, 0
      %vm1229 = vcmp.ne.s32.totalorder %v1197, 0
      %vm1230 = vcmp.ne.s32.totalorder %v1198, 0
      %vm1231 = vcmp.ne.s32.totalorder %v1199, 0
      %vm1232 = vcmp.ne.s32.totalorder %v1200, 0
      %vm1233 = vcmp.ne.s32.totalorder %v1201, 0
      %vm1234 = vcmp.ne.s32.totalorder %v1202, 0
      %vm1235 = vcmp.ne.s32.totalorder %v1203, 0
      %vm1236 = vcmp.ne.s32.totalorder %v1204, 0
      %vm1237 = vcmp.ne.s32.totalorder %v1205, 0
      %vm1238 = vcmp.ne.s32.totalorder %v1206, 0
      %vm1239 = vcmp.ne.s32.totalorder %v1207, 0
      %vm1240 = vcmp.ne.s32.totalorder %v1208, 0
      %vm1241 = vcmp.ne.s32.totalorder %v1209, 0
      %vm1242 = vcmp.ne.s32.totalorder %v1178, 15
      %vm1243 = vcmp.ne.s32.totalorder %v1179, 15
      %vm1244 = vcmp.ne.s32.totalorder %v1180, 15
      %vm1245 = vcmp.ne.s32.totalorder %v1181, 15
      %vm1246 = vcmp.ne.s32.totalorder %v1182, 15
      %vm1247 = vcmp.ne.s32.totalorder %v1183, 15
      %vm1248 = vcmp.ne.s32.totalorder %v1184, 15
      %vm1249 = vcmp.ne.s32.totalorder %v1185, 15
      %vm1250 = vcmp.ne.s32.totalorder %v1186, 15
      %vm1251 = vcmp.ne.s32.totalorder %v1187, 15
      %vm1252 = vcmp.ne.s32.totalorder %v1188, 15
      %vm1253 = vcmp.ne.s32.totalorder %v1189, 15
      %vm1254 = vcmp.ne.s32.totalorder %v1190, 15
      %vm1255 = vcmp.ne.s32.totalorder %v1191, 15
      %vm1256 = vcmp.ne.s32.totalorder %v1192, 15
      %vm1257 = vcmp.ne.s32.totalorder %v1193, 15
      %vm1258 = vcmp.ne.s32.totalorder %v1194, 15
      %vm1259 = vcmp.ne.s32.totalorder %v1195, 15
      %vm1260 = vcmp.ne.s32.totalorder %v1196, 15
      %vm1261 = vcmp.ne.s32.totalorder %v1197, 15
      %vm1262 = vcmp.ne.s32.totalorder %v1198, 15
      %vm1263 = vcmp.ne.s32.totalorder %v1199, 15
      %vm1264 = vcmp.ne.s32.totalorder %v1200, 15
      %vm1265 = vcmp.ne.s32.totalorder %v1201, 15
      %vm1266 = vcmp.ne.s32.totalorder %v1202, 15
      %vm1267 = vcmp.ne.s32.totalorder %v1203, 15
      %vm1268 = vcmp.ne.s32.totalorder %v1204, 15
      %vm1269 = vcmp.ne.s32.totalorder %v1205, 15
      %vm1270 = vcmp.ne.s32.totalorder %v1206, 15
      %vm1271 = vcmp.ne.s32.totalorder %v1207, 15
      %vm1272 = vcmp.ne.s32.totalorder %v1208, 15
      %vm1273 = vcmp.ne.s32.totalorder %v1209, 15
      %v1274 = vld [vmem:[#allocation2 + $0x7] sm:$0xff]
      %v1275 = vld [vmem:[#allocation2 + $0xf] sm:$0xff]
      %v1276 = vld [vmem:[#allocation2 + $0x17] sm:$0xff]
      %v1277 = vld [vmem:[#allocation2 + $0x1f] sm:$0xff]
      %v1278 = vld [vmem:[#allocation2 + $0x27] sm:$0xff]
      %v1279 = vld [vmem:[#allocation2 + $0x2f] sm:$0xff]
      %v1280 = vld [vmem:[#allocation2 + $0x37] sm:$0xff]
      %v1281 = vld [vmem:[#allocation2 + $0x3f] sm:$0xff]
      %v1282 = vld [vmem:[#allocation2 + $0x47] sm:$0xff]
      %v1283 = vld [vmem:[#allocation2 + $0x4f] sm:$0xff]
      %v1284 = vld [vmem:[#allocation2 + $0x57] sm:$0xff]
      %v1285 = vld [vmem:[#allocation2 + $0x5f] sm:$0xff]
      %v1286 = vld [vmem:[#allocation2 + $0x67] sm:$0xff]
      %v1287 = vld [vmem:[#allocation2 + $0x6f] sm:$0xff]
      %v1288 = vld [vmem:[#allocation2 + $0x77] sm:$0xff]
      %v1289 = vld [vmem:[#allocation2 + $0x7f] sm:$0xff]
      %v1290 = vld [vmem:[#allocation2 + $0x87] sm:$0xff]
      %v1291 = vld [vmem:[#allocation2 + $0x8f] sm:$0xff]
      %v1292 = vld [vmem:[#allocation2 + $0x97] sm:$0xff]
      %v1293 = vld [vmem:[#allocation2 + $0x9f] sm:$0xff]
      %v1294 = vld [vmem:[#allocation2 + $0xa7] sm:$0xff]
      %v1295 = vld [vmem:[#allocation2 + $0xaf] sm:$0xff]
      %v1296 = vld [vmem:[#allocation2 + $0xb7] sm:$0xff]
      %v1297 = vld [vmem:[#allocation2 + $0xbf] sm:$0xff]
      %v1298 = vld [vmem:[#allocation2 + $0xc7] sm:$0xff]
      %v1299 = vld [vmem:[#allocation2 + $0xcf] sm:$0xff]
      %v1300 = vld [vmem:[#allocation2 + $0xd7] sm:$0xff]
      %v1301 = vld [vmem:[#allocation2 + $0xdf] sm:$0xff]
      %v1302 = vld [vmem:[#allocation2 + $0xe7] sm:$0xff]
      %v1303 = vld [vmem:[#allocation2 + $0xef] sm:$0xff]
      %v1304 = vld [vmem:[#allocation2 + $0xf7] sm:$0xff]
      %v1305 = vld [vmem:[#allocation2 + $0xff] sm:$0xff]
      %v1306 = vsel %vm1210, 1, 0
      %v1307 = vsel %vm1211, 1, 0
      %v1308 = vsel %vm1212, 1, 0
      %v1309 = vsel %vm1213, 1, 0
      %v1310 = vsel %vm1214, 1, 0
      %v1311 = vsel %vm1215, 1, 0
      %v1312 = vsel %vm1216, 1, 0
      %v1313 = vsel %vm1217, 1, 0
      %v1314 = vsel %vm1218, 1, 0
      %v1315 = vsel %vm1219, 1, 0
      %v1316 = vsel %vm1220, 1, 0
      %v1317 = vsel %vm1221, 1, 0
      %v1318 = vsel %vm1222, 1, 0
      %v1319 = vsel %vm1223, 1, 0
      %v1320 = vsel %vm1224, 1, 0
      %v1321 = vsel %vm1225, 1, 0
      %v1322 = vsel %vm1226, 1, 0
      %v1323 = vsel %vm1227, 1, 0
      %v1324 = vsel %vm1228, 1, 0
      %v1325 = vsel %vm1229, 1, 0
      %v1326 = vsel %vm1230, 1, 0
      %v1327 = vsel %vm1231, 1, 0
      %v1328 = vsel %vm1232, 1, 0
      %v1329 = vsel %vm1233, 1, 0
      %v1330 = vsel %vm1234, 1, 0
      %v1331 = vsel %vm1235, 1, 0
      %v1332 = vsel %vm1236, 1, 0
      %v1333 = vsel %vm1237, 1, 0
      %v1334 = vsel %vm1238, 1, 0
      %v1335 = vsel %vm1239, 1, 0
      %v1336 = vsel %vm1240, 1, 0
      %v1337 = vsel %vm1241, 1, 0
      %vm1338 = vcmp.eq.s32.totalorder %v1306, 1
      %vm1339 = vcmp.eq.s32.totalorder %v1307, 1
      %vm1340 = vcmp.eq.s32.totalorder %v1308, 1
      %vm1341 = vcmp.eq.s32.totalorder %v1309, 1
      %vm1342 = vcmp.eq.s32.totalorder %v1310, 1
      %vm1343 = vcmp.eq.s32.totalorder %v1311, 1
      %vm1344 = vcmp.eq.s32.totalorder %v1312, 1
      %vm1345 = vcmp.eq.s32.totalorder %v1313, 1
      %vm1346 = vcmp.eq.s32.totalorder %v1314, 1
      %vm1347 = vcmp.eq.s32.totalorder %v1315, 1
      %vm1348 = vcmp.eq.s32.totalorder %v1316, 1
      %vm1349 = vcmp.eq.s32.totalorder %v1317, 1
      %vm1350 = vcmp.eq.s32.totalorder %v1318, 1
      %vm1351 = vcmp.eq.s32.totalorder %v1319, 1
      %vm1352 = vcmp.eq.s32.totalorder %v1320, 1
      %vm1353 = vcmp.eq.s32.totalorder %v1321, 1
      %vm1354 = vcmp.eq.s32.totalorder %v1322, 1
      %vm1355 = vcmp.eq.s32.totalorder %v1323, 1
      %vm1356 = vcmp.eq.s32.totalorder %v1324, 1
      %vm1357 = vcmp.eq.s32.totalorder %v1325, 1
      %vm1358 = vcmp.eq.s32.totalorder %v1326, 1
      %vm1359 = vcmp.eq.s32.totalorder %v1327, 1
      %vm1360 = vcmp.eq.s32.totalorder %v1328, 1
      %vm1361 = vcmp.eq.s32.totalorder %v1329, 1
      %vm1362 = vcmp.eq.s32.totalorder %v1330, 1
      %vm1363 = vcmp.eq.s32.totalorder %v1331, 1
      %vm1364 = vcmp.eq.s32.totalorder %v1332, 1
      %vm1365 = vcmp.eq.s32.totalorder %v1333, 1
      %vm1366 = vcmp.eq.s32.totalorder %v1334, 1
      %vm1367 = vcmp.eq.s32.totalorder %v1335, 1
      %vm1368 = vcmp.eq.s32.totalorder %v1336, 1
      %vm1369 = vcmp.eq.s32.totalorder %v1337, 1
      %v1370 = vsel %vm1338, %v1274, 0.0
      %v1371 = vsel %vm1339, %v1275, 0.0
      %v1372 = vsel %vm1340, %v1276, 0.0
      %v1373 = vsel %vm1341, %v1277, 0.0
      %v1374 = vsel %vm1342, %v1278, 0.0
      %v1375 = vsel %vm1343, %v1279, 0.0
      %v1376 = vsel %vm1344, %v1280, 0.0
      %v1377 = vsel %vm1345, %v1281, 0.0
      %v1378 = vsel %vm1346, %v1282, 0.0
      %v1379 = vsel %vm1347, %v1283, 0.0
      %v1380 = vsel %vm1348, %v1284, 0.0
      %v1381 = vsel %vm1349, %v1285, 0.0
      %v1382 = vsel %vm1350, %v1286, 0.0
      %v1383 = vsel %vm1351, %v1287, 0.0
      %v1384 = vsel %vm1352, %v1288, 0.0
      %v1385 = vsel %vm1353, %v1289, 0.0
      %v1386 = vsel %vm1354, %v1290, 0.0
      %v1387 = vsel %vm1355, %v1291, 0.0
      %v1388 = vsel %vm1356, %v1292, 0.0
      %v1389 = vsel %vm1357, %v1293, 0.0
      %v1390 = vsel %vm1358, %v1294, 0.0
      %v1391 = vsel %vm1359, %v1295, 0.0
      %v1392 = vsel %vm1360, %v1296, 0.0
      %v1393 = vsel %vm1361, %v1297, 0.0
      %v1394 = vsel %vm1362, %v1298, 0.0
      %v1395 = vsel %vm1363, %v1299, 0.0
      %v1396 = vsel %vm1364, %v1300, 0.0
      %v1397 = vsel %vm1365, %v1301, 0.0
      %v1398 = vsel %vm1366, %v1302, 0.0
      %v1399 = vsel %vm1367, %v1303, 0.0
      %v1400 = vsel %vm1368, %v1304, 0.0
      %v1401 = vsel %vm1369, %v1305, 0.0
      %v1402 = vld [vmem:[%s4] sm:$0xf]
      %v1403 = vld [vmem:[#allocation2 + $0x8] sm:$0xff]
      %v1404 = vld [vmem:[#allocation2 + $0x10] sm:$0xff]
      %v1405 = vld [vmem:[#allocation2 + $0x18] sm:$0xff]
      %v1406 = vld [vmem:[#allocation2 + $0x20] sm:$0xff]
      %v1407 = vld [vmem:[#allocation2 + $0x28] sm:$0xff]
      %v1408 = vld [vmem:[#allocation2 + $0x30] sm:$0xff]
      %v1409 = vld [vmem:[#allocation2 + $0x38] sm:$0xff]
      %v1410 = vld [vmem:[#allocation2 + $0x40] sm:$0xff]
      %v1411 = vld [vmem:[#allocation2 + $0x48] sm:$0xff]
      %v1412 = vld [vmem:[#allocation2 + $0x50] sm:$0xff]
      %v1413 = vld [vmem:[#allocation2 + $0x58] sm:$0xff]
      %v1414 = vld [vmem:[#allocation2 + $0x60] sm:$0xff]
      %v1415 = vld [vmem:[#allocation2 + $0x68] sm:$0xff]
      %v1416 = vld [vmem:[#allocation2 + $0x70] sm:$0xff]
      %v1417 = vld [vmem:[#allocation2 + $0x78] sm:$0xff]
      %v1418 = vld [vmem:[#allocation2 + $0x80] sm:$0xff]
      %v1419 = vld [vmem:[#allocation2 + $0x88] sm:$0xff]
      %v1420 = vld [vmem:[#allocation2 + $0x90] sm:$0xff]
      %v1421 = vld [vmem:[#allocation2 + $0x98] sm:$0xff]
      %v1422 = vld [vmem:[#allocation2 + $0xa0] sm:$0xff]
      %v1423 = vld [vmem:[#allocation2 + $0xa8] sm:$0xff]
      %v1424 = vld [vmem:[#allocation2 + $0xb0] sm:$0xff]
      %v1425 = vld [vmem:[#allocation2 + $0xb8] sm:$0xff]
      %v1426 = vld [vmem:[#allocation2 + $0xc0] sm:$0xff]
      %v1427 = vld [vmem:[#allocation2 + $0xc8] sm:$0xff]
      %v1428 = vld [vmem:[#allocation2 + $0xd0] sm:$0xff]
      %v1429 = vld [vmem:[#allocation2 + $0xd8] sm:$0xff]
      %v1430 = vld [vmem:[#allocation2 + $0xe0] sm:$0xff]
      %v1431 = vld [vmem:[#allocation2 + $0xe8] sm:$0xff]
      %v1432 = vld [vmem:[#allocation2 + $0xf0] sm:$0xff]
      %v1433 = vld [vmem:[#allocation2 + $0xf8] sm:$0xff]
      %v1434 = vld [vmem:[#allocation2 + $0x100] sm:$0xff]
      %s1435 = scalar_lea.vmem %s4, 4
      %v1436 = vld [vmem:[%s1435] sm:$0xf]
      %v1438 = vsel %vm535, %v1403, 0
      %v1441 = vsel %vm535, %v1404, 0
      %v1444 = vsel %vm535, %v1405, 0
      %v1447 = vsel %vm535, %v1406, 0
      %v1450 = vsel %vm535, %v1407, 0
      %v1453 = vsel %vm535, %v1408, 0
      %v1456 = vsel %vm535, %v1409, 0
      %v1459 = vsel %vm535, %v1410, 0
      %v1462 = vsel %vm535, %v1411, 0
      %v1465 = vsel %vm535, %v1412, 0
      %v1468 = vsel %vm535, %v1413, 0
      %v1471 = vsel %vm535, %v1414, 0
      %v1474 = vsel %vm535, %v1415, 0
      %v1477 = vsel %vm535, %v1416, 0
      %v1480 = vsel %vm535, %v1417, 0
      %v1483 = vsel %vm535, %v1418, 0
      %v1486 = vsel %vm535, %v1419, 0
      %v1489 = vsel %vm535, %v1420, 0
      %v1492 = vsel %vm535, %v1421, 0
      %v1495 = vsel %vm535, %v1422, 0
      %v1498 = vsel %vm535, %v1423, 0
      %v1501 = vsel %vm535, %v1424, 0
      %v1504 = vsel %vm535, %v1425, 0
      %v1507 = vsel %vm535, %v1426, 0
      %v1510 = vsel %vm535, %v1427, 0
      %v1513 = vsel %vm535, %v1428, 0
      %v1516 = vsel %vm535, %v1429, 0
      %v1519 = vsel %vm535, %v1430, 0
      %v1522 = vsel %vm535, %v1431, 0
      %v1525 = vsel %vm535, %v1432, 0
      %v1528 = vsel %vm535, %v1433, 0
      %v1531 = vsel %vm535, %v1434, 0
      %vm1533 = vcmask 1043456
      %v1535 = vsel %vm1533, %v1436, 0
      %1537 = vmatprep.subr.mxu0 0.0
      %1538 = vmatpush1.msra.mxu0 %v1535
      %1539 = vmatprep.subr.mxu0 0.0
      %1540 = vmatpush1.msra.mxu0 0.0
      %1541 = vmatprep.subr.mxu0 0.0
      %1542 = vmatpush1.msra.mxu0 0.0
      %1543 = vmatprep.subr.mxu0 0.0
      %1544 = vmatpush1.msra.mxu0 0.0
      %1545 = vmatprep.subr.mxu0 0.0
      %1546 = vmatpush1.msra.mxu0 0.0
      %1547 = vmatprep.subr.mxu0 0.0
      %1548 = vmatpush1.msra.mxu0 0.0
      %1549 = vmatprep.subr.mxu0 0.0
      %1550 = vmatpush1.msra.mxu0 0.0
      %1551 = vmatprep.subr.mxu0 0.0
      %1552 = vmatpush1.msra.mxu0 0.0
      %1553 = vmatprep.subr.mxu0 0.0
      %1554 = vmatpush1.msra.mxu0 0.0
      %1555 = vmatprep.subr.mxu0 0.0
      %1556 = vmatpush1.msra.mxu0 0.0
      %1557 = vmatprep.subr.mxu0 0.0
      %1558 = vmatpush1.msra.mxu0 0.0
      %1559 = vmatprep.subr.mxu0 0.0
      %1560 = vmatpush1.msra.mxu0 0.0
      %1561 = vmatprep.subr.mxu0 0.0
      %1562 = vmatpush1.msra.mxu0 0.0
      %1563 = vmatprep.subr.mxu0 0.0
      %1564 = vmatpush1.msra.mxu0 0.0
      %1565 = vmatprep.subr.mxu0 0.0
      %1566 = vmatpush1.msra.mxu0 0.0
      %1567 = vmatprep.subr.mxu0 0.0
      %1568 = vmatpush1.msra.mxu0 0.0
      %1569 = vmatprep.subr.mxu0 0.0
      %1570 = vmatpush1.msra.mxu0 0.0
      %1571 = vmatprep.subr.mxu0 0.0
      %1572 = vmatpush1.msra.mxu0 0.0
      %1573 = vmatprep.subr.mxu0 0.0
      %1574 = vmatpush1.msra.mxu0 0.0
      %1575 = vmatprep.subr.mxu0 0.0
      %1576 = vmatpush1.msra.mxu0 0.0
      %1577 = vmatprep.subr.mxu0 0.0
      %1578 = vmatpush1.msra.mxu0 0.0
      %1579 = vmatprep.subr.mxu0 0.0
      %1580 = vmatpush1.msra.mxu0 0.0
      %1581 = vmatprep.subr.mxu0 0.0
      %1582 = vmatpush1.msra.mxu0 0.0
      %1583 = vmatprep.subr.mxu0 0.0
      %1584 = vmatpush1.msra.mxu0 0.0
      %1585 = vmatprep.subr.mxu0 0.0
      %1586 = vmatpush1.msra.mxu0 0.0
      %1587 = vmatprep.subr.mxu0 0.0
      %1588 = vmatpush1.msra.mxu0 0.0
      %1589 = vmatprep.subr.mxu0 0.0
      %1590 = vmatpush1.msra.mxu0 0.0
      %1591 = vmatprep.subr.mxu0 0.0
      %1592 = vmatpush1.msra.mxu0 0.0
      %1593 = vmatprep.subr.mxu0 0.0
      %1594 = vmatpush1.msra.mxu0 0.0
      %1595 = vmatprep.subr.mxu0 0.0
      %1596 = vmatpush1.msra.mxu0 0.0
      %1597 = vmatprep.subr.mxu0 0.0
      %1598 = vmatpush1.msra.mxu0 0.0
      %1599 = vmatprep.subr.mxu0 0.0
      %1600 = vmatpush1.msra.mxu0 0.0
      %1601 = vmatprep.mubr.f32.mxu0 0.0
      %1602 = vmatmul.mubr.f32.gmra.mrb[0].mxu0 %v1438
      %v1603 = vpop.f32.mrb[0].mxu0
      %v1604 = vadd.f32 0.0, %v1603
      %v1605 = vpop.f32.mrb[0].mxu0
      %1606 = vmatprep.mubr.f32.mxu0 0.0
      %1607 = vmatmul.mubr.f32.gmra.mrb[0].mxu0 %v1441
      %v1608 = vpop.f32.mrb[0].mxu0
      %v1609 = vadd.f32 0.0, %v1608
      %v1610 = vpop.f32.mrb[0].mxu0
      %1611 = vmatprep.mubr.f32.mxu0 0.0
      %1612 = vmatmul.mubr.f32.gmra.mrb[0].mxu0 %v1444
      %v1613 = vpop.f32.mrb[0].mxu0
      %v1614 = vadd.f32 0.0, %v1613
      %v1615 = vpop.f32.mrb[0].mxu0
      %1616 = vmatprep.mubr.f32.mxu0 0.0
      %1617 = vmatmul.mubr.f32.gmra.mrb[0].mxu0 %v1447
      %v1618 = vpop.f32.mrb[0].mxu0
      %v1619 = vadd.f32 0.0, %v1618
      %v1620 = vpop.f32.mrb[0].mxu0
      %1621 = vmatprep.mubr.f32.mxu0 0.0
      %1622 = vmatmul.mubr.f32.gmra.mrb[0].mxu0 %v1450
      %v1623 = vpop.f32.mrb[0].mxu0
      %v1624 = vadd.f32 0.0, %v1623
      %v1625 = vpop.f32.mrb[0].mxu0
      %1626 = vmatprep.mubr.f32.mxu0 0.0
      %1627 = vmatmul.mubr.f32.gmra.mrb[0].mxu0 %v1453
      %v1628 = vpop.f32.mrb[0].mxu0
      %v1629 = vadd.f32 0.0, %v1628
      %v1630 = vpop.f32.mrb[0].mxu0
      %1631 = vmatprep.mubr.f32.mxu0 0.0
      %1632 = vmatmul.mubr.f32.gmra.mrb[0].mxu0 %v1456
      %v1633 = vpop.f32.mrb[0].mxu0
      %v1634 = vadd.f32 0.0, %v1633
      %v1635 = vpop.f32.mrb[0].mxu0
      %1636 = vmatprep.mubr.f32.mxu0 0.0
      %1637 = vmatmul.mubr.f32.gmra.mrb[0].mxu0 %v1459
      %v1638 = vpop.f32.mrb[0].mxu0
      %v1639 = vadd.f32 0.0, %v1638
      %v1640 = vpop.f32.mrb[0].mxu0
      %1641 = vmatprep.mubr.f32.mxu0 0.0
      %1642 = vmatmul.mubr.f32.gmra.mrb[0].mxu0 %v1462
      %v1643 = vpop.f32.mrb[0].mxu0
      %v1644 = vadd.f32 0.0, %v1643
      %v1645 = vpop.f32.mrb[0].mxu0
      %1646 = vmatprep.mubr.f32.mxu0 0.0
      %1647 = vmatmul.mubr.f32.gmra.mrb[0].mxu0 %v1465
      %v1648 = vpop.f32.mrb[0].mxu0
      %v1649 = vadd.f32 0.0, %v1648
      %v1650 = vpop.f32.mrb[0].mxu0
      %1651 = vmatprep.mubr.f32.mxu0 0.0
      %1652 = vmatmul.mubr.f32.gmra.mrb[0].mxu0 %v1468
      %v1653 = vpop.f32.mrb[0].mxu0
      %v1654 = vadd.f32 0.0, %v1653
      %v1655 = vpop.f32.mrb[0].mxu0
      %1656 = vmatprep.mubr.f32.mxu0 0.0
      %1657 = vmatmul.mubr.f32.gmra.mrb[0].mxu0 %v1471
      %v1658 = vpop.f32.mrb[0].mxu0
      %v1659 = vadd.f32 0.0, %v1658
      %v1660 = vpop.f32.mrb[0].mxu0
      %1661 = vmatprep.mubr.f32.mxu0 0.0
      %1662 = vmatmul.mubr.f32.gmra.mrb[0].mxu0 %v1474
      %v1663 = vpop.f32.mrb[0].mxu0
      %v1664 = vadd.f32 0.0, %v1663
      %v1665 = vpop.f32.mrb[0].mxu0
      %1666 = vmatprep.mubr.f32.mxu0 0.0
      %1667 = vmatmul.mubr.f32.gmra.mrb[0].mxu0 %v1477
      %v1668 = vpop.f32.mrb[0].mxu0
      %v1669 = vadd.f32 0.0, %v1668
      %v1670 = vpop.f32.mrb[0].mxu0
      %1671 = vmatprep.mubr.f32.mxu0 0.0
      %1672 = vmatmul.mubr.f32.gmra.mrb[0].mxu0 %v1480
      %v1673 = vpop.f32.mrb[0].mxu0
      %v1674 = vadd.f32 0.0, %v1673
      %v1675 = vpop.f32.mrb[0].mxu0
      %1676 = vmatprep.mubr.f32.mxu0 0.0
      %1677 = vmatmul.mubr.f32.gmra.mrb[0].mxu0 %v1483
      %v1678 = vpop.f32.mrb[0].mxu0
      %v1679 = vadd.f32 0.0, %v1678
      %v1680 = vpop.f32.mrb[0].mxu0
      %1681 = vmatprep.mubr.f32.mxu0 0.0
      %1682 = vmatmul.mubr.f32.gmra.mrb[0].mxu0 %v1486
      %v1683 = vpop.f32.mrb[0].mxu0
      %v1684 = vadd.f32 0.0, %v1683
      %v1685 = vpop.f32.mrb[0].mxu0
      %1686 = vmatprep.mubr.f32.mxu0 0.0
      %1687 = vmatmul.mubr.f32.gmra.mrb[0].mxu0 %v1489
      %v1688 = vpop.f32.mrb[0].mxu0
      %v1689 = vadd.f32 0.0, %v1688
      %v1690 = vpop.f32.mrb[0].mxu0
      %1691 = vmatprep.mubr.f32.mxu0 0.0
      %1692 = vmatmul.mubr.f32.gmra.mrb[0].mxu0 %v1492
      %v1693 = vpop.f32.mrb[0].mxu0
      %v1694 = vadd.f32 0.0, %v1693
      %v1695 = vpop.f32.mrb[0].mxu0
      %1696 = vmatprep.mubr.f32.mxu0 0.0
      %1697 = vmatmul.mubr.f32.gmra.mrb[0].mxu0 %v1495
      %v1698 = vpop.f32.mrb[0].mxu0
      %v1699 = vadd.f32 0.0, %v1698
      %v1700 = vpop.f32.mrb[0].mxu0
      %1701 = vmatprep.mubr.f32.mxu0 0.0
      %1702 = vmatmul.mubr.f32.gmra.mrb[0].mxu0 %v1498
      %v1703 = vpop.f32.mrb[0].mxu0
      %v1704 = vadd.f32 0.0, %v1703
      %v1705 = vpop.f32.mrb[0].mxu0
      %1706 = vmatprep.mubr.f32.mxu0 0.0
      %1707 = vmatmul.mubr.f32.gmra.mrb[0].mxu0 %v1501
      %v1708 = vpop.f32.mrb[0].mxu0
      %v1709 = vadd.f32 0.0, %v1708
      %v1710 = vpop.f32.mrb[0].mxu0
      %1711 = vmatprep.mubr.f32.mxu0 0.0
      %1712 = vmatmul.mubr.f32.gmra.mrb[0].mxu0 %v1504
      %v1713 = vpop.f32.mrb[0].mxu0
      %v1714 = vadd.f32 0.0, %v1713
      %v1715 = vpop.f32.mrb[0].mxu0
      %1716 = vmatprep.mubr.f32.mxu0 0.0
      %1717 = vmatmul.mubr.f32.gmra.mrb[0].mxu0 %v1507
      %v1718 = vpop.f32.mrb[0].mxu0
      %v1719 = vadd.f32 0.0, %v1718
      %v1720 = vpop.f32.mrb[0].mxu0
      %1721 = vmatprep.mubr.f32.mxu0 0.0
      %1722 = vmatmul.mubr.f32.gmra.mrb[0].mxu0 %v1510
      %v1723 = vpop.f32.mrb[0].mxu0
      %v1724 = vadd.f32 0.0, %v1723
      %v1725 = vpop.f32.mrb[0].mxu0
      %1726 = vmatprep.mubr.f32.mxu0 0.0
      %1727 = vmatmul.mubr.f32.gmra.mrb[0].mxu0 %v1513
      %v1728 = vpop.f32.mrb[0].mxu0
      %v1729 = vadd.f32 0.0, %v1728
      %v1730 = vpop.f32.mrb[0].mxu0
      %1731 = vmatprep.mubr.f32.mxu0 0.0
      %1732 = vmatmul.mubr.f32.gmra.mrb[0].mxu0 %v1516
      %v1733 = vpop.f32.mrb[0].mxu0
      %v1734 = vadd.f32 0.0, %v1733
      %v1735 = vpop.f32.mrb[0].mxu0
      %1736 = vmatprep.mubr.f32.mxu0 0.0
      %1737 = vmatmul.mubr.f32.gmra.mrb[0].mxu0 %v1519
      %v1738 = vpop.f32.mrb[0].mxu0
      %v1739 = vadd.f32 0.0, %v1738
      %v1740 = vpop.f32.mrb[0].mxu0
      %1741 = vmatprep.mubr.f32.mxu0 0.0
      %1742 = vmatmul.mubr.f32.gmra.mrb[0].mxu0 %v1522
      %v1743 = vpop.f32.mrb[0].mxu0
      %v1744 = vadd.f32 0.0, %v1743
      %v1745 = vpop.f32.mrb[0].mxu0
      %1746 = vmatprep.mubr.f32.mxu0 0.0
      %1747 = vmatmul.mubr.f32.gmra.mrb[0].mxu0 %v1525
      %v1748 = vpop.f32.mrb[0].mxu0
      %v1749 = vadd.f32 0.0, %v1748
      %v1750 = vpop.f32.mrb[0].mxu0
      %1751 = vmatprep.mubr.f32.mxu0 0.0
      %1752 = vmatmul.mubr.f32.gmra.mrb[0].mxu0 %v1528
      %v1753 = vpop.f32.mrb[0].mxu0
      %v1754 = vadd.f32 0.0, %v1753
      %v1755 = vpop.f32.mrb[0].mxu0
      %1756 = vmatprep.mubr.f32.mxu0 0.0
      %1757 = vmatmul.mubr.f32.gmra.mrb[0].mxu0 %v1531
      %v1758 = vpop.f32.mrb[0].mxu0
      %v1759 = vadd.f32 0.0, %v1758
      %v1760 = vpop.f32.mrb[0].mxu0
      %1761 = vdwg.mxu0
      %v1763 = vsel %vm535, %v1370, 0
      %v1766 = vsel %vm535, %v1371, 0
      %v1769 = vsel %vm535, %v1372, 0
      %v1772 = vsel %vm535, %v1373, 0
      %v1775 = vsel %vm535, %v1374, 0
      %v1778 = vsel %vm535, %v1375, 0
      %v1781 = vsel %vm535, %v1376, 0
      %v1784 = vsel %vm535, %v1377, 0
      %v1787 = vsel %vm535, %v1378, 0
      %v1790 = vsel %vm535, %v1379, 0
      %v1793 = vsel %vm535, %v1380, 0
      %v1796 = vsel %vm535, %v1381, 0
      %v1799 = vsel %vm535, %v1382, 0
      %v1802 = vsel %vm535, %v1383, 0
      %v1805 = vsel %vm535, %v1384, 0
      %v1808 = vsel %vm535, %v1385, 0
      %v1811 = vsel %vm535, %v1386, 0
      %v1814 = vsel %vm535, %v1387, 0
      %v1817 = vsel %vm535, %v1388, 0
      %v1820 = vsel %vm535, %v1389, 0
      %v1823 = vsel %vm535, %v1390, 0
      %v1826 = vsel %vm535, %v1391, 0
      %v1829 = vsel %vm535, %v1392, 0
      %v1832 = vsel %vm535, %v1393, 0
      %v1835 = vsel %vm535, %v1394, 0
      %v1838 = vsel %vm535, %v1395, 0
      %v1841 = vsel %vm535, %v1396, 0
      %v1844 = vsel %vm535, %v1397, 0
      %v1847 = vsel %vm535, %v1398, 0
      %v1850 = vsel %vm535, %v1399, 0
      %v1853 = vsel %vm535, %v1400, 0
      %v1856 = vsel %vm535, %v1401, 0
      %v1859 = vsel %vm1533, %v1402, 0
      %1861 = vmatprep.subr.mxu0 0.0
      %1862 = vmatpush1.msra.mxu0 %v1859
      %1863 = vmatprep.subr.mxu0 0.0
      %1864 = vmatpush1.msra.mxu0 0.0
      %1865 = vmatprep.subr.mxu0 0.0
      %1866 = vmatpush1.msra.mxu0 0.0
      %1867 = vmatprep.subr.mxu0 0.0
      %1868 = vmatpush1.msra.mxu0 0.0
      %1869 = vmatprep.subr.mxu0 0.0
      %1870 = vmatpush1.msra.mxu0 0.0
      %1871 = vmatprep.subr.mxu0 0.0
      %1872 = vmatpush1.msra.mxu0 0.0
      %1873 = vmatprep.subr.mxu0 0.0
      %1874 = vmatpush1.msra.mxu0 0.0
      %1875 = vmatprep.subr.mxu0 0.0
      %1876 = vmatpush1.msra.mxu0 0.0
      %1877 = vmatprep.subr.mxu0 0.0
      %1878 = vmatpush1.msra.mxu0 0.0
      %1879 = vmatprep.subr.mxu0 0.0
      %1880 = vmatpush1.msra.mxu0 0.0
      %1881 = vmatprep.subr.mxu0 0.0
      %1882 = vmatpush1.msra.mxu0 0.0
      %1883 = vmatprep.subr.mxu0 0.0
      %1884 = vmatpush1.msra.mxu0 0.0
      %1885 = vmatprep.subr.mxu0 0.0
      %1886 = vmatpush1.msra.mxu0 0.0
      %1887 = vmatprep.subr.mxu0 0.0
      %1888 = vmatpush1.msra.mxu0 0.0
      %1889 = vmatprep.subr.mxu0 0.0
      %1890 = vmatpush1.msra.mxu0 0.0
      %1891 = vmatprep.subr.mxu0 0.0
      %1892 = vmatpush1.msra.mxu0 0.0
      %1893 = vmatprep.subr.mxu0 0.0
      %1894 = vmatpush1.msra.mxu0 0.0
      %1895 = vmatprep.subr.mxu0 0.0
      %1896 = vmatpush1.msra.mxu0 0.0
      %1897 = vmatprep.subr.mxu0 0.0
      %1898 = vmatpush1.msra.mxu0 0.0
      %1899 = vmatprep.subr.mxu0 0.0
      %1900 = vmatpush1.msra.mxu0 0.0
      %1901 = vmatprep.subr.mxu0 0.0
      %1902 = vmatpush1.msra.mxu0 0.0
      %1903 = vmatprep.subr.mxu0 0.0
      %1904 = vmatpush1.msra.mxu0 0.0
      %1905 = vmatprep.subr.mxu0 0.0
      %1906 = vmatpush1.msra.mxu0 0.0
      %1907 = vmatprep.subr.mxu0 0.0
      %1908 = vmatpush1.msra.mxu0 0.0
      %1909 = vmatprep.subr.mxu0 0.0
      %1910 = vmatpush1.msra.mxu0 0.0
      %1911 = vmatprep.subr.mxu0 0.0
      %1912 = vmatpush1.msra.mxu0 0.0
      %1913 = vmatprep.subr.mxu0 0.0
      %1914 = vmatpush1.msra.mxu0 0.0
      %1915 = vmatprep.subr.mxu0 0.0
      %1916 = vmatpush1.msra.mxu0 0.0
      %1917 = vmatprep.subr.mxu0 0.0
      %1918 = vmatpush1.msra.mxu0 0.0
      %1919 = vmatprep.subr.mxu0 0.0
      %1920 = vmatpush1.msra.mxu0 0.0
      %1921 = vmatprep.subr.mxu0 0.0
      %1922 = vmatpush1.msra.mxu0 0.0
      %1923 = vmatprep.subr.mxu0 0.0
      %1924 = vmatpush1.msra.mxu0 0.0
      %1925 = vmatprep.mubr.f32.mxu0 0.0
      %1926 = vmatmul.mubr.f32.gmra.mrb[0].mxu0 %v1763
      %v1927 = vpop.f32.mrb[0].mxu0
      %v1928 = vadd.f32 %v1604, %v1927
      %v1929 = vpop.f32.mrb[0].mxu0
      %1930 = vmatprep.mubr.f32.mxu0 0.0
      %1931 = vmatmul.mubr.f32.gmra.mrb[0].mxu0 %v1766
      %v1932 = vpop.f32.mrb[0].mxu0
      %v1933 = vadd.f32 %v1609, %v1932
      %v1934 = vpop.f32.mrb[0].mxu0
      %1935 = vmatprep.mubr.f32.mxu0 0.0
      %1936 = vmatmul.mubr.f32.gmra.mrb[0].mxu0 %v1769
      %v1937 = vpop.f32.mrb[0].mxu0
      %v1938 = vadd.f32 %v1614, %v1937
      %v1939 = vpop.f32.mrb[0].mxu0
      %1940 = vmatprep.mubr.f32.mxu0 0.0
      %1941 = vmatmul.mubr.f32.gmra.mrb[0].mxu0 %v1772
      %v1942 = vpop.f32.mrb[0].mxu0
      %v1943 = vadd.f32 %v1619, %v1942
      %v1944 = vpop.f32.mrb[0].mxu0
      %1945 = vmatprep.mubr.f32.mxu0 0.0
      %1946 = vmatmul.mubr.f32.gmra.mrb[0].mxu0 %v1775
      %v1947 = vpop.f32.mrb[0].mxu0
      %v1948 = vadd.f32 %v1624, %v1947
      %v1949 = vpop.f32.mrb[0].mxu0
      %1950 = vmatprep.mubr.f32.mxu0 0.0
      %1951 = vmatmul.mubr.f32.gmra.mrb[0].mxu0 %v1778
      %v1952 = vpop.f32.mrb[0].mxu0
      %v1953 = vadd.f32 %v1629, %v1952
      %v1954 = vpop.f32.mrb[0].mxu0
      %1955 = vmatprep.mubr.f32.mxu0 0.0
      %1956 = vmatmul.mubr.f32.gmra.mrb[0].mxu0 %v1781
      %v1957 = vpop.f32.mrb[0].mxu0
      %v1958 = vadd.f32 %v1634, %v1957
      %v1959 = vpop.f32.mrb[0].mxu0
      %1960 = vmatprep.mubr.f32.mxu0 0.0
      %1961 = vmatmul.mubr.f32.gmra.mrb[0].mxu0 %v1784
      %v1962 = vpop.f32.mrb[0].mxu0
      %v1963 = vadd.f32 %v1639, %v1962
      %v1964 = vpop.f32.mrb[0].mxu0
      %1965 = vmatprep.mubr.f32.mxu0 0.0
      %1966 = vmatmul.mubr.f32.gmra.mrb[0].mxu0 %v1787
      %v1967 = vpop.f32.mrb[0].mxu0
      %v1968 = vadd.f32 %v1644, %v1967
      %v1969 = vpop.f32.mrb[0].mxu0
      %1970 = vmatprep.mubr.f32.mxu0 0.0
      %1971 = vmatmul.mubr.f32.gmra.mrb[0].mxu0 %v1790
      %v1972 = vpop.f32.mrb[0].mxu0
      %v1973 = vadd.f32 %v1649, %v1972
      %v1974 = vpop.f32.mrb[0].mxu0
      %1975 = vmatprep.mubr.f32.mxu0 0.0
      %1976 = vmatmul.mubr.f32.gmra.mrb[0].mxu0 %v1793
      %v1977 = vpop.f32.mrb[0].mxu0
      %v1978 = vadd.f32 %v1654, %v1977
      %v1979 = vpop.f32.mrb[0].mxu0
      %1980 = vmatprep.mubr.f32.mxu0 0.0
      %1981 = vmatmul.mubr.f32.gmra.mrb[0].mxu0 %v1796
      %v1982 = vpop.f32.mrb[0].mxu0
      %v1983 = vadd.f32 %v1659, %v1982
      %v1984 = vpop.f32.mrb[0].mxu0
      %1985 = vmatprep.mubr.f32.mxu0 0.0
      %1986 = vmatmul.mubr.f32.gmra.mrb[0].mxu0 %v1799
      %v1987 = vpop.f32.mrb[0].mxu0
      %v1988 = vadd.f32 %v1664, %v1987
      %v1989 = vpop.f32.mrb[0].mxu0
      %1990 = vmatprep.mubr.f32.mxu0 0.0
      %1991 = vmatmul.mubr.f32.gmra.mrb[0].mxu0 %v1802
      %v1992 = vpop.f32.mrb[0].mxu0
      %v1993 = vadd.f32 %v1669, %v1992
      %v1994 = vpop.f32.mrb[0].mxu0
      %1995 = vmatprep.mubr.f32.mxu0 0.0
      %1996 = vmatmul.mubr.f32.gmra.mrb[0].mxu0 %v1805
      %v1997 = vpop.f32.mrb[0].mxu0
      %v1998 = vadd.f32 %v1674, %v1997
      %v1999 = vpop.f32.mrb[0].mxu0
      %2000 = vmatprep.mubr.f32.mxu0 0.0
      %2001 = vmatmul.mubr.f32.gmra.mrb[0].mxu0 %v1808
      %v2002 = vpop.f32.mrb[0].mxu0
      %v2003 = vadd.f32 %v1679, %v2002
      %v2004 = vpop.f32.mrb[0].mxu0
      %2005 = vmatprep.mubr.f32.mxu0 0.0
      %2006 = vmatmul.mubr.f32.gmra.mrb[0].mxu0 %v1811
      %v2007 = vpop.f32.mrb[0].mxu0
      %v2008 = vadd.f32 %v1684, %v2007
      %v2009 = vpop.f32.mrb[0].mxu0
      %2010 = vmatprep.mubr.f32.mxu0 0.0
      %2011 = vmatmul.mubr.f32.gmra.mrb[0].mxu0 %v1814
      %v2012 = vpop.f32.mrb[0].mxu0
      %v2013 = vadd.f32 %v1689, %v2012
      %v2014 = vpop.f32.mrb[0].mxu0
      %2015 = vmatprep.mubr.f32.mxu0 0.0
      %2016 = vmatmul.mubr.f32.gmra.mrb[0].mxu0 %v1817
      %v2017 = vpop.f32.mrb[0].mxu0
      %v2018 = vadd.f32 %v1694, %v2017
      %v2019 = vpop.f32.mrb[0].mxu0
      %2020 = vmatprep.mubr.f32.mxu0 0.0
      %2021 = vmatmul.mubr.f32.gmra.mrb[0].mxu0 %v1820
      %v2022 = vpop.f32.mrb[0].mxu0
      %v2023 = vadd.f32 %v1699, %v2022
      %v2024 = vpop.f32.mrb[0].mxu0
      %2025 = vmatprep.mubr.f32.mxu0 0.0
      %2026 = vmatmul.mubr.f32.gmra.mrb[0].mxu0 %v1823
      %v2027 = vpop.f32.mrb[0].mxu0
      %v2028 = vadd.f32 %v1704, %v2027
      %v2029 = vpop.f32.mrb[0].mxu0
      %2030 = vmatprep.mubr.f32.mxu0 0.0
      %2031 = vmatmul.mubr.f32.gmra.mrb[0].mxu0 %v1826
      %v2032 = vpop.f32.mrb[0].mxu0
      %v2033 = vadd.f32 %v1709, %v2032
      %v2034 = vpop.f32.mrb[0].mxu0
      %2035 = vmatprep.mubr.f32.mxu0 0.0
      %2036 = vmatmul.mubr.f32.gmra.mrb[0].mxu0 %v1829
      %v2037 = vpop.f32.mrb[0].mxu0
      %v2038 = vadd.f32 %v1714, %v2037
      %v2039 = vpop.f32.mrb[0].mxu0
      %2040 = vmatprep.mubr.f32.mxu0 0.0
      %2041 = vmatmul.mubr.f32.gmra.mrb[0].mxu0 %v1832
      %v2042 = vpop.f32.mrb[0].mxu0
      %v2043 = vadd.f32 %v1719, %v2042
      %v2044 = vpop.f32.mrb[0].mxu0
      %2045 = vmatprep.mubr.f32.mxu0 0.0
      %2046 = vmatmul.mubr.f32.gmra.mrb[0].mxu0 %v1835
      %v2047 = vpop.f32.mrb[0].mxu0
      %v2048 = vadd.f32 %v1724, %v2047
      %v2049 = vpop.f32.mrb[0].mxu0
      %2050 = vmatprep.mubr.f32.mxu0 0.0
      %2051 = vmatmul.mubr.f32.gmra.mrb[0].mxu0 %v1838
      %v2052 = vpop.f32.mrb[0].mxu0
      %v2053 = vadd.f32 %v1729, %v2052
      %v2054 = vpop.f32.mrb[0].mxu0
      %2055 = vmatprep.mubr.f32.mxu0 0.0
      %2056 = vmatmul.mubr.f32.gmra.mrb[0].mxu0 %v1841
      %v2057 = vpop.f32.mrb[0].mxu0
      %v2058 = vadd.f32 %v1734, %v2057
      %v2059 = vpop.f32.mrb[0].mxu0
      %2060 = vmatprep.mubr.f32.mxu0 0.0
      %2061 = vmatmul.mubr.f32.gmra.mrb[0].mxu0 %v1844
      %v2062 = vpop.f32.mrb[0].mxu0
      %v2063 = vadd.f32 %v1739, %v2062
      %v2064 = vpop.f32.mrb[0].mxu0
      %2065 = vmatprep.mubr.f32.mxu0 0.0
      %2066 = vmatmul.mubr.f32.gmra.mrb[0].mxu0 %v1847
      %v2067 = vpop.f32.mrb[0].mxu0
      %v2068 = vadd.f32 %v1744, %v2067
      %v2069 = vpop.f32.mrb[0].mxu0
      %2070 = vmatprep.mubr.f32.mxu0 0.0
      %2071 = vmatmul.mubr.f32.gmra.mrb[0].mxu0 %v1850
      %v2072 = vpop.f32.mrb[0].mxu0
      %v2073 = vadd.f32 %v1749, %v2072
      %v2074 = vpop.f32.mrb[0].mxu0
      %2075 = vmatprep.mubr.f32.mxu0 0.0
      %2076 = vmatmul.mubr.f32.gmra.mrb[0].mxu0 %v1853
      %v2077 = vpop.f32.mrb[0].mxu0
      %v2078 = vadd.f32 %v1754, %v2077
      %v2079 = vpop.f32.mrb[0].mxu0
      %2080 = vmatprep.mubr.f32.mxu0 0.0
      %2081 = vmatmul.mubr.f32.gmra.mrb[0].mxu0 %v1856
      %v2082 = vpop.f32.mrb[0].mxu0
      %v2083 = vadd.f32 %v1759, %v2082
      %v2084 = vpop.f32.mrb[0].mxu0
      %2085 = vdwg.mxu0
      %v2086 = vld [vmem:[#allocation2 + $0x9] sm:$0xff]
      %v2087 = vld [vmem:[#allocation2 + $0x11] sm:$0xff]
      %v2088 = vld [vmem:[#allocation2 + $0x19] sm:$0xff]
      %v2089 = vld [vmem:[#allocation2 + $0x21] sm:$0xff]
      %v2090 = vld [vmem:[#allocation2 + $0x29] sm:$0xff]
      %v2091 = vld [vmem:[#allocation2 + $0x31] sm:$0xff]
      %v2092 = vld [vmem:[#allocation2 + $0x39] sm:$0xff]
      %v2093 = vld [vmem:[#allocation2 + $0x41] sm:$0xff]
      %v2094 = vld [vmem:[#allocation2 + $0x49] sm:$0xff]
      %v2095 = vld [vmem:[#allocation2 + $0x51] sm:$0xff]
      %v2096 = vld [vmem:[#allocation2 + $0x59] sm:$0xff]
      %v2097 = vld [vmem:[#allocation2 + $0x61] sm:$0xff]
      %v2098 = vld [vmem:[#allocation2 + $0x69] sm:$0xff]
      %v2099 = vld [vmem:[#allocation2 + $0x71] sm:$0xff]
      %v2100 = vld [vmem:[#allocation2 + $0x79] sm:$0xff]
      %v2101 = vld [vmem:[#allocation2 + $0x81] sm:$0xff]
      %v2102 = vld [vmem:[#allocation2 + $0x89] sm:$0xff]
      %v2103 = vld [vmem:[#allocation2 + $0x91] sm:$0xff]
      %v2104 = vld [vmem:[#allocation2 + $0x99] sm:$0xff]
      %v2105 = vld [vmem:[#allocation2 + $0xa1] sm:$0xff]
      %v2106 = vld [vmem:[#allocation2 + $0xa9] sm:$0xff]
      %v2107 = vld [vmem:[#allocation2 + $0xb1] sm:$0xff]
      %v2108 = vld [vmem:[#allocation2 + $0xb9] sm:$0xff]
      %v2109 = vld [vmem:[#allocation2 + $0xc1] sm:$0xff]
      %v2110 = vld [vmem:[#allocation2 + $0xc9] sm:$0xff]
      %v2111 = vld [vmem:[#allocation2 + $0xd1] sm:$0xff]
      %v2112 = vld [vmem:[#allocation2 + $0xd9] sm:$0xff]
      %v2113 = vld [vmem:[#allocation2 + $0xe1] sm:$0xff]
      %v2114 = vld [vmem:[#allocation2 + $0xe9] sm:$0xff]
      %v2115 = vld [vmem:[#allocation2 + $0xf1] sm:$0xff]
      %v2116 = vld [vmem:[#allocation2 + $0xf9] sm:$0xff]
      %v2117 = vld [vmem:[#allocation2 + $0x101] sm:$0xff]
      %v2118 = vsel %vm1242, 1, 0
      %v2119 = vsel %vm1243, 1, 0
      %v2120 = vsel %vm1244, 1, 0
      %v2121 = vsel %vm1245, 1, 0
      %v2122 = vsel %vm1246, 1, 0
      %v2123 = vsel %vm1247, 1, 0
      %v2124 = vsel %vm1248, 1, 0
      %v2125 = vsel %vm1249, 1, 0
      %v2126 = vsel %vm1250, 1, 0
      %v2127 = vsel %vm1251, 1, 0
      %v2128 = vsel %vm1252, 1, 0
      %v2129 = vsel %vm1253, 1, 0
      %v2130 = vsel %vm1254, 1, 0
      %v2131 = vsel %vm1255, 1, 0
      %v2132 = vsel %vm1256, 1, 0
      %v2133 = vsel %vm1257, 1, 0
      %v2134 = vsel %vm1258, 1, 0
      %v2135 = vsel %vm1259, 1, 0
      %v2136 = vsel %vm1260, 1, 0
      %v2137 = vsel %vm1261, 1, 0
      %v2138 = vsel %vm1262, 1, 0
      %v2139 = vsel %vm1263, 1, 0
      %v2140 = vsel %vm1264, 1, 0
      %v2141 = vsel %vm1265, 1, 0
      %v2142 = vsel %vm1266, 1, 0
      %v2143 = vsel %vm1267, 1, 0
      %v2144 = vsel %vm1268, 1, 0
      %v2145 = vsel %vm1269, 1, 0
      %v2146 = vsel %vm1270, 1, 0
      %v2147 = vsel %vm1271, 1, 0
      %v2148 = vsel %vm1272, 1, 0
      %v2149 = vsel %vm1273, 1, 0
      %vm2150 = vcmp.eq.s32.totalorder %v2118, 1
      %vm2151 = vcmp.eq.s32.totalorder %v2119, 1
      %vm2152 = vcmp.eq.s32.totalorder %v2120, 1
      %vm2153 = vcmp.eq.s32.totalorder %v2121, 1
      %vm2154 = vcmp.eq.s32.totalorder %v2122, 1
      %vm2155 = vcmp.eq.s32.totalorder %v2123, 1
      %vm2156 = vcmp.eq.s32.totalorder %v2124, 1
      %vm2157 = vcmp.eq.s32.totalorder %v2125, 1
      %vm2158 = vcmp.eq.s32.totalorder %v2126, 1
      %vm2159 = vcmp.eq.s32.totalorder %v2127, 1
      %vm2160 = vcmp.eq.s32.totalorder %v2128, 1
      %vm2161 = vcmp.eq.s32.totalorder %v2129, 1
      %vm2162 = vcmp.eq.s32.totalorder %v2130, 1
      %vm2163 = vcmp.eq.s32.totalorder %v2131, 1
      %vm2164 = vcmp.eq.s32.totalorder %v2132, 1
      %vm2165 = vcmp.eq.s32.totalorder %v2133, 1
      %vm2166 = vcmp.eq.s32.totalorder %v2134, 1
      %vm2167 = vcmp.eq.s32.totalorder %v2135, 1
      %vm2168 = vcmp.eq.s32.totalorder %v2136, 1
      %vm2169 = vcmp.eq.s32.totalorder %v2137, 1
      %vm2170 = vcmp.eq.s32.totalorder %v2138, 1
      %vm2171 = vcmp.eq.s32.totalorder %v2139, 1
      %vm2172 = vcmp.eq.s32.totalorder %v2140, 1
      %vm2173 = vcmp.eq.s32.totalorder %v2141, 1
      %vm2174 = vcmp.eq.s32.totalorder %v2142, 1
      %vm2175 = vcmp.eq.s32.totalorder %v2143, 1
      %vm2176 = vcmp.eq.s32.totalorder %v2144, 1
      %vm2177 = vcmp.eq.s32.totalorder %v2145, 1
      %vm2178 = vcmp.eq.s32.totalorder %v2146, 1
      %vm2179 = vcmp.eq.s32.totalorder %v2147, 1
      %vm2180 = vcmp.eq.s32.totalorder %v2148, 1
      %vm2181 = vcmp.eq.s32.totalorder %v2149, 1
      %v2182 = vsel %vm2150, %v2086, 0.0
      %v2183 = vsel %vm2151, %v2087, 0.0
      %v2184 = vsel %vm2152, %v2088, 0.0
      %v2185 = vsel %vm2153, %v2089, 0.0
      %v2186 = vsel %vm2154, %v2090, 0.0
      %v2187 = vsel %vm2155, %v2091, 0.0
      %v2188 = vsel %vm2156, %v2092, 0.0
      %v2189 = vsel %vm2157, %v2093, 0.0
      %v2190 = vsel %vm2158, %v2094, 0.0
      %v2191 = vsel %vm2159, %v2095, 0.0
      %v2192 = vsel %vm2160, %v2096, 0.0
      %v2193 = vsel %vm2161, %v2097, 0.0
      %v2194 = vsel %vm2162, %v2098, 0.0
      %v2195 = vsel %vm2163, %v2099, 0.0
      %v2196 = vsel %vm2164, %v2100, 0.0
      %v2197 = vsel %vm2165, %v2101, 0.0
      %v2198 = vsel %vm2166, %v2102, 0.0
      %v2199 = vsel %vm2167, %v2103, 0.0
      %v2200 = vsel %vm2168, %v2104, 0.0
      %v2201 = vsel %vm2169, %v2105, 0.0
      %v2202 = vsel %vm2170, %v2106, 0.0
      %v2203 = vsel %vm2171, %v2107, 0.0
      %v2204 = vsel %vm2172, %v2108, 0.0
      %v2205 = vsel %vm2173, %v2109, 0.0
      %v2206 = vsel %vm2174, %v2110, 0.0
      %v2207 = vsel %vm2175, %v2111, 0.0
      %v2208 = vsel %vm2176, %v2112, 0.0
      %v2209 = vsel %vm2177, %v2113, 0.0
      %v2210 = vsel %vm2178, %v2114, 0.0
      %v2211 = vsel %vm2179, %v2115, 0.0
      %v2212 = vsel %vm2180, %v2116, 0.0
      %v2213 = vsel %vm2181, %v2117, 0.0
      %s2214 = scalar_lea.vmem %s4, 8
      %v2215 = vld [vmem:[%s2214] sm:$0xf]
      %v2217 = vsel %vm535, %v2182, 0
      %v2220 = vsel %vm535, %v2183, 0
      %v2223 = vsel %vm535, %v2184, 0
      %v2226 = vsel %vm535, %v2185, 0
      %v2229 = vsel %vm535, %v2186, 0
      %v2232 = vsel %vm535, %v2187, 0
      %v2235 = vsel %vm535, %v2188, 0
      %v2238 = vsel %vm535, %v2189, 0
      %v2241 = vsel %vm535, %v2190, 0
      %v2244 = vsel %vm535, %v2191, 0
      %v2247 = vsel %vm535, %v2192, 0
      %v2250 = vsel %vm535, %v2193, 0
      %v2253 = vsel %vm535, %v2194, 0
      %v2256 = vsel %vm535, %v2195, 0
      %v2259 = vsel %vm535, %v2196, 0
      %v2262 = vsel %vm535, %v2197, 0
      %v2265 = vsel %vm535, %v2198, 0
      %v2268 = vsel %vm535, %v2199, 0
      %v2271 = vsel %vm535, %v2200, 0
      %v2274 = vsel %vm535, %v2201, 0
      %v2277 = vsel %vm535, %v2202, 0
      %v2280 = vsel %vm535, %v2203, 0
      %v2283 = vsel %vm535, %v2204, 0
      %v2286 = vsel %vm535, %v2205, 0
      %v2289 = vsel %vm535, %v2206, 0
      %v2292 = vsel %vm535, %v2207, 0
      %v2295 = vsel %vm535, %v2208, 0
      %v2298 = vsel %vm535, %v2209, 0
      %v2301 = vsel %vm535, %v2210, 0
      %v2304 = vsel %vm535, %v2211, 0
      %v2307 = vsel %vm535, %v2212, 0
      %v2310 = vsel %vm535, %v2213, 0
      %v2313 = vsel %vm1533, %v2215, 0
      %2315 = vmatprep.subr.mxu0 0.0
      %2316 = vmatpush1.msra.mxu0 %v2313
      %2317 = vmatprep.subr.mxu0 0.0
      %2318 = vmatpush1.msra.mxu0 0.0
      %2319 = vmatprep.subr.mxu0 0.0
      %2320 = vmatpush1.msra.mxu0 0.0
      %2321 = vmatprep.subr.mxu0 0.0
      %2322 = vmatpush1.msra.mxu0 0.0
      %2323 = vmatprep.subr.mxu0 0.0
      %2324 = vmatpush1.msra.mxu0 0.0
      %2325 = vmatprep.subr.mxu0 0.0
      %2326 = vmatpush1.msra.mxu0 0.0
      %2327 = vmatprep.subr.mxu0 0.0
      %2328 = vmatpush1.msra.mxu0 0.0
      %2329 = vmatprep.subr.mxu0 0.0
      %2330 = vmatpush1.msra.mxu0 0.0
      %2331 = vmatprep.subr.mxu0 0.0
      %2332 = vmatpush1.msra.mxu0 0.0
      %2333 = vmatprep.subr.mxu0 0.0
      %2334 = vmatpush1.msra.mxu0 0.0
      %2335 = vmatprep.subr.mxu0 0.0
      %2336 = vmatpush1.msra.mxu0 0.0
      %2337 = vmatprep.subr.mxu0 0.0
      %2338 = vmatpush1.msra.mxu0 0.0
      %2339 = vmatprep.subr.mxu0 0.0
      %2340 = vmatpush1.msra.mxu0 0.0
      %2341 = vmatprep.subr.mxu0 0.0
      %2342 = vmatpush1.msra.mxu0 0.0
      %2343 = vmatprep.subr.mxu0 0.0
      %2344 = vmatpush1.msra.mxu0 0.0
      %2345 = vmatprep.subr.mxu0 0.0
      %2346 = vmatpush1.msra.mxu0 0.0
      %2347 = vmatprep.subr.mxu0 0.0
      %2348 = vmatpush1.msra.mxu0 0.0
      %2349 = vmatprep.subr.mxu0 0.0
      %2350 = vmatpush1.msra.mxu0 0.0
      %2351 = vmatprep.subr.mxu0 0.0
      %2352 = vmatpush1.msra.mxu0 0.0
      %2353 = vmatprep.subr.mxu0 0.0
      %2354 = vmatpush1.msra.mxu0 0.0
      %2355 = vmatprep.subr.mxu0 0.0
      %2356 = vmatpush1.msra.mxu0 0.0
      %2357 = vmatprep.subr.mxu0 0.0
      %2358 = vmatpush1.msra.mxu0 0.0
      %2359 = vmatprep.subr.mxu0 0.0
      %2360 = vmatpush1.msra.mxu0 0.0
      %2361 = vmatprep.subr.mxu0 0.0
      %2362 = vmatpush1.msra.mxu0 0.0
      %2363 = vmatprep.subr.mxu0 0.0
      %2364 = vmatpush1.msra.mxu0 0.0
      %2365 = vmatprep.subr.mxu0 0.0
      %2366 = vmatpush1.msra.mxu0 0.0
      %2367 = vmatprep.subr.mxu0 0.0
      %2368 = vmatpush1.msra.mxu0 0.0
      %2369 = vmatprep.subr.mxu0 0.0
      %2370 = vmatpush1.msra.mxu0 0.0
      %2371 = vmatprep.subr.mxu0 0.0
      %2372 = vmatpush1.msra.mxu0 0.0
      %2373 = vmatprep.subr.mxu0 0.0
      %2374 = vmatpush1.msra.mxu0 0.0
      %2375 = vmatprep.subr.mxu0 0.0
      %2376 = vmatpush1.msra.mxu0 0.0
      %2377 = vmatprep.subr.mxu0 0.0
      %2378 = vmatpush1.msra.mxu0 0.0
      %2379 = vmatprep.mubr.f32.mxu0 0.0
      %2380 = vmatmul.mubr.f32.gmra.mrb[0].mxu0 %v2217
      %v2381 = vpop.f32.mrb[0].mxu0
      %v2382 = vadd.f32 0.0, %v2381
      %v2383 = vpop.f32.mrb[0].mxu0
      %2384 = vmatprep.mubr.f32.mxu0 0.0
      %2385 = vmatmul.mubr.f32.gmra.mrb[0].mxu0 %v2220
      %v2386 = vpop.f32.mrb[0].mxu0
      %v2387 = vadd.f32 0.0, %v2386
      %v2388 = vpop.f32.mrb[0].mxu0
      %2389 = vmatprep.mubr.f32.mxu0 0.0
      %2390 = vmatmul.mubr.f32.gmra.mrb[0].mxu0 %v2223
      %v2391 = vpop.f32.mrb[0].mxu0
      %v2392 = vadd.f32 0.0, %v2391
      %v2393 = vpop.f32.mrb[0].mxu0
      %2394 = vmatprep.mubr.f32.mxu0 0.0
      %2395 = vmatmul.mubr.f32.gmra.mrb[0].mxu0 %v2226
      %v2396 = vpop.f32.mrb[0].mxu0
      %v2397 = vadd.f32 0.0, %v2396
      %v2398 = vpop.f32.mrb[0].mxu0
      %2399 = vmatprep.mubr.f32.mxu0 0.0
      %2400 = vmatmul.mubr.f32.gmra.mrb[0].mxu0 %v2229
      %v2401 = vpop.f32.mrb[0].mxu0
      %v2402 = vadd.f32 0.0, %v2401
      %v2403 = vpop.f32.mrb[0].mxu0
      %2404 = vmatprep.mubr.f32.mxu0 0.0
      %2405 = vmatmul.mubr.f32.gmra.mrb[0].mxu0 %v2232
      %v2406 = vpop.f32.mrb[0].mxu0
      %v2407 = vadd.f32 0.0, %v2406
      %v2408 = vpop.f32.mrb[0].mxu0
      %2409 = vmatprep.mubr.f32.mxu0 0.0
      %2410 = vmatmul.mubr.f32.gmra.mrb[0].mxu0 %v2235
      %v2411 = vpop.f32.mrb[0].mxu0
      %v2412 = vadd.f32 0.0, %v2411
      %v2413 = vpop.f32.mrb[0].mxu0
      %2414 = vmatprep.mubr.f32.mxu0 0.0
      %2415 = vmatmul.mubr.f32.gmra.mrb[0].mxu0 %v2238
      %v2416 = vpop.f32.mrb[0].mxu0
      %v2417 = vadd.f32 0.0, %v2416
      %v2418 = vpop.f32.mrb[0].mxu0
      %2419 = vmatprep.mubr.f32.mxu0 0.0
      %2420 = vmatmul.mubr.f32.gmra.mrb[0].mxu0 %v2241
      %v2421 = vpop.f32.mrb[0].mxu0
      %v2422 = vadd.f32 0.0, %v2421
      %v2423 = vpop.f32.mrb[0].mxu0
      %2424 = vmatprep.mubr.f32.mxu0 0.0
      %2425 = vmatmul.mubr.f32.gmra.mrb[0].mxu0 %v2244
      %v2426 = vpop.f32.mrb[0].mxu0
      %v2427 = vadd.f32 0.0, %v2426
      %v2428 = vpop.f32.mrb[0].mxu0
      %2429 = vmatprep.mubr.f32.mxu0 0.0
      %2430 = vmatmul.mubr.f32.gmra.mrb[0].mxu0 %v2247
      %v2431 = vpop.f32.mrb[0].mxu0
      %v2432 = vadd.f32 0.0, %v2431
      %v2433 = vpop.f32.mrb[0].mxu0
      %2434 = vmatprep.mubr.f32.mxu0 0.0
      %2435 = vmatmul.mubr.f32.gmra.mrb[0].mxu0 %v2250
      %v2436 = vpop.f32.mrb[0].mxu0
      %v2437 = vadd.f32 0.0, %v2436
      %v2438 = vpop.f32.mrb[0].mxu0
      %2439 = vmatprep.mubr.f32.mxu0 0.0
      %2440 = vmatmul.mubr.f32.gmra.mrb[0].mxu0 %v2253
      %v2441 = vpop.f32.mrb[0].mxu0
      %v2442 = vadd.f32 0.0, %v2441
      %v2443 = vpop.f32.mrb[0].mxu0
      %2444 = vmatprep.mubr.f32.mxu0 0.0
      %2445 = vmatmul.mubr.f32.gmra.mrb[0].mxu0 %v2256
      %v2446 = vpop.f32.mrb[0].mxu0
      %v2447 = vadd.f32 0.0, %v2446
      %v2448 = vpop.f32.mrb[0].mxu0
      %2449 = vmatprep.mubr.f32.mxu0 0.0
      %2450 = vmatmul.mubr.f32.gmra.mrb[0].mxu0 %v2259
      %v2451 = vpop.f32.mrb[0].mxu0
      %v2452 = vadd.f32 0.0, %v2451
      %v2453 = vpop.f32.mrb[0].mxu0
      %2454 = vmatprep.mubr.f32.mxu0 0.0
      %2455 = vmatmul.mubr.f32.gmra.mrb[0].mxu0 %v2262
      %v2456 = vpop.f32.mrb[0].mxu0
      %v2457 = vadd.f32 0.0, %v2456
      %v2458 = vpop.f32.mrb[0].mxu0
      %2459 = vmatprep.mubr.f32.mxu0 0.0
      %2460 = vmatmul.mubr.f32.gmra.mrb[0].mxu0 %v2265
      %v2461 = vpop.f32.mrb[0].mxu0
      %v2462 = vadd.f32 0.0, %v2461
      %v2463 = vpop.f32.mrb[0].mxu0
      %2464 = vmatprep.mubr.f32.mxu0 0.0
      %2465 = vmatmul.mubr.f32.gmra.mrb[0].mxu0 %v2268
      %v2466 = vpop.f32.mrb[0].mxu0
      %v2467 = vadd.f32 0.0, %v2466
      %v2468 = vpop.f32.mrb[0].mxu0
      %2469 = vmatprep.mubr.f32.mxu0 0.0
      %2470 = vmatmul.mubr.f32.gmra.mrb[0].mxu0 %v2271
      %v2471 = vpop.f32.mrb[0].mxu0
      %v2472 = vadd.f32 0.0, %v2471
      %v2473 = vpop.f32.mrb[0].mxu0
      %2474 = vmatprep.mubr.f32.mxu0 0.0
      %2475 = vmatmul.mubr.f32.gmra.mrb[0].mxu0 %v2274
      %v2476 = vpop.f32.mrb[0].mxu0
      %v2477 = vadd.f32 0.0, %v2476
      %v2478 = vpop.f32.mrb[0].mxu0
      %2479 = vmatprep.mubr.f32.mxu0 0.0
      %2480 = vmatmul.mubr.f32.gmra.mrb[0].mxu0 %v2277
      %v2481 = vpop.f32.mrb[0].mxu0
      %v2482 = vadd.f32 0.0, %v2481
      %v2483 = vpop.f32.mrb[0].mxu0
      %2484 = vmatprep.mubr.f32.mxu0 0.0
      %2485 = vmatmul.mubr.f32.gmra.mrb[0].mxu0 %v2280
      %v2486 = vpop.f32.mrb[0].mxu0
      %v2487 = vadd.f32 0.0, %v2486
      %v2488 = vpop.f32.mrb[0].mxu0
      %2489 = vmatprep.mubr.f32.mxu0 0.0
      %2490 = vmatmul.mubr.f32.gmra.mrb[0].mxu0 %v2283
      %v2491 = vpop.f32.mrb[0].mxu0
      %v2492 = vadd.f32 0.0, %v2491
      %v2493 = vpop.f32.mrb[0].mxu0
      %2494 = vmatprep.mubr.f32.mxu0 0.0
      %2495 = vmatmul.mubr.f32.gmra.mrb[0].mxu0 %v2286
      %v2496 = vpop.f32.mrb[0].mxu0
      %v2497 = vadd.f32 0.0, %v2496
      %v2498 = vpop.f32.mrb[0].mxu0
      %2499 = vmatprep.mubr.f32.mxu0 0.0
      %2500 = vmatmul.mubr.f32.gmra.mrb[0].mxu0 %v2289
      %v2501 = vpop.f32.mrb[0].mxu0
      %v2502 = vadd.f32 0.0, %v2501
      %v2503 = vpop.f32.mrb[0].mxu0
      %2504 = vmatprep.mubr.f32.mxu0 0.0
      %2505 = vmatmul.mubr.f32.gmra.mrb[0].mxu0 %v2292
      %v2506 = vpop.f32.mrb[0].mxu0
      %v2507 = vadd.f32 0.0, %v2506
      %v2508 = vpop.f32.mrb[0].mxu0
      %2509 = vmatprep.mubr.f32.mxu0 0.0
      %2510 = vmatmul.mubr.f32.gmra.mrb[0].mxu0 %v2295
      %v2511 = vpop.f32.mrb[0].mxu0
      %v2512 = vadd.f32 0.0, %v2511
      %v2513 = vpop.f32.mrb[0].mxu0
      %2514 = vmatprep.mubr.f32.mxu0 0.0
      %2515 = vmatmul.mubr.f32.gmra.mrb[0].mxu0 %v2298
      %v2516 = vpop.f32.mrb[0].mxu0
      %v2517 = vadd.f32 0.0, %v2516
      %v2518 = vpop.f32.mrb[0].mxu0
      %2519 = vmatprep.mubr.f32.mxu0 0.0
      %2520 = vmatmul.mubr.f32.gmra.mrb[0].mxu0 %v2301
      %v2521 = vpop.f32.mrb[0].mxu0
      %v2522 = vadd.f32 0.0, %v2521
      %v2523 = vpop.f32.mrb[0].mxu0
      %2524 = vmatprep.mubr.f32.mxu0 0.0
      %2525 = vmatmul.mubr.f32.gmra.mrb[0].mxu0 %v2304
      %v2526 = vpop.f32.mrb[0].mxu0
      %v2527 = vadd.f32 0.0, %v2526
      %v2528 = vpop.f32.mrb[0].mxu0
      %2529 = vmatprep.mubr.f32.mxu0 0.0
      %2530 = vmatmul.mubr.f32.gmra.mrb[0].mxu0 %v2307
      %v2531 = vpop.f32.mrb[0].mxu0
      %v2532 = vadd.f32 0.0, %v2531
      %v2533 = vpop.f32.mrb[0].mxu0
      %2534 = vmatprep.mubr.f32.mxu0 0.0
      %2535 = vmatmul.mubr.f32.gmra.mrb[0].mxu0 %v2310
      %v2536 = vpop.f32.mrb[0].mxu0
      %v2537 = vadd.f32 0.0, %v2536
      %v2538 = vpop.f32.mrb[0].mxu0
      %2539 = vdwg.mxu0
      %v2540 = vadd.f32 %v1928, %v2382
      %v2541 = vadd.f32 %v1933, %v2387
      %v2542 = vadd.f32 %v1938, %v2392
      %v2543 = vadd.f32 %v1943, %v2397
      %v2544 = vadd.f32 %v1948, %v2402
      %v2545 = vadd.f32 %v1953, %v2407
      %v2546 = vadd.f32 %v1958, %v2412
      %v2547 = vadd.f32 %v1963, %v2417
      %v2548 = vadd.f32 %v1968, %v2422
      %v2549 = vadd.f32 %v1973, %v2427
      %v2550 = vadd.f32 %v1978, %v2432
      %v2551 = vadd.f32 %v1983, %v2437
      %v2552 = vadd.f32 %v1988, %v2442
      %v2553 = vadd.f32 %v1993, %v2447
      %v2554 = vadd.f32 %v1998, %v2452
      %v2555 = vadd.f32 %v2003, %v2457
      %v2556 = vadd.f32 %v2008, %v2462
      %v2557 = vadd.f32 %v2013, %v2467
      %v2558 = vadd.f32 %v2018, %v2472
      %v2559 = vadd.f32 %v2023, %v2477
      %v2560 = vadd.f32 %v2028, %v2482
      %v2561 = vadd.f32 %v2033, %v2487
      %v2562 = vadd.f32 %v2038, %v2492
      %v2563 = vadd.f32 %v2043, %v2497
      %v2564 = vadd.f32 %v2048, %v2502
      %v2565 = vadd.f32 %v2053, %v2507
      %v2566 = vadd.f32 %v2058, %v2512
      %v2567 = vadd.f32 %v2063, %v2517
      %v2568 = vadd.f32 %v2068, %v2522
      %v2569 = vadd.f32 %v2073, %v2527
      %v2570 = vadd.f32 %v2078, %v2532
      %v2571 = vadd.f32 %v2083, %v2537
      %v2572 = vld [vmem:[#allocation2 + $0x17] sm:$0xff]
      %v2573 = vld [vmem:[#allocation2 + $0x1f] sm:$0xff]
      %v2574 = vld [vmem:[#allocation2 + $0x27] sm:$0xff]
      %v2575 = vld [vmem:[#allocation2 + $0x2f] sm:$0xff]
      %v2576 = vld [vmem:[#allocation2 + $0x37] sm:$0xff]
      %v2577 = vld [vmem:[#allocation2 + $0x3f] sm:$0xff]
      %v2578 = vld [vmem:[#allocation2 + $0x47] sm:$0xff]
      %v2579 = vld [vmem:[#allocation2 + $0x4f] sm:$0xff]
      %v2580 = vld [vmem:[#allocation2 + $0x57] sm:$0xff]
      %v2581 = vld [vmem:[#allocation2 + $0x5f] sm:$0xff]
      %v2582 = vld [vmem:[#allocation2 + $0x67] sm:$0xff]
      %v2583 = vld [vmem:[#allocation2 + $0x6f] sm:$0xff]
      %v2584 = vld [vmem:[#allocation2 + $0x77] sm:$0xff]
      %v2585 = vld [vmem:[#allocation2 + $0x7f] sm:$0xff]
      %v2586 = vld [vmem:[#allocation2 + $0x87] sm:$0xff]
      %v2587 = vld [vmem:[#allocation2 + $0x8f] sm:$0xff]
      %v2588 = vld [vmem:[#allocation2 + $0x97] sm:$0xff]
      %v2589 = vld [vmem:[#allocation2 + $0x9f] sm:$0xff]
      %v2590 = vld [vmem:[#allocation2 + $0xa7] sm:$0xff]
      %v2591 = vld [vmem:[#allocation2 + $0xaf] sm:$0xff]
      %v2592 = vld [vmem:[#allocation2 + $0xb7] sm:$0xff]
      %v2593 = vld [vmem:[#allocation2 + $0xbf] sm:$0xff]
      %v2594 = vld [vmem:[#allocation2 + $0xc7] sm:$0xff]
      %v2595 = vld [vmem:[#allocation2 + $0xcf] sm:$0xff]
      %v2596 = vld [vmem:[#allocation2 + $0xd7] sm:$0xff]
      %v2597 = vld [vmem:[#allocation2 + $0xdf] sm:$0xff]
      %v2598 = vld [vmem:[#allocation2 + $0xe7] sm:$0xff]
      %v2599 = vld [vmem:[#allocation2 + $0xef] sm:$0xff]
      %v2600 = vld [vmem:[#allocation2 + $0xf7] sm:$0xff]
      %v2601 = vld [vmem:[#allocation2 + $0xff] sm:$0xff]
      %v2602 = vld [vmem:[#allocation2 + $0x107] sm:$0xff]
      %v2603 = vld [vmem:[#allocation2 + $0x10f] sm:$0xff]
      %v2604 = vsel %vm1338, %v2572, 0.0
      %v2605 = vsel %vm1339, %v2573, 0.0
      %v2606 = vsel %vm1340, %v2574, 0.0
      %v2607 = vsel %vm1341, %v2575, 0.0
      %v2608 = vsel %vm1342, %v2576, 0.0
      %v2609 = vsel %vm1343, %v2577, 0.0
      %v2610 = vsel %vm1344, %v2578, 0.0
      %v2611 = vsel %vm1345, %v2579, 0.0
      %v2612 = vsel %vm1346, %v2580, 0.0
      %v2613 = vsel %vm1347, %v2581, 0.0
      %v2614 = vsel %vm1348, %v2582, 0.0
      %v2615 = vsel %vm1349, %v2583, 0.0
      %v2616 = vsel %vm1350, %v2584, 0.0
      %v2617 = vsel %vm1351, %v2585, 0.0
      %v2618 = vsel %vm1352, %v2586, 0.0
      %v2619 = vsel %vm1353, %v2587, 0.0
      %v2620 = vsel %vm1354, %v2588, 0.0
      %v2621 = vsel %vm1355, %v2589, 0.0
      %v2622 = vsel %vm1356, %v2590, 0.0
      %v2623 = vsel %vm1357, %v2591, 0.0
      %v2624 = vsel %vm1358, %v2592, 0.0
      %v2625 = vsel %vm1359, %v2593, 0.0
      %v2626 = vsel %vm1360, %v2594, 0.0
      %v2627 = vsel %vm1361, %v2595, 0.0
      %v2628 = vsel %vm1362, %v2596, 0.0
      %v2629 = vsel %vm1363, %v2597, 0.0
      %v2630 = vsel %vm1364, %v2598, 0.0
      %v2631 = vsel %vm1365, %v2599, 0.0
      %v2632 = vsel %vm1366, %v2600, 0.0
      %v2633 = vsel %vm1367, %v2601, 0.0
      %v2634 = vsel %vm1368, %v2602, 0.0
      %v2635 = vsel %vm1369, %v2603, 0.0
      %s2636 = scalar_lea.vmem %s4, 12
      %v2637 = vld [vmem:[%s2636] sm:$0xf]
      %v2639 = vsel %vm535, %v2604, 0
      %v2642 = vsel %vm535, %v2605, 0
      %v2645 = vsel %vm535, %v2606, 0
      %v2648 = vsel %vm535, %v2607, 0
      %v2651 = vsel %vm535, %v2608, 0
      %v2654 = vsel %vm535, %v2609, 0
      %v2657 = vsel %vm535, %v2610, 0
      %v2660 = vsel %vm535, %v2611, 0
      %v2663 = vsel %vm535, %v2612, 0
      %v2666 = vsel %vm535, %v2613, 0
      %v2669 = vsel %vm535, %v2614, 0
      %v2672 = vsel %vm535, %v2615, 0
      %v2675 = vsel %vm535, %v2616, 0
      %v2678 = vsel %vm535, %v2617, 0
      %v2681 = vsel %vm535, %v2618, 0
      %v2684 = vsel %vm535, %v2619, 0
      %v2687 = vsel %vm535, %v2620, 0
      %v2690 = vsel %vm535, %v2621, 0
      %v2693 = vsel %vm535, %v2622, 0
      %v2696 = vsel %vm535, %v2623, 0
      %v2699 = vsel %vm535, %v2624, 0
      %v2702 = vsel %vm535, %v2625, 0
      %v2705 = vsel %vm535, %v2626, 0
      %v2708 = vsel %vm535, %v2627, 0
      %v2711 = vsel %vm535, %v2628, 0
      %v2714 = vsel %vm535, %v2629, 0
      %v2717 = vsel %vm535, %v2630, 0
      %v2720 = vsel %vm535, %v2631, 0
      %v2723 = vsel %vm535, %v2632, 0
      %v2726 = vsel %vm535, %v2633, 0
      %v2729 = vsel %vm535, %v2634, 0
      %v2732 = vsel %vm535, %v2635, 0
      %v2735 = vsel %vm1533, %v2637, 0
      %2737 = vmatprep.subr.mxu0 0.0
      %2738 = vmatpush1.msra.mxu0 %v2735
      %2739 = vmatprep.subr.mxu0 0.0
      %2740 = vmatpush1.msra.mxu0 0.0
      %2741 = vmatprep.subr.mxu0 0.0
      %2742 = vmatpush1.msra.mxu0 0.0
      %2743 = vmatprep.subr.mxu0 0.0
      %2744 = vmatpush1.msra.mxu0 0.0
      %2745 = vmatprep.subr.mxu0 0.0
      %2746 = vmatpush1.msra.mxu0 0.0
      %2747 = vmatprep.subr.mxu0 0.0
      %2748 = vmatpush1.msra.mxu0 0.0
      %2749 = vmatprep.subr.mxu0 0.0
      %2750 = vmatpush1.msra.mxu0 0.0
      %2751 = vmatprep.subr.mxu0 0.0
      %2752 = vmatpush1.msra.mxu0 0.0
      %2753 = vmatprep.subr.mxu0 0.0
      %2754 = vmatpush1.msra.mxu0 0.0
      %2755 = vmatprep.subr.mxu0 0.0
      %2756 = vmatpush1.msra.mxu0 0.0
      %2757 = vmatprep.subr.mxu0 0.0
      %2758 = vmatpush1.msra.mxu0 0.0
      %2759 = vmatprep.subr.mxu0 0.0
      %2760 = vmatpush1.msra.mxu0 0.0
      %2761 = vmatprep.subr.mxu0 0.0
      %2762 = vmatpush1.msra.mxu0 0.0
      %2763 = vmatprep.subr.mxu0 0.0
      %2764 = vmatpush1.msra.mxu0 0.0
      %2765 = vmatprep.subr.mxu0 0.0
      %2766 = vmatpush1.msra.mxu0 0.0
      %2767 = vmatprep.subr.mxu0 0.0
      %2768 = vmatpush1.msra.mxu0 0.0
      %2769 = vmatprep.subr.mxu0 0.0
      %2770 = vmatpush1.msra.mxu0 0.0
      %2771 = vmatprep.subr.mxu0 0.0
      %2772 = vmatpush1.msra.mxu0 0.0
      %2773 = vmatprep.subr.mxu0 0.0
      %2774 = vmatpush1.msra.mxu0 0.0
      %2775 = vmatprep.subr.mxu0 0.0
      %2776 = vmatpush1.msra.mxu0 0.0
      %2777 = vmatprep.subr.mxu0 0.0
      %2778 = vmatpush1.msra.mxu0 0.0
      %2779 = vmatprep.subr.mxu0 0.0
      %2780 = vmatpush1.msra.mxu0 0.0
      %2781 = vmatprep.subr.mxu0 0.0
      %2782 = vmatpush1.msra.mxu0 0.0
      %2783 = vmatprep.subr.mxu0 0.0
      %2784 = vmatpush1.msra.mxu0 0.0
      %2785 = vmatprep.subr.mxu0 0.0
      %2786 = vmatpush1.msra.mxu0 0.0
      %2787 = vmatprep.subr.mxu0 0.0
      %2788 = vmatpush1.msra.mxu0 0.0
      %2789 = vmatprep.subr.mxu0 0.0
      %2790 = vmatpush1.msra.mxu0 0.0
      %2791 = vmatprep.subr.mxu0 0.0
      %2792 = vmatpush1.msra.mxu0 0.0
      %2793 = vmatprep.subr.mxu0 0.0
      %2794 = vmatpush1.msra.mxu0 0.0
      %2795 = vmatprep.subr.mxu0 0.0
      %2796 = vmatpush1.msra.mxu0 0.0
      %2797 = vmatprep.subr.mxu0 0.0
      %2798 = vmatpush1.msra.mxu0 0.0
      %2799 = vmatprep.subr.mxu0 0.0
      %2800 = vmatpush1.msra.mxu0 0.0
      %2801 = vmatprep.mubr.f32.mxu0 0.0
      %2802 = vmatmul.mubr.f32.gmra.mrb[0].mxu0 %v2639
      %v2803 = vpop.f32.mrb[0].mxu0
      %v2804 = vadd.f32 0.0, %v2803
      %v2805 = vpop.f32.mrb[0].mxu0
      %2806 = vmatprep.mubr.f32.mxu0 0.0
      %2807 = vmatmul.mubr.f32.gmra.mrb[0].mxu0 %v2642
      %v2808 = vpop.f32.mrb[0].mxu0
      %v2809 = vadd.f32 0.0, %v2808
      %v2810 = vpop.f32.mrb[0].mxu0
      %2811 = vmatprep.mubr.f32.mxu0 0.0
      %2812 = vmatmul.mubr.f32.gmra.mrb[0].mxu0 %v2645
      %v2813 = vpop.f32.mrb[0].mxu0
      %v2814 = vadd.f32 0.0, %v2813
      %v2815 = vpop.f32.mrb[0].mxu0
      %2816 = vmatprep.mubr.f32.mxu0 0.0
      %2817 = vmatmul.mubr.f32.gmra.mrb[0].mxu0 %v2648
      %v2818 = vpop.f32.mrb[0].mxu0
      %v2819 = vadd.f32 0.0, %v2818
      %v2820 = vpop.f32.mrb[0].mxu0
      %2821 = vmatprep.mubr.f32.mxu0 0.0
      %2822 = vmatmul.mubr.f32.gmra.mrb[0].mxu0 %v2651
      %v2823 = vpop.f32.mrb[0].mxu0
      %v2824 = vadd.f32 0.0, %v2823
      %v2825 = vpop.f32.mrb[0].mxu0
      %2826 = vmatprep.mubr.f32.mxu0 0.0
      %2827 = vmatmul.mubr.f32.gmra.mrb[0].mxu0 %v2654
      %v2828 = vpop.f32.mrb[0].mxu0
      %v2829 = vadd.f32 0.0, %v2828
      %v2830 = vpop.f32.mrb[0].mxu0
      %2831 = vmatprep.mubr.f32.mxu0 0.0
      %2832 = vmatmul.mubr.f32.gmra.mrb[0].mxu0 %v2657
      %v2833 = vpop.f32.mrb[0].mxu0
      %v2834 = vadd.f32 0.0, %v2833
      %v2835 = vpop.f32.mrb[0].mxu0
      %2836 = vmatprep.mubr.f32.mxu0 0.0
      %2837 = vmatmul.mubr.f32.gmra.mrb[0].mxu0 %v2660
      %v2838 = vpop.f32.mrb[0].mxu0
      %v2839 = vadd.f32 0.0, %v2838
      %v2840 = vpop.f32.mrb[0].mxu0
      %2841 = vmatprep.mubr.f32.mxu0 0.0
      %2842 = vmatmul.mubr.f32.gmra.mrb[0].mxu0 %v2663
      %v2843 = vpop.f32.mrb[0].mxu0
      %v2844 = vadd.f32 0.0, %v2843
      %v2845 = vpop.f32.mrb[0].mxu0
      %2846 = vmatprep.mubr.f32.mxu0 0.0
      %2847 = vmatmul.mubr.f32.gmra.mrb[0].mxu0 %v2666
      %v2848 = vpop.f32.mrb[0].mxu0
      %v2849 = vadd.f32 0.0, %v2848
      %v2850 = vpop.f32.mrb[0].mxu0
      %2851 = vmatprep.mubr.f32.mxu0 0.0
      %2852 = vmatmul.mubr.f32.gmra.mrb[0].mxu0 %v2669
      %v2853 = vpop.f32.mrb[0].mxu0
      %v2854 = vadd.f32 0.0, %v2853
      %v2855 = vpop.f32.mrb[0].mxu0
      %2856 = vmatprep.mubr.f32.mxu0 0.0
      %2857 = vmatmul.mubr.f32.gmra.mrb[0].mxu0 %v2672
      %v2858 = vpop.f32.mrb[0].mxu0
      %v2859 = vadd.f32 0.0, %v2858
      %v2860 = vpop.f32.mrb[0].mxu0
      %2861 = vmatprep.mubr.f32.mxu0 0.0
      %2862 = vmatmul.mubr.f32.gmra.mrb[0].mxu0 %v2675
      %v2863 = vpop.f32.mrb[0].mxu0
      %v2864 = vadd.f32 0.0, %v2863
      %v2865 = vpop.f32.mrb[0].mxu0
      %2866 = vmatprep.mubr.f32.mxu0 0.0
      %2867 = vmatmul.mubr.f32.gmra.mrb[0].mxu0 %v2678
      %v2868 = vpop.f32.mrb[0].mxu0
      %v2869 = vadd.f32 0.0, %v2868
      %v2870 = vpop.f32.mrb[0].mxu0
      %2871 = vmatprep.mubr.f32.mxu0 0.0
      %2872 = vmatmul.mubr.f32.gmra.mrb[0].mxu0 %v2681
      %v2873 = vpop.f32.mrb[0].mxu0
      %v2874 = vadd.f32 0.0, %v2873
      %v2875 = vpop.f32.mrb[0].mxu0
      %2876 = vmatprep.mubr.f32.mxu0 0.0
      %2877 = vmatmul.mubr.f32.gmra.mrb[0].mxu0 %v2684
      %v2878 = vpop.f32.mrb[0].mxu0
      %v2879 = vadd.f32 0.0, %v2878
      %v2880 = vpop.f32.mrb[0].mxu0
      %2881 = vmatprep.mubr.f32.mxu0 0.0
      %2882 = vmatmul.mubr.f32.gmra.mrb[0].mxu0 %v2687
      %v2883 = vpop.f32.mrb[0].mxu0
      %v2884 = vadd.f32 0.0, %v2883
      %v2885 = vpop.f32.mrb[0].mxu0
      %2886 = vmatprep.mubr.f32.mxu0 0.0
      %2887 = vmatmul.mubr.f32.gmra.mrb[0].mxu0 %v2690
      %v2888 = vpop.f32.mrb[0].mxu0
      %v2889 = vadd.f32 0.0, %v2888
      %v2890 = vpop.f32.mrb[0].mxu0
      %2891 = vmatprep.mubr.f32.mxu0 0.0
      %2892 = vmatmul.mubr.f32.gmra.mrb[0].mxu0 %v2693
      %v2893 = vpop.f32.mrb[0].mxu0
      %v2894 = vadd.f32 0.0, %v2893
      %v2895 = vpop.f32.mrb[0].mxu0
      %2896 = vmatprep.mubr.f32.mxu0 0.0
      %2897 = vmatmul.mubr.f32.gmra.mrb[0].mxu0 %v2696
      %v2898 = vpop.f32.mrb[0].mxu0
      %v2899 = vadd.f32 0.0, %v2898
      %v2900 = vpop.f32.mrb[0].mxu0
      %2901 = vmatprep.mubr.f32.mxu0 0.0
      %2902 = vmatmul.mubr.f32.gmra.mrb[0].mxu0 %v2699
      %v2903 = vpop.f32.mrb[0].mxu0
      %v2904 = vadd.f32 0.0, %v2903
      %v2905 = vpop.f32.mrb[0].mxu0
      %2906 = vmatprep.mubr.f32.mxu0 0.0
      %2907 = vmatmul.mubr.f32.gmra.mrb[0].mxu0 %v2702
      %v2908 = vpop.f32.mrb[0].mxu0
      %v2909 = vadd.f32 0.0, %v2908
      %v2910 = vpop.f32.mrb[0].mxu0
      %2911 = vmatprep.mubr.f32.mxu0 0.0
      %2912 = vmatmul.mubr.f32.gmra.mrb[0].mxu0 %v2705
      %v2913 = vpop.f32.mrb[0].mxu0
      %v2914 = vadd.f32 0.0, %v2913
      %v2915 = vpop.f32.mrb[0].mxu0
      %2916 = vmatprep.mubr.f32.mxu0 0.0
      %2917 = vmatmul.mubr.f32.gmra.mrb[0].mxu0 %v2708
      %v2918 = vpop.f32.mrb[0].mxu0
      %v2919 = vadd.f32 0.0, %v2918
      %v2920 = vpop.f32.mrb[0].mxu0
      %2921 = vmatprep.mubr.f32.mxu0 0.0
      %2922 = vmatmul.mubr.f32.gmra.mrb[0].mxu0 %v2711
      %v2923 = vpop.f32.mrb[0].mxu0
      %v2924 = vadd.f32 0.0, %v2923
      %v2925 = vpop.f32.mrb[0].mxu0
      %2926 = vmatprep.mubr.f32.mxu0 0.0
      %2927 = vmatmul.mubr.f32.gmra.mrb[0].mxu0 %v2714
      %v2928 = vpop.f32.mrb[0].mxu0
      %v2929 = vadd.f32 0.0, %v2928
      %v2930 = vpop.f32.mrb[0].mxu0
      %2931 = vmatprep.mubr.f32.mxu0 0.0
      %2932 = vmatmul.mubr.f32.gmra.mrb[0].mxu0 %v2717
      %v2933 = vpop.f32.mrb[0].mxu0
      %v2934 = vadd.f32 0.0, %v2933
      %v2935 = vpop.f32.mrb[0].mxu0
      %2936 = vmatprep.mubr.f32.mxu0 0.0
      %2937 = vmatmul.mubr.f32.gmra.mrb[0].mxu0 %v2720
      %v2938 = vpop.f32.mrb[0].mxu0
      %v2939 = vadd.f32 0.0, %v2938
      %v2940 = vpop.f32.mrb[0].mxu0
      %2941 = vmatprep.mubr.f32.mxu0 0.0
      %2942 = vmatmul.mubr.f32.gmra.mrb[0].mxu0 %v2723
      %v2943 = vpop.f32.mrb[0].mxu0
      %v2944 = vadd.f32 0.0, %v2943
      %v2945 = vpop.f32.mrb[0].mxu0
      %2946 = vmatprep.mubr.f32.mxu0 0.0
      %2947 = vmatmul.mubr.f32.gmra.mrb[0].mxu0 %v2726
      %v2948 = vpop.f32.mrb[0].mxu0
      %v2949 = vadd.f32 0.0, %v2948
      %v2950 = vpop.f32.mrb[0].mxu0
      %2951 = vmatprep.mubr.f32.mxu0 0.0
      %2952 = vmatmul.mubr.f32.gmra.mrb[0].mxu0 %v2729
      %v2953 = vpop.f32.mrb[0].mxu0
      %v2954 = vadd.f32 0.0, %v2953
      %v2955 = vpop.f32.mrb[0].mxu0
      %2956 = vmatprep.mubr.f32.mxu0 0.0
      %2957 = vmatmul.mubr.f32.gmra.mrb[0].mxu0 %v2732
      %v2958 = vpop.f32.mrb[0].mxu0
      %v2959 = vadd.f32 0.0, %v2958
      %v2960 = vpop.f32.mrb[0].mxu0
      %2961 = vdwg.mxu0
      %v2962 = vadd.f32 %v2540, %v2804
      %v2963 = vadd.f32 %v2541, %v2809
      %v2964 = vadd.f32 %v2542, %v2814
      %v2965 = vadd.f32 %v2543, %v2819
      %v2966 = vadd.f32 %v2544, %v2824
      %v2967 = vadd.f32 %v2545, %v2829
      %v2968 = vadd.f32 %v2546, %v2834
      %v2969 = vadd.f32 %v2547, %v2839
      %v2970 = vadd.f32 %v2548, %v2844
      %v2971 = vadd.f32 %v2549, %v2849
      %v2972 = vadd.f32 %v2550, %v2854
      %v2973 = vadd.f32 %v2551, %v2859
      %v2974 = vadd.f32 %v2552, %v2864
      %v2975 = vadd.f32 %v2553, %v2869
      %v2976 = vadd.f32 %v2554, %v2874
      %v2977 = vadd.f32 %v2555, %v2879
      %v2978 = vadd.f32 %v2556, %v2884
      %v2979 = vadd.f32 %v2557, %v2889
      %v2980 = vadd.f32 %v2558, %v2894
      %v2981 = vadd.f32 %v2559, %v2899
      %v2982 = vadd.f32 %v2560, %v2904
      %v2983 = vadd.f32 %v2561, %v2909
      %v2984 = vadd.f32 %v2562, %v2914
      %v2985 = vadd.f32 %v2563, %v2919
      %v2986 = vadd.f32 %v2564, %v2924
      %v2987 = vadd.f32 %v2565, %v2929
      %v2988 = vadd.f32 %v2566, %v2934
      %v2989 = vadd.f32 %v2567, %v2939
      %v2990 = vadd.f32 %v2568, %v2944
      %v2991 = vadd.f32 %v2569, %v2949
      %v2992 = vadd.f32 %v2570, %v2954
      %v2993 = vadd.f32 %v2571, %v2959
      %v2994 = vld [vmem:[#allocation2 + $0x18] sm:$0xff]
      %v2995 = vld [vmem:[#allocation2 + $0x20] sm:$0xff]
      %v2996 = vld [vmem:[#allocation2 + $0x28] sm:$0xff]
      %v2997 = vld [vmem:[#allocation2 + $0x30] sm:$0xff]
      %v2998 = vld [vmem:[#allocation2 + $0x38] sm:$0xff]
      %v2999 = vld [vmem:[#allocation2 + $0x40] sm:$0xff]
      %v3000 = vld [vmem:[#allocation2 + $0x48] sm:$0xff]
      %v3001 = vld [vmem:[#allocation2 + $0x50] sm:$0xff]
      %v3002 = vld [vmem:[#allocation2 + $0x58] sm:$0xff]
      %v3003 = vld [vmem:[#allocation2 + $0x60] sm:$0xff]
      %v3004 = vld [vmem:[#allocation2 + $0x68] sm:$0xff]
      %v3005 = vld [vmem:[#allocation2 + $0x70] sm:$0xff]
      %v3006 = vld [vmem:[#allocation2 + $0x78] sm:$0xff]
      %v3007 = vld [vmem:[#allocation2 + $0x80] sm:$0xff]
      %v3008 = vld [vmem:[#allocation2 + $0x88] sm:$0xff]
      %v3009 = vld [vmem:[#allocation2 + $0x90] sm:$0xff]
      %v3010 = vld [vmem:[#allocation2 + $0x98] sm:$0xff]
      %v3011 = vld [vmem:[#allocation2 + $0xa0] sm:$0xff]
      %v3012 = vld [vmem:[#allocation2 + $0xa8] sm:$0xff]
      %v3013 = vld [vmem:[#allocation2 + $0xb0] sm:$0xff]
      %v3014 = vld [vmem:[#allocation2 + $0xb8] sm:$0xff]
      %v3015 = vld [vmem:[#allocation2 + $0xc0] sm:$0xff]
      %v3016 = vld [vmem:[#allocation2 + $0xc8] sm:$0xff]
      %v3017 = vld [vmem:[#allocation2 + $0xd0] sm:$0xff]
      %v3018 = vld [vmem:[#allocation2 + $0xd8] sm:$0xff]
      %v3019 = vld [vmem:[#allocation2 + $0xe0] sm:$0xff]
      %v3020 = vld [vmem:[#allocation2 + $0xe8] sm:$0xff]
      %v3021 = vld [vmem:[#allocation2 + $0xf0] sm:$0xff]
      %v3022 = vld [vmem:[#allocation2 + $0xf8] sm:$0xff]
      %v3023 = vld [vmem:[#allocation2 + $0x100] sm:$0xff]
      %v3024 = vld [vmem:[#allocation2 + $0x108] sm:$0xff]
      %v3025 = vld [vmem:[#allocation2 + $0x110] sm:$0xff]
      %s3026 = scalar_lea.vmem %s4, 16
      %v3027 = vld [vmem:[%s3026] sm:$0xf]
      %v3029 = vsel %vm535, %v2994, 0
      %v3032 = vsel %vm535, %v2995, 0
      %v3035 = vsel %vm535, %v2996, 0
      %v3038 = vsel %vm535, %v2997, 0
      %v3041 = vsel %vm535, %v2998, 0
      %v3044 = vsel %vm535, %v2999, 0
      %v3047 = vsel %vm535, %v3000, 0
      %v3050 = vsel %vm535, %v3001, 0
      %v3053 = vsel %vm535, %v3002, 0
      %v3056 = vsel %vm535, %v3003, 0
      %v3059 = vsel %vm535, %v3004, 0
      %v3062 = vsel %vm535, %v3005, 0
      %v3065 = vsel %vm535, %v3006, 0
      %v3068 = vsel %vm535, %v3007, 0
      %v3071 = vsel %vm535, %v3008, 0
      %v3074 = vsel %vm535, %v3009, 0
      %v3077 = vsel %vm535, %v3010, 0
      %v3080 = vsel %vm535, %v3011, 0
      %v3083 = vsel %vm535, %v3012, 0
      %v3086 = vsel %vm535, %v3013, 0
      %v3089 = vsel %vm535, %v3014, 0
      %v3092 = vsel %vm535, %v3015, 0
      %v3095 = vsel %vm535, %v3016, 0
      %v3098 = vsel %vm535, %v3017, 0
      %v3101 = vsel %vm535, %v3018, 0
      %v3104 = vsel %vm535, %v3019, 0
      %v3107 = vsel %vm535, %v3020, 0
      %v3110 = vsel %vm535, %v3021, 0
      %v3113 = vsel %vm535, %v3022, 0
      %v3116 = vsel %vm535, %v3023, 0
      %v3119 = vsel %vm535, %v3024, 0
      %v3122 = vsel %vm535, %v3025, 0
      %v3125 = vsel %vm1533, %v3027, 0
      %3127 = vmatprep.subr.mxu0 0.0
      %3128 = vmatpush1.msra.mxu0 %v3125
      %3129 = vmatprep.subr.mxu0 0.0
      %3130 = vmatpush1.msra.mxu0 0.0
      %3131 = vmatprep.subr.mxu0 0.0
      %3132 = vmatpush1.msra.mxu0 0.0
      %3133 = vmatprep.subr.mxu0 0.0
      %3134 = vmatpush1.msra.mxu0 0.0
      %3135 = vmatprep.subr.mxu0 0.0
      %3136 = vmatpush1.msra.mxu0 0.0
      %3137 = vmatprep.subr.mxu0 0.0
      %3138 = vmatpush1.msra.mxu0 0.0
      %3139 = vmatprep.subr.mxu0 0.0
      %3140 = vmatpush1.msra.mxu0 0.0
      %3141 = vmatprep.subr.mxu0 0.0
      %3142 = vmatpush1.msra.mxu0 0.0
      %3143 = vmatprep.subr.mxu0 0.0
      %3144 = vmatpush1.msra.mxu0 0.0
      %3145 = vmatprep.subr.mxu0 0.0
      %3146 = vmatpush1.msra.mxu0 0.0
      %3147 = vmatprep.subr.mxu0 0.0
      %3148 = vmatpush1.msra.mxu0 0.0
      %3149 = vmatprep.subr.mxu0 0.0
      %3150 = vmatpush1.msra.mxu0 0.0
      %3151 = vmatprep.subr.mxu0 0.0
      %3152 = vmatpush1.msra.mxu0 0.0
      %3153 = vmatprep.subr.mxu0 0.0
      %3154 = vmatpush1.msra.mxu0 0.0
      %3155 = vmatprep.subr.mxu0 0.0
      %3156 = vmatpush1.msra.mxu0 0.0
      %3157 = vmatprep.subr.mxu0 0.0
      %3158 = vmatpush1.msra.mxu0 0.0
      %3159 = vmatprep.subr.mxu0 0.0
      %3160 = vmatpush1.msra.mxu0 0.0
      %3161 = vmatprep.subr.mxu0 0.0
      %3162 = vmatpush1.msra.mxu0 0.0
      %3163 = vmatprep.subr.mxu0 0.0
      %3164 = vmatpush1.msra.mxu0 0.0
      %3165 = vmatprep.subr.mxu0 0.0
      %3166 = vmatpush1.msra.mxu0 0.0
      %3167 = vmatprep.subr.mxu0 0.0
      %3168 = vmatpush1.msra.mxu0 0.0
      %3169 = vmatprep.subr.mxu0 0.0
      %3170 = vmatpush1.msra.mxu0 0.0
      %3171 = vmatprep.subr.mxu0 0.0
      %3172 = vmatpush1.msra.mxu0 0.0
      %3173 = vmatprep.subr.mxu0 0.0
      %3174 = vmatpush1.msra.mxu0 0.0
      %3175 = vmatprep.subr.mxu0 0.0
      %3176 = vmatpush1.msra.mxu0 0.0
      %3177 = vmatprep.subr.mxu0 0.0
      %3178 = vmatpush1.msra.mxu0 0.0
      %3179 = vmatprep.subr.mxu0 0.0
      %3180 = vmatpush1.msra.mxu0 0.0
      %3181 = vmatprep.subr.mxu0 0.0
      %3182 = vmatpush1.msra.mxu0 0.0
      %3183 = vmatprep.subr.mxu0 0.0
      %3184 = vmatpush1.msra.mxu0 0.0
      %3185 = vmatprep.subr.mxu0 0.0
      %3186 = vmatpush1.msra.mxu0 0.0
      %3187 = vmatprep.subr.mxu0 0.0
      %3188 = vmatpush1.msra.mxu0 0.0
      %3189 = vmatprep.subr.mxu0 0.0
      %3190 = vmatpush1.msra.mxu0 0.0
      %3191 = vmatprep.mubr.f32.mxu0 0.0
      %3192 = vmatmul.mubr.f32.gmra.mrb[0].mxu0 %v3029
      %v3193 = vpop.f32.mrb[0].mxu0
      %v3194 = vadd.f32 0.0, %v3193
      %v3195 = vpop.f32.mrb[0].mxu0
      %3196 = vmatprep.mubr.f32.mxu0 0.0
      %3197 = vmatmul.mubr.f32.gmra.mrb[0].mxu0 %v3032
      %v3198 = vpop.f32.mrb[0].mxu0
      %v3199 = vadd.f32 0.0, %v3198
      %v3200 = vpop.f32.mrb[0].mxu0
      %3201 = vmatprep.mubr.f32.mxu0 0.0
      %3202 = vmatmul.mubr.f32.gmra.mrb[0].mxu0 %v3035
      %v3203 = vpop.f32.mrb[0].mxu0
      %v3204 = vadd.f32 0.0, %v3203
      %v3205 = vpop.f32.mrb[0].mxu0
      %3206 = vmatprep.mubr.f32.mxu0 0.0
      %3207 = vmatmul.mubr.f32.gmra.mrb[0].mxu0 %v3038
      %v3208 = vpop.f32.mrb[0].mxu0
      %v3209 = vadd.f32 0.0, %v3208
      %v3210 = vpop.f32.mrb[0].mxu0
      %3211 = vmatprep.mubr.f32.mxu0 0.0
      %3212 = vmatmul.mubr.f32.gmra.mrb[0].mxu0 %v3041
      %v3213 = vpop.f32.mrb[0].mxu0
      %v3214 = vadd.f32 0.0, %v3213
      %v3215 = vpop.f32.mrb[0].mxu0
      %3216 = vmatprep.mubr.f32.mxu0 0.0
      %3217 = vmatmul.mubr.f32.gmra.mrb[0].mxu0 %v3044
      %v3218 = vpop.f32.mrb[0].mxu0
      %v3219 = vadd.f32 0.0, %v3218
      %v3220 = vpop.f32.mrb[0].mxu0
      %3221 = vmatprep.mubr.f32.mxu0 0.0
      %3222 = vmatmul.mubr.f32.gmra.mrb[0].mxu0 %v3047
      %v3223 = vpop.f32.mrb[0].mxu0
      %v3224 = vadd.f32 0.0, %v3223
      %v3225 = vpop.f32.mrb[0].mxu0
      %3226 = vmatprep.mubr.f32.mxu0 0.0
      %3227 = vmatmul.mubr.f32.gmra.mrb[0].mxu0 %v3050
      %v3228 = vpop.f32.mrb[0].mxu0
      %v3229 = vadd.f32 0.0, %v3228
      %v3230 = vpop.f32.mrb[0].mxu0
      %3231 = vmatprep.mubr.f32.mxu0 0.0
      %3232 = vmatmul.mubr.f32.gmra.mrb[0].mxu0 %v3053
      %v3233 = vpop.f32.mrb[0].mxu0
      %v3234 = vadd.f32 0.0, %v3233
      %v3235 = vpop.f32.mrb[0].mxu0
      %3236 = vmatprep.mubr.f32.mxu0 0.0
      %3237 = vmatmul.mubr.f32.gmra.mrb[0].mxu0 %v3056
      %v3238 = vpop.f32.mrb[0].mxu0
      %v3239 = vadd.f32 0.0, %v3238
      %v3240 = vpop.f32.mrb[0].mxu0
      %3241 = vmatprep.mubr.f32.mxu0 0.0
      %3242 = vmatmul.mubr.f32.gmra.mrb[0].mxu0 %v3059
      %v3243 = vpop.f32.mrb[0].mxu0
      %v3244 = vadd.f32 0.0, %v3243
      %v3245 = vpop.f32.mrb[0].mxu0
      %3246 = vmatprep.mubr.f32.mxu0 0.0
      %3247 = vmatmul.mubr.f32.gmra.mrb[0].mxu0 %v3062
      %v3248 = vpop.f32.mrb[0].mxu0
      %v3249 = vadd.f32 0.0, %v3248
      %v3250 = vpop.f32.mrb[0].mxu0
      %3251 = vmatprep.mubr.f32.mxu0 0.0
      %3252 = vmatmul.mubr.f32.gmra.mrb[0].mxu0 %v3065
      %v3253 = vpop.f32.mrb[0].mxu0
      %v3254 = vadd.f32 0.0, %v3253
      %v3255 = vpop.f32.mrb[0].mxu0
      %3256 = vmatprep.mubr.f32.mxu0 0.0
      %3257 = vmatmul.mubr.f32.gmra.mrb[0].mxu0 %v3068
      %v3258 = vpop.f32.mrb[0].mxu0
      %v3259 = vadd.f32 0.0, %v3258
      %v3260 = vpop.f32.mrb[0].mxu0
      %3261 = vmatprep.mubr.f32.mxu0 0.0
      %3262 = vmatmul.mubr.f32.gmra.mrb[0].mxu0 %v3071
      %v3263 = vpop.f32.mrb[0].mxu0
      %v3264 = vadd.f32 0.0, %v3263
      %v3265 = vpop.f32.mrb[0].mxu0
      %3266 = vmatprep.mubr.f32.mxu0 0.0
      %3267 = vmatmul.mubr.f32.gmra.mrb[0].mxu0 %v3074
      %v3268 = vpop.f32.mrb[0].mxu0
      %v3269 = vadd.f32 0.0, %v3268
      %v3270 = vpop.f32.mrb[0].mxu0
      %3271 = vmatprep.mubr.f32.mxu0 0.0
      %3272 = vmatmul.mubr.f32.gmra.mrb[0].mxu0 %v3077
      %v3273 = vpop.f32.mrb[0].mxu0
      %v3274 = vadd.f32 0.0, %v3273
      %v3275 = vpop.f32.mrb[0].mxu0
      %3276 = vmatprep.mubr.f32.mxu0 0.0
      %3277 = vmatmul.mubr.f32.gmra.mrb[0].mxu0 %v3080
      %v3278 = vpop.f32.mrb[0].mxu0
      %v3279 = vadd.f32 0.0, %v3278
      %v3280 = vpop.f32.mrb[0].mxu0
      %3281 = vmatprep.mubr.f32.mxu0 0.0
      %3282 = vmatmul.mubr.f32.gmra.mrb[0].mxu0 %v3083
      %v3283 = vpop.f32.mrb[0].mxu0
      %v3284 = vadd.f32 0.0, %v3283
      %v3285 = vpop.f32.mrb[0].mxu0
      %3286 = vmatprep.mubr.f32.mxu0 0.0
      %3287 = vmatmul.mubr.f32.gmra.mrb[0].mxu0 %v3086
      %v3288 = vpop.f32.mrb[0].mxu0
      %v3289 = vadd.f32 0.0, %v3288
      %v3290 = vpop.f32.mrb[0].mxu0
      %3291 = vmatprep.mubr.f32.mxu0 0.0
      %3292 = vmatmul.mubr.f32.gmra.mrb[0].mxu0 %v3089
      %v3293 = vpop.f32.mrb[0].mxu0
      %v3294 = vadd.f32 0.0, %v3293
      %v3295 = vpop.f32.mrb[0].mxu0
      %3296 = vmatprep.mubr.f32.mxu0 0.0
      %3297 = vmatmul.mubr.f32.gmra.mrb[0].mxu0 %v3092
      %v3298 = vpop.f32.mrb[0].mxu0
      %v3299 = vadd.f32 0.0, %v3298
      %v3300 = vpop.f32.mrb[0].mxu0
      %3301 = vmatprep.mubr.f32.mxu0 0.0
      %3302 = vmatmul.mubr.f32.gmra.mrb[0].mxu0 %v3095
      %v3303 = vpop.f32.mrb[0].mxu0
      %v3304 = vadd.f32 0.0, %v3303
      %v3305 = vpop.f32.mrb[0].mxu0
      %3306 = vmatprep.mubr.f32.mxu0 0.0
      %3307 = vmatmul.mubr.f32.gmra.mrb[0].mxu0 %v3098
      %v3308 = vpop.f32.mrb[0].mxu0
      %v3309 = vadd.f32 0.0, %v3308
      %v3310 = vpop.f32.mrb[0].mxu0
      %3311 = vmatprep.mubr.f32.mxu0 0.0
      %3312 = vmatmul.mubr.f32.gmra.mrb[0].mxu0 %v3101
      %v3313 = vpop.f32.mrb[0].mxu0
      %v3314 = vadd.f32 0.0, %v3313
      %v3315 = vpop.f32.mrb[0].mxu0
      %3316 = vmatprep.mubr.f32.mxu0 0.0
      %3317 = vmatmul.mubr.f32.gmra.mrb[0].mxu0 %v3104
      %v3318 = vpop.f32.mrb[0].mxu0
      %v3319 = vadd.f32 0.0, %v3318
      %v3320 = vpop.f32.mrb[0].mxu0
      %3321 = vmatprep.mubr.f32.mxu0 0.0
      %3322 = vmatmul.mubr.f32.gmra.mrb[0].mxu0 %v3107
      %v3323 = vpop.f32.mrb[0].mxu0
      %v3324 = vadd.f32 0.0, %v3323
      %v3325 = vpop.f32.mrb[0].mxu0
      %3326 = vmatprep.mubr.f32.mxu0 0.0
      %3327 = vmatmul.mubr.f32.gmra.mrb[0].mxu0 %v3110
      %v3328 = vpop.f32.mrb[0].mxu0
      %v3329 = vadd.f32 0.0, %v3328
      %v3330 = vpop.f32.mrb[0].mxu0
      %3331 = vmatprep.mubr.f32.mxu0 0.0
      %3332 = vmatmul.mubr.f32.gmra.mrb[0].mxu0 %v3113
      %v3333 = vpop.f32.mrb[0].mxu0
      %v3334 = vadd.f32 0.0, %v3333
      %v3335 = vpop.f32.mrb[0].mxu0
      %3336 = vmatprep.mubr.f32.mxu0 0.0
      %3337 = vmatmul.mubr.f32.gmra.mrb[0].mxu0 %v3116
      %v3338 = vpop.f32.mrb[0].mxu0
      %v3339 = vadd.f32 0.0, %v3338
      %v3340 = vpop.f32.mrb[0].mxu0
      %3341 = vmatprep.mubr.f32.mxu0 0.0
      %3342 = vmatmul.mubr.f32.gmra.mrb[0].mxu0 %v3119
      %v3343 = vpop.f32.mrb[0].mxu0
      %v3344 = vadd.f32 0.0, %v3343
      %v3345 = vpop.f32.mrb[0].mxu0
      %3346 = vmatprep.mubr.f32.mxu0 0.0
      %3347 = vmatmul.mubr.f32.gmra.mrb[0].mxu0 %v3122
      %v3348 = vpop.f32.mrb[0].mxu0
      %v3349 = vadd.f32 0.0, %v3348
      %v3350 = vpop.f32.mrb[0].mxu0
      %3351 = vdwg.mxu0
      %v3352 = vadd.f32 %v2962, %v3194
      %v3353 = vadd.f32 %v2963, %v3199
      %v3354 = vadd.f32 %v2964, %v3204
      %v3355 = vadd.f32 %v2965, %v3209
      %v3356 = vadd.f32 %v2966, %v3214
      %v3357 = vadd.f32 %v2967, %v3219
      %v3358 = vadd.f32 %v2968, %v3224
      %v3359 = vadd.f32 %v2969, %v3229
      %v3360 = vadd.f32 %v2970, %v3234
      %v3361 = vadd.f32 %v2971, %v3239
      %v3362 = vadd.f32 %v2972, %v3244
      %v3363 = vadd.f32 %v2973, %v3249
      %v3364 = vadd.f32 %v2974, %v3254
      %v3365 = vadd.f32 %v2975, %v3259
      %v3366 = vadd.f32 %v2976, %v3264
      %v3367 = vadd.f32 %v2977, %v3269
      %v3368 = vadd.f32 %v2978, %v3274
      %v3369 = vadd.f32 %v2979, %v3279
      %v3370 = vadd.f32 %v2980, %v3284
      %v3371 = vadd.f32 %v2981, %v3289
      %v3372 = vadd.f32 %v2982, %v3294
      %v3373 = vadd.f32 %v2983, %v3299
      %v3374 = vadd.f32 %v2984, %v3304
      %v3375 = vadd.f32 %v2985, %v3309
      %v3376 = vadd.f32 %v2986, %v3314
      %v3377 = vadd.f32 %v2987, %v3319
      %v3378 = vadd.f32 %v2988, %v3324
      %v3379 = vadd.f32 %v2989, %v3329
      %v3380 = vadd.f32 %v2990, %v3334
      %v3381 = vadd.f32 %v2991, %v3339
      %v3382 = vadd.f32 %v2992, %v3344
      %v3383 = vadd.f32 %v2993, %v3349
      %v3384 = vld [vmem:[#allocation2 + $0x19] sm:$0xff]
      %v3385 = vld [vmem:[#allocation2 + $0x21] sm:$0xff]
      %v3386 = vld [vmem:[#allocation2 + $0x29] sm:$0xff]
      %v3387 = vld [vmem:[#allocation2 + $0x31] sm:$0xff]
      %v3388 = vld [vmem:[#allocation2 + $0x39] sm:$0xff]
      %v3389 = vld [vmem:[#allocation2 + $0x41] sm:$0xff]
      %v3390 = vld [vmem:[#allocation2 + $0x49] sm:$0xff]
      %v3391 = vld [vmem:[#allocation2 + $0x51] sm:$0xff]
      %v3392 = vld [vmem:[#allocation2 + $0x59] sm:$0xff]
      %v3393 = vld [vmem:[#allocation2 + $0x61] sm:$0xff]
      %v3394 = vld [vmem:[#allocation2 + $0x69] sm:$0xff]
      %v3395 = vld [vmem:[#allocation2 + $0x71] sm:$0xff]
      %v3396 = vld [vmem:[#allocation2 + $0x79] sm:$0xff]
      %v3397 = vld [vmem:[#allocation2 + $0x81] sm:$0xff]
      %v3398 = vld [vmem:[#allocation2 + $0x89] sm:$0xff]
      %v3399 = vld [vmem:[#allocation2 + $0x91] sm:$0xff]
      %v3400 = vld [vmem:[#allocation2 + $0x99] sm:$0xff]
      %v3401 = vld [vmem:[#allocation2 + $0xa1] sm:$0xff]
      %v3402 = vld [vmem:[#allocation2 + $0xa9] sm:$0xff]
      %v3403 = vld [vmem:[#allocation2 + $0xb1] sm:$0xff]
      %v3404 = vld [vmem:[#allocation2 + $0xb9] sm:$0xff]
      %v3405 = vld [vmem:[#allocation2 + $0xc1] sm:$0xff]
      %v3406 = vld [vmem:[#allocation2 + $0xc9] sm:$0xff]
      %v3407 = vld [vmem:[#allocation2 + $0xd1] sm:$0xff]
      %v3408 = vld [vmem:[#allocation2 + $0xd9] sm:$0xff]
      %v3409 = vld [vmem:[#allocation2 + $0xe1] sm:$0xff]
      %v3410 = vld [vmem:[#allocation2 + $0xe9] sm:$0xff]
      %v3411 = vld [vmem:[#allocation2 + $0xf1] sm:$0xff]
      %v3412 = vld [vmem:[#allocation2 + $0xf9] sm:$0xff]
      %v3413 = vld [vmem:[#allocation2 + $0x101] sm:$0xff]
      %v3414 = vld [vmem:[#allocation2 + $0x109] sm:$0xff]
      %v3415 = vld [vmem:[#allocation2 + $0x111] sm:$0xff]
      %v3416 = vsel %vm2150, %v3384, 0.0
      %v3417 = vsel %vm2151, %v3385, 0.0
      %v3418 = vsel %vm2152, %v3386, 0.0
      %v3419 = vsel %vm2153, %v3387, 0.0
      %v3420 = vsel %vm2154, %v3388, 0.0
      %v3421 = vsel %vm2155, %v3389, 0.0
      %v3422 = vsel %vm2156, %v3390, 0.0
      %v3423 = vsel %vm2157, %v3391, 0.0
      %v3424 = vsel %vm2158, %v3392, 0.0
      %v3425 = vsel %vm2159, %v3393, 0.0
      %v3426 = vsel %vm2160, %v3394, 0.0
      %v3427 = vsel %vm2161, %v3395, 0.0
      %v3428 = vsel %vm2162, %v3396, 0.0
      %v3429 = vsel %vm2163, %v3397, 0.0
      %v3430 = vsel %vm2164, %v3398, 0.0
      %v3431 = vsel %vm2165, %v3399, 0.0
      %v3432 = vsel %vm2166, %v3400, 0.0
      %v3433 = vsel %vm2167, %v3401, 0.0
      %v3434 = vsel %vm2168, %v3402, 0.0
      %v3435 = vsel %vm2169, %v3403, 0.0
      %v3436 = vsel %vm2170, %v3404, 0.0
      %v3437 = vsel %vm2171, %v3405, 0.0
      %v3438 = vsel %vm2172, %v3406, 0.0
      %v3439 = vsel %vm2173, %v3407, 0.0
      %v3440 = vsel %vm2174, %v3408, 0.0
      %v3441 = vsel %vm2175, %v3409, 0.0
      %v3442 = vsel %vm2176, %v3410, 0.0
      %v3443 = vsel %vm2177, %v3411, 0.0
      %v3444 = vsel %vm2178, %v3412, 0.0
      %v3445 = vsel %vm2179, %v3413, 0.0
      %v3446 = vsel %vm2180, %v3414, 0.0
      %v3447 = vsel %vm2181, %v3415, 0.0
      %s3448 = scalar_lea.vmem %s4, 20
      %v3449 = vld [vmem:[%s3448] sm:$0xf]
      %v3451 = vsel %vm535, %v3416, 0
      %v3454 = vsel %vm535, %v3417, 0
      %v3457 = vsel %vm535, %v3418, 0
      %v3460 = vsel %vm535, %v3419, 0
      %v3463 = vsel %vm535, %v3420, 0
      %v3466 = vsel %vm535, %v3421, 0
      %v3469 = vsel %vm535, %v3422, 0
      %v3472 = vsel %vm535, %v3423, 0
      %v3475 = vsel %vm535, %v3424, 0
      %v3478 = vsel %vm535, %v3425, 0
      %v3481 = vsel %vm535, %v3426, 0
      %v3484 = vsel %vm535, %v3427, 0
      %v3487 = vsel %vm535, %v3428, 0
      %v3490 = vsel %vm535, %v3429, 0
      %v3493 = vsel %vm535, %v3430, 0
      %v3496 = vsel %vm535, %v3431, 0
      %v3499 = vsel %vm535, %v3432, 0
      %v3502 = vsel %vm535, %v3433, 0
      %v3505 = vsel %vm535, %v3434, 0
      %v3508 = vsel %vm535, %v3435, 0
      %v3511 = vsel %vm535, %v3436, 0
      %v3514 = vsel %vm535, %v3437, 0
      %v3517 = vsel %vm535, %v3438, 0
      %v3520 = vsel %vm535, %v3439, 0
      %v3523 = vsel %vm535, %v3440, 0
      %v3526 = vsel %vm535, %v3441, 0
      %v3529 = vsel %vm535, %v3442, 0
      %v3532 = vsel %vm535, %v3443, 0
      %v3535 = vsel %vm535, %v3444, 0
      %v3538 = vsel %vm535, %v3445, 0
      %v3541 = vsel %vm535, %v3446, 0
      %v3544 = vsel %vm535, %v3447, 0
      %v3547 = vsel %vm1533, %v3449, 0
      %3549 = vmatprep.subr.mxu0 0.0
      %3550 = vmatpush1.msra.mxu0 %v3547
      %3551 = vmatprep.subr.mxu0 0.0
      %3552 = vmatpush1.msra.mxu0 0.0
      %3553 = vmatprep.subr.mxu0 0.0
      %3554 = vmatpush1.msra.mxu0 0.0
      %3555 = vmatprep.subr.mxu0 0.0
      %3556 = vmatpush1.msra.mxu0 0.0
      %3557 = vmatprep.subr.mxu0 0.0
      %3558 = vmatpush1.msra.mxu0 0.0
      %3559 = vmatprep.subr.mxu0 0.0
      %3560 = vmatpush1.msra.mxu0 0.0
      %3561 = vmatprep.subr.mxu0 0.0
      %3562 = vmatpush1.msra.mxu0 0.0
      %3563 = vmatprep.subr.mxu0 0.0
      %3564 = vmatpush1.msra.mxu0 0.0
      %3565 = vmatprep.subr.mxu0 0.0
      %3566 = vmatpush1.msra.mxu0 0.0
      %3567 = vmatprep.subr.mxu0 0.0
      %3568 = vmatpush1.msra.mxu0 0.0
      %3569 = vmatprep.subr.mxu0 0.0
      %3570 = vmatpush1.msra.mxu0 0.0
      %3571 = vmatprep.subr.mxu0 0.0
      %3572 = vmatpush1.msra.mxu0 0.0
      %3573 = vmatprep.subr.mxu0 0.0
      %3574 = vmatpush1.msra.mxu0 0.0
      %3575 = vmatprep.subr.mxu0 0.0
      %3576 = vmatpush1.msra.mxu0 0.0
      %3577 = vmatprep.subr.mxu0 0.0
      %3578 = vmatpush1.msra.mxu0 0.0
      %3579 = vmatprep.subr.mxu0 0.0
      %3580 = vmatpush1.msra.mxu0 0.0
      %3581 = vmatprep.subr.mxu0 0.0
      %3582 = vmatpush1.msra.mxu0 0.0
      %3583 = vmatprep.subr.mxu0 0.0
      %3584 = vmatpush1.msra.mxu0 0.0
      %3585 = vmatprep.subr.mxu0 0.0
      %3586 = vmatpush1.msra.mxu0 0.0
      %3587 = vmatprep.subr.mxu0 0.0
      %3588 = vmatpush1.msra.mxu0 0.0
      %3589 = vmatprep.subr.mxu0 0.0
      %3590 = vmatpush1.msra.mxu0 0.0
      %3591 = vmatprep.subr.mxu0 0.0
      %3592 = vmatpush1.msra.mxu0 0.0
      %3593 = vmatprep.subr.mxu0 0.0
      %3594 = vmatpush1.msra.mxu0 0.0
      %3595 = vmatprep.subr.mxu0 0.0
      %3596 = vmatpush1.msra.mxu0 0.0
      %3597 = vmatprep.subr.mxu0 0.0
      %3598 = vmatpush1.msra.mxu0 0.0
      %3599 = vmatprep.subr.mxu0 0.0
      %3600 = vmatpush1.msra.mxu0 0.0
      %3601 = vmatprep.subr.mxu0 0.0
      %3602 = vmatpush1.msra.mxu0 0.0
      %3603 = vmatprep.subr.mxu0 0.0
      %3604 = vmatpush1.msra.mxu0 0.0
      %3605 = vmatprep.subr.mxu0 0.0
      %3606 = vmatpush1.msra.mxu0 0.0
      %3607 = vmatprep.subr.mxu0 0.0
      %3608 = vmatpush1.msra.mxu0 0.0
      %3609 = vmatprep.subr.mxu0 0.0
      %3610 = vmatpush1.msra.mxu0 0.0
      %3611 = vmatprep.subr.mxu0 0.0
      %3612 = vmatpush1.msra.mxu0 0.0
      %3613 = vmatprep.mubr.f32.mxu0 0.0
      %3614 = vmatmul.mubr.f32.gmra.mrb[0].mxu0 %v3451
      %v3615 = vpop.f32.mrb[0].mxu0
      %v3616 = vadd.f32 0.0, %v3615
      %v3617 = vpop.f32.mrb[0].mxu0
      %3618 = vmatprep.mubr.f32.mxu0 0.0
      %3619 = vmatmul.mubr.f32.gmra.mrb[0].mxu0 %v3454
      %v3620 = vpop.f32.mrb[0].mxu0
      %v3621 = vadd.f32 0.0, %v3620
      %v3622 = vpop.f32.mrb[0].mxu0
      %3623 = vmatprep.mubr.f32.mxu0 0.0
      %3624 = vmatmul.mubr.f32.gmra.mrb[0].mxu0 %v3457
      %v3625 = vpop.f32.mrb[0].mxu0
      %v3626 = vadd.f32 0.0, %v3625
      %v3627 = vpop.f32.mrb[0].mxu0
      %3628 = vmatprep.mubr.f32.mxu0 0.0
      %3629 = vmatmul.mubr.f32.gmra.mrb[0].mxu0 %v3460
      %v3630 = vpop.f32.mrb[0].mxu0
      %v3631 = vadd.f32 0.0, %v3630
      %v3632 = vpop.f32.mrb[0].mxu0
      %3633 = vmatprep.mubr.f32.mxu0 0.0
      %3634 = vmatmul.mubr.f32.gmra.mrb[0].mxu0 %v3463
      %v3635 = vpop.f32.mrb[0].mxu0
      %v3636 = vadd.f32 0.0, %v3635
      %v3637 = vpop.f32.mrb[0].mxu0
      %3638 = vmatprep.mubr.f32.mxu0 0.0
      %3639 = vmatmul.mubr.f32.gmra.mrb[0].mxu0 %v3466
      %v3640 = vpop.f32.mrb[0].mxu0
      %v3641 = vadd.f32 0.0, %v3640
      %v3642 = vpop.f32.mrb[0].mxu0
      %3643 = vmatprep.mubr.f32.mxu0 0.0
      %3644 = vmatmul.mubr.f32.gmra.mrb[0].mxu0 %v3469
      %v3645 = vpop.f32.mrb[0].mxu0
      %v3646 = vadd.f32 0.0, %v3645
      %v3647 = vpop.f32.mrb[0].mxu0
      %3648 = vmatprep.mubr.f32.mxu0 0.0
      %3649 = vmatmul.mubr.f32.gmra.mrb[0].mxu0 %v3472
      %v3650 = vpop.f32.mrb[0].mxu0
      %v3651 = vadd.f32 0.0, %v3650
      %v3652 = vpop.f32.mrb[0].mxu0
      %3653 = vmatprep.mubr.f32.mxu0 0.0
      %3654 = vmatmul.mubr.f32.gmra.mrb[0].mxu0 %v3475
      %v3655 = vpop.f32.mrb[0].mxu0
      %v3656 = vadd.f32 0.0, %v3655
      %v3657 = vpop.f32.mrb[0].mxu0
      %3658 = vmatprep.mubr.f32.mxu0 0.0
      %3659 = vmatmul.mubr.f32.gmra.mrb[0].mxu0 %v3478
      %v3660 = vpop.f32.mrb[0].mxu0
      %v3661 = vadd.f32 0.0, %v3660
      %v3662 = vpop.f32.mrb[0].mxu0
      %3663 = vmatprep.mubr.f32.mxu0 0.0
      %3664 = vmatmul.mubr.f32.gmra.mrb[0].mxu0 %v3481
      %v3665 = vpop.f32.mrb[0].mxu0
      %v3666 = vadd.f32 0.0, %v3665
      %v3667 = vpop.f32.mrb[0].mxu0
      %3668 = vmatprep.mubr.f32.mxu0 0.0
      %3669 = vmatmul.mubr.f32.gmra.mrb[0].mxu0 %v3484
      %v3670 = vpop.f32.mrb[0].mxu0
      %v3671 = vadd.f32 0.0, %v3670
      %v3672 = vpop.f32.mrb[0].mxu0
      %3673 = vmatprep.mubr.f32.mxu0 0.0
      %3674 = vmatmul.mubr.f32.gmra.mrb[0].mxu0 %v3487
      %v3675 = vpop.f32.mrb[0].mxu0
      %v3676 = vadd.f32 0.0, %v3675
      %v3677 = vpop.f32.mrb[0].mxu0
      %3678 = vmatprep.mubr.f32.mxu0 0.0
      %3679 = vmatmul.mubr.f32.gmra.mrb[0].mxu0 %v3490
      %v3680 = vpop.f32.mrb[0].mxu0
      %v3681 = vadd.f32 0.0, %v3680
      %v3682 = vpop.f32.mrb[0].mxu0
      %3683 = vmatprep.mubr.f32.mxu0 0.0
      %3684 = vmatmul.mubr.f32.gmra.mrb[0].mxu0 %v3493
      %v3685 = vpop.f32.mrb[0].mxu0
      %v3686 = vadd.f32 0.0, %v3685
      %v3687 = vpop.f32.mrb[0].mxu0
      %3688 = vmatprep.mubr.f32.mxu0 0.0
      %3689 = vmatmul.mubr.f32.gmra.mrb[0].mxu0 %v3496
      %v3690 = vpop.f32.mrb[0].mxu0
      %v3691 = vadd.f32 0.0, %v3690
      %v3692 = vpop.f32.mrb[0].mxu0
      %3693 = vmatprep.mubr.f32.mxu0 0.0
      %3694 = vmatmul.mubr.f32.gmra.mrb[0].mxu0 %v3499
      %v3695 = vpop.f32.mrb[0].mxu0
      %v3696 = vadd.f32 0.0, %v3695
      %v3697 = vpop.f32.mrb[0].mxu0
      %3698 = vmatprep.mubr.f32.mxu0 0.0
      %3699 = vmatmul.mubr.f32.gmra.mrb[0].mxu0 %v3502
      %v3700 = vpop.f32.mrb[0].mxu0
      %v3701 = vadd.f32 0.0, %v3700
      %v3702 = vpop.f32.mrb[0].mxu0
      %3703 = vmatprep.mubr.f32.mxu0 0.0
      %3704 = vmatmul.mubr.f32.gmra.mrb[0].mxu0 %v3505
      %v3705 = vpop.f32.mrb[0].mxu0
      %v3706 = vadd.f32 0.0, %v3705
      %v3707 = vpop.f32.mrb[0].mxu0
      %3708 = vmatprep.mubr.f32.mxu0 0.0
      %3709 = vmatmul.mubr.f32.gmra.mrb[0].mxu0 %v3508
      %v3710 = vpop.f32.mrb[0].mxu0
      %v3711 = vadd.f32 0.0, %v3710
      %v3712 = vpop.f32.mrb[0].mxu0
      %3713 = vmatprep.mubr.f32.mxu0 0.0
      %3714 = vmatmul.mubr.f32.gmra.mrb[0].mxu0 %v3511
      %v3715 = vpop.f32.mrb[0].mxu0
      %v3716 = vadd.f32 0.0, %v3715
      %v3717 = vpop.f32.mrb[0].mxu0
      %3718 = vmatprep.mubr.f32.mxu0 0.0
      %3719 = vmatmul.mubr.f32.gmra.mrb[0].mxu0 %v3514
      %v3720 = vpop.f32.mrb[0].mxu0
      %v3721 = vadd.f32 0.0, %v3720
      %v3722 = vpop.f32.mrb[0].mxu0
      %3723 = vmatprep.mubr.f32.mxu0 0.0
      %3724 = vmatmul.mubr.f32.gmra.mrb[0].mxu0 %v3517
      %v3725 = vpop.f32.mrb[0].mxu0
      %v3726 = vadd.f32 0.0, %v3725
      %v3727 = vpop.f32.mrb[0].mxu0
      %3728 = vmatprep.mubr.f32.mxu0 0.0
      %3729 = vmatmul.mubr.f32.gmra.mrb[0].mxu0 %v3520
      %v3730 = vpop.f32.mrb[0].mxu0
      %v3731 = vadd.f32 0.0, %v3730
      %v3732 = vpop.f32.mrb[0].mxu0
      %3733 = vmatprep.mubr.f32.mxu0 0.0
      %3734 = vmatmul.mubr.f32.gmra.mrb[0].mxu0 %v3523
      %v3735 = vpop.f32.mrb[0].mxu0
      %v3736 = vadd.f32 0.0, %v3735
      %v3737 = vpop.f32.mrb[0].mxu0
      %3738 = vmatprep.mubr.f32.mxu0 0.0
      %3739 = vmatmul.mubr.f32.gmra.mrb[0].mxu0 %v3526
      %v3740 = vpop.f32.mrb[0].mxu0
      %v3741 = vadd.f32 0.0, %v3740
      %v3742 = vpop.f32.mrb[0].mxu0
      %3743 = vmatprep.mubr.f32.mxu0 0.0
      %3744 = vmatmul.mubr.f32.gmra.mrb[0].mxu0 %v3529
      %v3745 = vpop.f32.mrb[0].mxu0
      %v3746 = vadd.f32 0.0, %v3745
      %v3747 = vpop.f32.mrb[0].mxu0
      %3748 = vmatprep.mubr.f32.mxu0 0.0
      %3749 = vmatmul.mubr.f32.gmra.mrb[0].mxu0 %v3532
      %v3750 = vpop.f32.mrb[0].mxu0
      %v3751 = vadd.f32 0.0, %v3750
      %v3752 = vpop.f32.mrb[0].mxu0
      %3753 = vmatprep.mubr.f32.mxu0 0.0
      %3754 = vmatmul.mubr.f32.gmra.mrb[0].mxu0 %v3535
      %v3755 = vpop.f32.mrb[0].mxu0
      %v3756 = vadd.f32 0.0, %v3755
      %v3757 = vpop.f32.mrb[0].mxu0
      %3758 = vmatprep.mubr.f32.mxu0 0.0
      %3759 = vmatmul.mubr.f32.gmra.mrb[0].mxu0 %v3538
      %v3760 = vpop.f32.mrb[0].mxu0
      %v3761 = vadd.f32 0.0, %v3760
      %v3762 = vpop.f32.mrb[0].mxu0
      %3763 = vmatprep.mubr.f32.mxu0 0.0
      %3764 = vmatmul.mubr.f32.gmra.mrb[0].mxu0 %v3541
      %v3765 = vpop.f32.mrb[0].mxu0
      %v3766 = vadd.f32 0.0, %v3765
      %v3767 = vpop.f32.mrb[0].mxu0
      %3768 = vmatprep.mubr.f32.mxu0 0.0
      %3769 = vmatmul.mubr.f32.gmra.mrb[0].mxu0 %v3544
      %v3770 = vpop.f32.mrb[0].mxu0
      %v3771 = vadd.f32 0.0, %v3770
      %v3772 = vpop.f32.mrb[0].mxu0
      %3773 = vdwg.mxu0
      %v3774 = vadd.f32 %v3352, %v3616
      %v3775 = vadd.f32 %v3353, %v3621
      %v3776 = vadd.f32 %v3354, %v3626
      %v3777 = vadd.f32 %v3355, %v3631
      %v3778 = vadd.f32 %v3356, %v3636
      %v3779 = vadd.f32 %v3357, %v3641
      %v3780 = vadd.f32 %v3358, %v3646
      %v3781 = vadd.f32 %v3359, %v3651
      %v3782 = vadd.f32 %v3360, %v3656
      %v3783 = vadd.f32 %v3361, %v3661
      %v3784 = vadd.f32 %v3362, %v3666
      %v3785 = vadd.f32 %v3363, %v3671
      %v3786 = vadd.f32 %v3364, %v3676
      %v3787 = vadd.f32 %v3365, %v3681
      %v3788 = vadd.f32 %v3366, %v3686
      %v3789 = vadd.f32 %v3367, %v3691
      %v3790 = vadd.f32 %v3368, %v3696
      %v3791 = vadd.f32 %v3369, %v3701
      %v3792 = vadd.f32 %v3370, %v3706
      %v3793 = vadd.f32 %v3371, %v3711
      %v3794 = vadd.f32 %v3372, %v3716
      %v3795 = vadd.f32 %v3373, %v3721
      %v3796 = vadd.f32 %v3374, %v3726
      %v3797 = vadd.f32 %v3375, %v3731
      %v3798 = vadd.f32 %v3376, %v3736
      %v3799 = vadd.f32 %v3377, %v3741
      %v3800 = vadd.f32 %v3378, %v3746
      %v3801 = vadd.f32 %v3379, %v3751
      %v3802 = vadd.f32 %v3380, %v3756
      %v3803 = vadd.f32 %v3381, %v3761
      %v3804 = vadd.f32 %v3382, %v3766
      %v3805 = vadd.f32 %v3383, %v3771
      %v3806 = vld [vmem:[#allocation2 + $0x27] sm:$0xff]
      %v3807 = vld [vmem:[#allocation2 + $0x2f] sm:$0xff]
      %v3808 = vld [vmem:[#allocation2 + $0x37] sm:$0xff]
      %v3809 = vld [vmem:[#allocation2 + $0x3f] sm:$0xff]
      %v3810 = vld [vmem:[#allocation2 + $0x47] sm:$0xff]
      %v3811 = vld [vmem:[#allocation2 + $0x4f] sm:$0xff]
      %v3812 = vld [vmem:[#allocation2 + $0x57] sm:$0xff]
      %v3813 = vld [vmem:[#allocation2 + $0x5f] sm:$0xff]
      %v3814 = vld [vmem:[#allocation2 + $0x67] sm:$0xff]
      %v3815 = vld [vmem:[#allocation2 + $0x6f] sm:$0xff]
      %v3816 = vld [vmem:[#allocation2 + $0x77] sm:$0xff]
      %v3817 = vld [vmem:[#allocation2 + $0x7f] sm:$0xff]
      %v3818 = vld [vmem:[#allocation2 + $0x87] sm:$0xff]
      %v3819 = vld [vmem:[#allocation2 + $0x8f] sm:$0xff]
      %v3820 = vld [vmem:[#allocation2 + $0x97] sm:$0xff]
      %v3821 = vld [vmem:[#allocation2 + $0x9f] sm:$0xff]
      %v3822 = vld [vmem:[#allocation2 + $0xa7] sm:$0xff]
      %v3823 = vld [vmem:[#allocation2 + $0xaf] sm:$0xff]
      %v3824 = vld [vmem:[#allocation2 + $0xb7] sm:$0xff]
      %v3825 = vld [vmem:[#allocation2 + $0xbf] sm:$0xff]
      %v3826 = vld [vmem:[#allocation2 + $0xc7] sm:$0xff]
      %v3827 = vld [vmem:[#allocation2 + $0xcf] sm:$0xff]
      %v3828 = vld [vmem:[#allocation2 + $0xd7] sm:$0xff]
      %v3829 = vld [vmem:[#allocation2 + $0xdf] sm:$0xff]
      %v3830 = vld [vmem:[#allocation2 + $0xe7] sm:$0xff]
      %v3831 = vld [vmem:[#allocation2 + $0xef] sm:$0xff]
      %v3832 = vld [vmem:[#allocation2 + $0xf7] sm:$0xff]
      %v3833 = vld [vmem:[#allocation2 + $0xff] sm:$0xff]
      %v3834 = vld [vmem:[#allocation2 + $0x107] sm:$0xff]
      %v3835 = vld [vmem:[#allocation2 + $0x10f] sm:$0xff]
      %v3836 = vld [vmem:[#allocation2 + $0x117] sm:$0xff]
      %v3837 = vld [vmem:[#allocation2 + $0x11f] sm:$0xff]
      %v3838 = vsel %vm1338, %v3806, 0.0
      %v3839 = vsel %vm1339, %v3807, 0.0
      %v3840 = vsel %vm1340, %v3808, 0.0
      %v3841 = vsel %vm1341, %v3809, 0.0
      %v3842 = vsel %vm1342, %v3810, 0.0
      %v3843 = vsel %vm1343, %v3811, 0.0
      %v3844 = vsel %vm1344, %v3812, 0.0
      %v3845 = vsel %vm1345, %v3813, 0.0
      %v3846 = vsel %vm1346, %v3814, 0.0
      %v3847 = vsel %vm1347, %v3815, 0.0
      %v3848 = vsel %vm1348, %v3816, 0.0
      %v3849 = vsel %vm1349, %v3817, 0.0
      %v3850 = vsel %vm1350, %v3818, 0.0
      %v3851 = vsel %vm1351, %v3819, 0.0
      %v3852 = vsel %vm1352, %v3820, 0.0
      %v3853 = vsel %vm1353, %v3821, 0.0
      %v3854 = vsel %vm1354, %v3822, 0.0
      %v3855 = vsel %vm1355, %v3823, 0.0
      %v3856 = vsel %vm1356, %v3824, 0.0
      %v3857 = vsel %vm1357, %v3825, 0.0
      %v3858 = vsel %vm1358, %v3826, 0.0
      %v3859 = vsel %vm1359, %v3827, 0.0
      %v3860 = vsel %vm1360, %v3828, 0.0
      %v3861 = vsel %vm1361, %v3829, 0.0
      %v3862 = vsel %vm1362, %v3830, 0.0
      %v3863 = vsel %vm1363, %v3831, 0.0
      %v3864 = vsel %vm1364, %v3832, 0.0
      %v3865 = vsel %vm1365, %v3833, 0.0
      %v3866 = vsel %vm1366, %v3834, 0.0
      %v3867 = vsel %vm1367, %v3835, 0.0
      %v3868 = vsel %vm1368, %v3836, 0.0
      %v3869 = vsel %vm1369, %v3837, 0.0
      %s3870 = scalar_lea.vmem %s4, 24
      %v3871 = vld [vmem:[%s3870] sm:$0xf]
      %v3873 = vsel %vm535, %v3838, 0
      %v3876 = vsel %vm535, %v3839, 0
      %v3879 = vsel %vm535, %v3840, 0
      %v3882 = vsel %vm535, %v3841, 0
      %v3885 = vsel %vm535, %v3842, 0
      %v3888 = vsel %vm535, %v3843, 0
      %v3891 = vsel %vm535, %v3844, 0
      %v3894 = vsel %vm535, %v3845, 0
      %v3897 = vsel %vm535, %v3846, 0
      %v3900 = vsel %vm535, %v3847, 0
      %v3903 = vsel %vm535, %v3848, 0
      %v3906 = vsel %vm535, %v3849, 0
      %v3909 = vsel %vm535, %v3850, 0
      %v3912 = vsel %vm535, %v3851, 0
      %v3915 = vsel %vm535, %v3852, 0
      %v3918 = vsel %vm535, %v3853, 0
      %v3921 = vsel %vm535, %v3854, 0
      %v3924 = vsel %vm535, %v3855, 0
      %v3927 = vsel %vm535, %v3856, 0
      %v3930 = vsel %vm535, %v3857, 0
      %v3933 = vsel %vm535, %v3858, 0
      %v3936 = vsel %vm535, %v3859, 0
      %v3939 = vsel %vm535, %v3860, 0
      %v3942 = vsel %vm535, %v3861, 0
      %v3945 = vsel %vm535, %v3862, 0
      %v3948 = vsel %vm535, %v3863, 0
      %v3951 = vsel %vm535, %v3864, 0
      %v3954 = vsel %vm535, %v3865, 0
      %v3957 = vsel %vm535, %v3866, 0
      %v3960 = vsel %vm535, %v3867, 0
      %v3963 = vsel %vm535, %v3868, 0
      %v3966 = vsel %vm535, %v3869, 0
      %v3969 = vsel %vm1533, %v3871, 0
      %3971 = vmatprep.subr.mxu0 0.0
      %3972 = vmatpush1.msra.mxu0 %v3969
      %3973 = vmatprep.subr.mxu0 0.0
      %3974 = vmatpush1.msra.mxu0 0.0
      %3975 = vmatprep.subr.mxu0 0.0
      %3976 = vmatpush1.msra.mxu0 0.0
      %3977 = vmatprep.subr.mxu0 0.0
      %3978 = vmatpush1.msra.mxu0 0.0
      %3979 = vmatprep.subr.mxu0 0.0
      %3980 = vmatpush1.msra.mxu0 0.0
      %3981 = vmatprep.subr.mxu0 0.0
      %3982 = vmatpush1.msra.mxu0 0.0
      %3983 = vmatprep.subr.mxu0 0.0
      %3984 = vmatpush1.msra.mxu0 0.0
      %3985 = vmatprep.subr.mxu0 0.0
      %3986 = vmatpush1.msra.mxu0 0.0
      %3987 = vmatprep.subr.mxu0 0.0
      %3988 = vmatpush1.msra.mxu0 0.0
      %3989 = vmatprep.subr.mxu0 0.0
      %3990 = vmatpush1.msra.mxu0 0.0
      %3991 = vmatprep.subr.mxu0 0.0
      %3992 = vmatpush1.msra.mxu0 0.0
      %3993 = vmatprep.subr.mxu0 0.0
      %3994 = vmatpush1.msra.mxu0 0.0
      %3995 = vmatprep.subr.mxu0 0.0
      %3996 = vmatpush1.msra.mxu0 0.0
      %3997 = vmatprep.subr.mxu0 0.0
      %3998 = vmatpush1.msra.mxu0 0.0
      %3999 = vmatprep.subr.mxu0 0.0
      %4000 = vmatpush1.msra.mxu0 0.0
      %4001 = vmatprep.subr.mxu0 0.0
      %4002 = vmatpush1.msra.mxu0 0.0
      %4003 = vmatprep.subr.mxu0 0.0
      %4004 = vmatpush1.msra.mxu0 0.0
      %4005 = vmatprep.subr.mxu0 0.0
      %4006 = vmatpush1.msra.mxu0 0.0
      %4007 = vmatprep.subr.mxu0 0.0
      %4008 = vmatpush1.msra.mxu0 0.0
      %4009 = vmatprep.subr.mxu0 0.0
      %4010 = vmatpush1.msra.mxu0 0.0
      %4011 = vmatprep.subr.mxu0 0.0
      %4012 = vmatpush1.msra.mxu0 0.0
      %4013 = vmatprep.subr.mxu0 0.0
      %4014 = vmatpush1.msra.mxu0 0.0
      %4015 = vmatprep.subr.mxu0 0.0
      %4016 = vmatpush1.msra.mxu0 0.0
      %4017 = vmatprep.subr.mxu0 0.0
      %4018 = vmatpush1.msra.mxu0 0.0
      %4019 = vmatprep.subr.mxu0 0.0
      %4020 = vmatpush1.msra.mxu0 0.0
      %4021 = vmatprep.subr.mxu0 0.0
      %4022 = vmatpush1.msra.mxu0 0.0
      %4023 = vmatprep.subr.mxu0 0.0
      %4024 = vmatpush1.msra.mxu0 0.0
      %4025 = vmatprep.subr.mxu0 0.0
      %4026 = vmatpush1.msra.mxu0 0.0
      %4027 = vmatprep.subr.mxu0 0.0
      %4028 = vmatpush1.msra.mxu0 0.0
      %4029 = vmatprep.subr.mxu0 0.0
      %4030 = vmatpush1.msra.mxu0 0.0
      %4031 = vmatprep.subr.mxu0 0.0
      %4032 = vmatpush1.msra.mxu0 0.0
      %4033 = vmatprep.subr.mxu0 0.0
      %4034 = vmatpush1.msra.mxu0 0.0
      %4035 = vmatprep.mubr.f32.mxu0 0.0
      %4036 = vmatmul.mubr.f32.gmra.mrb[0].mxu0 %v3873
      %v4037 = vpop.f32.mrb[0].mxu0
      %v4038 = vadd.f32 0.0, %v4037
      %v4039 = vpop.f32.mrb[0].mxu0
      %4040 = vmatprep.mubr.f32.mxu0 0.0
      %4041 = vmatmul.mubr.f32.gmra.mrb[0].mxu0 %v3876
      %v4042 = vpop.f32.mrb[0].mxu0
      %v4043 = vadd.f32 0.0, %v4042
      %v4044 = vpop.f32.mrb[0].mxu0
      %4045 = vmatprep.mubr.f32.mxu0 0.0
      %4046 = vmatmul.mubr.f32.gmra.mrb[0].mxu0 %v3879
      %v4047 = vpop.f32.mrb[0].mxu0
      %v4048 = vadd.f32 0.0, %v4047
      %v4049 = vpop.f32.mrb[0].mxu0
      %4050 = vmatprep.mubr.f32.mxu0 0.0
      %4051 = vmatmul.mubr.f32.gmra.mrb[0].mxu0 %v3882
      %v4052 = vpop.f32.mrb[0].mxu0
      %v4053 = vadd.f32 0.0, %v4052
      %v4054 = vpop.f32.mrb[0].mxu0
      %4055 = vmatprep.mubr.f32.mxu0 0.0
      %4056 = vmatmul.mubr.f32.gmra.mrb[0].mxu0 %v3885
      %v4057 = vpop.f32.mrb[0].mxu0
      %v4058 = vadd.f32 0.0, %v4057
      %v4059 = vpop.f32.mrb[0].mxu0
      %4060 = vmatprep.mubr.f32.mxu0 0.0
      %4061 = vmatmul.mubr.f32.gmra.mrb[0].mxu0 %v3888
      %v4062 = vpop.f32.mrb[0].mxu0
      %v4063 = vadd.f32 0.0, %v4062
      %v4064 = vpop.f32.mrb[0].mxu0
      %4065 = vmatprep.mubr.f32.mxu0 0.0
      %4066 = vmatmul.mubr.f32.gmra.mrb[0].mxu0 %v3891
      %v4067 = vpop.f32.mrb[0].mxu0
      %v4068 = vadd.f32 0.0, %v4067
      %v4069 = vpop.f32.mrb[0].mxu0
      %4070 = vmatprep.mubr.f32.mxu0 0.0
      %4071 = vmatmul.mubr.f32.gmra.mrb[0].mxu0 %v3894
      %v4072 = vpop.f32.mrb[0].mxu0
      %v4073 = vadd.f32 0.0, %v4072
      %v4074 = vpop.f32.mrb[0].mxu0
      %4075 = vmatprep.mubr.f32.mxu0 0.0
      %4076 = vmatmul.mubr.f32.gmra.mrb[0].mxu0 %v3897
      %v4077 = vpop.f32.mrb[0].mxu0
      %v4078 = vadd.f32 0.0, %v4077
      %v4079 = vpop.f32.mrb[0].mxu0
      %4080 = vmatprep.mubr.f32.mxu0 0.0
      %4081 = vmatmul.mubr.f32.gmra.mrb[0].mxu0 %v3900
      %v4082 = vpop.f32.mrb[0].mxu0
      %v4083 = vadd.f32 0.0, %v4082
      %v4084 = vpop.f32.mrb[0].mxu0
      %4085 = vmatprep.mubr.f32.mxu0 0.0
      %4086 = vmatmul.mubr.f32.gmra.mrb[0].mxu0 %v3903
      %v4087 = vpop.f32.mrb[0].mxu0
      %v4088 = vadd.f32 0.0, %v4087
      %v4089 = vpop.f32.mrb[0].mxu0
      %4090 = vmatprep.mubr.f32.mxu0 0.0
      %4091 = vmatmul.mubr.f32.gmra.mrb[0].mxu0 %v3906
      %v4092 = vpop.f32.mrb[0].mxu0
      %v4093 = vadd.f32 0.0, %v4092
      %v4094 = vpop.f32.mrb[0].mxu0
      %4095 = vmatprep.mubr.f32.mxu0 0.0
      %4096 = vmatmul.mubr.f32.gmra.mrb[0].mxu0 %v3909
      %v4097 = vpop.f32.mrb[0].mxu0
      %v4098 = vadd.f32 0.0, %v4097
      %v4099 = vpop.f32.mrb[0].mxu0
      %4100 = vmatprep.mubr.f32.mxu0 0.0
      %4101 = vmatmul.mubr.f32.gmra.mrb[0].mxu0 %v3912
      %v4102 = vpop.f32.mrb[0].mxu0
      %v4103 = vadd.f32 0.0, %v4102
      %v4104 = vpop.f32.mrb[0].mxu0
      %4105 = vmatprep.mubr.f32.mxu0 0.0
      %4106 = vmatmul.mubr.f32.gmra.mrb[0].mxu0 %v3915
      %v4107 = vpop.f32.mrb[0].mxu0
      %v4108 = vadd.f32 0.0, %v4107
      %v4109 = vpop.f32.mrb[0].mxu0
      %4110 = vmatprep.mubr.f32.mxu0 0.0
      %4111 = vmatmul.mubr.f32.gmra.mrb[0].mxu0 %v3918
      %v4112 = vpop.f32.mrb[0].mxu0
      %v4113 = vadd.f32 0.0, %v4112
      %v4114 = vpop.f32.mrb[0].mxu0
      %4115 = vmatprep.mubr.f32.mxu0 0.0
      %4116 = vmatmul.mubr.f32.gmra.mrb[0].mxu0 %v3921
      %v4117 = vpop.f32.mrb[0].mxu0
      %v4118 = vadd.f32 0.0, %v4117
      %v4119 = vpop.f32.mrb[0].mxu0
      %4120 = vmatprep.mubr.f32.mxu0 0.0
      %4121 = vmatmul.mubr.f32.gmra.mrb[0].mxu0 %v3924
      %v4122 = vpop.f32.mrb[0].mxu0
      %v4123 = vadd.f32 0.0, %v4122
      %v4124 = vpop.f32.mrb[0].mxu0
      %4125 = vmatprep.mubr.f32.mxu0 0.0
      %4126 = vmatmul.mubr.f32.gmra.mrb[0].mxu0 %v3927
      %v4127 = vpop.f32.mrb[0].mxu0
      %v4128 = vadd.f32 0.0, %v4127
      %v4129 = vpop.f32.mrb[0].mxu0
      %4130 = vmatprep.mubr.f32.mxu0 0.0
      %4131 = vmatmul.mubr.f32.gmra.mrb[0].mxu0 %v3930
      %v4132 = vpop.f32.mrb[0].mxu0
      %v4133 = vadd.f32 0.0, %v4132
      %v4134 = vpop.f32.mrb[0].mxu0
      %4135 = vmatprep.mubr.f32.mxu0 0.0
      %4136 = vmatmul.mubr.f32.gmra.mrb[0].mxu0 %v3933
      %v4137 = vpop.f32.mrb[0].mxu0
      %v4138 = vadd.f32 0.0, %v4137
      %v4139 = vpop.f32.mrb[0].mxu0
      %4140 = vmatprep.mubr.f32.mxu0 0.0
      %4141 = vmatmul.mubr.f32.gmra.mrb[0].mxu0 %v3936
      %v4142 = vpop.f32.mrb[0].mxu0
      %v4143 = vadd.f32 0.0, %v4142
      %v4144 = vpop.f32.mrb[0].mxu0
      %4145 = vmatprep.mubr.f32.mxu0 0.0
      %4146 = vmatmul.mubr.f32.gmra.mrb[0].mxu0 %v3939
      %v4147 = vpop.f32.mrb[0].mxu0
      %v4148 = vadd.f32 0.0, %v4147
      %v4149 = vpop.f32.mrb[0].mxu0
      %4150 = vmatprep.mubr.f32.mxu0 0.0
      %4151 = vmatmul.mubr.f32.gmra.mrb[0].mxu0 %v3942
      %v4152 = vpop.f32.mrb[0].mxu0
      %v4153 = vadd.f32 0.0, %v4152
      %v4154 = vpop.f32.mrb[0].mxu0
      %4155 = vmatprep.mubr.f32.mxu0 0.0
      %4156 = vmatmul.mubr.f32.gmra.mrb[0].mxu0 %v3945
      %v4157 = vpop.f32.mrb[0].mxu0
      %v4158 = vadd.f32 0.0, %v4157
      %v4159 = vpop.f32.mrb[0].mxu0
      %4160 = vmatprep.mubr.f32.mxu0 0.0
      %4161 = vmatmul.mubr.f32.gmra.mrb[0].mxu0 %v3948
      %v4162 = vpop.f32.mrb[0].mxu0
      %v4163 = vadd.f32 0.0, %v4162
      %v4164 = vpop.f32.mrb[0].mxu0
      %4165 = vmatprep.mubr.f32.mxu0 0.0
      %4166 = vmatmul.mubr.f32.gmra.mrb[0].mxu0 %v3951
      %v4167 = vpop.f32.mrb[0].mxu0
      %v4168 = vadd.f32 0.0, %v4167
      %v4169 = vpop.f32.mrb[0].mxu0
      %4170 = vmatprep.mubr.f32.mxu0 0.0
      %4171 = vmatmul.mubr.f32.gmra.mrb[0].mxu0 %v3954
      %v4172 = vpop.f32.mrb[0].mxu0
      %v4173 = vadd.f32 0.0, %v4172
      %v4174 = vpop.f32.mrb[0].mxu0
      %4175 = vmatprep.mubr.f32.mxu0 0.0
      %4176 = vmatmul.mubr.f32.gmra.mrb[0].mxu0 %v3957
      %v4177 = vpop.f32.mrb[0].mxu0
      %v4178 = vadd.f32 0.0, %v4177
      %v4179 = vpop.f32.mrb[0].mxu0
      %4180 = vmatprep.mubr.f32.mxu0 0.0
      %4181 = vmatmul.mubr.f32.gmra.mrb[0].mxu0 %v3960
      %v4182 = vpop.f32.mrb[0].mxu0
      %v4183 = vadd.f32 0.0, %v4182
      %v4184 = vpop.f32.mrb[0].mxu0
      %4185 = vmatprep.mubr.f32.mxu0 0.0
      %4186 = vmatmul.mubr.f32.gmra.mrb[0].mxu0 %v3963
      %v4187 = vpop.f32.mrb[0].mxu0
      %v4188 = vadd.f32 0.0, %v4187
      %v4189 = vpop.f32.mrb[0].mxu0
      %4190 = vmatprep.mubr.f32.mxu0 0.0
      %4191 = vmatmul.mubr.f32.gmra.mrb[0].mxu0 %v3966
      %v4192 = vpop.f32.mrb[0].mxu0
      %v4193 = vadd.f32 0.0, %v4192
      %v4194 = vpop.f32.mrb[0].mxu0
      %4195 = vdwg.mxu0
      %v4196 = vadd.f32 %v3774, %v4038
      %v4197 = vadd.f32 %v3775, %v4043
      %v4198 = vadd.f32 %v3776, %v4048
      %v4199 = vadd.f32 %v3777, %v4053
      %v4200 = vadd.f32 %v3778, %v4058
      %v4201 = vadd.f32 %v3779, %v4063
      %v4202 = vadd.f32 %v3780, %v4068
      %v4203 = vadd.f32 %v3781, %v4073
      %v4204 = vadd.f32 %v3782, %v4078
      %v4205 = vadd.f32 %v3783, %v4083
      %v4206 = vadd.f32 %v3784, %v4088
      %v4207 = vadd.f32 %v3785, %v4093
      %v4208 = vadd.f32 %v3786, %v4098
      %v4209 = vadd.f32 %v3787, %v4103
      %v4210 = vadd.f32 %v3788, %v4108
      %v4211 = vadd.f32 %v3789, %v4113
      %v4212 = vadd.f32 %v3790, %v4118
      %v4213 = vadd.f32 %v3791, %v4123
      %v4214 = vadd.f32 %v3792, %v4128
      %v4215 = vadd.f32 %v3793, %v4133
      %v4216 = vadd.f32 %v3794, %v4138
      %v4217 = vadd.f32 %v3795, %v4143
      %v4218 = vadd.f32 %v3796, %v4148
      %v4219 = vadd.f32 %v3797, %v4153
      %v4220 = vadd.f32 %v3798, %v4158
      %v4221 = vadd.f32 %v3799, %v4163
      %v4222 = vadd.f32 %v3800, %v4168
      %v4223 = vadd.f32 %v3801, %v4173
      %v4224 = vadd.f32 %v3802, %v4178
      %v4225 = vadd.f32 %v3803, %v4183
      %v4226 = vadd.f32 %v3804, %v4188
      %v4227 = vadd.f32 %v3805, %v4193
      %v4228 = vld [vmem:[#allocation2 + $0x28] sm:$0xff]
      %v4229 = vld [vmem:[#allocation2 + $0x30] sm:$0xff]
      %v4230 = vld [vmem:[#allocation2 + $0x38] sm:$0xff]
      %v4231 = vld [vmem:[#allocation2 + $0x40] sm:$0xff]
      %v4232 = vld [vmem:[#allocation2 + $0x48] sm:$0xff]
      %v4233 = vld [vmem:[#allocation2 + $0x50] sm:$0xff]
      %v4234 = vld [vmem:[#allocation2 + $0x58] sm:$0xff]
      %v4235 = vld [vmem:[#allocation2 + $0x60] sm:$0xff]
      %v4236 = vld [vmem:[#allocation2 + $0x68] sm:$0xff]
      %v4237 = vld [vmem:[#allocation2 + $0x70] sm:$0xff]
      %v4238 = vld [vmem:[#allocation2 + $0x78] sm:$0xff]
      %v4239 = vld [vmem:[#allocation2 + $0x80] sm:$0xff]
      %v4240 = vld [vmem:[#allocation2 + $0x88] sm:$0xff]
      %v4241 = vld [vmem:[#allocation2 + $0x90] sm:$0xff]
      %v4242 = vld [vmem:[#allocation2 + $0x98] sm:$0xff]
      %v4243 = vld [vmem:[#allocation2 + $0xa0] sm:$0xff]
      %v4244 = vld [vmem:[#allocation2 + $0xa8] sm:$0xff]
      %v4245 = vld [vmem:[#allocation2 + $0xb0] sm:$0xff]
      %v4246 = vld [vmem:[#allocation2 + $0xb8] sm:$0xff]
      %v4247 = vld [vmem:[#allocation2 + $0xc0] sm:$0xff]
      %v4248 = vld [vmem:[#allocation2 + $0xc8] sm:$0xff]
      %v4249 = vld [vmem:[#allocation2 + $0xd0] sm:$0xff]
      %v4250 = vld [vmem:[#allocation2 + $0xd8] sm:$0xff]
      %v4251 = vld [vmem:[#allocation2 + $0xe0] sm:$0xff]
      %v4252 = vld [vmem:[#allocation2 + $0xe8] sm:$0xff]
      %v4253 = vld [vmem:[#allocation2 + $0xf0] sm:$0xff]
      %v4254 = vld [vmem:[#allocation2 + $0xf8] sm:$0xff]
      %v4255 = vld [vmem:[#allocation2 + $0x100] sm:$0xff]
      %v4256 = vld [vmem:[#allocation2 + $0x108] sm:$0xff]
      %v4257 = vld [vmem:[#allocation2 + $0x110] sm:$0xff]
      %v4258 = vld [vmem:[#allocation2 + $0x118] sm:$0xff]
      %v4259 = vld [vmem:[#allocation2 + $0x120] sm:$0xff]
      %s4260 = scalar_lea.vmem %s4, 28
      %v4261 = vld [vmem:[%s4260] sm:$0xf]
      %v4263 = vsel %vm535, %v4228, 0
      %v4266 = vsel %vm535, %v4229, 0
      %v4269 = vsel %vm535, %v4230, 0
      %v4272 = vsel %vm535, %v4231, 0
      %v4275 = vsel %vm535, %v4232, 0
      %v4278 = vsel %vm535, %v4233, 0
      %v4281 = vsel %vm535, %v4234, 0
      %v4284 = vsel %vm535, %v4235, 0
      %v4287 = vsel %vm535, %v4236, 0
      %v4290 = vsel %vm535, %v4237, 0
      %v4293 = vsel %vm535, %v4238, 0
      %v4296 = vsel %vm535, %v4239, 0
      %v4299 = vsel %vm535, %v4240, 0
      %v4302 = vsel %vm535, %v4241, 0
      %v4305 = vsel %vm535, %v4242, 0
      %v4308 = vsel %vm535, %v4243, 0
      %v4311 = vsel %vm535, %v4244, 0
      %v4314 = vsel %vm535, %v4245, 0
      %v4317 = vsel %vm535, %v4246, 0
      %v4320 = vsel %vm535, %v4247, 0
      %v4323 = vsel %vm535, %v4248, 0
      %v4326 = vsel %vm535, %v4249, 0
      %v4329 = vsel %vm535, %v4250, 0
      %v4332 = vsel %vm535, %v4251, 0
      %v4335 = vsel %vm535, %v4252, 0
      %v4338 = vsel %vm535, %v4253, 0
      %v4341 = vsel %vm535, %v4254, 0
      %v4344 = vsel %vm535, %v4255, 0
      %v4347 = vsel %vm535, %v4256, 0
      %v4350 = vsel %vm535, %v4257, 0
      %v4353 = vsel %vm535, %v4258, 0
      %v4356 = vsel %vm535, %v4259, 0
      %v4359 = vsel %vm1533, %v4261, 0
      %4361 = vmatprep.subr.mxu0 0.0
      %4362 = vmatpush1.msra.mxu0 %v4359
      %4363 = vmatprep.subr.mxu0 0.0
      %4364 = vmatpush1.msra.mxu0 0.0
      %4365 = vmatprep.subr.mxu0 0.0
      %4366 = vmatpush1.msra.mxu0 0.0
      %4367 = vmatprep.subr.mxu0 0.0
      %4368 = vmatpush1.msra.mxu0 0.0
      %4369 = vmatprep.subr.mxu0 0.0
      %4370 = vmatpush1.msra.mxu0 0.0
      %4371 = vmatprep.subr.mxu0 0.0
      %4372 = vmatpush1.msra.mxu0 0.0
      %4373 = vmatprep.subr.mxu0 0.0
      %4374 = vmatpush1.msra.mxu0 0.0
      %4375 = vmatprep.subr.mxu0 0.0
      %4376 = vmatpush1.msra.mxu0 0.0
      %4377 = vmatprep.subr.mxu0 0.0
      %4378 = vmatpush1.msra.mxu0 0.0
      %4379 = vmatprep.subr.mxu0 0.0
      %4380 = vmatpush1.msra.mxu0 0.0
      %4381 = vmatprep.subr.mxu0 0.0
      %4382 = vmatpush1.msra.mxu0 0.0
      %4383 = vmatprep.subr.mxu0 0.0
      %4384 = vmatpush1.msra.mxu0 0.0
      %4385 = vmatprep.subr.mxu0 0.0
      %4386 = vmatpush1.msra.mxu0 0.0
      %4387 = vmatprep.subr.mxu0 0.0
      %4388 = vmatpush1.msra.mxu0 0.0
      %4389 = vmatprep.subr.mxu0 0.0
      %4390 = vmatpush1.msra.mxu0 0.0
      %4391 = vmatprep.subr.mxu0 0.0
      %4392 = vmatpush1.msra.mxu0 0.0
      %4393 = vmatprep.subr.mxu0 0.0
      %4394 = vmatpush1.msra.mxu0 0.0
      %4395 = vmatprep.subr.mxu0 0.0
      %4396 = vmatpush1.msra.mxu0 0.0
      %4397 = vmatprep.subr.mxu0 0.0
      %4398 = vmatpush1.msra.mxu0 0.0
      %4399 = vmatprep.subr.mxu0 0.0
      %4400 = vmatpush1.msra.mxu0 0.0
      %4401 = vmatprep.subr.mxu0 0.0
      %4402 = vmatpush1.msra.mxu0 0.0
      %4403 = vmatprep.subr.mxu0 0.0
      %4404 = vmatpush1.msra.mxu0 0.0
      %4405 = vmatprep.subr.mxu0 0.0
      %4406 = vmatpush1.msra.mxu0 0.0
      %4407 = vmatprep.subr.mxu0 0.0
      %4408 = vmatpush1.msra.mxu0 0.0
      %4409 = vmatprep.subr.mxu0 0.0
      %4410 = vmatpush1.msra.mxu0 0.0
      %4411 = vmatprep.subr.mxu0 0.0
      %4412 = vmatpush1.msra.mxu0 0.0
      %4413 = vmatprep.subr.mxu0 0.0
      %4414 = vmatpush1.msra.mxu0 0.0
      %4415 = vmatprep.subr.mxu0 0.0
      %4416 = vmatpush1.msra.mxu0 0.0
      %4417 = vmatprep.subr.mxu0 0.0
      %4418 = vmatpush1.msra.mxu0 0.0
      %4419 = vmatprep.subr.mxu0 0.0
      %4420 = vmatpush1.msra.mxu0 0.0
      %4421 = vmatprep.subr.mxu0 0.0
      %4422 = vmatpush1.msra.mxu0 0.0
      %4423 = vmatprep.subr.mxu0 0.0
      %4424 = vmatpush1.msra.mxu0 0.0
      %4425 = vmatprep.mubr.f32.mxu0 0.0
      %4426 = vmatmul.mubr.f32.gmra.mrb[0].mxu0 %v4263
      %v4427 = vpop.f32.mrb[0].mxu0
      %v4428 = vadd.f32 0.0, %v4427
      %v4429 = vpop.f32.mrb[0].mxu0
      %4430 = vmatprep.mubr.f32.mxu0 0.0
      %4431 = vmatmul.mubr.f32.gmra.mrb[0].mxu0 %v4266
      %v4432 = vpop.f32.mrb[0].mxu0
      %v4433 = vadd.f32 0.0, %v4432
      %v4434 = vpop.f32.mrb[0].mxu0
      %4435 = vmatprep.mubr.f32.mxu0 0.0
      %4436 = vmatmul.mubr.f32.gmra.mrb[0].mxu0 %v4269
      %v4437 = vpop.f32.mrb[0].mxu0
      %v4438 = vadd.f32 0.0, %v4437
      %v4439 = vpop.f32.mrb[0].mxu0
      %4440 = vmatprep.mubr.f32.mxu0 0.0
      %4441 = vmatmul.mubr.f32.gmra.mrb[0].mxu0 %v4272
      %v4442 = vpop.f32.mrb[0].mxu0
      %v4443 = vadd.f32 0.0, %v4442
      %v4444 = vpop.f32.mrb[0].mxu0
      %4445 = vmatprep.mubr.f32.mxu0 0.0
      %4446 = vmatmul.mubr.f32.gmra.mrb[0].mxu0 %v4275
      %v4447 = vpop.f32.mrb[0].mxu0
      %v4448 = vadd.f32 0.0, %v4447
      %v4449 = vpop.f32.mrb[0].mxu0
      %4450 = vmatprep.mubr.f32.mxu0 0.0
      %4451 = vmatmul.mubr.f32.gmra.mrb[0].mxu0 %v4278
      %v4452 = vpop.f32.mrb[0].mxu0
      %v4453 = vadd.f32 0.0, %v4452
      %v4454 = vpop.f32.mrb[0].mxu0
      %4455 = vmatprep.mubr.f32.mxu0 0.0
      %4456 = vmatmul.mubr.f32.gmra.mrb[0].mxu0 %v4281
      %v4457 = vpop.f32.mrb[0].mxu0
      %v4458 = vadd.f32 0.0, %v4457
      %v4459 = vpop.f32.mrb[0].mxu0
      %4460 = vmatprep.mubr.f32.mxu0 0.0
      %4461 = vmatmul.mubr.f32.gmra.mrb[0].mxu0 %v4284
      %v4462 = vpop.f32.mrb[0].mxu0
      %v4463 = vadd.f32 0.0, %v4462
      %v4464 = vpop.f32.mrb[0].mxu0
      %4465 = vmatprep.mubr.f32.mxu0 0.0
      %4466 = vmatmul.mubr.f32.gmra.mrb[0].mxu0 %v4287
      %v4467 = vpop.f32.mrb[0].mxu0
      %v4468 = vadd.f32 0.0, %v4467
      %v4469 = vpop.f32.mrb[0].mxu0
      %4470 = vmatprep.mubr.f32.mxu0 0.0
      %4471 = vmatmul.mubr.f32.gmra.mrb[0].mxu0 %v4290
      %v4472 = vpop.f32.mrb[0].mxu0
      %v4473 = vadd.f32 0.0, %v4472
      %v4474 = vpop.f32.mrb[0].mxu0
      %4475 = vmatprep.mubr.f32.mxu0 0.0
      %4476 = vmatmul.mubr.f32.gmra.mrb[0].mxu0 %v4293
      %v4477 = vpop.f32.mrb[0].mxu0
      %v4478 = vadd.f32 0.0, %v4477
      %v4479 = vpop.f32.mrb[0].mxu0
      %4480 = vmatprep.mubr.f32.mxu0 0.0
      %4481 = vmatmul.mubr.f32.gmra.mrb[0].mxu0 %v4296
      %v4482 = vpop.f32.mrb[0].mxu0
      %v4483 = vadd.f32 0.0, %v4482
      %v4484 = vpop.f32.mrb[0].mxu0
      %4485 = vmatprep.mubr.f32.mxu0 0.0
      %4486 = vmatmul.mubr.f32.gmra.mrb[0].mxu0 %v4299
      %v4487 = vpop.f32.mrb[0].mxu0
      %v4488 = vadd.f32 0.0, %v4487
      %v4489 = vpop.f32.mrb[0].mxu0
      %4490 = vmatprep.mubr.f32.mxu0 0.0
      %4491 = vmatmul.mubr.f32.gmra.mrb[0].mxu0 %v4302
      %v4492 = vpop.f32.mrb[0].mxu0
      %v4493 = vadd.f32 0.0, %v4492
      %v4494 = vpop.f32.mrb[0].mxu0
      %4495 = vmatprep.mubr.f32.mxu0 0.0
      %4496 = vmatmul.mubr.f32.gmra.mrb[0].mxu0 %v4305
      %v4497 = vpop.f32.mrb[0].mxu0
      %v4498 = vadd.f32 0.0, %v4497
      %v4499 = vpop.f32.mrb[0].mxu0
      %4500 = vmatprep.mubr.f32.mxu0 0.0
      %4501 = vmatmul.mubr.f32.gmra.mrb[0].mxu0 %v4308
      %v4502 = vpop.f32.mrb[0].mxu0
      %v4503 = vadd.f32 0.0, %v4502
      %v4504 = vpop.f32.mrb[0].mxu0
      %4505 = vmatprep.mubr.f32.mxu0 0.0
      %4506 = vmatmul.mubr.f32.gmra.mrb[0].mxu0 %v4311
      %v4507 = vpop.f32.mrb[0].mxu0
      %v4508 = vadd.f32 0.0, %v4507
      %v4509 = vpop.f32.mrb[0].mxu0
      %4510 = vmatprep.mubr.f32.mxu0 0.0
      %4511 = vmatmul.mubr.f32.gmra.mrb[0].mxu0 %v4314
      %v4512 = vpop.f32.mrb[0].mxu0
      %v4513 = vadd.f32 0.0, %v4512
      %v4514 = vpop.f32.mrb[0].mxu0
      %4515 = vmatprep.mubr.f32.mxu0 0.0
      %4516 = vmatmul.mubr.f32.gmra.mrb[0].mxu0 %v4317
      %v4517 = vpop.f32.mrb[0].mxu0
      %v4518 = vadd.f32 0.0, %v4517
      %v4519 = vpop.f32.mrb[0].mxu0
      %4520 = vmatprep.mubr.f32.mxu0 0.0
      %4521 = vmatmul.mubr.f32.gmra.mrb[0].mxu0 %v4320
      %v4522 = vpop.f32.mrb[0].mxu0
      %v4523 = vadd.f32 0.0, %v4522
      %v4524 = vpop.f32.mrb[0].mxu0
      %4525 = vmatprep.mubr.f32.mxu0 0.0
      %4526 = vmatmul.mubr.f32.gmra.mrb[0].mxu0 %v4323
      %v4527 = vpop.f32.mrb[0].mxu0
      %v4528 = vadd.f32 0.0, %v4527
      %v4529 = vpop.f32.mrb[0].mxu0
      %4530 = vmatprep.mubr.f32.mxu0 0.0
      %4531 = vmatmul.mubr.f32.gmra.mrb[0].mxu0 %v4326
      %v4532 = vpop.f32.mrb[0].mxu0
      %v4533 = vadd.f32 0.0, %v4532
      %v4534 = vpop.f32.mrb[0].mxu0
      %4535 = vmatprep.mubr.f32.mxu0 0.0
      %4536 = vmatmul.mubr.f32.gmra.mrb[0].mxu0 %v4329
      %v4537 = vpop.f32.mrb[0].mxu0
      %v4538 = vadd.f32 0.0, %v4537
      %v4539 = vpop.f32.mrb[0].mxu0
      %4540 = vmatprep.mubr.f32.mxu0 0.0
      %4541 = vmatmul.mubr.f32.gmra.mrb[0].mxu0 %v4332
      %v4542 = vpop.f32.mrb[0].mxu0
      %v4543 = vadd.f32 0.0, %v4542
      %v4544 = vpop.f32.mrb[0].mxu0
      %4545 = vmatprep.mubr.f32.mxu0 0.0
      %4546 = vmatmul.mubr.f32.gmra.mrb[0].mxu0 %v4335
      %v4547 = vpop.f32.mrb[0].mxu0
      %v4548 = vadd.f32 0.0, %v4547
      %v4549 = vpop.f32.mrb[0].mxu0
      %4550 = vmatprep.mubr.f32.mxu0 0.0
      %4551 = vmatmul.mubr.f32.gmra.mrb[0].mxu0 %v4338
      %v4552 = vpop.f32.mrb[0].mxu0
      %v4553 = vadd.f32 0.0, %v4552
      %v4554 = vpop.f32.mrb[0].mxu0
      %4555 = vmatprep.mubr.f32.mxu0 0.0
      %4556 = vmatmul.mubr.f32.gmra.mrb[0].mxu0 %v4341
      %v4557 = vpop.f32.mrb[0].mxu0
      %v4558 = vadd.f32 0.0, %v4557
      %v4559 = vpop.f32.mrb[0].mxu0
      %4560 = vmatprep.mubr.f32.mxu0 0.0
      %4561 = vmatmul.mubr.f32.gmra.mrb[0].mxu0 %v4344
      %v4562 = vpop.f32.mrb[0].mxu0
      %v4563 = vadd.f32 0.0, %v4562
      %v4564 = vpop.f32.mrb[0].mxu0
      %4565 = vmatprep.mubr.f32.mxu0 0.0
      %4566 = vmatmul.mubr.f32.gmra.mrb[0].mxu0 %v4347
      %v4567 = vpop.f32.mrb[0].mxu0
      %v4568 = vadd.f32 0.0, %v4567
      %v4569 = vpop.f32.mrb[0].mxu0
      %4570 = vmatprep.mubr.f32.mxu0 0.0
      %4571 = vmatmul.mubr.f32.gmra.mrb[0].mxu0 %v4350
      %v4572 = vpop.f32.mrb[0].mxu0
      %v4573 = vadd.f32 0.0, %v4572
      %v4574 = vpop.f32.mrb[0].mxu0
      %4575 = vmatprep.mubr.f32.mxu0 0.0
      %4576 = vmatmul.mubr.f32.gmra.mrb[0].mxu0 %v4353
      %v4577 = vpop.f32.mrb[0].mxu0
      %v4578 = vadd.f32 0.0, %v4577
      %v4579 = vpop.f32.mrb[0].mxu0
      %4580 = vmatprep.mubr.f32.mxu0 0.0
      %4581 = vmatmul.mubr.f32.gmra.mrb[0].mxu0 %v4356
      %v4582 = vpop.f32.mrb[0].mxu0
      %v4583 = vadd.f32 0.0, %v4582
      %v4584 = vpop.f32.mrb[0].mxu0
      %4585 = vdwg.mxu0
      %v4586 = vadd.f32 %v4196, %v4428
      %v4587 = vadd.f32 %v4197, %v4433
      %v4588 = vadd.f32 %v4198, %v4438
      %v4589 = vadd.f32 %v4199, %v4443
      %v4590 = vadd.f32 %v4200, %v4448
      %v4591 = vadd.f32 %v4201, %v4453
      %v4592 = vadd.f32 %v4202, %v4458
      %v4593 = vadd.f32 %v4203, %v4463
      %v4594 = vadd.f32 %v4204, %v4468
      %v4595 = vadd.f32 %v4205, %v4473
      %v4596 = vadd.f32 %v4206, %v4478
      %v4597 = vadd.f32 %v4207, %v4483
      %v4598 = vadd.f32 %v4208, %v4488
      %v4599 = vadd.f32 %v4209, %v4493
      %v4600 = vadd.f32 %v4210, %v4498
      %v4601 = vadd.f32 %v4211, %v4503
      %v4602 = vadd.f32 %v4212, %v4508
      %v4603 = vadd.f32 %v4213, %v4513
      %v4604 = vadd.f32 %v4214, %v4518
      %v4605 = vadd.f32 %v4215, %v4523
      %v4606 = vadd.f32 %v4216, %v4528
      %v4607 = vadd.f32 %v4217, %v4533
      %v4608 = vadd.f32 %v4218, %v4538
      %v4609 = vadd.f32 %v4219, %v4543
      %v4610 = vadd.f32 %v4220, %v4548
      %v4611 = vadd.f32 %v4221, %v4553
      %v4612 = vadd.f32 %v4222, %v4558
      %v4613 = vadd.f32 %v4223, %v4563
      %v4614 = vadd.f32 %v4224, %v4568
      %v4615 = vadd.f32 %v4225, %v4573
      %v4616 = vadd.f32 %v4226, %v4578
      %v4617 = vadd.f32 %v4227, %v4583
      %v4618 = vld [vmem:[#allocation2 + $0x29] sm:$0xff]
      %v4619 = vld [vmem:[#allocation2 + $0x31] sm:$0xff]
      %v4620 = vld [vmem:[#allocation2 + $0x39] sm:$0xff]
      %v4621 = vld [vmem:[#allocation2 + $0x41] sm:$0xff]
      %v4622 = vld [vmem:[#allocation2 + $0x49] sm:$0xff]
      %v4623 = vld [vmem:[#allocation2 + $0x51] sm:$0xff]
      %v4624 = vld [vmem:[#allocation2 + $0x59] sm:$0xff]
      %v4625 = vld [vmem:[#allocation2 + $0x61] sm:$0xff]
      %v4626 = vld [vmem:[#allocation2 + $0x69] sm:$0xff]
      %v4627 = vld [vmem:[#allocation2 + $0x71] sm:$0xff]
      %v4628 = vld [vmem:[#allocation2 + $0x79] sm:$0xff]
      %v4629 = vld [vmem:[#allocation2 + $0x81] sm:$0xff]
      %v4630 = vld [vmem:[#allocation2 + $0x89] sm:$0xff]
      %v4631 = vld [vmem:[#allocation2 + $0x91] sm:$0xff]
      %v4632 = vld [vmem:[#allocation2 + $0x99] sm:$0xff]
      %v4633 = vld [vmem:[#allocation2 + $0xa1] sm:$0xff]
      %v4634 = vld [vmem:[#allocation2 + $0xa9] sm:$0xff]
      %v4635 = vld [vmem:[#allocation2 + $0xb1] sm:$0xff]
      %v4636 = vld [vmem:[#allocation2 + $0xb9] sm:$0xff]
      %v4637 = vld [vmem:[#allocation2 + $0xc1] sm:$0xff]
      %v4638 = vld [vmem:[#allocation2 + $0xc9] sm:$0xff]
      %v4639 = vld [vmem:[#allocation2 + $0xd1] sm:$0xff]
      %v4640 = vld [vmem:[#allocation2 + $0xd9] sm:$0xff]
      %v4641 = vld [vmem:[#allocation2 + $0xe1] sm:$0xff]
      %v4642 = vld [vmem:[#allocation2 + $0xe9] sm:$0xff]
      %v4643 = vld [vmem:[#allocation2 + $0xf1] sm:$0xff]
      %v4644 = vld [vmem:[#allocation2 + $0xf9] sm:$0xff]
      %v4645 = vld [vmem:[#allocation2 + $0x101] sm:$0xff]
      %v4646 = vld [vmem:[#allocation2 + $0x109] sm:$0xff]
      %v4647 = vld [vmem:[#allocation2 + $0x111] sm:$0xff]
      %v4648 = vld [vmem:[#allocation2 + $0x119] sm:$0xff]
      %v4649 = vld [vmem:[#allocation2 + $0x121] sm:$0xff]
      %v4650 = vsel %vm2150, %v4618, 0.0
      %v4651 = vsel %vm2151, %v4619, 0.0
      %v4652 = vsel %vm2152, %v4620, 0.0
      %v4653 = vsel %vm2153, %v4621, 0.0
      %v4654 = vsel %vm2154, %v4622, 0.0
      %v4655 = vsel %vm2155, %v4623, 0.0
      %v4656 = vsel %vm2156, %v4624, 0.0
      %v4657 = vsel %vm2157, %v4625, 0.0
      %v4658 = vsel %vm2158, %v4626, 0.0
      %v4659 = vsel %vm2159, %v4627, 0.0
      %v4660 = vsel %vm2160, %v4628, 0.0
      %v4661 = vsel %vm2161, %v4629, 0.0
      %v4662 = vsel %vm2162, %v4630, 0.0
      %v4663 = vsel %vm2163, %v4631, 0.0
      %v4664 = vsel %vm2164, %v4632, 0.0
      %v4665 = vsel %vm2165, %v4633, 0.0
      %v4666 = vsel %vm2166, %v4634, 0.0
      %v4667 = vsel %vm2167, %v4635, 0.0
      %v4668 = vsel %vm2168, %v4636, 0.0
      %v4669 = vsel %vm2169, %v4637, 0.0
      %v4670 = vsel %vm2170, %v4638, 0.0
      %v4671 = vsel %vm2171, %v4639, 0.0
      %v4672 = vsel %vm2172, %v4640, 0.0
      %v4673 = vsel %vm2173, %v4641, 0.0
      %v4674 = vsel %vm2174, %v4642, 0.0
      %v4675 = vsel %vm2175, %v4643, 0.0
      %v4676 = vsel %vm2176, %v4644, 0.0
      %v4677 = vsel %vm2177, %v4645, 0.0
      %v4678 = vsel %vm2178, %v4646, 0.0
      %v4679 = vsel %vm2179, %v4647, 0.0
      %v4680 = vsel %vm2180, %v4648, 0.0
      %v4681 = vsel %vm2181, %v4649, 0.0
      %s4682 = scalar_lea.vmem %s4, 32
      %v4683 = vld [vmem:[%s4682] sm:$0xf]
      %v4685 = vsel %vm535, %v4650, 0
      %v4688 = vsel %vm535, %v4651, 0
      %v4691 = vsel %vm535, %v4652, 0
      %v4694 = vsel %vm535, %v4653, 0
      %v4697 = vsel %vm535, %v4654, 0
      %v4700 = vsel %vm535, %v4655, 0
      %v4703 = vsel %vm535, %v4656, 0
      %v4706 = vsel %vm535, %v4657, 0
      %v4709 = vsel %vm535, %v4658, 0
      %v4712 = vsel %vm535, %v4659, 0
      %v4715 = vsel %vm535, %v4660, 0
      %v4718 = vsel %vm535, %v4661, 0
      %v4721 = vsel %vm535, %v4662, 0
      %v4724 = vsel %vm535, %v4663, 0
      %v4727 = vsel %vm535, %v4664, 0
      %v4730 = vsel %vm535, %v4665, 0
      %v4733 = vsel %vm535, %v4666, 0
      %v4736 = vsel %vm535, %v4667, 0
      %v4739 = vsel %vm535, %v4668, 0
      %v4742 = vsel %vm535, %v4669, 0
      %v4745 = vsel %vm535, %v4670, 0
      %v4748 = vsel %vm535, %v4671, 0
      %v4751 = vsel %vm535, %v4672, 0
      %v4754 = vsel %vm535, %v4673, 0
      %v4757 = vsel %vm535, %v4674, 0
      %v4760 = vsel %vm535, %v4675, 0
      %v4763 = vsel %vm535, %v4676, 0
      %v4766 = vsel %vm535, %v4677, 0
      %v4769 = vsel %vm535, %v4678, 0
      %v4772 = vsel %vm535, %v4679, 0
      %v4775 = vsel %vm535, %v4680, 0
      %v4778 = vsel %vm535, %v4681, 0
      %v4781 = vsel %vm1533, %v4683, 0
      %4783 = vmatprep.subr.mxu0 0.0
      %4784 = vmatpush1.msra.mxu0 %v4781
      %4785 = vmatprep.subr.mxu0 0.0
      %4786 = vmatpush1.msra.mxu0 0.0
      %4787 = vmatprep.subr.mxu0 0.0
      %4788 = vmatpush1.msra.mxu0 0.0
      %4789 = vmatprep.subr.mxu0 0.0
      %4790 = vmatpush1.msra.mxu0 0.0
      %4791 = vmatprep.subr.mxu0 0.0
      %4792 = vmatpush1.msra.mxu0 0.0
      %4793 = vmatprep.subr.mxu0 0.0
      %4794 = vmatpush1.msra.mxu0 0.0
      %4795 = vmatprep.subr.mxu0 0.0
      %4796 = vmatpush1.msra.mxu0 0.0
      %4797 = vmatprep.subr.mxu0 0.0
      %4798 = vmatpush1.msra.mxu0 0.0
      %4799 = vmatprep.subr.mxu0 0.0
      %4800 = vmatpush1.msra.mxu0 0.0
      %4801 = vmatprep.subr.mxu0 0.0
      %4802 = vmatpush1.msra.mxu0 0.0
      %4803 = vmatprep.subr.mxu0 0.0
      %4804 = vmatpush1.msra.mxu0 0.0
      %4805 = vmatprep.subr.mxu0 0.0
      %4806 = vmatpush1.msra.mxu0 0.0
      %4807 = vmatprep.subr.mxu0 0.0
      %4808 = vmatpush1.msra.mxu0 0.0
      %4809 = vmatprep.subr.mxu0 0.0
      %4810 = vmatpush1.msra.mxu0 0.0
      %4811 = vmatprep.subr.mxu0 0.0
      %4812 = vmatpush1.msra.mxu0 0.0
      %4813 = vmatprep.subr.mxu0 0.0
      %4814 = vmatpush1.msra.mxu0 0.0
      %4815 = vmatprep.subr.mxu0 0.0
      %4816 = vmatpush1.msra.mxu0 0.0
      %4817 = vmatprep.subr.mxu0 0.0
      %4818 = vmatpush1.msra.mxu0 0.0
      %4819 = vmatprep.subr.mxu0 0.0
      %4820 = vmatpush1.msra.mxu0 0.0
      %4821 = vmatprep.subr.mxu0 0.0
      %4822 = vmatpush1.msra.mxu0 0.0
      %4823 = vmatprep.subr.mxu0 0.0
      %4824 = vmatpush1.msra.mxu0 0.0
      %4825 = vmatprep.subr.mxu0 0.0
      %4826 = vmatpush1.msra.mxu0 0.0
      %4827 = vmatprep.subr.mxu0 0.0
      %4828 = vmatpush1.msra.mxu0 0.0
      %4829 = vmatprep.subr.mxu0 0.0
      %4830 = vmatpush1.msra.mxu0 0.0
      %4831 = vmatprep.subr.mxu0 0.0
      %4832 = vmatpush1.msra.mxu0 0.0
      %4833 = vmatprep.subr.mxu0 0.0
      %4834 = vmatpush1.msra.mxu0 0.0
      %4835 = vmatprep.subr.mxu0 0.0
      %4836 = vmatpush1.msra.mxu0 0.0
      %4837 = vmatprep.subr.mxu0 0.0
      %4838 = vmatpush1.msra.mxu0 0.0
      %4839 = vmatprep.subr.mxu0 0.0
      %4840 = vmatpush1.msra.mxu0 0.0
      %4841 = vmatprep.subr.mxu0 0.0
      %4842 = vmatpush1.msra.mxu0 0.0
      %4843 = vmatprep.subr.mxu0 0.0
      %4844 = vmatpush1.msra.mxu0 0.0
      %4845 = vmatprep.subr.mxu0 0.0
      %4846 = vmatpush1.msra.mxu0 0.0
      %4847 = vmatprep.mubr.f32.mxu0 0.0
      %4848 = vmatmul.mubr.f32.gmra.mrb[0].mxu0 %v4685
      %v4849 = vpop.f32.mrb[0].mxu0
      %v4850 = vadd.f32 0.0, %v4849
      %v4851 = vpop.f32.mrb[0].mxu0
      %4852 = vmatprep.mubr.f32.mxu0 0.0
      %4853 = vmatmul.mubr.f32.gmra.mrb[0].mxu0 %v4688
      %v4854 = vpop.f32.mrb[0].mxu0
      %v4855 = vadd.f32 0.0, %v4854
      %v4856 = vpop.f32.mrb[0].mxu0
      %4857 = vmatprep.mubr.f32.mxu0 0.0
      %4858 = vmatmul.mubr.f32.gmra.mrb[0].mxu0 %v4691
      %v4859 = vpop.f32.mrb[0].mxu0
      %v4860 = vadd.f32 0.0, %v4859
      %v4861 = vpop.f32.mrb[0].mxu0
      %4862 = vmatprep.mubr.f32.mxu0 0.0
      %4863 = vmatmul.mubr.f32.gmra.mrb[0].mxu0 %v4694
      %v4864 = vpop.f32.mrb[0].mxu0
      %v4865 = vadd.f32 0.0, %v4864
      %v4866 = vpop.f32.mrb[0].mxu0
      %4867 = vmatprep.mubr.f32.mxu0 0.0
      %4868 = vmatmul.mubr.f32.gmra.mrb[0].mxu0 %v4697
      %v4869 = vpop.f32.mrb[0].mxu0
      %v4870 = vadd.f32 0.0, %v4869
      %v4871 = vpop.f32.mrb[0].mxu0
      %4872 = vmatprep.mubr.f32.mxu0 0.0
      %4873 = vmatmul.mubr.f32.gmra.mrb[0].mxu0 %v4700
      %v4874 = vpop.f32.mrb[0].mxu0
      %v4875 = vadd.f32 0.0, %v4874
      %v4876 = vpop.f32.mrb[0].mxu0
      %4877 = vmatprep.mubr.f32.mxu0 0.0
      %4878 = vmatmul.mubr.f32.gmra.mrb[0].mxu0 %v4703
      %v4879 = vpop.f32.mrb[0].mxu0
      %v4880 = vadd.f32 0.0, %v4879
      %v4881 = vpop.f32.mrb[0].mxu0
      %4882 = vmatprep.mubr.f32.mxu0 0.0
      %4883 = vmatmul.mubr.f32.gmra.mrb[0].mxu0 %v4706
      %v4884 = vpop.f32.mrb[0].mxu0
      %v4885 = vadd.f32 0.0, %v4884
      %v4886 = vpop.f32.mrb[0].mxu0
      %4887 = vmatprep.mubr.f32.mxu0 0.0
      %4888 = vmatmul.mubr.f32.gmra.mrb[0].mxu0 %v4709
      %v4889 = vpop.f32.mrb[0].mxu0
      %v4890 = vadd.f32 0.0, %v4889
      %v4891 = vpop.f32.mrb[0].mxu0
      %4892 = vmatprep.mubr.f32.mxu0 0.0
      %4893 = vmatmul.mubr.f32.gmra.mrb[0].mxu0 %v4712
      %v4894 = vpop.f32.mrb[0].mxu0
      %v4895 = vadd.f32 0.0, %v4894
      %v4896 = vpop.f32.mrb[0].mxu0
      %4897 = vmatprep.mubr.f32.mxu0 0.0
      %4898 = vmatmul.mubr.f32.gmra.mrb[0].mxu0 %v4715
      %v4899 = vpop.f32.mrb[0].mxu0
      %v4900 = vadd.f32 0.0, %v4899
      %v4901 = vpop.f32.mrb[0].mxu0
      %4902 = vmatprep.mubr.f32.mxu0 0.0
      %4903 = vmatmul.mubr.f32.gmra.mrb[0].mxu0 %v4718
      %v4904 = vpop.f32.mrb[0].mxu0
      %v4905 = vadd.f32 0.0, %v4904
      %v4906 = vpop.f32.mrb[0].mxu0
      %4907 = vmatprep.mubr.f32.mxu0 0.0
      %4908 = vmatmul.mubr.f32.gmra.mrb[0].mxu0 %v4721
      %v4909 = vpop.f32.mrb[0].mxu0
      %v4910 = vadd.f32 0.0, %v4909
      %v4911 = vpop.f32.mrb[0].mxu0
      %4912 = vmatprep.mubr.f32.mxu0 0.0
      %4913 = vmatmul.mubr.f32.gmra.mrb[0].mxu0 %v4724
      %v4914 = vpop.f32.mrb[0].mxu0
      %v4915 = vadd.f32 0.0, %v4914
      %v4916 = vpop.f32.mrb[0].mxu0
      %4917 = vmatprep.mubr.f32.mxu0 0.0
      %4918 = vmatmul.mubr.f32.gmra.mrb[0].mxu0 %v4727
      %v4919 = vpop.f32.mrb[0].mxu0
      %v4920 = vadd.f32 0.0, %v4919
      %v4921 = vpop.f32.mrb[0].mxu0
      %4922 = vmatprep.mubr.f32.mxu0 0.0
      %4923 = vmatmul.mubr.f32.gmra.mrb[0].mxu0 %v4730
      %v4924 = vpop.f32.mrb[0].mxu0
      %v4925 = vadd.f32 0.0, %v4924
      %v4926 = vpop.f32.mrb[0].mxu0
      %4927 = vmatprep.mubr.f32.mxu0 0.0
      %4928 = vmatmul.mubr.f32.gmra.mrb[0].mxu0 %v4733
      %v4929 = vpop.f32.mrb[0].mxu0
      %v4930 = vadd.f32 0.0, %v4929
      %v4931 = vpop.f32.mrb[0].mxu0
      %4932 = vmatprep.mubr.f32.mxu0 0.0
      %4933 = vmatmul.mubr.f32.gmra.mrb[0].mxu0 %v4736
      %v4934 = vpop.f32.mrb[0].mxu0
      %v4935 = vadd.f32 0.0, %v4934
      %v4936 = vpop.f32.mrb[0].mxu0
      %4937 = vmatprep.mubr.f32.mxu0 0.0
      %4938 = vmatmul.mubr.f32.gmra.mrb[0].mxu0 %v4739
      %v4939 = vpop.f32.mrb[0].mxu0
      %v4940 = vadd.f32 0.0, %v4939
      %v4941 = vpop.f32.mrb[0].mxu0
      %4942 = vmatprep.mubr.f32.mxu0 0.0
      %4943 = vmatmul.mubr.f32.gmra.mrb[0].mxu0 %v4742
      %v4944 = vpop.f32.mrb[0].mxu0
      %v4945 = vadd.f32 0.0, %v4944
      %v4946 = vpop.f32.mrb[0].mxu0
      %4947 = vmatprep.mubr.f32.mxu0 0.0
      %4948 = vmatmul.mubr.f32.gmra.mrb[0].mxu0 %v4745
      %v4949 = vpop.f32.mrb[0].mxu0
      %v4950 = vadd.f32 0.0, %v4949
      %v4951 = vpop.f32.mrb[0].mxu0
      %4952 = vmatprep.mubr.f32.mxu0 0.0
      %4953 = vmatmul.mubr.f32.gmra.mrb[0].mxu0 %v4748
      %v4954 = vpop.f32.mrb[0].mxu0
      %v4955 = vadd.f32 0.0, %v4954
      %v4956 = vpop.f32.mrb[0].mxu0
      %4957 = vmatprep.mubr.f32.mxu0 0.0
      %4958 = vmatmul.mubr.f32.gmra.mrb[0].mxu0 %v4751
      %v4959 = vpop.f32.mrb[0].mxu0
      %v4960 = vadd.f32 0.0, %v4959
      %v4961 = vpop.f32.mrb[0].mxu0
      %4962 = vmatprep.mubr.f32.mxu0 0.0
      %4963 = vmatmul.mubr.f32.gmra.mrb[0].mxu0 %v4754
      %v4964 = vpop.f32.mrb[0].mxu0
      %v4965 = vadd.f32 0.0, %v4964
      %v4966 = vpop.f32.mrb[0].mxu0
      %4967 = vmatprep.mubr.f32.mxu0 0.0
      %4968 = vmatmul.mubr.f32.gmra.mrb[0].mxu0 %v4757
      %v4969 = vpop.f32.mrb[0].mxu0
      %v4970 = vadd.f32 0.0, %v4969
      %v4971 = vpop.f32.mrb[0].mxu0
      %4972 = vmatprep.mubr.f32.mxu0 0.0
      %4973 = vmatmul.mubr.f32.gmra.mrb[0].mxu0 %v4760
      %v4974 = vpop.f32.mrb[0].mxu0
      %v4975 = vadd.f32 0.0, %v4974
      %v4976 = vpop.f32.mrb[0].mxu0
      %4977 = vmatprep.mubr.f32.mxu0 0.0
      %4978 = vmatmul.mubr.f32.gmra.mrb[0].mxu0 %v4763
      %v4979 = vpop.f32.mrb[0].mxu0
      %v4980 = vadd.f32 0.0, %v4979
      %v4981 = vpop.f32.mrb[0].mxu0
      %4982 = vmatprep.mubr.f32.mxu0 0.0
      %4983 = vmatmul.mubr.f32.gmra.mrb[0].mxu0 %v4766
      %v4984 = vpop.f32.mrb[0].mxu0
      %v4985 = vadd.f32 0.0, %v4984
      %v4986 = vpop.f32.mrb[0].mxu0
      %4987 = vmatprep.mubr.f32.mxu0 0.0
      %4988 = vmatmul.mubr.f32.gmra.mrb[0].mxu0 %v4769
      %v4989 = vpop.f32.mrb[0].mxu0
      %v4990 = vadd.f32 0.0, %v4989
      %v4991 = vpop.f32.mrb[0].mxu0
      %4992 = vmatprep.mubr.f32.mxu0 0.0
      %4993 = vmatmul.mubr.f32.gmra.mrb[0].mxu0 %v4772
      %v4994 = vpop.f32.mrb[0].mxu0
      %v4995 = vadd.f32 0.0, %v4994
      %v4996 = vpop.f32.mrb[0].mxu0
      %4997 = vmatprep.mubr.f32.mxu0 0.0
      %4998 = vmatmul.mubr.f32.gmra.mrb[0].mxu0 %v4775
      %v4999 = vpop.f32.mrb[0].mxu0
      %v5000 = vadd.f32 0.0, %v4999
      %v5001 = vpop.f32.mrb[0].mxu0
      %5002 = vmatprep.mubr.f32.mxu0 0.0
      %5003 = vmatmul.mubr.f32.gmra.mrb[0].mxu0 %v4778
      %v5004 = vpop.f32.mrb[0].mxu0
      %v5005 = vadd.f32 0.0, %v5004
      %v5006 = vpop.f32.mrb[0].mxu0
      %5007 = vdwg.mxu0
      %v5008 = vadd.f32 %v4586, %v4850
      %v5009 = vadd.f32 %v4587, %v4855
      %v5010 = vadd.f32 %v4588, %v4860
      %v5011 = vadd.f32 %v4589, %v4865
      %v5012 = vadd.f32 %v4590, %v4870
      %v5013 = vadd.f32 %v4591, %v4875
      %v5014 = vadd.f32 %v4592, %v4880
      %v5015 = vadd.f32 %v4593, %v4885
      %v5016 = vadd.f32 %v4594, %v4890
      %v5017 = vadd.f32 %v4595, %v4895
      %v5018 = vadd.f32 %v4596, %v4900
      %v5019 = vadd.f32 %v4597, %v4905
      %v5020 = vadd.f32 %v4598, %v4910
      %v5021 = vadd.f32 %v4599, %v4915
      %v5022 = vadd.f32 %v4600, %v4920
      %v5023 = vadd.f32 %v4601, %v4925
      %v5024 = vadd.f32 %v4602, %v4930
      %v5025 = vadd.f32 %v4603, %v4935
      %v5026 = vadd.f32 %v4604, %v4940
      %v5027 = vadd.f32 %v4605, %v4945
      %v5028 = vadd.f32 %v4606, %v4950
      %v5029 = vadd.f32 %v4607, %v4955
      %v5030 = vadd.f32 %v4608, %v4960
      %v5031 = vadd.f32 %v4609, %v4965
      %v5032 = vadd.f32 %v4610, %v4970
      %v5033 = vadd.f32 %v4611, %v4975
      %v5034 = vadd.f32 %v4612, %v4980
      %v5035 = vadd.f32 %v4613, %v4985
      %v5036 = vadd.f32 %v4614, %v4990
      %v5037 = vadd.f32 %v4615, %v4995
      %v5038 = vadd.f32 %v4616, %v5000
      %v5039 = vadd.f32 %v4617, %v5005
      %v5040 = vld [vmem:[%s5] sm:$0x1]
      %v5042 = vlaneseq
      %v5043 = vshrl.u32 %v5042, 7
      %v5044 = vsub.s32 0, %v5043
      %v5045 = vrot.slane %v5040, %v5044
      %v5047 = vadd.f32 %v5008, %v5045
      %v5048 = vadd.f32 %v5009, %v5045
      %v5049 = vadd.f32 %v5010, %v5045
      %v5050 = vadd.f32 %v5011, %v5045
      %v5051 = vadd.f32 %v5012, %v5045
      %v5052 = vadd.f32 %v5013, %v5045
      %v5053 = vadd.f32 %v5014, %v5045
      %v5054 = vadd.f32 %v5015, %v5045
      %v5055 = vadd.f32 %v5016, %v5045
      %v5056 = vadd.f32 %v5017, %v5045
      %v5057 = vadd.f32 %v5018, %v5045
      %v5058 = vadd.f32 %v5019, %v5045
      %v5059 = vadd.f32 %v5020, %v5045
      %v5060 = vadd.f32 %v5021, %v5045
      %v5061 = vadd.f32 %v5022, %v5045
      %v5062 = vadd.f32 %v5023, %v5045
      %v5063 = vadd.f32 %v5024, %v5045
      %v5064 = vadd.f32 %v5025, %v5045
      %v5065 = vadd.f32 %v5026, %v5045
      %v5066 = vadd.f32 %v5027, %v5045
      %v5067 = vadd.f32 %v5028, %v5045
      %v5068 = vadd.f32 %v5029, %v5045
      %v5069 = vadd.f32 %v5030, %v5045
      %v5070 = vadd.f32 %v5031, %v5045
      %v5071 = vadd.f32 %v5032, %v5045
      %v5072 = vadd.f32 %v5033, %v5045
      %v5073 = vadd.f32 %v5034, %v5045
      %v5074 = vadd.f32 %v5035, %v5045
      %v5075 = vadd.f32 %v5036, %v5045
      %v5076 = vadd.f32 %v5037, %v5045
      %v5077 = vadd.f32 %v5038, %v5045
      %v5078 = vadd.f32 %v5039, %v5045
      %v5079 = vld [vmem:[%s6] sm:$0x1]
      %v5080 = vld [vmem:[%s7] sm:$0x1]
      %v5081 = vld [vmem:[%s8] sm:$0x1]
      %v5082 = vmul.f32 %v5047, %v5047
      %v5083 = vmul.f32 %v5048, %v5048
      %v5084 = vmul.f32 %v5049, %v5049
      %v5085 = vmul.f32 %v5050, %v5050
      %v5086 = vmul.f32 %v5051, %v5051
      %v5087 = vmul.f32 %v5052, %v5052
      %v5088 = vmul.f32 %v5053, %v5053
      %v5089 = vmul.f32 %v5054, %v5054
      %v5090 = vmul.f32 %v5055, %v5055
      %v5091 = vmul.f32 %v5056, %v5056
      %v5092 = vmul.f32 %v5057, %v5057
      %v5093 = vmul.f32 %v5058, %v5058
      %v5094 = vmul.f32 %v5059, %v5059
      %v5095 = vmul.f32 %v5060, %v5060
      %v5096 = vmul.f32 %v5061, %v5061
      %v5097 = vmul.f32 %v5062, %v5062
      %v5098 = vmul.f32 %v5063, %v5063
      %v5099 = vmul.f32 %v5064, %v5064
      %v5100 = vmul.f32 %v5065, %v5065
      %v5101 = vmul.f32 %v5066, %v5066
      %v5102 = vmul.f32 %v5067, %v5067
      %v5103 = vmul.f32 %v5068, %v5068
      %v5104 = vmul.f32 %v5069, %v5069
      %v5105 = vmul.f32 %v5070, %v5070
      %v5106 = vmul.f32 %v5071, %v5071
      %v5107 = vmul.f32 %v5072, %v5072
      %v5108 = vmul.f32 %v5073, %v5073
      %v5109 = vmul.f32 %v5074, %v5074
      %v5110 = vmul.f32 %v5075, %v5075
      %v5111 = vmul.f32 %v5076, %v5076
      %v5112 = vmul.f32 %v5077, %v5077
      %v5113 = vmul.f32 %v5078, %v5078
      %v5114 = vsel %vm535, %v5082, 0.0
      %v5115 = vsel %vm535, %v5083, 0.0
      %v5116 = vadd.f32 %v5114, %v5115
      %v5117 = vsel %vm535, %v5084, 0.0
      %v5118 = vadd.f32 %v5116, %v5117
      %v5119 = vsel %vm535, %v5085, 0.0
      %v5120 = vadd.f32 %v5118, %v5119
      %v5121 = vsel %vm535, %v5086, 0.0
      %v5122 = vadd.f32 %v5120, %v5121
      %v5123 = vsel %vm535, %v5087, 0.0
      %v5124 = vadd.f32 %v5122, %v5123
      %v5125 = vsel %vm535, %v5088, 0.0
      %v5126 = vadd.f32 %v5124, %v5125
      %v5127 = vsel %vm535, %v5089, 0.0
      %v5128 = vadd.f32 %v5126, %v5127
      %v5129 = vsel %vm535, %v5090, 0.0
      %v5130 = vadd.f32 %v5128, %v5129
      %v5131 = vsel %vm535, %v5091, 0.0
      %v5132 = vadd.f32 %v5130, %v5131
      %v5133 = vsel %vm535, %v5092, 0.0
      %v5134 = vadd.f32 %v5132, %v5133
      %v5135 = vsel %vm535, %v5093, 0.0
      %v5136 = vadd.f32 %v5134, %v5135
      %v5137 = vsel %vm535, %v5094, 0.0
      %v5138 = vadd.f32 %v5136, %v5137
      %v5139 = vsel %vm535, %v5095, 0.0
      %v5140 = vadd.f32 %v5138, %v5139
      %v5141 = vsel %vm535, %v5096, 0.0
      %v5142 = vadd.f32 %v5140, %v5141
      %v5143 = vsel %vm535, %v5097, 0.0
      %v5144 = vadd.f32 %v5142, %v5143
      %v5145 = vsel %vm535, %v5098, 0.0
      %v5146 = vadd.f32 %v5144, %v5145
      %v5147 = vsel %vm535, %v5099, 0.0
      %v5148 = vadd.f32 %v5146, %v5147
      %v5149 = vsel %vm535, %v5100, 0.0
      %v5150 = vadd.f32 %v5148, %v5149
      %v5151 = vsel %vm535, %v5101, 0.0
      %v5152 = vadd.f32 %v5150, %v5151
      %v5153 = vsel %vm535, %v5102, 0.0
      %v5154 = vadd.f32 %v5152, %v5153
      %v5155 = vsel %vm535, %v5103, 0.0
      %v5156 = vadd.f32 %v5154, %v5155
      %v5157 = vsel %vm535, %v5104, 0.0
      %v5158 = vadd.f32 %v5156, %v5157
      %v5159 = vsel %vm535, %v5105, 0.0
      %v5160 = vadd.f32 %v5158, %v5159
      %v5161 = vsel %vm535, %v5106, 0.0
      %v5162 = vadd.f32 %v5160, %v5161
      %v5163 = vsel %vm535, %v5107, 0.0
      %v5164 = vadd.f32 %v5162, %v5163
      %v5165 = vsel %vm535, %v5108, 0.0
      %v5166 = vadd.f32 %v5164, %v5165
      %v5167 = vsel %vm535, %v5109, 0.0
      %v5168 = vadd.f32 %v5166, %v5167
      %v5169 = vsel %vm535, %v5110, 0.0
      %v5170 = vadd.f32 %v5168, %v5169
      %v5171 = vsel %vm535, %v5111, 0.0
      %v5172 = vadd.f32 %v5170, %v5171
      %v5173 = vsel %vm535, %v5112, 0.0
      %v5174 = vadd.f32 %v5172, %v5173
      %v5175 = vsel %vm535, %v5113, 0.0
      %v5176 = vadd.f32 %v5174, %v5175
      %v5177 = vrot.slane %v5176, 4
      %v5178 = vadd.f32 %v5176, %v5177
      %v5179 = vrot.slane %v5178, 2
      %v5180 = vadd.f32 %v5178, %v5179
      %v5181 = vrot.slane %v5180, 1
      %v5182 = vadd.f32 %v5180, %v5181
      %v5183 = vmul.f32 %v5182, %v605
      %v5184 = vadd.f32 %v5183, 1e-05
      %v5185 = vrsqrt.pop %v5184
      %v5186 = vmul.f32 %v5047, %v5185
      %v5187 = vmul.f32 %v5048, %v5185
      %v5188 = vmul.f32 %v5049, %v5185
      %v5189 = vmul.f32 %v5050, %v5185
      %v5190 = vmul.f32 %v5051, %v5185
      %v5191 = vmul.f32 %v5052, %v5185
      %v5192 = vmul.f32 %v5053, %v5185
      %v5193 = vmul.f32 %v5054, %v5185
      %v5194 = vmul.f32 %v5055, %v5185
      %v5195 = vmul.f32 %v5056, %v5185
      %v5196 = vmul.f32 %v5057, %v5185
      %v5197 = vmul.f32 %v5058, %v5185
      %v5198 = vmul.f32 %v5059, %v5185
      %v5199 = vmul.f32 %v5060, %v5185
      %v5200 = vmul.f32 %v5061, %v5185
      %v5201 = vmul.f32 %v5062, %v5185
      %v5202 = vmul.f32 %v5063, %v5185
      %v5203 = vmul.f32 %v5064, %v5185
      %v5204 = vmul.f32 %v5065, %v5185
      %v5205 = vmul.f32 %v5066, %v5185
      %v5206 = vmul.f32 %v5067, %v5185
      %v5207 = vmul.f32 %v5068, %v5185
      %v5208 = vmul.f32 %v5069, %v5185
      %v5209 = vmul.f32 %v5070, %v5185
      %v5210 = vmul.f32 %v5071, %v5185
      %v5211 = vmul.f32 %v5072, %v5185
      %v5212 = vmul.f32 %v5073, %v5185
      %v5213 = vmul.f32 %v5074, %v5185
      %v5214 = vmul.f32 %v5075, %v5185
      %v5215 = vmul.f32 %v5076, %v5185
      %v5216 = vmul.f32 %v5077, %v5185
      %v5217 = vmul.f32 %v5078, %v5185
      %v5219 = vlaneseq
      %v5220 = vshrl.u32 %v5219, 7
      %v5221 = vsub.s32 0, %v5220
      %v5222 = vrot.slane %v5079, %v5221
      %v5224 = vmul.f32 %v5222, %v5186
      %v5225 = vmul.f32 %v5222, %v5187
      %v5226 = vmul.f32 %v5222, %v5188
      %v5227 = vmul.f32 %v5222, %v5189
      %v5228 = vmul.f32 %v5222, %v5190
      %v5229 = vmul.f32 %v5222, %v5191
      %v5230 = vmul.f32 %v5222, %v5192
      %v5231 = vmul.f32 %v5222, %v5193
      %v5232 = vmul.f32 %v5222, %v5194
      %v5233 = vmul.f32 %v5222, %v5195
      %v5234 = vmul.f32 %v5222, %v5196
      %v5235 = vmul.f32 %v5222, %v5197
      %v5236 = vmul.f32 %v5222, %v5198
      %v5237 = vmul.f32 %v5222, %v5199
      %v5238 = vmul.f32 %v5222, %v5200
      %v5239 = vmul.f32 %v5222, %v5201
      %v5240 = vmul.f32 %v5222, %v5202
      %v5241 = vmul.f32 %v5222, %v5203
      %v5242 = vmul.f32 %v5222, %v5204
      %v5243 = vmul.f32 %v5222, %v5205
      %v5244 = vmul.f32 %v5222, %v5206
      %v5245 = vmul.f32 %v5222, %v5207
      %v5246 = vmul.f32 %v5222, %v5208
      %v5247 = vmul.f32 %v5222, %v5209
      %v5248 = vmul.f32 %v5222, %v5210
      %v5249 = vmul.f32 %v5222, %v5211
      %v5250 = vmul.f32 %v5222, %v5212
      %v5251 = vmul.f32 %v5222, %v5213
      %v5252 = vmul.f32 %v5222, %v5214
      %v5253 = vmul.f32 %v5222, %v5215
      %v5254 = vmul.f32 %v5222, %v5216
      %v5255 = vmul.f32 %v5222, %v5217
      %v5257 = vlaneseq
      %v5258 = vshrl.u32 %v5257, 7
      %v5259 = vsub.s32 0, %v5258
      %v5260 = vrot.slane %v5080, %v5259
      %v5262 = vadd.f32 %v5224, %v5260
      %v5263 = vadd.f32 %v5225, %v5260
      %v5264 = vadd.f32 %v5226, %v5260
      %v5265 = vadd.f32 %v5227, %v5260
      %v5266 = vadd.f32 %v5228, %v5260
      %v5267 = vadd.f32 %v5229, %v5260
      %v5268 = vadd.f32 %v5230, %v5260
      %v5269 = vadd.f32 %v5231, %v5260
      %v5270 = vadd.f32 %v5232, %v5260
      %v5271 = vadd.f32 %v5233, %v5260
      %v5272 = vadd.f32 %v5234, %v5260
      %v5273 = vadd.f32 %v5235, %v5260
      %v5274 = vadd.f32 %v5236, %v5260
      %v5275 = vadd.f32 %v5237, %v5260
      %v5276 = vadd.f32 %v5238, %v5260
      %v5277 = vadd.f32 %v5239, %v5260
      %v5278 = vadd.f32 %v5240, %v5260
      %v5279 = vadd.f32 %v5241, %v5260
      %v5280 = vadd.f32 %v5242, %v5260
      %v5281 = vadd.f32 %v5243, %v5260
      %v5282 = vadd.f32 %v5244, %v5260
      %v5283 = vadd.f32 %v5245, %v5260
      %v5284 = vadd.f32 %v5246, %v5260
      %v5285 = vadd.f32 %v5247, %v5260
      %v5286 = vadd.f32 %v5248, %v5260
      %v5287 = vadd.f32 %v5249, %v5260
      %v5288 = vadd.f32 %v5250, %v5260
      %v5289 = vadd.f32 %v5251, %v5260
      %v5290 = vadd.f32 %v5252, %v5260
      %v5291 = vadd.f32 %v5253, %v5260
      %v5292 = vadd.f32 %v5254, %v5260
      %v5293 = vadd.f32 %v5255, %v5260
      %v5295 = vlaneseq
      %v5296 = vshrl.u32 %v5295, 7
      %v5297 = vsub.s32 0, %v5296
      %v5298 = vrot.slane %v5081, %v5297
      %v5300 = vmax.f32 %v5262, %v5298
      %v5301 = vmax.f32 %v5263, %v5298
      %v5302 = vmax.f32 %v5264, %v5298
      %v5303 = vmax.f32 %v5265, %v5298
      %v5304 = vmax.f32 %v5266, %v5298
      %v5305 = vmax.f32 %v5267, %v5298
      %v5306 = vmax.f32 %v5268, %v5298
      %v5307 = vmax.f32 %v5269, %v5298
      %v5308 = vmax.f32 %v5270, %v5298
      %v5309 = vmax.f32 %v5271, %v5298
      %v5310 = vmax.f32 %v5272, %v5298
      %v5311 = vmax.f32 %v5273, %v5298
      %v5312 = vmax.f32 %v5274, %v5298
      %v5313 = vmax.f32 %v5275, %v5298
      %v5314 = vmax.f32 %v5276, %v5298
      %v5315 = vmax.f32 %v5277, %v5298
      %v5316 = vmax.f32 %v5278, %v5298
      %v5317 = vmax.f32 %v5279, %v5298
      %v5318 = vmax.f32 %v5280, %v5298
      %v5319 = vmax.f32 %v5281, %v5298
      %v5320 = vmax.f32 %v5282, %v5298
      %v5321 = vmax.f32 %v5283, %v5298
      %v5322 = vmax.f32 %v5284, %v5298
      %v5323 = vmax.f32 %v5285, %v5298
      %v5324 = vmax.f32 %v5286, %v5298
      %v5325 = vmax.f32 %v5287, %v5298
      %v5326 = vmax.f32 %v5288, %v5298
      %v5327 = vmax.f32 %v5289, %v5298
      %v5328 = vmax.f32 %v5290, %v5298
      %v5329 = vmax.f32 %v5291, %v5298
      %v5330 = vmax.f32 %v5292, %v5298
      %v5331 = vmax.f32 %v5293, %v5298
      %v5332 = vld [vmem:[%s13] sm:$0xff]
      %v5333 = vld [vmem:[%s13 + $0x8] sm:$0xff]
      %v5334 = vld [vmem:[%s13 + $0x10] sm:$0xff]
      %v5335 = vld [vmem:[%s13 + $0x18] sm:$0xff]
      %v5336 = vld [vmem:[%s13 + $0x20] sm:$0xff]
      %v5337 = vld [vmem:[%s13 + $0x28] sm:$0xff]
      %v5338 = vld [vmem:[%s13 + $0x30] sm:$0xff]
      %v5339 = vld [vmem:[%s13 + $0x38] sm:$0xff]
      %v5340 = vld [vmem:[%s13 + $0x40] sm:$0xff]
      %v5341 = vld [vmem:[%s13 + $0x48] sm:$0xff]
      %v5342 = vld [vmem:[%s13 + $0x50] sm:$0xff]
      %v5343 = vld [vmem:[%s13 + $0x58] sm:$0xff]
      %v5344 = vld [vmem:[%s13 + $0x60] sm:$0xff]
      %v5345 = vld [vmem:[%s13 + $0x68] sm:$0xff]
      %v5346 = vld [vmem:[%s13 + $0x70] sm:$0xff]
      %v5347 = vld [vmem:[%s13 + $0x78] sm:$0xff]
      %5348 = vmatprep.subr.mxu0 0.0
      %5349 = vmatpush1.msra.mxu0 %v5300
      %5350 = vmatprep.subr.mxu0 0.0
      %5351 = vmatpush1.msra.mxu0 %v5301
      %5352 = vmatprep.subr.mxu0 0.0
      %5353 = vmatpush1.msra.mxu0 %v5302
      %5354 = vmatprep.subr.mxu0 0.0
      %5355 = vmatpush1.msra.mxu0 %v5303
      %5356 = vmatprep.subr.mxu0 0.0
      %5357 = vmatpush1.msra.mxu0 %v5304
      %5358 = vmatprep.subr.mxu0 0.0
      %5359 = vmatpush1.msra.mxu0 %v5305
      %5360 = vmatprep.subr.mxu0 0.0
      %5361 = vmatpush1.msra.mxu0 %v5306
      %5362 = vmatprep.subr.mxu0 0.0
      %5363 = vmatpush1.msra.mxu0 %v5307
      %5364 = vmatprep.subr.mxu0 0.0
      %5365 = vmatpush1.msra.mxu0 %v5308
      %5366 = vmatprep.subr.mxu0 0.0
      %5367 = vmatpush1.msra.mxu0 %v5309
      %5368 = vmatprep.subr.mxu0 0.0
      %5369 = vmatpush1.msra.mxu0 %v5310
      %5370 = vmatprep.subr.mxu0 0.0
      %5371 = vmatpush1.msra.mxu0 %v5311
      %5372 = vmatprep.subr.mxu0 0.0
      %5373 = vmatpush1.msra.mxu0 %v5312
      %5374 = vmatprep.subr.mxu0 0.0
      %5375 = vmatpush1.msra.mxu0 %v5313
      %5376 = vmatprep.subr.mxu0 0.0
      %5377 = vmatpush1.msra.mxu0 %v5314
      %5378 = vmatprep.subr.mxu0 0.0
      %5379 = vmatpush1.msra.mxu0 %v5315
      %5380 = vmatprep.subr.mxu0 0.0
      %5381 = vmatpush1.msra.mxu0 %v5316
      %5382 = vmatprep.subr.mxu0 0.0
      %5383 = vmatpush1.msra.mxu0 %v5317
      %5384 = vmatprep.subr.mxu0 0.0
      %5385 = vmatpush1.msra.mxu0 %v5318
      %5386 = vmatprep.subr.mxu0 0.0
      %5387 = vmatpush1.msra.mxu0 %v5319
      %5388 = vmatprep.subr.mxu0 0.0
      %5389 = vmatpush1.msra.mxu0 %v5320
      %5390 = vmatprep.subr.mxu0 0.0
      %5391 = vmatpush1.msra.mxu0 %v5321
      %5392 = vmatprep.subr.mxu0 0.0
      %5393 = vmatpush1.msra.mxu0 %v5322
      %5394 = vmatprep.subr.mxu0 0.0
      %5395 = vmatpush1.msra.mxu0 %v5323
      %5396 = vmatprep.subr.mxu0 0.0
      %5397 = vmatpush1.msra.mxu0 %v5324
      %5398 = vmatprep.subr.mxu0 0.0
      %5399 = vmatpush1.msra.mxu0 %v5325
      %5400 = vmatprep.subr.mxu0 0.0
      %5401 = vmatpush1.msra.mxu0 %v5326
      %5402 = vmatprep.subr.mxu0 0.0
      %5403 = vmatpush1.msra.mxu0 %v5327
      %5404 = vmatprep.subr.mxu0 0.0
      %5405 = vmatpush1.msra.mxu0 %v5328
      %5406 = vmatprep.subr.mxu0 0.0
      %5407 = vmatpush1.msra.mxu0 %v5329
      %5408 = vmatprep.subr.mxu0 0.0
      %5409 = vmatpush1.msra.mxu0 %v5330
      %5410 = vmatprep.subr.mxu0 0.0
      %5411 = vmatpush1.msra.mxu0 %v5331
      %5412 = vmatprep.mubr.f32.mxu0 %v5333
      %5413 = vmatmul.mubr.f32.gmra.mrb[0].mxu0 %v5332
      %v5414 = vpop.f32.mrb[0].mxu0
      %v5415 = vadd.f32 0.0, %v5414
      %v5416 = vpop.f32.mrb[0].mxu0
      %5417 = vmatprep.mubr.f32.mxu0 %v5335
      %5418 = vmatmul.mubr.f32.gmra.mrb[0].mxu0 %v5334
      %v5419 = vpop.f32.mrb[0].mxu0
      %v5420 = vadd.f32 0.0, %v5419
      %v5421 = vpop.f32.mrb[0].mxu0
      %5422 = vmatprep.mubr.f32.mxu0 %v5337
      %5423 = vmatmul.mubr.f32.gmra.mrb[0].mxu0 %v5336
      %v5424 = vpop.f32.mrb[0].mxu0
      %v5425 = vadd.f32 0.0, %v5424
      %v5426 = vpop.f32.mrb[0].mxu0
      %5427 = vmatprep.mubr.f32.mxu0 %v5339
      %5428 = vmatmul.mubr.f32.gmra.mrb[0].mxu0 %v5338
      %v5429 = vpop.f32.mrb[0].mxu0
      %v5430 = vadd.f32 0.0, %v5429
      %v5431 = vpop.f32.mrb[0].mxu0
      %5432 = vmatprep.mubr.f32.mxu0 %v5341
      %5433 = vmatmul.mubr.f32.gmra.mrb[0].mxu0 %v5340
      %v5434 = vpop.f32.mrb[0].mxu0
      %v5435 = vadd.f32 0.0, %v5434
      %v5436 = vpop.f32.mrb[0].mxu0
      %5437 = vmatprep.mubr.f32.mxu0 %v5343
      %5438 = vmatmul.mubr.f32.gmra.mrb[0].mxu0 %v5342
      %v5439 = vpop.f32.mrb[0].mxu0
      %v5440 = vadd.f32 0.0, %v5439
      %v5441 = vpop.f32.mrb[0].mxu0
      %5442 = vmatprep.mubr.f32.mxu0 %v5345
      %5443 = vmatmul.mubr.f32.gmra.mrb[0].mxu0 %v5344
      %v5444 = vpop.f32.mrb[0].mxu0
      %v5445 = vadd.f32 0.0, %v5444
      %v5446 = vpop.f32.mrb[0].mxu0
      %5447 = vmatprep.mubr.f32.mxu0 %v5347
      %5448 = vmatmul.mubr.f32.gmra.mrb[0].mxu0 %v5346
      %v5449 = vpop.f32.mrb[0].mxu0
      %v5450 = vadd.f32 0.0, %v5449
      %v5451 = vpop.f32.mrb[0].mxu0
      %5452 = vdwg.mxu0
      %5453 = vst.msk [vmem:[#allocation3] sm:$0xff] %vm535, 0.0
      %5454 = vst.msk [vmem:[#allocation3 + $0x8] sm:$0xff] %vm535, 0.0
      %5455 = vst.msk [vmem:[#allocation3 + $0x50] sm:$0xff] %vm535, 0.0
      %5456 = vst.msk [vmem:[#allocation3 + $0x58] sm:$0xff] %vm535, 0.0
      %5457 = vst.msk [vmem:[#allocation3 + $0x10] sm:$0xff] %vm535, %v5415
      %5458 = vst.msk [vmem:[#allocation3 + $0x18] sm:$0xff] %vm535, %v5420
      %5459 = vst.msk [vmem:[#allocation3 + $0x20] sm:$0xff] %vm535, %v5425
      %5460 = vst.msk [vmem:[#allocation3 + $0x28] sm:$0xff] %vm535, %v5430
      %5461 = vst.msk [vmem:[#allocation3 + $0x30] sm:$0xff] %vm535, %v5435
      %5462 = vst.msk [vmem:[#allocation3 + $0x38] sm:$0xff] %vm535, %v5440
      %5463 = vst.msk [vmem:[#allocation3 + $0x40] sm:$0xff] %vm535, %v5445
      %5464 = vst.msk [vmem:[#allocation3 + $0x48] sm:$0xff] %vm535, %v5450
      %vm5465 = vcmp.lt.s32.totalorder %v794, 0
      %v5466 = vsub.s32 0, %v794
      %v5467 = vsel %vm5465, %v5466, %v794
      %v5468 = vshrl.u32 %v5467, 3
      %v5469 = vand.u32 %v5467, 7
      %v5470 = vsub.s32 0, %v5469
      %v5471 = vsel %vm5465, %v5470, %v5469
      %vm5472 = vcmp.lt.s32.totalorder %v795, 0
      %v5473 = vsub.s32 0, %v795
      %v5474 = vsel %vm5472, %v5473, %v795
      %v5475 = vshrl.u32 %v5474, 3
      %v5476 = vand.u32 %v5474, 7
      %v5477 = vsub.s32 0, %v5476
      %v5478 = vsel %vm5472, %v5477, %v5476
      %vm5479 = vcmp.lt.s32.totalorder %v796, 0
      %v5480 = vsub.s32 0, %v796
      %v5481 = vsel %vm5479, %v5480, %v796
      %v5482 = vshrl.u32 %v5481, 3
      %v5483 = vand.u32 %v5481, 7
      %v5484 = vsub.s32 0, %v5483
      %v5485 = vsel %vm5479, %v5484, %v5483
      %vm5486 = vcmp.lt.s32.totalorder %v797, 0
      %v5487 = vsub.s32 0, %v797
      %v5488 = vsel %vm5486, %v5487, %v797
      %v5489 = vshrl.u32 %v5488, 3
      %v5490 = vand.u32 %v5488, 7
      %v5491 = vsub.s32 0, %v5490
      %v5492 = vsel %vm5486, %v5491, %v5490
      %vm5493 = vcmp.lt.s32.totalorder %v798, 0
      %v5494 = vsub.s32 0, %v798
      %v5495 = vsel %vm5493, %v5494, %v798
      %v5496 = vshrl.u32 %v5495, 3
      %v5497 = vand.u32 %v5495, 7
      %v5498 = vsub.s32 0, %v5497
      %v5499 = vsel %vm5493, %v5498, %v5497
      %vm5500 = vcmp.lt.s32.totalorder %v799, 0
      %v5501 = vsub.s32 0, %v799
      %v5502 = vsel %vm5500, %v5501, %v799
      %v5503 = vshrl.u32 %v5502, 3
      %v5504 = vand.u32 %v5502, 7
      %v5505 = vsub.s32 0, %v5504
      %v5506 = vsel %vm5500, %v5505, %v5504
      %vm5507 = vcmp.lt.s32.totalorder %v800, 0
      %v5508 = vsub.s32 0, %v800
      %v5509 = vsel %vm5507, %v5508, %v800
      %v5510 = vshrl.u32 %v5509, 3
      %v5511 = vand.u32 %v5509, 7
      %v5512 = vsub.s32 0, %v5511
      %v5513 = vsel %vm5507, %v5512, %v5511
      %vm5514 = vcmp.lt.s32.totalorder %v801, 0
      %v5515 = vsub.s32 0, %v801
      %v5516 = vsel %vm5514, %v5515, %v801
      %v5517 = vshrl.u32 %v5516, 3
      %v5518 = vand.u32 %v5516, 7
      %v5519 = vsub.s32 0, %v5518
      %v5520 = vsel %vm5514, %v5519, %v5518
      %vm5521 = vcmp.ne.s32.totalorder %v5471, 0
      %vm5522 = vcmp.ne.s32.totalorder %v5478, 0
      %vm5523 = vcmp.ne.s32.totalorder %v5485, 0
      %vm5524 = vcmp.ne.s32.totalorder %v5492, 0
      %vm5525 = vcmp.ne.s32.totalorder %v5499, 0
      %vm5526 = vcmp.ne.s32.totalorder %v5506, 0
      %vm5527 = vcmp.ne.s32.totalorder %v5513, 0
      %vm5528 = vcmp.ne.s32.totalorder %v5520, 0
      %vm5529 = vcmp.lt.s32.totalorder %v5471, 0
      %vm5530 = vcmp.lt.s32.totalorder %v5478, 0
      %vm5531 = vcmp.lt.s32.totalorder %v5485, 0
      %vm5532 = vcmp.lt.s32.totalorder %v5492, 0
      %vm5533 = vcmp.lt.s32.totalorder %v5499, 0
      %vm5534 = vcmp.lt.s32.totalorder %v5506, 0
      %vm5535 = vcmp.lt.s32.totalorder %v5513, 0
      %vm5536 = vcmp.lt.s32.totalorder %v5520, 0
      %vm5537 = vmand %vm5529, %vm5521
      %vm5538 = vmand %vm5530, %vm5522
      %vm5539 = vmand %vm5531, %vm5523
      %vm5540 = vmand %vm5532, %vm5524
      %vm5541 = vmand %vm5533, %vm5525
      %vm5542 = vmand %vm5534, %vm5526
      %vm5543 = vmand %vm5535, %vm5527
      %vm5544 = vmand %vm5536, %vm5528
      %v5545 = vadd.s32 %v5471, 8
      %v5546 = vadd.s32 %v5478, 8
      %v5547 = vadd.s32 %v5485, 8
      %v5548 = vadd.s32 %v5492, 8
      %v5549 = vadd.s32 %v5499, 8
      %v5550 = vadd.s32 %v5506, 8
      %v5551 = vadd.s32 %v5513, 8
      %v5552 = vadd.s32 %v5520, 8
      %v5553 = vsel %vm5537, %v5545, %v5471
      %v5554 = vsel %vm5538, %v5546, %v5478
      %v5555 = vsel %vm5539, %v5547, %v5485
      %v5556 = vsel %vm5540, %v5548, %v5492
      %v5557 = vsel %vm5541, %v5549, %v5499
      %v5558 = vsel %vm5542, %v5550, %v5506
      %v5559 = vsel %vm5543, %v5551, %v5513
      %v5560 = vsel %vm5544, %v5552, %v5520
      %vm5561 = vcmp.ne.s32.totalorder %v5553, 0
      %vm5562 = vcmp.ne.s32.totalorder %v5554, 0
      %vm5563 = vcmp.ne.s32.totalorder %v5555, 0
      %vm5564 = vcmp.ne.s32.totalorder %v5556, 0
      %vm5565 = vcmp.ne.s32.totalorder %v5557, 0
      %vm5566 = vcmp.ne.s32.totalorder %v5558, 0
      %vm5567 = vcmp.ne.s32.totalorder %v5559, 0
      %vm5568 = vcmp.ne.s32.totalorder %v5560, 0
      %vm5569 = vcmp.ne.s32.totalorder %v5553, 7
      %vm5570 = vcmp.ne.s32.totalorder %v5554, 7
      %vm5571 = vcmp.ne.s32.totalorder %v5555, 7
      %vm5572 = vcmp.ne.s32.totalorder %v5556, 7
      %vm5573 = vcmp.ne.s32.totalorder %v5557, 7
      %vm5574 = vcmp.ne.s32.totalorder %v5558, 7
      %vm5575 = vcmp.ne.s32.totalorder %v5559, 7
      %vm5576 = vcmp.ne.s32.totalorder %v5560, 7
      %v5577 = vld [vmem:[#allocation3 + $0x7] sm:$0xff]
      %v5578 = vld [vmem:[#allocation3 + $0xf] sm:$0xff]
      %v5579 = vld [vmem:[#allocation3 + $0x17] sm:$0xff]
      %v5580 = vld [vmem:[#allocation3 + $0x1f] sm:$0xff]
      %v5581 = vld [vmem:[#allocation3 + $0x27] sm:$0xff]
      %v5582 = vld [vmem:[#allocation3 + $0x2f] sm:$0xff]
      %v5583 = vld [vmem:[#allocation3 + $0x37] sm:$0xff]
      %v5584 = vld [vmem:[#allocation3 + $0x3f] sm:$0xff]
      %v5585 = vsel %vm5561, 1, 0
      %v5586 = vsel %vm5562, 1, 0
      %v5587 = vsel %vm5563, 1, 0
      %v5588 = vsel %vm5564, 1, 0
      %v5589 = vsel %vm5565, 1, 0
      %v5590 = vsel %vm5566, 1, 0
      %v5591 = vsel %vm5567, 1, 0
      %v5592 = vsel %vm5568, 1, 0
      %vm5593 = vcmp.eq.s32.totalorder %v5585, 1
      %vm5594 = vcmp.eq.s32.totalorder %v5586, 1
      %vm5595 = vcmp.eq.s32.totalorder %v5587, 1
      %vm5596 = vcmp.eq.s32.totalorder %v5588, 1
      %vm5597 = vcmp.eq.s32.totalorder %v5589, 1
      %vm5598 = vcmp.eq.s32.totalorder %v5590, 1
      %vm5599 = vcmp.eq.s32.totalorder %v5591, 1
      %vm5600 = vcmp.eq.s32.totalorder %v5592, 1
      %v5601 = vsel %vm5593, %v5577, 0.0
      %v5602 = vsel %vm5594, %v5578, 0.0
      %v5603 = vsel %vm5595, %v5579, 0.0
      %v5604 = vsel %vm5596, %v5580, 0.0
      %v5605 = vsel %vm5597, %v5581, 0.0
      %v5606 = vsel %vm5598, %v5582, 0.0
      %v5607 = vsel %vm5599, %v5583, 0.0
      %v5608 = vsel %vm5600, %v5584, 0.0
      %v5609 = vld [vmem:[%s9] sm:$0xf]
      %v5610 = vld [vmem:[#allocation3 + $0x8] sm:$0xff]
      %v5611 = vld [vmem:[#allocation3 + $0x10] sm:$0xff]
      %v5612 = vld [vmem:[#allocation3 + $0x18] sm:$0xff]
      %v5613 = vld [vmem:[#allocation3 + $0x20] sm:$0xff]
      %v5614 = vld [vmem:[#allocation3 + $0x28] sm:$0xff]
      %v5615 = vld [vmem:[#allocation3 + $0x30] sm:$0xff]
      %v5616 = vld [vmem:[#allocation3 + $0x38] sm:$0xff]
      %v5617 = vld [vmem:[#allocation3 + $0x40] sm:$0xff]
      %s5618 = scalar_lea.vmem %s9, 4
      %v5619 = vld [vmem:[%s5618] sm:$0xf]
      %v5621 = vsel %vm535, %v5610, 0
      %v5624 = vsel %vm535, %v5611, 0
      %v5627 = vsel %vm535, %v5612, 0
      %v5630 = vsel %vm535, %v5613, 0
      %v5633 = vsel %vm535, %v5614, 0
      %v5636 = vsel %vm535, %v5615, 0
      %v5639 = vsel %vm535, %v5616, 0
      %v5642 = vsel %vm535, %v5617, 0
      %v5645 = vsel %vm1533, %v5619, 0
      %5647 = vmatprep.subr.mxu0 0.0
      %5648 = vmatpush1.msra.mxu0 %v5645
      %5649 = vmatprep.subr.mxu0 0.0
      %5650 = vmatpush1.msra.mxu0 0.0
      %5651 = vmatprep.subr.mxu0 0.0
      %5652 = vmatpush1.msra.mxu0 0.0
      %5653 = vmatprep.subr.mxu0 0.0
      %5654 = vmatpush1.msra.mxu0 0.0
      %5655 = vmatprep.subr.mxu0 0.0
      %5656 = vmatpush1.msra.mxu0 0.0
      %5657 = vmatprep.subr.mxu0 0.0
      %5658 = vmatpush1.msra.mxu0 0.0
      %5659 = vmatprep.subr.mxu0 0.0
      %5660 = vmatpush1.msra.mxu0 0.0
      %5661 = vmatprep.subr.mxu0 0.0
      %5662 = vmatpush1.msra.mxu0 0.0
      %5663 = vmatprep.subr.mxu0 0.0
      %5664 = vmatpush1.msra.mxu0 0.0
      %5665 = vmatprep.subr.mxu0 0.0
      %5666 = vmatpush1.msra.mxu0 0.0
      %5667 = vmatprep.subr.mxu0 0.0
      %5668 = vmatpush1.msra.mxu0 0.0
      %5669 = vmatprep.subr.mxu0 0.0
      %5670 = vmatpush1.msra.mxu0 0.0
      %5671 = vmatprep.subr.mxu0 0.0
      %5672 = vmatpush1.msra.mxu0 0.0
      %5673 = vmatprep.subr.mxu0 0.0
      %5674 = vmatpush1.msra.mxu0 0.0
      %5675 = vmatprep.subr.mxu0 0.0
      %5676 = vmatpush1.msra.mxu0 0.0
      %5677 = vmatprep.subr.mxu0 0.0
      %5678 = vmatpush1.msra.mxu0 0.0
      %5679 = vmatprep.subr.mxu0 0.0
      %5680 = vmatpush1.msra.mxu0 0.0
      %5681 = vmatprep.subr.mxu0 0.0
      %5682 = vmatpush1.msra.mxu0 0.0
      %5683 = vmatprep.subr.mxu0 0.0
      %5684 = vmatpush1.msra.mxu0 0.0
      %5685 = vmatprep.subr.mxu0 0.0
      %5686 = vmatpush1.msra.mxu0 0.0
      %5687 = vmatprep.subr.mxu0 0.0
      %5688 = vmatpush1.msra.mxu0 0.0
      %5689 = vmatprep.subr.mxu0 0.0
      %5690 = vmatpush1.msra.mxu0 0.0
      %5691 = vmatprep.subr.mxu0 0.0
      %5692 = vmatpush1.msra.mxu0 0.0
      %5693 = vmatprep.subr.mxu0 0.0
      %5694 = vmatpush1.msra.mxu0 0.0
      %5695 = vmatprep.subr.mxu0 0.0
      %5696 = vmatpush1.msra.mxu0 0.0
      %5697 = vmatprep.subr.mxu0 0.0
      %5698 = vmatpush1.msra.mxu0 0.0
      %5699 = vmatprep.subr.mxu0 0.0
      %5700 = vmatpush1.msra.mxu0 0.0
      %5701 = vmatprep.subr.mxu0 0.0
      %5702 = vmatpush1.msra.mxu0 0.0
      %5703 = vmatprep.subr.mxu0 0.0
      %5704 = vmatpush1.msra.mxu0 0.0
      %5705 = vmatprep.subr.mxu0 0.0
      %5706 = vmatpush1.msra.mxu0 0.0
      %5707 = vmatprep.subr.mxu0 0.0
      %5708 = vmatpush1.msra.mxu0 0.0
      %5709 = vmatprep.subr.mxu0 0.0
      %5710 = vmatpush1.msra.mxu0 0.0
      %5711 = vmatprep.mubr.f32.mxu0 0.0
      %5712 = vmatmul.mubr.f32.gmra.mrb[0].mxu0 %v5621
      %v5713 = vpop.f32.mrb[0].mxu0
      %v5714 = vadd.f32 0.0, %v5713
      %v5715 = vpop.f32.mrb[0].mxu0
      %5716 = vmatprep.mubr.f32.mxu0 0.0
      %5717 = vmatmul.mubr.f32.gmra.mrb[0].mxu0 %v5624
      %v5718 = vpop.f32.mrb[0].mxu0
      %v5719 = vadd.f32 0.0, %v5718
      %v5720 = vpop.f32.mrb[0].mxu0
      %5721 = vmatprep.mubr.f32.mxu0 0.0
      %5722 = vmatmul.mubr.f32.gmra.mrb[0].mxu0 %v5627
      %v5723 = vpop.f32.mrb[0].mxu0
      %v5724 = vadd.f32 0.0, %v5723
      %v5725 = vpop.f32.mrb[0].mxu0
      %5726 = vmatprep.mubr.f32.mxu0 0.0
      %5727 = vmatmul.mubr.f32.gmra.mrb[0].mxu0 %v5630
      %v5728 = vpop.f32.mrb[0].mxu0
      %v5729 = vadd.f32 0.0, %v5728
      %v5730 = vpop.f32.mrb[0].mxu0
      %5731 = vmatprep.mubr.f32.mxu0 0.0
      %5732 = vmatmul.mubr.f32.gmra.mrb[0].mxu0 %v5633
      %v5733 = vpop.f32.mrb[0].mxu0
      %v5734 = vadd.f32 0.0, %v5733
      %v5735 = vpop.f32.mrb[0].mxu0
      %5736 = vmatprep.mubr.f32.mxu0 0.0
      %5737 = vmatmul.mubr.f32.gmra.mrb[0].mxu0 %v5636
      %v5738 = vpop.f32.mrb[0].mxu0
      %v5739 = vadd.f32 0.0, %v5738
      %v5740 = vpop.f32.mrb[0].mxu0
      %5741 = vmatprep.mubr.f32.mxu0 0.0
      %5742 = vmatmul.mubr.f32.gmra.mrb[0].mxu0 %v5639
      %v5743 = vpop.f32.mrb[0].mxu0
      %v5744 = vadd.f32 0.0, %v5743
      %v5745 = vpop.f32.mrb[0].mxu0
      %5746 = vmatprep.mubr.f32.mxu0 0.0
      %5747 = vmatmul.mubr.f32.gmra.mrb[0].mxu0 %v5642
      %v5748 = vpop.f32.mrb[0].mxu0
      %v5749 = vadd.f32 0.0, %v5748
      %v5750 = vpop.f32.mrb[0].mxu0
      %5751 = vdwg.mxu0
      %v5753 = vsel %vm535, %v5601, 0
      %v5756 = vsel %vm535, %v5602, 0
      %v5759 = vsel %vm535, %v5603, 0
      %v5762 = vsel %vm535, %v5604, 0
      %v5765 = vsel %vm535, %v5605, 0
      %v5768 = vsel %vm535, %v5606, 0
      %v5771 = vsel %vm535, %v5607, 0
      %v5774 = vsel %vm535, %v5608, 0
      %v5777 = vsel %vm1533, %v5609, 0
      %5779 = vmatprep.subr.mxu0 0.0
      %5780 = vmatpush1.msra.mxu0 %v5777
      %5781 = vmatprep.subr.mxu0 0.0
      %5782 = vmatpush1.msra.mxu0 0.0
      %5783 = vmatprep.subr.mxu0 0.0
      %5784 = vmatpush1.msra.mxu0 0.0
      %5785 = vmatprep.subr.mxu0 0.0
      %5786 = vmatpush1.msra.mxu0 0.0
      %5787 = vmatprep.subr.mxu0 0.0
      %5788 = vmatpush1.msra.mxu0 0.0
      %5789 = vmatprep.subr.mxu0 0.0
      %5790 = vmatpush1.msra.mxu0 0.0
      %5791 = vmatprep.subr.mxu0 0.0
      %5792 = vmatpush1.msra.mxu0 0.0
      %5793 = vmatprep.subr.mxu0 0.0
      %5794 = vmatpush1.msra.mxu0 0.0
      %5795 = vmatprep.subr.mxu0 0.0
      %5796 = vmatpush1.msra.mxu0 0.0
      %5797 = vmatprep.subr.mxu0 0.0
      %5798 = vmatpush1.msra.mxu0 0.0
      %5799 = vmatprep.subr.mxu0 0.0
      %5800 = vmatpush1.msra.mxu0 0.0
      %5801 = vmatprep.subr.mxu0 0.0
      %5802 = vmatpush1.msra.mxu0 0.0
      %5803 = vmatprep.subr.mxu0 0.0
      %5804 = vmatpush1.msra.mxu0 0.0
      %5805 = vmatprep.subr.mxu0 0.0
      %5806 = vmatpush1.msra.mxu0 0.0
      %5807 = vmatprep.subr.mxu0 0.0
      %5808 = vmatpush1.msra.mxu0 0.0
      %5809 = vmatprep.subr.mxu0 0.0
      %5810 = vmatpush1.msra.mxu0 0.0
      %5811 = vmatprep.subr.mxu0 0.0
      %5812 = vmatpush1.msra.mxu0 0.0
      %5813 = vmatprep.subr.mxu0 0.0
      %5814 = vmatpush1.msra.mxu0 0.0
      %5815 = vmatprep.subr.mxu0 0.0
      %5816 = vmatpush1.msra.mxu0 0.0
      %5817 = vmatprep.subr.mxu0 0.0
      %5818 = vmatpush1.msra.mxu0 0.0
      %5819 = vmatprep.subr.mxu0 0.0
      %5820 = vmatpush1.msra.mxu0 0.0
      %5821 = vmatprep.subr.mxu0 0.0
      %5822 = vmatpush1.msra.mxu0 0.0
      %5823 = vmatprep.subr.mxu0 0.0
      %5824 = vmatpush1.msra.mxu0 0.0
      %5825 = vmatprep.subr.mxu0 0.0
      %5826 = vmatpush1.msra.mxu0 0.0
      %5827 = vmatprep.subr.mxu0 0.0
      %5828 = vmatpush1.msra.mxu0 0.0
      %5829 = vmatprep.subr.mxu0 0.0
      %5830 = vmatpush1.msra.mxu0 0.0
      %5831 = vmatprep.subr.mxu0 0.0
      %5832 = vmatpush1.msra.mxu0 0.0
      %5833 = vmatprep.subr.mxu0 0.0
      %5834 = vmatpush1.msra.mxu0 0.0
      %5835 = vmatprep.subr.mxu0 0.0
      %5836 = vmatpush1.msra.mxu0 0.0
      %5837 = vmatprep.subr.mxu0 0.0
      %5838 = vmatpush1.msra.mxu0 0.0
      %5839 = vmatprep.subr.mxu0 0.0
      %5840 = vmatpush1.msra.mxu0 0.0
      %5841 = vmatprep.subr.mxu0 0.0
      %5842 = vmatpush1.msra.mxu0 0.0
      %5843 = vmatprep.mubr.f32.mxu0 0.0
      %5844 = vmatmul.mubr.f32.gmra.mrb[0].mxu0 %v5753
      %v5845 = vpop.f32.mrb[0].mxu0
      %v5846 = vadd.f32 %v5714, %v5845
      %v5847 = vpop.f32.mrb[0].mxu0
      %5848 = vmatprep.mubr.f32.mxu0 0.0
      %5849 = vmatmul.mubr.f32.gmra.mrb[0].mxu0 %v5756
      %v5850 = vpop.f32.mrb[0].mxu0
      %v5851 = vadd.f32 %v5719, %v5850
      %v5852 = vpop.f32.mrb[0].mxu0
      %5853 = vmatprep.mubr.f32.mxu0 0.0
      %5854 = vmatmul.mubr.f32.gmra.mrb[0].mxu0 %v5759
      %v5855 = vpop.f32.mrb[0].mxu0
      %v5856 = vadd.f32 %v5724, %v5855
      %v5857 = vpop.f32.mrb[0].mxu0
      %5858 = vmatprep.mubr.f32.mxu0 0.0
      %5859 = vmatmul.mubr.f32.gmra.mrb[0].mxu0 %v5762
      %v5860 = vpop.f32.mrb[0].mxu0
      %v5861 = vadd.f32 %v5729, %v5860
      %v5862 = vpop.f32.mrb[0].mxu0
      %5863 = vmatprep.mubr.f32.mxu0 0.0
      %5864 = vmatmul.mubr.f32.gmra.mrb[0].mxu0 %v5765
      %v5865 = vpop.f32.mrb[0].mxu0
      %v5866 = vadd.f32 %v5734, %v5865
      %v5867 = vpop.f32.mrb[0].mxu0
      %5868 = vmatprep.mubr.f32.mxu0 0.0
      %5869 = vmatmul.mubr.f32.gmra.mrb[0].mxu0 %v5768
      %v5870 = vpop.f32.mrb[0].mxu0
      %v5871 = vadd.f32 %v5739, %v5870
      %v5872 = vpop.f32.mrb[0].mxu0
      %5873 = vmatprep.mubr.f32.mxu0 0.0
      %5874 = vmatmul.mubr.f32.gmra.mrb[0].mxu0 %v5771
      %v5875 = vpop.f32.mrb[0].mxu0
      %v5876 = vadd.f32 %v5744, %v5875
      %v5877 = vpop.f32.mrb[0].mxu0
      %5878 = vmatprep.mubr.f32.mxu0 0.0
      %5879 = vmatmul.mubr.f32.gmra.mrb[0].mxu0 %v5774
      %v5880 = vpop.f32.mrb[0].mxu0
      %v5881 = vadd.f32 %v5749, %v5880
      %v5882 = vpop.f32.mrb[0].mxu0
      %5883 = vdwg.mxu0
      %v5884 = vld [vmem:[#allocation3 + $0x9] sm:$0xff]
      %v5885 = vld [vmem:[#allocation3 + $0x11] sm:$0xff]
      %v5886 = vld [vmem:[#allocation3 + $0x19] sm:$0xff]
      %v5887 = vld [vmem:[#allocation3 + $0x21] sm:$0xff]
      %v5888 = vld [vmem:[#allocation3 + $0x29] sm:$0xff]
      %v5889 = vld [vmem:[#allocation3 + $0x31] sm:$0xff]
      %v5890 = vld [vmem:[#allocation3 + $0x39] sm:$0xff]
      %v5891 = vld [vmem:[#allocation3 + $0x41] sm:$0xff]
      %v5892 = vsel %vm5569, 1, 0
      %v5893 = vsel %vm5570, 1, 0
      %v5894 = vsel %vm5571, 1, 0
      %v5895 = vsel %vm5572, 1, 0
      %v5896 = vsel %vm5573, 1, 0
      %v5897 = vsel %vm5574, 1, 0
      %v5898 = vsel %vm5575, 1, 0
      %v5899 = vsel %vm5576, 1, 0
      %vm5900 = vcmp.eq.s32.totalorder %v5892, 1
      %vm5901 = vcmp.eq.s32.totalorder %v5893, 1
      %vm5902 = vcmp.eq.s32.totalorder %v5894, 1
      %vm5903 = vcmp.eq.s32.totalorder %v5895, 1
      %vm5904 = vcmp.eq.s32.totalorder %v5896, 1
      %vm5905 = vcmp.eq.s32.totalorder %v5897, 1
      %vm5906 = vcmp.eq.s32.totalorder %v5898, 1
      %vm5907 = vcmp.eq.s32.totalorder %v5899, 1
      %v5908 = vsel %vm5900, %v5884, 0.0
      %v5909 = vsel %vm5901, %v5885, 0.0
      %v5910 = vsel %vm5902, %v5886, 0.0
      %v5911 = vsel %vm5903, %v5887, 0.0
      %v5912 = vsel %vm5904, %v5888, 0.0
      %v5913 = vsel %vm5905, %v5889, 0.0
      %v5914 = vsel %vm5906, %v5890, 0.0
      %v5915 = vsel %vm5907, %v5891, 0.0
      %s5916 = scalar_lea.vmem %s9, 8
      %v5917 = vld [vmem:[%s5916] sm:$0xf]
      %v5919 = vsel %vm535, %v5908, 0
      %v5922 = vsel %vm535, %v5909, 0
      %v5925 = vsel %vm535, %v5910, 0
      %v5928 = vsel %vm535, %v5911, 0
      %v5931 = vsel %vm535, %v5912, 0
      %v5934 = vsel %vm535, %v5913, 0
      %v5937 = vsel %vm535, %v5914, 0
      %v5940 = vsel %vm535, %v5915, 0
      %v5943 = vsel %vm1533, %v5917, 0
      %5945 = vmatprep.subr.mxu0 0.0
      %5946 = vmatpush1.msra.mxu0 %v5943
      %5947 = vmatprep.subr.mxu0 0.0
      %5948 = vmatpush1.msra.mxu0 0.0
      %5949 = vmatprep.subr.mxu0 0.0
      %5950 = vmatpush1.msra.mxu0 0.0
      %5951 = vmatprep.subr.mxu0 0.0
      %5952 = vmatpush1.msra.mxu0 0.0
      %5953 = vmatprep.subr.mxu0 0.0
      %5954 = vmatpush1.msra.mxu0 0.0
      %5955 = vmatprep.subr.mxu0 0.0
      %5956 = vmatpush1.msra.mxu0 0.0
      %5957 = vmatprep.subr.mxu0 0.0
      %5958 = vmatpush1.msra.mxu0 0.0
      %5959 = vmatprep.subr.mxu0 0.0
      %5960 = vmatpush1.msra.mxu0 0.0
      %5961 = vmatprep.subr.mxu0 0.0
      %5962 = vmatpush1.msra.mxu0 0.0
      %5963 = vmatprep.subr.mxu0 0.0
      %5964 = vmatpush1.msra.mxu0 0.0
      %5965 = vmatprep.subr.mxu0 0.0
      %5966 = vmatpush1.msra.mxu0 0.0
      %5967 = vmatprep.subr.mxu0 0.0
      %5968 = vmatpush1.msra.mxu0 0.0
      %5969 = vmatprep.subr.mxu0 0.0
      %5970 = vmatpush1.msra.mxu0 0.0
      %5971 = vmatprep.subr.mxu0 0.0
      %5972 = vmatpush1.msra.mxu0 0.0
      %5973 = vmatprep.subr.mxu0 0.0
      %5974 = vmatpush1.msra.mxu0 0.0
      %5975 = vmatprep.subr.mxu0 0.0
      %5976 = vmatpush1.msra.mxu0 0.0
      %5977 = vmatprep.subr.mxu0 0.0
      %5978 = vmatpush1.msra.mxu0 0.0
      %5979 = vmatprep.subr.mxu0 0.0
      %5980 = vmatpush1.msra.mxu0 0.0
      %5981 = vmatprep.subr.mxu0 0.0
      %5982 = vmatpush1.msra.mxu0 0.0
      %5983 = vmatprep.subr.mxu0 0.0
      %5984 = vmatpush1.msra.mxu0 0.0
      %5985 = vmatprep.subr.mxu0 0.0
      %5986 = vmatpush1.msra.mxu0 0.0
      %5987 = vmatprep.subr.mxu0 0.0
      %5988 = vmatpush1.msra.mxu0 0.0
      %5989 = vmatprep.subr.mxu0 0.0
      %5990 = vmatpush1.msra.mxu0 0.0
      %5991 = vmatprep.subr.mxu0 0.0
      %5992 = vmatpush1.msra.mxu0 0.0
      %5993 = vmatprep.subr.mxu0 0.0
      %5994 = vmatpush1.msra.mxu0 0.0
      %5995 = vmatprep.subr.mxu0 0.0
      %5996 = vmatpush1.msra.mxu0 0.0
      %5997 = vmatprep.subr.mxu0 0.0
      %5998 = vmatpush1.msra.mxu0 0.0
      %5999 = vmatprep.subr.mxu0 0.0
      %6000 = vmatpush1.msra.mxu0 0.0
      %6001 = vmatprep.subr.mxu0 0.0
      %6002 = vmatpush1.msra.mxu0 0.0
      %6003 = vmatprep.subr.mxu0 0.0
      %6004 = vmatpush1.msra.mxu0 0.0
      %6005 = vmatprep.subr.mxu0 0.0
      %6006 = vmatpush1.msra.mxu0 0.0
      %6007 = vmatprep.subr.mxu0 0.0
      %6008 = vmatpush1.msra.mxu0 0.0
      %6009 = vmatprep.mubr.f32.mxu0 0.0
      %6010 = vmatmul.mubr.f32.gmra.mrb[0].mxu0 %v5919
      %v6011 = vpop.f32.mrb[0].mxu0
      %v6012 = vadd.f32 0.0, %v6011
      %v6013 = vpop.f32.mrb[0].mxu0
      %6014 = vmatprep.mubr.f32.mxu0 0.0
      %6015 = vmatmul.mubr.f32.gmra.mrb[0].mxu0 %v5922
      %v6016 = vpop.f32.mrb[0].mxu0
      %v6017 = vadd.f32 0.0, %v6016
      %v6018 = vpop.f32.mrb[0].mxu0
      %6019 = vmatprep.mubr.f32.mxu0 0.0
      %6020 = vmatmul.mubr.f32.gmra.mrb[0].mxu0 %v5925
      %v6021 = vpop.f32.mrb[0].mxu0
      %v6022 = vadd.f32 0.0, %v6021
      %v6023 = vpop.f32.mrb[0].mxu0
      %6024 = vmatprep.mubr.f32.mxu0 0.0
      %6025 = vmatmul.mubr.f32.gmra.mrb[0].mxu0 %v5928
      %v6026 = vpop.f32.mrb[0].mxu0
      %v6027 = vadd.f32 0.0, %v6026
      %v6028 = vpop.f32.mrb[0].mxu0
      %6029 = vmatprep.mubr.f32.mxu0 0.0
      %6030 = vmatmul.mubr.f32.gmra.mrb[0].mxu0 %v5931
      %v6031 = vpop.f32.mrb[0].mxu0
      %v6032 = vadd.f32 0.0, %v6031
      %v6033 = vpop.f32.mrb[0].mxu0
      %6034 = vmatprep.mubr.f32.mxu0 0.0
      %6035 = vmatmul.mubr.f32.gmra.mrb[0].mxu0 %v5934
      %v6036 = vpop.f32.mrb[0].mxu0
      %v6037 = vadd.f32 0.0, %v6036
      %v6038 = vpop.f32.mrb[0].mxu0
      %6039 = vmatprep.mubr.f32.mxu0 0.0
      %6040 = vmatmul.mubr.f32.gmra.mrb[0].mxu0 %v5937
      %v6041 = vpop.f32.mrb[0].mxu0
      %v6042 = vadd.f32 0.0, %v6041
      %v6043 = vpop.f32.mrb[0].mxu0
      %6044 = vmatprep.mubr.f32.mxu0 0.0
      %6045 = vmatmul.mubr.f32.gmra.mrb[0].mxu0 %v5940
      %v6046 = vpop.f32.mrb[0].mxu0
      %v6047 = vadd.f32 0.0, %v6046
      %v6048 = vpop.f32.mrb[0].mxu0
      %6049 = vdwg.mxu0
      %v6050 = vadd.f32 %v5846, %v6012
      %v6051 = vadd.f32 %v5851, %v6017
      %v6052 = vadd.f32 %v5856, %v6022
      %v6053 = vadd.f32 %v5861, %v6027
      %v6054 = vadd.f32 %v5866, %v6032
      %v6055 = vadd.f32 %v5871, %v6037
      %v6056 = vadd.f32 %v5876, %v6042
      %v6057 = vadd.f32 %v5881, %v6047
      %v6058 = vld [vmem:[#allocation3 + $0xf] sm:$0xff]
      %v6059 = vld [vmem:[#allocation3 + $0x17] sm:$0xff]
      %v6060 = vld [vmem:[#allocation3 + $0x1f] sm:$0xff]
      %v6061 = vld [vmem:[#allocation3 + $0x27] sm:$0xff]
      %v6062 = vld [vmem:[#allocation3 + $0x2f] sm:$0xff]
      %v6063 = vld [vmem:[#allocation3 + $0x37] sm:$0xff]
      %v6064 = vld [vmem:[#allocation3 + $0x3f] sm:$0xff]
      %v6065 = vld [vmem:[#allocation3 + $0x47] sm:$0xff]
      %v6066 = vsel %vm5593, %v6058, 0.0
      %v6067 = vsel %vm5594, %v6059, 0.0
      %v6068 = vsel %vm5595, %v6060, 0.0
      %v6069 = vsel %vm5596, %v6061, 0.0
      %v6070 = vsel %vm5597, %v6062, 0.0
      %v6071 = vsel %vm5598, %v6063, 0.0
      %v6072 = vsel %vm5599, %v6064, 0.0
      %v6073 = vsel %vm5600, %v6065, 0.0
      %s6074 = scalar_lea.vmem %s9, 12
      %v6075 = vld [vmem:[%s6074] sm:$0xf]
      %v6077 = vsel %vm535, %v6066, 0
      %v6080 = vsel %vm535, %v6067, 0
      %v6083 = vsel %vm535, %v6068, 0
      %v6086 = vsel %vm535, %v6069, 0
      %v6089 = vsel %vm535, %v6070, 0
      %v6092 = vsel %vm535, %v6071, 0
      %v6095 = vsel %vm535, %v6072, 0
      %v6098 = vsel %vm535, %v6073, 0
      %v6101 = vsel %vm1533, %v6075, 0
      %6103 = vmatprep.subr.mxu0 0.0
      %6104 = vmatpush1.msra.mxu0 %v6101
      %6105 = vmatprep.subr.mxu0 0.0
      %6106 = vmatpush1.msra.mxu0 0.0
      %6107 = vmatprep.subr.mxu0 0.0
      %6108 = vmatpush1.msra.mxu0 0.0
      %6109 = vmatprep.subr.mxu0 0.0
      %6110 = vmatpush1.msra.mxu0 0.0
      %6111 = vmatprep.subr.mxu0 0.0
      %6112 = vmatpush1.msra.mxu0 0.0
      %6113 = vmatprep.subr.mxu0 0.0
      %6114 = vmatpush1.msra.mxu0 0.0
      %6115 = vmatprep.subr.mxu0 0.0
      %6116 = vmatpush1.msra.mxu0 0.0
      %6117 = vmatprep.subr.mxu0 0.0
      %6118 = vmatpush1.msra.mxu0 0.0
      %6119 = vmatprep.subr.mxu0 0.0
      %6120 = vmatpush1.msra.mxu0 0.0
      %6121 = vmatprep.subr.mxu0 0.0
      %6122 = vmatpush1.msra.mxu0 0.0
      %6123 = vmatprep.subr.mxu0 0.0
      %6124 = vmatpush1.msra.mxu0 0.0
      %6125 = vmatprep.subr.mxu0 0.0
      %6126 = vmatpush1.msra.mxu0 0.0
      %6127 = vmatprep.subr.mxu0 0.0
      %6128 = vmatpush1.msra.mxu0 0.0
      %6129 = vmatprep.subr.mxu0 0.0
      %6130 = vmatpush1.msra.mxu0 0.0
      %6131 = vmatprep.subr.mxu0 0.0
      %6132 = vmatpush1.msra.mxu0 0.0
      %6133 = vmatprep.subr.mxu0 0.0
      %6134 = vmatpush1.msra.mxu0 0.0
      %6135 = vmatprep.subr.mxu0 0.0
      %6136 = vmatpush1.msra.mxu0 0.0
      %6137 = vmatprep.subr.mxu0 0.0
      %6138 = vmatpush1.msra.mxu0 0.0
      %6139 = vmatprep.subr.mxu0 0.0
      %6140 = vmatpush1.msra.mxu0 0.0
      %6141 = vmatprep.subr.mxu0 0.0
      %6142 = vmatpush1.msra.mxu0 0.0
      %6143 = vmatprep.subr.mxu0 0.0
      %6144 = vmatpush1.msra.mxu0 0.0
      %6145 = vmatprep.subr.mxu0 0.0
      %6146 = vmatpush1.msra.mxu0 0.0
      %6147 = vmatprep.subr.mxu0 0.0
      %6148 = vmatpush1.msra.mxu0 0.0
      %6149 = vmatprep.subr.mxu0 0.0
      %6150 = vmatpush1.msra.mxu0 0.0
      %6151 = vmatprep.subr.mxu0 0.0
      %6152 = vmatpush1.msra.mxu0 0.0
      %6153 = vmatprep.subr.mxu0 0.0
      %6154 = vmatpush1.msra.mxu0 0.0
      %6155 = vmatprep.subr.mxu0 0.0
      %6156 = vmatpush1.msra.mxu0 0.0
      %6157 = vmatprep.subr.mxu0 0.0
      %6158 = vmatpush1.msra.mxu0 0.0
      %6159 = vmatprep.subr.mxu0 0.0
      %6160 = vmatpush1.msra.mxu0 0.0
      %6161 = vmatprep.subr.mxu0 0.0
      %6162 = vmatpush1.msra.mxu0 0.0
      %6163 = vmatprep.subr.mxu0 0.0
      %6164 = vmatpush1.msra.mxu0 0.0
      %6165 = vmatprep.subr.mxu0 0.0
      %6166 = vmatpush1.msra.mxu0 0.0
      %6167 = vmatprep.mubr.f32.mxu0 0.0
      %6168 = vmatmul.mubr.f32.gmra.mrb[0].mxu0 %v6077
      %v6169 = vpop.f32.mrb[0].mxu0
      %v6170 = vadd.f32 0.0, %v6169
      %v6171 = vpop.f32.mrb[0].mxu0
      %6172 = vmatprep.mubr.f32.mxu0 0.0
      %6173 = vmatmul.mubr.f32.gmra.mrb[0].mxu0 %v6080
      %v6174 = vpop.f32.mrb[0].mxu0
      %v6175 = vadd.f32 0.0, %v6174
      %v6176 = vpop.f32.mrb[0].mxu0
      %6177 = vmatprep.mubr.f32.mxu0 0.0
      %6178 = vmatmul.mubr.f32.gmra.mrb[0].mxu0 %v6083
      %v6179 = vpop.f32.mrb[0].mxu0
      %v6180 = vadd.f32 0.0, %v6179
      %v6181 = vpop.f32.mrb[0].mxu0
      %6182 = vmatprep.mubr.f32.mxu0 0.0
      %6183 = vmatmul.mubr.f32.gmra.mrb[0].mxu0 %v6086
      %v6184 = vpop.f32.mrb[0].mxu0
      %v6185 = vadd.f32 0.0, %v6184
      %v6186 = vpop.f32.mrb[0].mxu0
      %6187 = vmatprep.mubr.f32.mxu0 0.0
      %6188 = vmatmul.mubr.f32.gmra.mrb[0].mxu0 %v6089
      %v6189 = vpop.f32.mrb[0].mxu0
      %v6190 = vadd.f32 0.0, %v6189
      %v6191 = vpop.f32.mrb[0].mxu0
      %6192 = vmatprep.mubr.f32.mxu0 0.0
      %6193 = vmatmul.mubr.f32.gmra.mrb[0].mxu0 %v6092
      %v6194 = vpop.f32.mrb[0].mxu0
      %v6195 = vadd.f32 0.0, %v6194
      %v6196 = vpop.f32.mrb[0].mxu0
      %6197 = vmatprep.mubr.f32.mxu0 0.0
      %6198 = vmatmul.mubr.f32.gmra.mrb[0].mxu0 %v6095
      %v6199 = vpop.f32.mrb[0].mxu0
      %v6200 = vadd.f32 0.0, %v6199
      %v6201 = vpop.f32.mrb[0].mxu0
      %6202 = vmatprep.mubr.f32.mxu0 0.0
      %6203 = vmatmul.mubr.f32.gmra.mrb[0].mxu0 %v6098
      %v6204 = vpop.f32.mrb[0].mxu0
      %v6205 = vadd.f32 0.0, %v6204
      %v6206 = vpop.f32.mrb[0].mxu0
      %6207 = vdwg.mxu0
      %v6208 = vadd.f32 %v6050, %v6170
      %v6209 = vadd.f32 %v6051, %v6175
      %v6210 = vadd.f32 %v6052, %v6180
      %v6211 = vadd.f32 %v6053, %v6185
      %v6212 = vadd.f32 %v6054, %v6190
      %v6213 = vadd.f32 %v6055, %v6195
      %v6214 = vadd.f32 %v6056, %v6200
      %v6215 = vadd.f32 %v6057, %v6205
      %v6216 = vld [vmem:[#allocation3 + $0x10] sm:$0xff]
      %v6217 = vld [vmem:[#allocation3 + $0x18] sm:$0xff]
      %v6218 = vld [vmem:[#allocation3 + $0x20] sm:$0xff]
      %v6219 = vld [vmem:[#allocation3 + $0x28] sm:$0xff]
      %v6220 = vld [vmem:[#allocation3 + $0x30] sm:$0xff]
      %v6221 = vld [vmem:[#allocation3 + $0x38] sm:$0xff]
      %v6222 = vld [vmem:[#allocation3 + $0x40] sm:$0xff]
      %v6223 = vld [vmem:[#allocation3 + $0x48] sm:$0xff]
      %s6224 = scalar_lea.vmem %s9, 16
      %v6225 = vld [vmem:[%s6224] sm:$0xf]
      %v6227 = vsel %vm535, %v6216, 0
      %v6230 = vsel %vm535, %v6217, 0
      %v6233 = vsel %vm535, %v6218, 0
      %v6236 = vsel %vm535, %v6219, 0
      %v6239 = vsel %vm535, %v6220, 0
      %v6242 = vsel %vm535, %v6221, 0
      %v6245 = vsel %vm535, %v6222, 0
      %v6248 = vsel %vm535, %v6223, 0
      %v6251 = vsel %vm1533, %v6225, 0
      %6253 = vmatprep.subr.mxu0 0.0
      %6254 = vmatpush1.msra.mxu0 %v6251
      %6255 = vmatprep.subr.mxu0 0.0
      %6256 = vmatpush1.msra.mxu0 0.0
      %6257 = vmatprep.subr.mxu0 0.0
      %6258 = vmatpush1.msra.mxu0 0.0
      %6259 = vmatprep.subr.mxu0 0.0
      %6260 = vmatpush1.msra.mxu0 0.0
      %6261 = vmatprep.subr.mxu0 0.0
      %6262 = vmatpush1.msra.mxu0 0.0
      %6263 = vmatprep.subr.mxu0 0.0
      %6264 = vmatpush1.msra.mxu0 0.0
      %6265 = vmatprep.subr.mxu0 0.0
      %6266 = vmatpush1.msra.mxu0 0.0
      %6267 = vmatprep.subr.mxu0 0.0
      %6268 = vmatpush1.msra.mxu0 0.0
      %6269 = vmatprep.subr.mxu0 0.0
      %6270 = vmatpush1.msra.mxu0 0.0
      %6271 = vmatprep.subr.mxu0 0.0
      %6272 = vmatpush1.msra.mxu0 0.0
      %6273 = vmatprep.subr.mxu0 0.0
      %6274 = vmatpush1.msra.mxu0 0.0
      %6275 = vmatprep.subr.mxu0 0.0
      %6276 = vmatpush1.msra.mxu0 0.0
      %6277 = vmatprep.subr.mxu0 0.0
      %6278 = vmatpush1.msra.mxu0 0.0
      %6279 = vmatprep.subr.mxu0 0.0
      %6280 = vmatpush1.msra.mxu0 0.0
      %6281 = vmatprep.subr.mxu0 0.0
      %6282 = vmatpush1.msra.mxu0 0.0
      %6283 = vmatprep.subr.mxu0 0.0
      %6284 = vmatpush1.msra.mxu0 0.0
      %6285 = vmatprep.subr.mxu0 0.0
      %6286 = vmatpush1.msra.mxu0 0.0
      %6287 = vmatprep.subr.mxu0 0.0
      %6288 = vmatpush1.msra.mxu0 0.0
      %6289 = vmatprep.subr.mxu0 0.0
      %6290 = vmatpush1.msra.mxu0 0.0
      %6291 = vmatprep.subr.mxu0 0.0
      %6292 = vmatpush1.msra.mxu0 0.0
      %6293 = vmatprep.subr.mxu0 0.0
      %6294 = vmatpush1.msra.mxu0 0.0
      %6295 = vmatprep.subr.mxu0 0.0
      %6296 = vmatpush1.msra.mxu0 0.0
      %6297 = vmatprep.subr.mxu0 0.0
      %6298 = vmatpush1.msra.mxu0 0.0
      %6299 = vmatprep.subr.mxu0 0.0
      %6300 = vmatpush1.msra.mxu0 0.0
      %6301 = vmatprep.subr.mxu0 0.0
      %6302 = vmatpush1.msra.mxu0 0.0
      %6303 = vmatprep.subr.mxu0 0.0
      %6304 = vmatpush1.msra.mxu0 0.0
      %6305 = vmatprep.subr.mxu0 0.0
      %6306 = vmatpush1.msra.mxu0 0.0
      %6307 = vmatprep.subr.mxu0 0.0
      %6308 = vmatpush1.msra.mxu0 0.0
      %6309 = vmatprep.subr.mxu0 0.0
      %6310 = vmatpush1.msra.mxu0 0.0
      %6311 = vmatprep.subr.mxu0 0.0
      %6312 = vmatpush1.msra.mxu0 0.0
      %6313 = vmatprep.subr.mxu0 0.0
      %6314 = vmatpush1.msra.mxu0 0.0
      %6315 = vmatprep.subr.mxu0 0.0
      %6316 = vmatpush1.msra.mxu0 0.0
      %6317 = vmatprep.mubr.f32.mxu0 0.0
      %6318 = vmatmul.mubr.f32.gmra.mrb[0].mxu0 %v6227
      %v6319 = vpop.f32.mrb[0].mxu0
      %v6320 = vadd.f32 0.0, %v6319
      %v6321 = vpop.f32.mrb[0].mxu0
      %6322 = vmatprep.mubr.f32.mxu0 0.0
      %6323 = vmatmul.mubr.f32.gmra.mrb[0].mxu0 %v6230
      %v6324 = vpop.f32.mrb[0].mxu0
      %v6325 = vadd.f32 0.0, %v6324
      %v6326 = vpop.f32.mrb[0].mxu0
      %6327 = vmatprep.mubr.f32.mxu0 0.0
      %6328 = vmatmul.mubr.f32.gmra.mrb[0].mxu0 %v6233
      %v6329 = vpop.f32.mrb[0].mxu0
      %v6330 = vadd.f32 0.0, %v6329
      %v6331 = vpop.f32.mrb[0].mxu0
      %6332 = vmatprep.mubr.f32.mxu0 0.0
      %6333 = vmatmul.mubr.f32.gmra.mrb[0].mxu0 %v6236
      %v6334 = vpop.f32.mrb[0].mxu0
      %v6335 = vadd.f32 0.0, %v6334
      %v6336 = vpop.f32.mrb[0].mxu0
      %6337 = vmatprep.mubr.f32.mxu0 0.0
      %6338 = vmatmul.mubr.f32.gmra.mrb[0].mxu0 %v6239
      %v6339 = vpop.f32.mrb[0].mxu0
      %v6340 = vadd.f32 0.0, %v6339
      %v6341 = vpop.f32.mrb[0].mxu0
      %6342 = vmatprep.mubr.f32.mxu0 0.0
      %6343 = vmatmul.mubr.f32.gmra.mrb[0].mxu0 %v6242
      %v6344 = vpop.f32.mrb[0].mxu0
      %v6345 = vadd.f32 0.0, %v6344
      %v6346 = vpop.f32.mrb[0].mxu0
      %6347 = vmatprep.mubr.f32.mxu0 0.0
      %6348 = vmatmul.mubr.f32.gmra.mrb[0].mxu0 %v6245
      %v6349 = vpop.f32.mrb[0].mxu0
      %v6350 = vadd.f32 0.0, %v6349
      %v6351 = vpop.f32.mrb[0].mxu0
      %6352 = vmatprep.mubr.f32.mxu0 0.0
      %6353 = vmatmul.mubr.f32.gmra.mrb[0].mxu0 %v6248
      %v6354 = vpop.f32.mrb[0].mxu0
      %v6355 = vadd.f32 0.0, %v6354
      %v6356 = vpop.f32.mrb[0].mxu0
      %6357 = vdwg.mxu0
      %v6358 = vadd.f32 %v6208, %v6320
      %v6359 = vadd.f32 %v6209, %v6325
      %v6360 = vadd.f32 %v6210, %v6330
      %v6361 = vadd.f32 %v6211, %v6335
      %v6362 = vadd.f32 %v6212, %v6340
      %v6363 = vadd.f32 %v6213, %v6345
      %v6364 = vadd.f32 %v6214, %v6350
      %v6365 = vadd.f32 %v6215, %v6355
      %v6366 = vld [vmem:[#allocation3 + $0x11] sm:$0xff]
      %v6367 = vld [vmem:[#allocation3 + $0x19] sm:$0xff]
      %v6368 = vld [vmem:[#allocation3 + $0x21] sm:$0xff]
      %v6369 = vld [vmem:[#allocation3 + $0x29] sm:$0xff]
      %v6370 = vld [vmem:[#allocation3 + $0x31] sm:$0xff]
      %v6371 = vld [vmem:[#allocation3 + $0x39] sm:$0xff]
      %v6372 = vld [vmem:[#allocation3 + $0x41] sm:$0xff]
      %v6373 = vld [vmem:[#allocation3 + $0x49] sm:$0xff]
      %v6374 = vsel %vm5900, %v6366, 0.0
      %v6375 = vsel %vm5901, %v6367, 0.0
      %v6376 = vsel %vm5902, %v6368, 0.0
      %v6377 = vsel %vm5903, %v6369, 0.0
      %v6378 = vsel %vm5904, %v6370, 0.0
      %v6379 = vsel %vm5905, %v6371, 0.0
      %v6380 = vsel %vm5906, %v6372, 0.0
      %v6381 = vsel %vm5907, %v6373, 0.0
      %s6382 = scalar_lea.vmem %s9, 20
      %v6383 = vld [vmem:[%s6382] sm:$0xf]
      %v6385 = vsel %vm535, %v6374, 0
      %v6388 = vsel %vm535, %v6375, 0
      %v6391 = vsel %vm535, %v6376, 0
      %v6394 = vsel %vm535, %v6377, 0
      %v6397 = vsel %vm535, %v6378, 0
      %v6400 = vsel %vm535, %v6379, 0
      %v6403 = vsel %vm535, %v6380, 0
      %v6406 = vsel %vm535, %v6381, 0
      %v6409 = vsel %vm1533, %v6383, 0
      %6411 = vmatprep.subr.mxu0 0.0
      %6412 = vmatpush1.msra.mxu0 %v6409
      %6413 = vmatprep.subr.mxu0 0.0
      %6414 = vmatpush1.msra.mxu0 0.0
      %6415 = vmatprep.subr.mxu0 0.0
      %6416 = vmatpush1.msra.mxu0 0.0
      %6417 = vmatprep.subr.mxu0 0.0
      %6418 = vmatpush1.msra.mxu0 0.0
      %6419 = vmatprep.subr.mxu0 0.0
      %6420 = vmatpush1.msra.mxu0 0.0
      %6421 = vmatprep.subr.mxu0 0.0
      %6422 = vmatpush1.msra.mxu0 0.0
      %6423 = vmatprep.subr.mxu0 0.0
      %6424 = vmatpush1.msra.mxu0 0.0
      %6425 = vmatprep.subr.mxu0 0.0
      %6426 = vmatpush1.msra.mxu0 0.0
      %6427 = vmatprep.subr.mxu0 0.0
      %6428 = vmatpush1.msra.mxu0 0.0
      %6429 = vmatprep.subr.mxu0 0.0
      %6430 = vmatpush1.msra.mxu0 0.0
      %6431 = vmatprep.subr.mxu0 0.0
      %6432 = vmatpush1.msra.mxu0 0.0
      %6433 = vmatprep.subr.mxu0 0.0
      %6434 = vmatpush1.msra.mxu0 0.0
      %6435 = vmatprep.subr.mxu0 0.0
      %6436 = vmatpush1.msra.mxu0 0.0
      %6437 = vmatprep.subr.mxu0 0.0
      %6438 = vmatpush1.msra.mxu0 0.0
      %6439 = vmatprep.subr.mxu0 0.0
      %6440 = vmatpush1.msra.mxu0 0.0
      %6441 = vmatprep.subr.mxu0 0.0
      %6442 = vmatpush1.msra.mxu0 0.0
      %6443 = vmatprep.subr.mxu0 0.0
      %6444 = vmatpush1.msra.mxu0 0.0
      %6445 = vmatprep.subr.mxu0 0.0
      %6446 = vmatpush1.msra.mxu0 0.0
      %6447 = vmatprep.subr.mxu0 0.0
      %6448 = vmatpush1.msra.mxu0 0.0
      %6449 = vmatprep.subr.mxu0 0.0
      %6450 = vmatpush1.msra.mxu0 0.0
      %6451 = vmatprep.subr.mxu0 0.0
      %6452 = vmatpush1.msra.mxu0 0.0
      %6453 = vmatprep.subr.mxu0 0.0
      %6454 = vmatpush1.msra.mxu0 0.0
      %6455 = vmatprep.subr.mxu0 0.0
      %6456 = vmatpush1.msra.mxu0 0.0
      %6457 = vmatprep.subr.mxu0 0.0
      %6458 = vmatpush1.msra.mxu0 0.0
      %6459 = vmatprep.subr.mxu0 0.0
      %6460 = vmatpush1.msra.mxu0 0.0
      %6461 = vmatprep.subr.mxu0 0.0
      %6462 = vmatpush1.msra.mxu0 0.0
      %6463 = vmatprep.subr.mxu0 0.0
      %6464 = vmatpush1.msra.mxu0 0.0
      %6465 = vmatprep.subr.mxu0 0.0
      %6466 = vmatpush1.msra.mxu0 0.0
      %6467 = vmatprep.subr.mxu0 0.0
      %6468 = vmatpush1.msra.mxu0 0.0
      %6469 = vmatprep.subr.mxu0 0.0
      %6470 = vmatpush1.msra.mxu0 0.0
      %6471 = vmatprep.subr.mxu0 0.0
      %6472 = vmatpush1.msra.mxu0 0.0
      %6473 = vmatprep.subr.mxu0 0.0
      %6474 = vmatpush1.msra.mxu0 0.0
      %6475 = vmatprep.mubr.f32.mxu0 0.0
      %6476 = vmatmul.mubr.f32.gmra.mrb[0].mxu0 %v6385
      %v6477 = vpop.f32.mrb[0].mxu0
      %v6478 = vadd.f32 0.0, %v6477
      %v6479 = vpop.f32.mrb[0].mxu0
      %6480 = vmatprep.mubr.f32.mxu0 0.0
      %6481 = vmatmul.mubr.f32.gmra.mrb[0].mxu0 %v6388
      %v6482 = vpop.f32.mrb[0].mxu0
      %v6483 = vadd.f32 0.0, %v6482
      %v6484 = vpop.f32.mrb[0].mxu0
      %6485 = vmatprep.mubr.f32.mxu0 0.0
      %6486 = vmatmul.mubr.f32.gmra.mrb[0].mxu0 %v6391
      %v6487 = vpop.f32.mrb[0].mxu0
      %v6488 = vadd.f32 0.0, %v6487
      %v6489 = vpop.f32.mrb[0].mxu0
      %6490 = vmatprep.mubr.f32.mxu0 0.0
      %6491 = vmatmul.mubr.f32.gmra.mrb[0].mxu0 %v6394
      %v6492 = vpop.f32.mrb[0].mxu0
      %v6493 = vadd.f32 0.0, %v6492
      %v6494 = vpop.f32.mrb[0].mxu0
      %6495 = vmatprep.mubr.f32.mxu0 0.0
      %6496 = vmatmul.mubr.f32.gmra.mrb[0].mxu0 %v6397
      %v6497 = vpop.f32.mrb[0].mxu0
      %v6498 = vadd.f32 0.0, %v6497
      %v6499 = vpop.f32.mrb[0].mxu0
      %6500 = vmatprep.mubr.f32.mxu0 0.0
      %6501 = vmatmul.mubr.f32.gmra.mrb[0].mxu0 %v6400
      %v6502 = vpop.f32.mrb[0].mxu0
      %v6503 = vadd.f32 0.0, %v6502
      %v6504 = vpop.f32.mrb[0].mxu0
      %6505 = vmatprep.mubr.f32.mxu0 0.0
      %6506 = vmatmul.mubr.f32.gmra.mrb[0].mxu0 %v6403
      %v6507 = vpop.f32.mrb[0].mxu0
      %v6508 = vadd.f32 0.0, %v6507
      %v6509 = vpop.f32.mrb[0].mxu0
      %6510 = vmatprep.mubr.f32.mxu0 0.0
      %6511 = vmatmul.mubr.f32.gmra.mrb[0].mxu0 %v6406
      %v6512 = vpop.f32.mrb[0].mxu0
      %v6513 = vadd.f32 0.0, %v6512
      %v6514 = vpop.f32.mrb[0].mxu0
      %6515 = vdwg.mxu0
      %v6516 = vadd.f32 %v6358, %v6478
      %v6517 = vadd.f32 %v6359, %v6483
      %v6518 = vadd.f32 %v6360, %v6488
      %v6519 = vadd.f32 %v6361, %v6493
      %v6520 = vadd.f32 %v6362, %v6498
      %v6521 = vadd.f32 %v6363, %v6503
      %v6522 = vadd.f32 %v6364, %v6508
      %v6523 = vadd.f32 %v6365, %v6513
      %v6524 = vld [vmem:[#allocation3 + $0x17] sm:$0xff]
      %v6525 = vld [vmem:[#allocation3 + $0x1f] sm:$0xff]
      %v6526 = vld [vmem:[#allocation3 + $0x27] sm:$0xff]
      %v6527 = vld [vmem:[#allocation3 + $0x2f] sm:$0xff]
      %v6528 = vld [vmem:[#allocation3 + $0x37] sm:$0xff]
      %v6529 = vld [vmem:[#allocation3 + $0x3f] sm:$0xff]
      %v6530 = vld [vmem:[#allocation3 + $0x47] sm:$0xff]
      %v6531 = vld [vmem:[#allocation3 + $0x4f] sm:$0xff]
      %v6532 = vsel %vm5593, %v6524, 0.0
      %v6533 = vsel %vm5594, %v6525, 0.0
      %v6534 = vsel %vm5595, %v6526, 0.0
      %v6535 = vsel %vm5596, %v6527, 0.0
      %v6536 = vsel %vm5597, %v6528, 0.0
      %v6537 = vsel %vm5598, %v6529, 0.0
      %v6538 = vsel %vm5599, %v6530, 0.0
      %v6539 = vsel %vm5600, %v6531, 0.0
      %s6540 = scalar_lea.vmem %s9, 24
      %v6541 = vld [vmem:[%s6540] sm:$0xf]
      %v6543 = vsel %vm535, %v6532, 0
      %v6546 = vsel %vm535, %v6533, 0
      %v6549 = vsel %vm535, %v6534, 0
      %v6552 = vsel %vm535, %v6535, 0
      %v6555 = vsel %vm535, %v6536, 0
      %v6558 = vsel %vm535, %v6537, 0
      %v6561 = vsel %vm535, %v6538, 0
      %v6564 = vsel %vm535, %v6539, 0
      %v6567 = vsel %vm1533, %v6541, 0
      %6569 = vmatprep.subr.mxu0 0.0
      %6570 = vmatpush1.msra.mxu0 %v6567
      %6571 = vmatprep.subr.mxu0 0.0
      %6572 = vmatpush1.msra.mxu0 0.0
      %6573 = vmatprep.subr.mxu0 0.0
      %6574 = vmatpush1.msra.mxu0 0.0
      %6575 = vmatprep.subr.mxu0 0.0
      %6576 = vmatpush1.msra.mxu0 0.0
      %6577 = vmatprep.subr.mxu0 0.0
      %6578 = vmatpush1.msra.mxu0 0.0
      %6579 = vmatprep.subr.mxu0 0.0
      %6580 = vmatpush1.msra.mxu0 0.0
      %6581 = vmatprep.subr.mxu0 0.0
      %6582 = vmatpush1.msra.mxu0 0.0
      %6583 = vmatprep.subr.mxu0 0.0
      %6584 = vmatpush1.msra.mxu0 0.0
      %6585 = vmatprep.subr.mxu0 0.0
      %6586 = vmatpush1.msra.mxu0 0.0
      %6587 = vmatprep.subr.mxu0 0.0
      %6588 = vmatpush1.msra.mxu0 0.0
      %6589 = vmatprep.subr.mxu0 0.0
      %6590 = vmatpush1.msra.mxu0 0.0
      %6591 = vmatprep.subr.mxu0 0.0
      %6592 = vmatpush1.msra.mxu0 0.0
      %6593 = vmatprep.subr.mxu0 0.0
      %6594 = vmatpush1.msra.mxu0 0.0
      %6595 = vmatprep.subr.mxu0 0.0
      %6596 = vmatpush1.msra.mxu0 0.0
      %6597 = vmatprep.subr.mxu0 0.0
      %6598 = vmatpush1.msra.mxu0 0.0
      %6599 = vmatprep.subr.mxu0 0.0
      %6600 = vmatpush1.msra.mxu0 0.0
      %6601 = vmatprep.subr.mxu0 0.0
      %6602 = vmatpush1.msra.mxu0 0.0
      %6603 = vmatprep.subr.mxu0 0.0
      %6604 = vmatpush1.msra.mxu0 0.0
      %6605 = vmatprep.subr.mxu0 0.0
      %6606 = vmatpush1.msra.mxu0 0.0
      %6607 = vmatprep.subr.mxu0 0.0
      %6608 = vmatpush1.msra.mxu0 0.0
      %6609 = vmatprep.subr.mxu0 0.0
      %6610 = vmatpush1.msra.mxu0 0.0
      %6611 = vmatprep.subr.mxu0 0.0
      %6612 = vmatpush1.msra.mxu0 0.0
      %6613 = vmatprep.subr.mxu0 0.0
      %6614 = vmatpush1.msra.mxu0 0.0
      %6615 = vmatprep.subr.mxu0 0.0
      %6616 = vmatpush1.msra.mxu0 0.0
      %6617 = vmatprep.subr.mxu0 0.0
      %6618 = vmatpush1.msra.mxu0 0.0
      %6619 = vmatprep.subr.mxu0 0.0
      %6620 = vmatpush1.msra.mxu0 0.0
      %6621 = vmatprep.subr.mxu0 0.0
      %6622 = vmatpush1.msra.mxu0 0.0
      %6623 = vmatprep.subr.mxu0 0.0
      %6624 = vmatpush1.msra.mxu0 0.0
      %6625 = vmatprep.subr.mxu0 0.0
      %6626 = vmatpush1.msra.mxu0 0.0
      %6627 = vmatprep.subr.mxu0 0.0
      %6628 = vmatpush1.msra.mxu0 0.0
      %6629 = vmatprep.subr.mxu0 0.0
      %6630 = vmatpush1.msra.mxu0 0.0
      %6631 = vmatprep.subr.mxu0 0.0
      %6632 = vmatpush1.msra.mxu0 0.0
      %6633 = vmatprep.mubr.f32.mxu0 0.0
      %6634 = vmatmul.mubr.f32.gmra.mrb[0].mxu0 %v6543
      %v6635 = vpop.f32.mrb[0].mxu0
      %v6636 = vadd.f32 0.0, %v6635
      %v6637 = vpop.f32.mrb[0].mxu0
      %6638 = vmatprep.mubr.f32.mxu0 0.0
      %6639 = vmatmul.mubr.f32.gmra.mrb[0].mxu0 %v6546
      %v6640 = vpop.f32.mrb[0].mxu0
      %v6641 = vadd.f32 0.0, %v6640
      %v6642 = vpop.f32.mrb[0].mxu0
      %6643 = vmatprep.mubr.f32.mxu0 0.0
      %6644 = vmatmul.mubr.f32.gmra.mrb[0].mxu0 %v6549
      %v6645 = vpop.f32.mrb[0].mxu0
      %v6646 = vadd.f32 0.0, %v6645
      %v6647 = vpop.f32.mrb[0].mxu0
      %6648 = vmatprep.mubr.f32.mxu0 0.0
      %6649 = vmatmul.mubr.f32.gmra.mrb[0].mxu0 %v6552
      %v6650 = vpop.f32.mrb[0].mxu0
      %v6651 = vadd.f32 0.0, %v6650
      %v6652 = vpop.f32.mrb[0].mxu0
      %6653 = vmatprep.mubr.f32.mxu0 0.0
      %6654 = vmatmul.mubr.f32.gmra.mrb[0].mxu0 %v6555
      %v6655 = vpop.f32.mrb[0].mxu0
      %v6656 = vadd.f32 0.0, %v6655
      %v6657 = vpop.f32.mrb[0].mxu0
      %6658 = vmatprep.mubr.f32.mxu0 0.0
      %6659 = vmatmul.mubr.f32.gmra.mrb[0].mxu0 %v6558
      %v6660 = vpop.f32.mrb[0].mxu0
      %v6661 = vadd.f32 0.0, %v6660
      %v6662 = vpop.f32.mrb[0].mxu0
      %6663 = vmatprep.mubr.f32.mxu0 0.0
      %6664 = vmatmul.mubr.f32.gmra.mrb[0].mxu0 %v6561
      %v6665 = vpop.f32.mrb[0].mxu0
      %v6666 = vadd.f32 0.0, %v6665
      %v6667 = vpop.f32.mrb[0].mxu0
      %6668 = vmatprep.mubr.f32.mxu0 0.0
      %6669 = vmatmul.mubr.f32.gmra.mrb[0].mxu0 %v6564
      %v6670 = vpop.f32.mrb[0].mxu0
      %v6671 = vadd.f32 0.0, %v6670
      %v6672 = vpop.f32.mrb[0].mxu0
      %6673 = vdwg.mxu0
      %v6674 = vadd.f32 %v6516, %v6636
      %v6675 = vadd.f32 %v6517, %v6641
      %v6676 = vadd.f32 %v6518, %v6646
      %v6677 = vadd.f32 %v6519, %v6651
      %v6678 = vadd.f32 %v6520, %v6656
      %v6679 = vadd.f32 %v6521, %v6661
      %v6680 = vadd.f32 %v6522, %v6666
      %v6681 = vadd.f32 %v6523, %v6671
      %v6682 = vld [vmem:[#allocation3 + $0x18] sm:$0xff]
      %v6683 = vld [vmem:[#allocation3 + $0x20] sm:$0xff]
      %v6684 = vld [vmem:[#allocation3 + $0x28] sm:$0xff]
      %v6685 = vld [vmem:[#allocation3 + $0x30] sm:$0xff]
      %v6686 = vld [vmem:[#allocation3 + $0x38] sm:$0xff]
      %v6687 = vld [vmem:[#allocation3 + $0x40] sm:$0xff]
      %v6688 = vld [vmem:[#allocation3 + $0x48] sm:$0xff]
      %v6689 = vld [vmem:[#allocation3 + $0x50] sm:$0xff]
      %s6690 = scalar_lea.vmem %s9, 28
      %v6691 = vld [vmem:[%s6690] sm:$0xf]
      %v6693 = vsel %vm535, %v6682, 0
      %v6696 = vsel %vm535, %v6683, 0
      %v6699 = vsel %vm535, %v6684, 0
      %v6702 = vsel %vm535, %v6685, 0
      %v6705 = vsel %vm535, %v6686, 0
      %v6708 = vsel %vm535, %v6687, 0
      %v6711 = vsel %vm535, %v6688, 0
      %v6714 = vsel %vm535, %v6689, 0
      %v6717 = vsel %vm1533, %v6691, 0
      %6719 = vmatprep.subr.mxu0 0.0
      %6720 = vmatpush1.msra.mxu0 %v6717
      %6721 = vmatprep.subr.mxu0 0.0
      %6722 = vmatpush1.msra.mxu0 0.0
      %6723 = vmatprep.subr.mxu0 0.0
      %6724 = vmatpush1.msra.mxu0 0.0
      %6725 = vmatprep.subr.mxu0 0.0
      %6726 = vmatpush1.msra.mxu0 0.0
      %6727 = vmatprep.subr.mxu0 0.0
      %6728 = vmatpush1.msra.mxu0 0.0
      %6729 = vmatprep.subr.mxu0 0.0
      %6730 = vmatpush1.msra.mxu0 0.0
      %6731 = vmatprep.subr.mxu0 0.0
      %6732 = vmatpush1.msra.mxu0 0.0
      %6733 = vmatprep.subr.mxu0 0.0
      %6734 = vmatpush1.msra.mxu0 0.0
      %6735 = vmatprep.subr.mxu0 0.0
      %6736 = vmatpush1.msra.mxu0 0.0
      %6737 = vmatprep.subr.mxu0 0.0
      %6738 = vmatpush1.msra.mxu0 0.0
      %6739 = vmatprep.subr.mxu0 0.0
      %6740 = vmatpush1.msra.mxu0 0.0
      %6741 = vmatprep.subr.mxu0 0.0
      %6742 = vmatpush1.msra.mxu0 0.0
      %6743 = vmatprep.subr.mxu0 0.0
      %6744 = vmatpush1.msra.mxu0 0.0
      %6745 = vmatprep.subr.mxu0 0.0
      %6746 = vmatpush1.msra.mxu0 0.0
      %6747 = vmatprep.subr.mxu0 0.0
      %6748 = vmatpush1.msra.mxu0 0.0
      %6749 = vmatprep.subr.mxu0 0.0
      %6750 = vmatpush1.msra.mxu0 0.0
      %6751 = vmatprep.subr.mxu0 0.0
      %6752 = vmatpush1.msra.mxu0 0.0
      %6753 = vmatprep.subr.mxu0 0.0
      %6754 = vmatpush1.msra.mxu0 0.0
      %6755 = vmatprep.subr.mxu0 0.0
      %6756 = vmatpush1.msra.mxu0 0.0
      %6757 = vmatprep.subr.mxu0 0.0
      %6758 = vmatpush1.msra.mxu0 0.0
      %6759 = vmatprep.subr.mxu0 0.0
      %6760 = vmatpush1.msra.mxu0 0.0
      %6761 = vmatprep.subr.mxu0 0.0
      %6762 = vmatpush1.msra.mxu0 0.0
      %6763 = vmatprep.subr.mxu0 0.0
      %6764 = vmatpush1.msra.mxu0 0.0
      %6765 = vmatprep.subr.mxu0 0.0
      %6766 = vmatpush1.msra.mxu0 0.0
      %6767 = vmatprep.subr.mxu0 0.0
      %6768 = vmatpush1.msra.mxu0 0.0
      %6769 = vmatprep.subr.mxu0 0.0
      %6770 = vmatpush1.msra.mxu0 0.0
      %6771 = vmatprep.subr.mxu0 0.0
      %6772 = vmatpush1.msra.mxu0 0.0
      %6773 = vmatprep.subr.mxu0 0.0
      %6774 = vmatpush1.msra.mxu0 0.0
      %6775 = vmatprep.subr.mxu0 0.0
      %6776 = vmatpush1.msra.mxu0 0.0
      %6777 = vmatprep.subr.mxu0 0.0
      %6778 = vmatpush1.msra.mxu0 0.0
      %6779 = vmatprep.subr.mxu0 0.0
      %6780 = vmatpush1.msra.mxu0 0.0
      %6781 = vmatprep.subr.mxu0 0.0
      %6782 = vmatpush1.msra.mxu0 0.0
      %6783 = vmatprep.mubr.f32.mxu0 0.0
      %6784 = vmatmul.mubr.f32.gmra.mrb[0].mxu0 %v6693
      %v6785 = vpop.f32.mrb[0].mxu0
      %v6786 = vadd.f32 0.0, %v6785
      %v6787 = vpop.f32.mrb[0].mxu0
      %6788 = vmatprep.mubr.f32.mxu0 0.0
      %6789 = vmatmul.mubr.f32.gmra.mrb[0].mxu0 %v6696
      %v6790 = vpop.f32.mrb[0].mxu0
      %v6791 = vadd.f32 0.0, %v6790
      %v6792 = vpop.f32.mrb[0].mxu0
      %6793 = vmatprep.mubr.f32.mxu0 0.0
      %6794 = vmatmul.mubr.f32.gmra.mrb[0].mxu0 %v6699
      %v6795 = vpop.f32.mrb[0].mxu0
      %v6796 = vadd.f32 0.0, %v6795
      %v6797 = vpop.f32.mrb[0].mxu0
      %6798 = vmatprep.mubr.f32.mxu0 0.0
      %6799 = vmatmul.mubr.f32.gmra.mrb[0].mxu0 %v6702
      %v6800 = vpop.f32.mrb[0].mxu0
      %v6801 = vadd.f32 0.0, %v6800
      %v6802 = vpop.f32.mrb[0].mxu0
      %6803 = vmatprep.mubr.f32.mxu0 0.0
      %6804 = vmatmul.mubr.f32.gmra.mrb[0].mxu0 %v6705
      %v6805 = vpop.f32.mrb[0].mxu0
      %v6806 = vadd.f32 0.0, %v6805
      %v6807 = vpop.f32.mrb[0].mxu0
      %6808 = vmatprep.mubr.f32.mxu0 0.0
      %6809 = vmatmul.mubr.f32.gmra.mrb[0].mxu0 %v6708
      %v6810 = vpop.f32.mrb[0].mxu0
      %v6811 = vadd.f32 0.0, %v6810
      %v6812 = vpop.f32.mrb[0].mxu0
      %6813 = vmatprep.mubr.f32.mxu0 0.0
      %6814 = vmatmul.mubr.f32.gmra.mrb[0].mxu0 %v6711
      %v6815 = vpop.f32.mrb[0].mxu0
      %v6816 = vadd.f32 0.0, %v6815
      %v6817 = vpop.f32.mrb[0].mxu0
      %6818 = vmatprep.mubr.f32.mxu0 0.0
      %6819 = vmatmul.mubr.f32.gmra.mrb[0].mxu0 %v6714
      %v6820 = vpop.f32.mrb[0].mxu0
      %v6821 = vadd.f32 0.0, %v6820
      %v6822 = vpop.f32.mrb[0].mxu0
      %6823 = vdwg.mxu0
      %v6824 = vadd.f32 %v6674, %v6786
      %v6825 = vadd.f32 %v6675, %v6791
      %v6826 = vadd.f32 %v6676, %v6796
      %v6827 = vadd.f32 %v6677, %v6801
      %v6828 = vadd.f32 %v6678, %v6806
      %v6829 = vadd.f32 %v6679, %v6811
      %v6830 = vadd.f32 %v6680, %v6816
      %v6831 = vadd.f32 %v6681, %v6821
      %v6832 = vld [vmem:[#allocation3 + $0x19] sm:$0xff]
      %v6833 = vld [vmem:[#allocation3 + $0x21] sm:$0xff]
      %v6834 = vld [vmem:[#allocation3 + $0x29] sm:$0xff]
      %v6835 = vld [vmem:[#allocation3 + $0x31] sm:$0xff]
      %v6836 = vld [vmem:[#allocation3 + $0x39] sm:$0xff]
      %v6837 = vld [vmem:[#allocation3 + $0x41] sm:$0xff]
      %v6838 = vld [vmem:[#allocation3 + $0x49] sm:$0xff]
      %v6839 = vld [vmem:[#allocation3 + $0x51] sm:$0xff]
      %v6840 = vsel %vm5900, %v6832, 0.0
      %v6841 = vsel %vm5901, %v6833, 0.0
      %v6842 = vsel %vm5902, %v6834, 0.0
      %v6843 = vsel %vm5903, %v6835, 0.0
      %v6844 = vsel %vm5904, %v6836, 0.0
      %v6845 = vsel %vm5905, %v6837, 0.0
      %v6846 = vsel %vm5906, %v6838, 0.0
      %v6847 = vsel %vm5907, %v6839, 0.0
      %s6848 = scalar_lea.vmem %s9, 32
      %v6849 = vld [vmem:[%s6848] sm:$0xf]
      %v6851 = vsel %vm535, %v6840, 0
      %v6854 = vsel %vm535, %v6841, 0
      %v6857 = vsel %vm535, %v6842, 0
      %v6860 = vsel %vm535, %v6843, 0
      %v6863 = vsel %vm535, %v6844, 0
      %v6866 = vsel %vm535, %v6845, 0
      %v6869 = vsel %vm535, %v6846, 0
      %v6872 = vsel %vm535, %v6847, 0
      %v6875 = vsel %vm1533, %v6849, 0
      %6877 = vmatprep.subr.mxu0 0.0
      %6878 = vmatpush1.msra.mxu0 %v6875
      %6879 = vmatprep.subr.mxu0 0.0
      %6880 = vmatpush1.msra.mxu0 0.0
      %6881 = vmatprep.subr.mxu0 0.0
      %6882 = vmatpush1.msra.mxu0 0.0
      %6883 = vmatprep.subr.mxu0 0.0
      %6884 = vmatpush1.msra.mxu0 0.0
      %6885 = vmatprep.subr.mxu0 0.0
      %6886 = vmatpush1.msra.mxu0 0.0
      %6887 = vmatprep.subr.mxu0 0.0
      %6888 = vmatpush1.msra.mxu0 0.0
      %6889 = vmatprep.subr.mxu0 0.0
      %6890 = vmatpush1.msra.mxu0 0.0
      %6891 = vmatprep.subr.mxu0 0.0
      %6892 = vmatpush1.msra.mxu0 0.0
      %6893 = vmatprep.subr.mxu0 0.0
      %6894 = vmatpush1.msra.mxu0 0.0
      %6895 = vmatprep.subr.mxu0 0.0
      %6896 = vmatpush1.msra.mxu0 0.0
      %6897 = vmatprep.subr.mxu0 0.0
      %6898 = vmatpush1.msra.mxu0 0.0
      %6899 = vmatprep.subr.mxu0 0.0
      %6900 = vmatpush1.msra.mxu0 0.0
      %6901 = vmatprep.subr.mxu0 0.0
      %6902 = vmatpush1.msra.mxu0 0.0
      %6903 = vmatprep.subr.mxu0 0.0
      %6904 = vmatpush1.msra.mxu0 0.0
      %6905 = vmatprep.subr.mxu0 0.0
      %6906 = vmatpush1.msra.mxu0 0.0
      %6907 = vmatprep.subr.mxu0 0.0
      %6908 = vmatpush1.msra.mxu0 0.0
      %6909 = vmatprep.subr.mxu0 0.0
      %6910 = vmatpush1.msra.mxu0 0.0
      %6911 = vmatprep.subr.mxu0 0.0
      %6912 = vmatpush1.msra.mxu0 0.0
      %6913 = vmatprep.subr.mxu0 0.0
      %6914 = vmatpush1.msra.mxu0 0.0
      %6915 = vmatprep.subr.mxu0 0.0
      %6916 = vmatpush1.msra.mxu0 0.0
      %6917 = vmatprep.subr.mxu0 0.0
      %6918 = vmatpush1.msra.mxu0 0.0
      %6919 = vmatprep.subr.mxu0 0.0
      %6920 = vmatpush1.msra.mxu0 0.0
      %6921 = vmatprep.subr.mxu0 0.0
      %6922 = vmatpush1.msra.mxu0 0.0
      %6923 = vmatprep.subr.mxu0 0.0
      %6924 = vmatpush1.msra.mxu0 0.0
      %6925 = vmatprep.subr.mxu0 0.0
      %6926 = vmatpush1.msra.mxu0 0.0
      %6927 = vmatprep.subr.mxu0 0.0
      %6928 = vmatpush1.msra.mxu0 0.0
      %6929 = vmatprep.subr.mxu0 0.0
      %6930 = vmatpush1.msra.mxu0 0.0
      %6931 = vmatprep.subr.mxu0 0.0
      %6932 = vmatpush1.msra.mxu0 0.0
      %6933 = vmatprep.subr.mxu0 0.0
      %6934 = vmatpush1.msra.mxu0 0.0
      %6935 = vmatprep.subr.mxu0 0.0
      %6936 = vmatpush1.msra.mxu0 0.0
      %6937 = vmatprep.subr.mxu0 0.0
      %6938 = vmatpush1.msra.mxu0 0.0
      %6939 = vmatprep.subr.mxu0 0.0
      %6940 = vmatpush1.msra.mxu0 0.0
      %6941 = vmatprep.mubr.f32.mxu0 0.0
      %6942 = vmatmul.mubr.f32.gmra.mrb[0].mxu0 %v6851
      %v6943 = vpop.f32.mrb[0].mxu0
      %v6944 = vadd.f32 0.0, %v6943
      %v6945 = vpop.f32.mrb[0].mxu0
      %6946 = vmatprep.mubr.f32.mxu0 0.0
      %6947 = vmatmul.mubr.f32.gmra.mrb[0].mxu0 %v6854
      %v6948 = vpop.f32.mrb[0].mxu0
      %v6949 = vadd.f32 0.0, %v6948
      %v6950 = vpop.f32.mrb[0].mxu0
      %6951 = vmatprep.mubr.f32.mxu0 0.0
      %6952 = vmatmul.mubr.f32.gmra.mrb[0].mxu0 %v6857
      %v6953 = vpop.f32.mrb[0].mxu0
      %v6954 = vadd.f32 0.0, %v6953
      %v6955 = vpop.f32.mrb[0].mxu0
      %6956 = vmatprep.mubr.f32.mxu0 0.0
      %6957 = vmatmul.mubr.f32.gmra.mrb[0].mxu0 %v6860
      %v6958 = vpop.f32.mrb[0].mxu0
      %v6959 = vadd.f32 0.0, %v6958
      %v6960 = vpop.f32.mrb[0].mxu0
      %6961 = vmatprep.mubr.f32.mxu0 0.0
      %6962 = vmatmul.mubr.f32.gmra.mrb[0].mxu0 %v6863
      %v6963 = vpop.f32.mrb[0].mxu0
      %v6964 = vadd.f32 0.0, %v6963
      %v6965 = vpop.f32.mrb[0].mxu0
      %6966 = vmatprep.mubr.f32.mxu0 0.0
      %6967 = vmatmul.mubr.f32.gmra.mrb[0].mxu0 %v6866
      %v6968 = vpop.f32.mrb[0].mxu0
      %v6969 = vadd.f32 0.0, %v6968
      %v6970 = vpop.f32.mrb[0].mxu0
      %6971 = vmatprep.mubr.f32.mxu0 0.0
      %6972 = vmatmul.mubr.f32.gmra.mrb[0].mxu0 %v6869
      %v6973 = vpop.f32.mrb[0].mxu0
      %v6974 = vadd.f32 0.0, %v6973
      %v6975 = vpop.f32.mrb[0].mxu0
      %6976 = vmatprep.mubr.f32.mxu0 0.0
      %6977 = vmatmul.mubr.f32.gmra.mrb[0].mxu0 %v6872
      %v6978 = vpop.f32.mrb[0].mxu0
      %v6979 = vadd.f32 0.0, %v6978
      %v6980 = vpop.f32.mrb[0].mxu0
      %6981 = vdwg.mxu0
      %v6982 = vadd.f32 %v6824, %v6944
      %v6983 = vadd.f32 %v6825, %v6949
      %v6984 = vadd.f32 %v6826, %v6954
      %v6985 = vadd.f32 %v6827, %v6959
      %v6986 = vadd.f32 %v6828, %v6964
      %v6987 = vadd.f32 %v6829, %v6969
      %v6988 = vadd.f32 %v6830, %v6974
      %v6989 = vadd.f32 %v6831, %v6979
      %v6990 = vld [vmem:[%s10] sm:$0x1]
      %v6992 = vlaneseq
      %v6993 = vshrl.u32 %v6992, 7
      %v6994 = vsub.s32 0, %v6993
      %v6995 = vrot.slane %v6990, %v6994
      %v6997 = vadd.f32 %v6982, %v6995
      %v6998 = vadd.f32 %v6983, %v6995
      %v6999 = vadd.f32 %v6984, %v6995
      %v7000 = vadd.f32 %v6985, %v6995
      %v7001 = vadd.f32 %v6986, %v6995
      %v7002 = vadd.f32 %v6987, %v6995
      %v7003 = vadd.f32 %v6988, %v6995
      %v7004 = vadd.f32 %v6989, %v6995
      %v7005 = vld [vmem:[%s11] sm:$0xf]
      %v7006 = vld [vmem:[%s12] sm:$0x1]
      %v7008 = vlaneseq
      %v7009 = vshrl.u32 %v7008, 7
      %v7010 = vsub.s32 0, %v7009
      %v7011 = vrot.slane %v7006, %v7010
      %v7014 = vsel %vm535, %v468, 0
      %v7017 = vsel %vm535, %v469, 0
      %v7020 = vsel %vm535, %v470, 0
      %v7023 = vsel %vm535, %v471, 0
      %v7026 = vsel %vm535, %v472, 0
      %v7029 = vsel %vm535, %v473, 0
      %v7032 = vsel %vm535, %v474, 0
      %v7035 = vsel %vm535, %v475, 0
      %v7038 = vsel %vm535, %v476, 0
      %v7041 = vsel %vm535, %v477, 0
      %v7044 = vsel %vm535, %v478, 0
      %v7047 = vsel %vm535, %v479, 0
      %v7050 = vsel %vm535, %v480, 0
      %v7053 = vsel %vm535, %v481, 0
      %v7056 = vsel %vm535, %v482, 0
      %v7059 = vsel %vm535, %v483, 0
      %v7062 = vsel %vm535, %v484, 0
      %v7065 = vsel %vm535, %v485, 0
      %v7068 = vsel %vm535, %v486, 0
      %v7071 = vsel %vm535, %v487, 0
      %v7074 = vsel %vm535, %v488, 0
      %v7077 = vsel %vm535, %v489, 0
      %v7080 = vsel %vm535, %v490, 0
      %v7083 = vsel %vm535, %v491, 0
      %v7086 = vsel %vm535, %v492, 0
      %v7089 = vsel %vm535, %v493, 0
      %v7092 = vsel %vm535, %v494, 0
      %v7095 = vsel %vm535, %v495, 0
      %v7098 = vsel %vm535, %v496, 0
      %v7101 = vsel %vm535, %v497, 0
      %v7104 = vsel %vm535, %v498, 0
      %v7107 = vsel %vm535, %v499, 0
      %v7110 = vsel %vm1533, %v7005, 0
      %7112 = vmatprep.subr.mxu0 0.0
      %7113 = vmatpush1.msra.mxu0 %v7110
      %7114 = vmatprep.subr.mxu0 0.0
      %7115 = vmatpush1.msra.mxu0 0.0
      %7116 = vmatprep.subr.mxu0 0.0
      %7117 = vmatpush1.msra.mxu0 0.0
      %7118 = vmatprep.subr.mxu0 0.0
      %7119 = vmatpush1.msra.mxu0 0.0
      %7120 = vmatprep.subr.mxu0 0.0
      %7121 = vmatpush1.msra.mxu0 0.0
      %7122 = vmatprep.subr.mxu0 0.0
      %7123 = vmatpush1.msra.mxu0 0.0
      %7124 = vmatprep.subr.mxu0 0.0
      %7125 = vmatpush1.msra.mxu0 0.0
      %7126 = vmatprep.subr.mxu0 0.0
      %7127 = vmatpush1.msra.mxu0 0.0
      %7128 = vmatprep.subr.mxu0 0.0
      %7129 = vmatpush1.msra.mxu0 0.0
      %7130 = vmatprep.subr.mxu0 0.0
      %7131 = vmatpush1.msra.mxu0 0.0
      %7132 = vmatprep.subr.mxu0 0.0
      %7133 = vmatpush1.msra.mxu0 0.0
      %7134 = vmatprep.subr.mxu0 0.0
      %7135 = vmatpush1.msra.mxu0 0.0
      %7136 = vmatprep.subr.mxu0 0.0
      %7137 = vmatpush1.msra.mxu0 0.0
      %7138 = vmatprep.subr.mxu0 0.0
      %7139 = vmatpush1.msra.mxu0 0.0
      %7140 = vmatprep.subr.mxu0 0.0
      %7141 = vmatpush1.msra.mxu0 0.0
      %7142 = vmatprep.subr.mxu0 0.0
      %7143 = vmatpush1.msra.mxu0 0.0
      %7144 = vmatprep.subr.mxu0 0.0
      %7145 = vmatpush1.msra.mxu0 0.0
      %7146 = vmatprep.subr.mxu0 0.0
      %7147 = vmatpush1.msra.mxu0 0.0
      %7148 = vmatprep.subr.mxu0 0.0
      %7149 = vmatpush1.msra.mxu0 0.0
      %7150 = vmatprep.subr.mxu0 0.0
      %7151 = vmatpush1.msra.mxu0 0.0
      %7152 = vmatprep.subr.mxu0 0.0
      %7153 = vmatpush1.msra.mxu0 0.0
      %7154 = vmatprep.subr.mxu0 0.0
      %7155 = vmatpush1.msra.mxu0 0.0
      %7156 = vmatprep.subr.mxu0 0.0
      %7157 = vmatpush1.msra.mxu0 0.0
      %7158 = vmatprep.subr.mxu0 0.0
      %7159 = vmatpush1.msra.mxu0 0.0
      %7160 = vmatprep.subr.mxu0 0.0
      %7161 = vmatpush1.msra.mxu0 0.0
      %7162 = vmatprep.subr.mxu0 0.0
      %7163 = vmatpush1.msra.mxu0 0.0
      %7164 = vmatprep.subr.mxu0 0.0
      %7165 = vmatpush1.msra.mxu0 0.0
      %7166 = vmatprep.subr.mxu0 0.0
      %7167 = vmatpush1.msra.mxu0 0.0
      %7168 = vmatprep.subr.mxu0 0.0
      %7169 = vmatpush1.msra.mxu0 0.0
      %7170 = vmatprep.subr.mxu0 0.0
      %7171 = vmatpush1.msra.mxu0 0.0
      %7172 = vmatprep.subr.mxu0 0.0
      %7173 = vmatpush1.msra.mxu0 0.0
      %7174 = vmatprep.subr.mxu0 0.0
      %7175 = vmatpush1.msra.mxu0 0.0
      %7176 = vmatprep.mubr.f32.mxu0 0.0
      %7177 = vmatmul.mubr.f32.gmra.mrb[0].mxu0 %v7014
      %v7178 = vpop.f32.mrb[0].mxu0
      %v7179 = vadd.f32 %v7011, %v7178
      %v7180 = vpop.f32.mrb[0].mxu0
      %7181 = vmatprep.mubr.f32.mxu0 0.0
      %7182 = vmatmul.mubr.f32.gmra.mrb[0].mxu0 %v7017
      %v7183 = vpop.f32.mrb[0].mxu0
      %v7184 = vadd.f32 %v7011, %v7183
      %v7185 = vpop.f32.mrb[0].mxu0
      %7186 = vmatprep.mubr.f32.mxu0 0.0
      %7187 = vmatmul.mubr.f32.gmra.mrb[0].mxu0 %v7020
      %v7188 = vpop.f32.mrb[0].mxu0
      %v7189 = vadd.f32 %v7011, %v7188
      %v7190 = vpop.f32.mrb[0].mxu0
      %7191 = vmatprep.mubr.f32.mxu0 0.0
      %7192 = vmatmul.mubr.f32.gmra.mrb[0].mxu0 %v7023
      %v7193 = vpop.f32.mrb[0].mxu0
      %v7194 = vadd.f32 %v7011, %v7193
      %v7195 = vpop.f32.mrb[0].mxu0
      %7196 = vmatprep.mubr.f32.mxu0 0.0
      %7197 = vmatmul.mubr.f32.gmra.mrb[0].mxu0 %v7026
      %v7198 = vpop.f32.mrb[0].mxu0
      %v7199 = vadd.f32 %v7011, %v7198
      %v7200 = vpop.f32.mrb[0].mxu0
      %7201 = vmatprep.mubr.f32.mxu0 0.0
      %7202 = vmatmul.mubr.f32.gmra.mrb[0].mxu0 %v7029
      %v7203 = vpop.f32.mrb[0].mxu0
      %v7204 = vadd.f32 %v7011, %v7203
      %v7205 = vpop.f32.mrb[0].mxu0
      %7206 = vmatprep.mubr.f32.mxu0 0.0
      %7207 = vmatmul.mubr.f32.gmra.mrb[0].mxu0 %v7032
      %v7208 = vpop.f32.mrb[0].mxu0
      %v7209 = vadd.f32 %v7011, %v7208
      %v7210 = vpop.f32.mrb[0].mxu0
      %7211 = vmatprep.mubr.f32.mxu0 0.0
      %7212 = vmatmul.mubr.f32.gmra.mrb[0].mxu0 %v7035
      %v7213 = vpop.f32.mrb[0].mxu0
      %v7214 = vadd.f32 %v7011, %v7213
      %v7215 = vpop.f32.mrb[0].mxu0
      %7216 = vmatprep.mubr.f32.mxu0 0.0
      %7217 = vmatmul.mubr.f32.gmra.mrb[0].mxu0 %v7038
      %v7218 = vpop.f32.mrb[0].mxu0
      %v7219 = vadd.f32 %v7011, %v7218
      %v7220 = vpop.f32.mrb[0].mxu0
      %7221 = vmatprep.mubr.f32.mxu0 0.0
      %7222 = vmatmul.mubr.f32.gmra.mrb[0].mxu0 %v7041
      %v7223 = vpop.f32.mrb[0].mxu0
      %v7224 = vadd.f32 %v7011, %v7223
      %v7225 = vpop.f32.mrb[0].mxu0
      %7226 = vmatprep.mubr.f32.mxu0 0.0
      %7227 = vmatmul.mubr.f32.gmra.mrb[0].mxu0 %v7044
      %v7228 = vpop.f32.mrb[0].mxu0
      %v7229 = vadd.f32 %v7011, %v7228
      %v7230 = vpop.f32.mrb[0].mxu0
      %7231 = vmatprep.mubr.f32.mxu0 0.0
      %7232 = vmatmul.mubr.f32.gmra.mrb[0].mxu0 %v7047
      %v7233 = vpop.f32.mrb[0].mxu0
      %v7234 = vadd.f32 %v7011, %v7233
      %v7235 = vpop.f32.mrb[0].mxu0
      %7236 = vmatprep.mubr.f32.mxu0 0.0
      %7237 = vmatmul.mubr.f32.gmra.mrb[0].mxu0 %v7050
      %v7238 = vpop.f32.mrb[0].mxu0
      %v7239 = vadd.f32 %v7011, %v7238
      %v7240 = vpop.f32.mrb[0].mxu0
      %7241 = vmatprep.mubr.f32.mxu0 0.0
      %7242 = vmatmul.mubr.f32.gmra.mrb[0].mxu0 %v7053
      %v7243 = vpop.f32.mrb[0].mxu0
      %v7244 = vadd.f32 %v7011, %v7243
      %v7245 = vpop.f32.mrb[0].mxu0
      %7246 = vmatprep.mubr.f32.mxu0 0.0
      %7247 = vmatmul.mubr.f32.gmra.mrb[0].mxu0 %v7056
      %v7248 = vpop.f32.mrb[0].mxu0
      %v7249 = vadd.f32 %v7011, %v7248
      %v7250 = vpop.f32.mrb[0].mxu0
      %7251 = vmatprep.mubr.f32.mxu0 0.0
      %7252 = vmatmul.mubr.f32.gmra.mrb[0].mxu0 %v7059
      %v7253 = vpop.f32.mrb[0].mxu0
      %v7254 = vadd.f32 %v7011, %v7253
      %v7255 = vpop.f32.mrb[0].mxu0
      %7256 = vmatprep.mubr.f32.mxu0 0.0
      %7257 = vmatmul.mubr.f32.gmra.mrb[0].mxu0 %v7062
      %v7258 = vpop.f32.mrb[0].mxu0
      %v7259 = vadd.f32 %v7011, %v7258
      %v7260 = vpop.f32.mrb[0].mxu0
      %7261 = vmatprep.mubr.f32.mxu0 0.0
      %7262 = vmatmul.mubr.f32.gmra.mrb[0].mxu0 %v7065
      %v7263 = vpop.f32.mrb[0].mxu0
      %v7264 = vadd.f32 %v7011, %v7263
      %v7265 = vpop.f32.mrb[0].mxu0
      %7266 = vmatprep.mubr.f32.mxu0 0.0
      %7267 = vmatmul.mubr.f32.gmra.mrb[0].mxu0 %v7068
      %v7268 = vpop.f32.mrb[0].mxu0
      %v7269 = vadd.f32 %v7011, %v7268
      %v7270 = vpop.f32.mrb[0].mxu0
      %7271 = vmatprep.mubr.f32.mxu0 0.0
      %7272 = vmatmul.mubr.f32.gmra.mrb[0].mxu0 %v7071
      %v7273 = vpop.f32.mrb[0].mxu0
      %v7274 = vadd.f32 %v7011, %v7273
      %v7275 = vpop.f32.mrb[0].mxu0
      %7276 = vmatprep.mubr.f32.mxu0 0.0
      %7277 = vmatmul.mubr.f32.gmra.mrb[0].mxu0 %v7074
      %v7278 = vpop.f32.mrb[0].mxu0
      %v7279 = vadd.f32 %v7011, %v7278
      %v7280 = vpop.f32.mrb[0].mxu0
      %7281 = vmatprep.mubr.f32.mxu0 0.0
      %7282 = vmatmul.mubr.f32.gmra.mrb[0].mxu0 %v7077
      %v7283 = vpop.f32.mrb[0].mxu0
      %v7284 = vadd.f32 %v7011, %v7283
      %v7285 = vpop.f32.mrb[0].mxu0
      %7286 = vmatprep.mubr.f32.mxu0 0.0
      %7287 = vmatmul.mubr.f32.gmra.mrb[0].mxu0 %v7080
      %v7288 = vpop.f32.mrb[0].mxu0
      %v7289 = vadd.f32 %v7011, %v7288
      %v7290 = vpop.f32.mrb[0].mxu0
      %7291 = vmatprep.mubr.f32.mxu0 0.0
      %7292 = vmatmul.mubr.f32.gmra.mrb[0].mxu0 %v7083
      %v7293 = vpop.f32.mrb[0].mxu0
      %v7294 = vadd.f32 %v7011, %v7293
      %v7295 = vpop.f32.mrb[0].mxu0
      %7296 = vmatprep.mubr.f32.mxu0 0.0
      %7297 = vmatmul.mubr.f32.gmra.mrb[0].mxu0 %v7086
      %v7298 = vpop.f32.mrb[0].mxu0
      %v7299 = vadd.f32 %v7011, %v7298
      %v7300 = vpop.f32.mrb[0].mxu0
      %7301 = vmatprep.mubr.f32.mxu0 0.0
      %7302 = vmatmul.mubr.f32.gmra.mrb[0].mxu0 %v7089
      %v7303 = vpop.f32.mrb[0].mxu0
      %v7304 = vadd.f32 %v7011, %v7303
      %v7305 = vpop.f32.mrb[0].mxu0
      %7306 = vmatprep.mubr.f32.mxu0 0.0
      %7307 = vmatmul.mubr.f32.gmra.mrb[0].mxu0 %v7092
      %v7308 = vpop.f32.mrb[0].mxu0
      %v7309 = vadd.f32 %v7011, %v7308
      %v7310 = vpop.f32.mrb[0].mxu0
      %7311 = vmatprep.mubr.f32.mxu0 0.0
      %7312 = vmatmul.mubr.f32.gmra.mrb[0].mxu0 %v7095
      %v7313 = vpop.f32.mrb[0].mxu0
      %v7314 = vadd.f32 %v7011, %v7313
      %v7315 = vpop.f32.mrb[0].mxu0
      %7316 = vmatprep.mubr.f32.mxu0 0.0
      %7317 = vmatmul.mubr.f32.gmra.mrb[0].mxu0 %v7098
      %v7318 = vpop.f32.mrb[0].mxu0
      %v7319 = vadd.f32 %v7011, %v7318
      %v7320 = vpop.f32.mrb[0].mxu0
      %7321 = vmatprep.mubr.f32.mxu0 0.0
      %7322 = vmatmul.mubr.f32.gmra.mrb[0].mxu0 %v7101
      %v7323 = vpop.f32.mrb[0].mxu0
      %v7324 = vadd.f32 %v7011, %v7323
      %v7325 = vpop.f32.mrb[0].mxu0
      %7326 = vmatprep.mubr.f32.mxu0 0.0
      %7327 = vmatmul.mubr.f32.gmra.mrb[0].mxu0 %v7104
      %v7328 = vpop.f32.mrb[0].mxu0
      %v7329 = vadd.f32 %v7011, %v7328
      %v7330 = vpop.f32.mrb[0].mxu0
      %7331 = vmatprep.mubr.f32.mxu0 0.0
      %7332 = vmatmul.mubr.f32.gmra.mrb[0].mxu0 %v7107
      %v7333 = vpop.f32.mrb[0].mxu0
      %v7334 = vadd.f32 %v7011, %v7333
      %v7335 = vpop.f32.mrb[0].mxu0
      %7336 = vdwg.mxu0
      %v7337 = vld [vmem:[%s13] sm:$0xff]
      %v7338 = vld [vmem:[%s13 + $0x8] sm:$0xff]
      %v7339 = vld [vmem:[%s13 + $0x10] sm:$0xff]
      %v7340 = vld [vmem:[%s13 + $0x18] sm:$0xff]
      %v7341 = vld [vmem:[%s13 + $0x20] sm:$0xff]
      %v7342 = vld [vmem:[%s13 + $0x28] sm:$0xff]
      %v7343 = vld [vmem:[%s13 + $0x30] sm:$0xff]
      %v7344 = vld [vmem:[%s13 + $0x38] sm:$0xff]
      %v7345 = vld [vmem:[%s13 + $0x40] sm:$0xff]
      %v7346 = vld [vmem:[%s13 + $0x48] sm:$0xff]
      %v7347 = vld [vmem:[%s13 + $0x50] sm:$0xff]
      %v7348 = vld [vmem:[%s13 + $0x58] sm:$0xff]
      %v7349 = vld [vmem:[%s13 + $0x60] sm:$0xff]
      %v7350 = vld [vmem:[%s13 + $0x68] sm:$0xff]
      %v7351 = vld [vmem:[%s13 + $0x70] sm:$0xff]
      %v7352 = vld [vmem:[%s13 + $0x78] sm:$0xff]
      %7353 = vmatprep.subr.mxu0 0.0
      %7354 = vmatpush1.msra.mxu0 %v7179
      %7355 = vmatprep.subr.mxu0 0.0
      %7356 = vmatpush1.msra.mxu0 %v7184
      %7357 = vmatprep.subr.mxu0 0.0
      %7358 = vmatpush1.msra.mxu0 %v7189
      %7359 = vmatprep.subr.mxu0 0.0
      %7360 = vmatpush1.msra.mxu0 %v7194
      %7361 = vmatprep.subr.mxu0 0.0
      %7362 = vmatpush1.msra.mxu0 %v7199
      %7363 = vmatprep.subr.mxu0 0.0
      %7364 = vmatpush1.msra.mxu0 %v7204
      %7365 = vmatprep.subr.mxu0 0.0
      %7366 = vmatpush1.msra.mxu0 %v7209
      %7367 = vmatprep.subr.mxu0 0.0
      %7368 = vmatpush1.msra.mxu0 %v7214
      %7369 = vmatprep.subr.mxu0 0.0
      %7370 = vmatpush1.msra.mxu0 %v7219
      %7371 = vmatprep.subr.mxu0 0.0
      %7372 = vmatpush1.msra.mxu0 %v7224
      %7373 = vmatprep.subr.mxu0 0.0
      %7374 = vmatpush1.msra.mxu0 %v7229
      %7375 = vmatprep.subr.mxu0 0.0
      %7376 = vmatpush1.msra.mxu0 %v7234
      %7377 = vmatprep.subr.mxu0 0.0
      %7378 = vmatpush1.msra.mxu0 %v7239
      %7379 = vmatprep.subr.mxu0 0.0
      %7380 = vmatpush1.msra.mxu0 %v7244
      %7381 = vmatprep.subr.mxu0 0.0
      %7382 = vmatpush1.msra.mxu0 %v7249
      %7383 = vmatprep.subr.mxu0 0.0
      %7384 = vmatpush1.msra.mxu0 %v7254
      %7385 = vmatprep.subr.mxu0 0.0
      %7386 = vmatpush1.msra.mxu0 %v7259
      %7387 = vmatprep.subr.mxu0 0.0
      %7388 = vmatpush1.msra.mxu0 %v7264
      %7389 = vmatprep.subr.mxu0 0.0
      %7390 = vmatpush1.msra.mxu0 %v7269
      %7391 = vmatprep.subr.mxu0 0.0
      %7392 = vmatpush1.msra.mxu0 %v7274
      %7393 = vmatprep.subr.mxu0 0.0
      %7394 = vmatpush1.msra.mxu0 %v7279
      %7395 = vmatprep.subr.mxu0 0.0
      %7396 = vmatpush1.msra.mxu0 %v7284
      %7397 = vmatprep.subr.mxu0 0.0
      %7398 = vmatpush1.msra.mxu0 %v7289
      %7399 = vmatprep.subr.mxu0 0.0
      %7400 = vmatpush1.msra.mxu0 %v7294
      %7401 = vmatprep.subr.mxu0 0.0
      %7402 = vmatpush1.msra.mxu0 %v7299
      %7403 = vmatprep.subr.mxu0 0.0
      %7404 = vmatpush1.msra.mxu0 %v7304
      %7405 = vmatprep.subr.mxu0 0.0
      %7406 = vmatpush1.msra.mxu0 %v7309
      %7407 = vmatprep.subr.mxu0 0.0
      %7408 = vmatpush1.msra.mxu0 %v7314
      %7409 = vmatprep.subr.mxu0 0.0
      %7410 = vmatpush1.msra.mxu0 %v7319
      %7411 = vmatprep.subr.mxu0 0.0
      %7412 = vmatpush1.msra.mxu0 %v7324
      %7413 = vmatprep.subr.mxu0 0.0
      %7414 = vmatpush1.msra.mxu0 %v7329
      %7415 = vmatprep.subr.mxu0 0.0
      %7416 = vmatpush1.msra.mxu0 %v7334
      %7417 = vmatprep.mubr.f32.mxu0 %v7338
      %7418 = vmatmul.mubr.f32.gmra.mrb[0].mxu0 %v7337
      %v7419 = vpop.f32.mrb[0].mxu0
      %v7420 = vadd.f32 0.0, %v7419
      %v7421 = vpop.f32.mrb[0].mxu0
      %7422 = vmatprep.mubr.f32.mxu0 %v7340
      %7423 = vmatmul.mubr.f32.gmra.mrb[0].mxu0 %v7339
      %v7424 = vpop.f32.mrb[0].mxu0
      %v7425 = vadd.f32 0.0, %v7424
      %v7426 = vpop.f32.mrb[0].mxu0
      %7427 = vmatprep.mubr.f32.mxu0 %v7342
      %7428 = vmatmul.mubr.f32.gmra.mrb[0].mxu0 %v7341
      %v7429 = vpop.f32.mrb[0].mxu0
      %v7430 = vadd.f32 0.0, %v7429
      %v7431 = vpop.f32.mrb[0].mxu0
      %7432 = vmatprep.mubr.f32.mxu0 %v7344
      %7433 = vmatmul.mubr.f32.gmra.mrb[0].mxu0 %v7343
      %v7434 = vpop.f32.mrb[0].mxu0
      %v7435 = vadd.f32 0.0, %v7434
      %v7436 = vpop.f32.mrb[0].mxu0
      %7437 = vmatprep.mubr.f32.mxu0 %v7346
      %7438 = vmatmul.mubr.f32.gmra.mrb[0].mxu0 %v7345
      %v7439 = vpop.f32.mrb[0].mxu0
      %v7440 = vadd.f32 0.0, %v7439
      %v7441 = vpop.f32.mrb[0].mxu0
      %7442 = vmatprep.mubr.f32.mxu0 %v7348
      %7443 = vmatmul.mubr.f32.gmra.mrb[0].mxu0 %v7347
      %v7444 = vpop.f32.mrb[0].mxu0
      %v7445 = vadd.f32 0.0, %v7444
      %v7446 = vpop.f32.mrb[0].mxu0
      %7447 = vmatprep.mubr.f32.mxu0 %v7350
      %7448 = vmatmul.mubr.f32.gmra.mrb[0].mxu0 %v7349
      %v7449 = vpop.f32.mrb[0].mxu0
      %v7450 = vadd.f32 0.0, %v7449
      %v7451 = vpop.f32.mrb[0].mxu0
      %7452 = vmatprep.mubr.f32.mxu0 %v7352
      %7453 = vmatmul.mubr.f32.gmra.mrb[0].mxu0 %v7351
      %v7454 = vpop.f32.mrb[0].mxu0
      %v7455 = vadd.f32 0.0, %v7454
      %v7456 = vpop.f32.mrb[0].mxu0
      %7457 = vdwg.mxu0
      %v7458 = vadd.f32 %v6997, %v7420
      %v7459 = vadd.f32 %v6998, %v7425
      %v7460 = vadd.f32 %v6999, %v7430
      %v7461 = vadd.f32 %v7000, %v7435
      %v7462 = vadd.f32 %v7001, %v7440
      %v7463 = vadd.f32 %v7002, %v7445
      %v7464 = vadd.f32 %v7003, %v7450
      %v7465 = vadd.f32 %v7004, %v7455
      %vm7466 = vcmask 64512
      %7467 = vst.msk [vmem:[%s467] sm:$0xff] %vm7466, %v7458
      %7468 = vst.msk [vmem:[%s467 + $0x8] sm:$0xff] %vm7466, %v7459
      %7469 = vst.msk [vmem:[%s467 + $0x10] sm:$0xff] %vm7466, %v7460
      %7470 = vst.msk [vmem:[%s467 + $0x18] sm:$0xff] %vm7466, %v7461
      %7471 = vst.msk [vmem:[%s467 + $0x20] sm:$0xff] %vm7466, %v7462
      %7472 = vst.msk [vmem:[%s467 + $0x28] sm:$0xff] %vm7466, %v7463
      %7473 = vst.msk [vmem:[%s467 + $0x30] sm:$0xff] %vm7466, %v7464
      %7474 = vst.msk [vmem:[%s467 + $0x38] sm:$0xff] %vm7466, %v7465
      %p7475 = scmp.lt.s32.totalorder %s25, 1
      %s7476 = scalar_select %p7475, %s25, 1
      %s7477 = smul.addr %s7476, 8
      %s7478 = smul.addr %s7477, 8
      %s7479 = scalar_lea.vmem %s14, %s7478
      // Predicated region
      $region77: #{gresidual_block_forward.1} parent=75 // pred_check
        %p7480 = pneg %p342
      $region78: #{gresidual_block_forward.1} parent=75 // pred_check_branch
        %7482 = sbr.rel (%p7480) target = $region80
      $region79: #{gresidual_block_forward.1} parent=75 // pred_region
        _
      $region80: #{gresidual_block_forward.1} parent=75 // pred_fallthru
        _
    $region76: #{gresidual_block_forward.1} parent=5 // pred_fallthru
      _
    %p7483 = scmp.le.s32.totalorder 2, %s20
    // Predicated region
    $region81: #{gresidual_block_forward.1} parent=5 // pred_check
      %p7484 = pneg %p7483
    $region82: #{gresidual_block_forward.1} parent=5 // pred_check_branch
      %7486 = sbr.rel (%p7484) target = $region84
    $region83: #{gresidual_block_forward.1} parent=5 // pred_region
      %s7487 = ssub.s32 %s20, 2
      // Predicated region
      $region85: #{gresidual_block_forward.1} parent=83 // pred_check
        %p7488 = pneg %p348
      $region86: #{gresidual_block_forward.1} parent=83 // pred_check_branch
        %7490 = sbr.rel (%p7488) target = $region88
      $region87: #{gresidual_block_forward.1} parent=83 // pred_region
        %p7491 = scmp.lt.s32.totalorder %s26, 1
        %s7492 = scalar_select %p7491, %s26, 1
        %s7493 = smul.addr %s7492, 8
        %s7494 = smul.addr %s7493, 8
        %s7495 = scalar_lea.vmem %s14, %s7494
      $region88: #{gresidual_block_forward.1} parent=83 // pred_fallthru
        _
    $region84: #{gresidual_block_forward.1} parent=5 // pred_fallthru
      _
  $region6: #{gresidual_block_forward.1} parent=0 // loop_footer
    %s24 = sadd.s32 1, %s20
  $region7: #{gresidual_block_forward.1} parent=0 // loop_footer_branch
    %19 = sbr.rel target = $region3
  $region8: #{gresidual_block_forward.1} parent=0 // loop_exit
    _

</llo_original>
